<compile_context>
chip_gen: v5e
topology: v5e:2x2
jax: 0.10.0
libtpu: 0.0.40
codegen_flags: <defaults>
</compile_context>

<pallas_src>
import functools

import jax
import jax.numpy as jnp
from jax.experimental import pallas as pl
from jax.experimental.pallas import tpu as pltpu

NDF = 64
BN_EPS = 1e-5
LRELU_SLOPE = 0.2


def _round_up(x, m):
    return (x + m - 1) // m * m


def _choose_tm(M):
    """Row tile: whole-M for small M (no weight re-streaming, full MXU rows);
    only split into >=2 blocks (v7x megacore) when M >= 256."""
    if M >= 256:
        for t in (512, 256, 128):
            if M % t == 0 and M // t >= 2:
                return t
    for t in (512, 256, 128, 64, 32, 16, 8):
        if M % t == 0:
            return t
    return M


def _choose_tn(Np, m_blocks):
    """Column tile (lane-dense, >=128). Only use 256 when the (i, j) grid
    already has >=2 parallel blocks; otherwise 128 so the second TensorCore
    (v7x) gets work from the N axis."""
    if Np % 256 == 0 and m_blocks * (Np // 256) >= 2:
        return 256
    return 128 if Np % 128 == 0 else Np


def _choose_tk(K):
    for t in (1024, 512, 256, 128):
        if K % t == 0:
            return t
    return K


# ------------------------- Pallas kernels -------------------------

def _gemm_lrelu_kernel(a_ref, b_ref, o_ref, *acc, slope, multi_k):
    """bf16 GEMM (f32 accumulate) + fused LeakyReLU. Optional K grid axis."""
    if multi_k:
        acc_ref, = acc
        k = pl.program_id(2)

        @pl.when(k == 0)
        def _():
            acc_ref[...] = jnp.zeros_like(acc_ref)

        acc_ref[...] += jnp.dot(a_ref[...], b_ref[...],
                                preferred_element_type=jnp.float32)

        @pl.when(k == pl.num_programs(2) - 1)
        def _():
            y = acc_ref[...]
            o_ref[...] = jnp.where(y >= 0, y, slope * y).astype(o_ref.dtype)
    else:
        y = jnp.dot(a_ref[...], b_ref[...], preferred_element_type=jnp.float32)
        o_ref[...] = jnp.where(y >= 0, y, slope * y).astype(o_ref.dtype)


def _gemm_bnstats_kernel(a_ref, b_ref, o_ref, sum_ref, sq_ref, *acc, multi_k):
    """bf16 GEMM + per-(M-block, channel) sum / sum-of-squares taken from the
    f32 accumulator (row 0 of the stats blocks only). y is stored as bf16."""
    def epilogue(y):
        o_ref[...] = y.astype(o_ref.dtype)
        sum_ref[0:1, :] = jnp.sum(y, axis=0, keepdims=True)
        sq_ref[0:1, :] = jnp.sum(y * y, axis=0, keepdims=True)

    if multi_k:
        acc_ref, = acc
        k = pl.program_id(2)

        @pl.when(k == 0)
        def _():
            acc_ref[...] = jnp.zeros_like(acc_ref)

        acc_ref[...] += jnp.dot(a_ref[...], b_ref[...],
                                preferred_element_type=jnp.float32)

        @pl.when(k == pl.num_programs(2) - 1)
        def _():
            epilogue(acc_ref[...])
    else:
        epilogue(jnp.dot(a_ref[...], b_ref[...],
                         preferred_element_type=jnp.float32))


def _affine_lrelu_kernel(x_ref, s_ref, t_ref, o_ref, *, slope):
    y = x_ref[...].astype(jnp.float32) * s_ref[...] + t_ref[...]
    o_ref[...] = jnp.where(y >= 0, y, slope * y).astype(o_ref.dtype)


def _affine_lrelu_rowdot_kernel(x_ref, s_ref, t_ref, w_ref, o_ref, *, slope):
    """BN-normalize + LeakyReLU + per-row dot with conv5 weight rows (the 4x4
    valid conv over a 4x4 map == per-image dot product)."""
    y = x_ref[...].astype(jnp.float32) * s_ref[...] + t_ref[...]
    y = jnp.where(y >= 0, y, slope * y)
    o_ref[...] = jnp.sum(y * w_ref[...], axis=1, keepdims=True)


# ------------------------- Pallas wrappers -------------------------

def _prep_a(patches, Kp):
    """bf16 cast; pad rows to a multiple of 8 and cols up to the (padded)
    weight K so the GEMM lane dim is 128-aligned (layer 1: 75 -> 128)."""
    M, K = patches.shape
    Mp = _round_up(M, 8)
    a = patches.astype(jnp.bfloat16)
    if Mp != M or Kp != K:
        a = jnp.zeros((Mp, Kp), jnp.bfloat16).at[:M, :K].set(a)
    return a, M, Mp


def _gemm_tiles(Mp, Np, Kp):
    tm = _choose_tm(Mp)
    tn = _choose_tn(Np, Mp // tm)
    tk = _choose_tk(Kp)
    return tm, tn, tk, (Kp // tk) > 1


def conv_gemm_lrelu(patches, w_pad, cout, out_dtype, slope=LRELU_SLOPE):
    """LeakyReLU(patches @ W). w_pad is a pre-padded bf16 [Kp, Np] matrix."""
    Kp, Np = w_pad.shape
    a, M, Mp = _prep_a(patches, Kp)
    tm, tn, tk, multi_k = _gemm_tiles(Mp, Np, Kp)
    if multi_k:
        grid = (Mp // tm, Np // tn, Kp // tk)
        in_specs = [pl.BlockSpec((tm, tk), lambda i, j, k: (i, k)),
                    pl.BlockSpec((tk, tn), lambda i, j, k: (k, j))]
        out_specs = pl.BlockSpec((tm, tn), lambda i, j, k: (i, j))
        scratch = [pltpu.VMEM((tm, tn), jnp.float32)]
        dims = ("parallel", "parallel", "arbitrary")
    else:
        grid = (Mp // tm, Np // tn)
        in_specs = [pl.BlockSpec((tm, tk), lambda i, j: (i, 0)),
                    pl.BlockSpec((tk, tn), lambda i, j: (0, j))]
        out_specs = pl.BlockSpec((tm, tn), lambda i, j: (i, j))
        scratch = []
        dims = ("parallel", "parallel")
    out = pl.pallas_call(
        functools.partial(_gemm_lrelu_kernel, slope=slope, multi_k=multi_k),
        out_shape=jax.ShapeDtypeStruct((Mp, Np), out_dtype),
        grid=grid, in_specs=in_specs, out_specs=out_specs,
        scratch_shapes=scratch,
        compiler_params=pltpu.CompilerParams(dimension_semantics=dims),
    )(a, w_pad)
    return out[:M, :cout]


def conv_gemm_bnstats(patches, w_pad, cout):
    """Conv GEMM (bf16 out) + per-channel batch sum / sum-of-squares (f32)."""
    Kp, Np = w_pad.shape
    a, M, Mp = _prep_a(patches, Kp)
    tm, tn, tk, multi_k = _gemm_tiles(Mp, Np, Kp)
    mg = Mp // tm
    out_shape = (jax.ShapeDtypeStruct((Mp, Np), jnp.bfloat16),
                 jax.ShapeDtypeStruct((mg * 8, Np), jnp.float32),
                 jax.ShapeDtypeStruct((mg * 8, Np), jnp.float32))
    if multi_k:
        grid = (mg, Np // tn, Kp // tk)
        in_specs = [pl.BlockSpec((tm, tk), lambda i, j, k: (i, k)),
                    pl.BlockSpec((tk, tn), lambda i, j, k: (k, j))]
        out_specs = (pl.BlockSpec((tm, tn), lambda i, j, k: (i, j)),
                     pl.BlockSpec((8, tn), lambda i, j, k: (i, j)),
                     pl.BlockSpec((8, tn), lambda i, j, k: (i, j)))
        scratch = [pltpu.VMEM((tm, tn), jnp.float32)]
        dims = ("parallel", "parallel", "arbitrary")
    else:
        grid = (mg, Np // tn)
        in_specs = [pl.BlockSpec((tm, tk), lambda i, j: (i, 0)),
                    pl.BlockSpec((tk, tn), lambda i, j: (0, j))]
        out_specs = (pl.BlockSpec((tm, tn), lambda i, j: (i, j)),
                     pl.BlockSpec((8, tn), lambda i, j: (i, j)),
                     pl.BlockSpec((8, tn), lambda i, j: (i, j)))
        scratch = []
        dims = ("parallel", "parallel")
    y, sums, sqs = pl.pallas_call(
        functools.partial(_gemm_bnstats_kernel, multi_k=multi_k),
        out_shape=out_shape,
        grid=grid, in_specs=in_specs, out_specs=out_specs,
        scratch_shapes=scratch,
        compiler_params=pltpu.CompilerParams(dimension_semantics=dims),
    )(a, w_pad)
    # only row 0 of each 8-row stats block is valid; reduce the handful of
    # M blocks (and drop padded channels) in XLA -- negligible.
    col_sum = sums[0::8, :cout].sum(axis=0)
    col_sq = sqs[0::8, :cout].sum(axis=0)
    return y[:M, :cout], col_sum, col_sq


def pallas_affine_lrelu(x, scale, shift, out_dtype, slope=LRELU_SLOPE):
    """y = LeakyReLU(x * scale + shift). Gridded over rows, lane-dense C."""
    M, C = x.shape
    tm = _choose_tm(M)
    return pl.pallas_call(
        functools.partial(_affine_lrelu_kernel, slope=slope),
        out_shape=jax.ShapeDtypeStruct((M, C), out_dtype),
        grid=(M // tm,),
        in_specs=[pl.BlockSpec((tm, C), lambda i: (i, 0)),
                  pl.BlockSpec((1, C), lambda i: (0, 0)),
                  pl.BlockSpec((1, C), lambda i: (0, 0))],
        out_specs=pl.BlockSpec((tm, C), lambda i: (i, 0)),
        compiler_params=pltpu.CompilerParams(dimension_semantics=("parallel",)),
    )(x, scale.reshape(1, C).astype(jnp.float32),
      shift.reshape(1, C).astype(jnp.float32))


def pallas_affine_lrelu_rowdot(x, scale, shift, w_rows, slope=LRELU_SLOPE):
    """per_row = sum_c( LeakyReLU(x*scale+shift) * w_rows ) -> [M, 1] f32."""
    M, C = x.shape
    tm = _choose_tm(M)
    return pl.pallas_call(
        functools.partial(_affine_lrelu_rowdot_kernel, slope=slope),
        out_shape=jax.ShapeDtypeStruct((M, 1), jnp.float32),
        grid=(M // tm,),
        in_specs=[pl.BlockSpec((tm, C), lambda i: (i, 0)),
                  pl.BlockSpec((1, C), lambda i: (0, 0)),
                  pl.BlockSpec((1, C), lambda i: (0, 0)),
                  pl.BlockSpec((tm, C), lambda i: (i, 0))],
        out_specs=pl.BlockSpec((tm, 1), lambda i: (i, 0)),
        compiler_params=pltpu.CompilerParams(dimension_semantics=("parallel",)),
    )(x, scale.reshape(1, C).astype(jnp.float32),
      shift.reshape(1, C).astype(jnp.float32),
      w_rows.astype(jnp.float32))


# ------------------------- Glue (im2col, weight prep) -------------------------
# TODO(synk): im2col (strided window gather) stays in XLA; fusing it into the
# GEMM A operand needs manual strided DMA / Element index maps and is the next
# structural win for larger batches.

def _im2col(x_nhwc, kh, kw, stride, pad):
    """x: [N,H,W,C] -> patches [N*Ho*Wo, kh*kw*C] (row order n,ho,wo; col i,j,c)."""
    N, H, W, C = x_nhwc.shape
    xp = jnp.pad(x_nhwc, ((0, 0), (pad, pad), (pad, pad), (0, 0)))
    Ho = (H + 2 * pad - kh) // stride + 1
    Wo = (W + 2 * pad - kw) // stride + 1
    cols = []
    for i in range(kh):
        for j in range(kw):
            patch = xp[:, i:i + stride * (Ho - 1) + 1:stride,
                          j:j + stride * (Wo - 1) + 1:stride, :]
            cols.append(patch)                       # [N,Ho,Wo,C]
    patches = jnp.stack(cols, axis=3)                # [N,Ho,Wo,kh*kw,C]
    return patches.reshape(N * Ho * Wo, kh * kw * C), (N, Ho, Wo)


def _gemm_weight(w_oihw):
    """OIHW -> [Kp, Np] bf16 GEMM matrix matching im2col (i, j, c) column
    order; K and N zero-padded to multiples of 128 (lane-dense, aligned)."""
    Cout, Cin, kh, kw = w_oihw.shape
    m = jnp.transpose(w_oihw, (2, 3, 1, 0)).reshape(kh * kw * Cin, Cout)
    K, C = m.shape
    Kp, Np = _round_up(K, 128), _round_up(C, 128)
    m = m.astype(jnp.bfloat16)
    if (Kp, Np) == (K, C):
        return m
    return jnp.zeros((Kp, Np), jnp.bfloat16).at[:K, :C].set(m)


def prepare_params(params):
    """One-time weight preprocessing, hoisted out of the per-forward path."""
    prep = {f'w{i}': _gemm_weight(params[f'w{i}']) for i in (1, 2, 3, 4)}
    # conv5 (512->1, k4, s1, valid) over the 4x4 layer-4 map is a per-image
    # dot product: reshape its weight to [kh*kw, Cin] rows (NHWC row order).
    w5 = params['w5'][0]                              # [Cin, 4, 4]
    prep['w5_rows'] = (jnp.transpose(w5, (1, 2, 0))
                       .reshape(16, w5.shape[0]).astype(jnp.float32))
    prep['b5'] = params['b5'].astype(jnp.float32)
    for i in (2, 3, 4):
        prep[f'g{i}'] = params[f'g{i}'].astype(jnp.float32)
        prep[f'b{i}'] = params[f'b{i}'].astype(jnp.float32)
    return prep


def discriminator_forward(x_nchw, prep):
    """Matches Discriminator.forward(x) (train-mode BN) for NCHW f32 input."""
    x = jnp.transpose(x_nchw, (0, 2, 3, 1)).astype(jnp.bfloat16)   # NHWC bf16

    # layer 1: conv(3->64, k5, s3, p1, no bias) + LeakyReLU fused in the GEMM.
    patches, (N, Ho, Wo) = _im2col(x, 5, 5, 3, 1)
    x = conv_gemm_lrelu(patches, prep['w1'], NDF, jnp.bfloat16) \
        .reshape(N, Ho, Wo, NDF)

    # layers 2-4: conv(k4,s2,p1) + BatchNorm (batch stats) + LeakyReLU(0.2).
    out = None
    for idx, cout in ((2, NDF * 2), (3, NDF * 4), (4, NDF * 8)):
        patches, (N, Ho, Wo) = _im2col(x, 4, 4, 2, 1)
        M = patches.shape[0]
        y, col_sum, col_sq = conv_gemm_bnstats(patches, prep[f'w{idx}'], cout)
        mean = col_sum / M
        var = jnp.maximum(col_sq / M - mean * mean, 0.0)   # biased var, clamp
        inv_std = jax.lax.rsqrt(var + BN_EPS)
        scale = prep[f'g{idx}'] * inv_std
        shift = prep[f'b{idx}'] - mean * scale
        if idx < 4:
            x = pallas_affine_lrelu(y, scale, shift, jnp.bfloat16) \
                .reshape(N, Ho, Wo, cout)
        else:
            # layer-4 normalize + LeakyReLU fused with layer 5:
            # conv(512->1, k4, s1, p0) over a 4x4 map == per-image dot + bias.
            assert Ho == 4 and Wo == 4, "final 4x4 valid conv must give 1x1"
            w_rows = jnp.tile(prep['w5_rows'], (N, 1))        # [N*16, 512]
            per_row = pallas_affine_lrelu_rowdot(y, scale, shift, w_rows)
            out = per_row.reshape(N, Ho * Wo).sum(axis=1) + prep['b5']
    # TODO(synk): BatchNorm running_mean/running_var updates (training-side
    # state) are intentionally not reproduced; forward math uses batch stats.
    return out                                   # [N] f32, == .view(-1)


# ------------------------- Parameter init -------------------------

def init_params(key):
    ks = jax.random.split(key, 9)

    def conv_w(k, cout, cin, kh, kw):
        return 0.02 * jax.random.normal(k, (cout, cin, kh, kw), jnp.float32)

    return {
        'w1': conv_w(ks[0], NDF, 3, 5, 5),
        'w2': conv_w(ks[1], NDF * 2, NDF, 4, 4),
        'g2': 1.0 + 0.02 * jax.random.normal(ks[2], (NDF * 2,), jnp.float32),
        'b2': jnp.zeros((NDF * 2,), jnp.float32),
        'w3': conv_w(ks[3], NDF * 4, NDF * 2, 4, 4),
        'g3': 1.0 + 0.02 * jax.random.normal(ks[4], (NDF * 4,), jnp.float32),
        'b3': jnp.zeros((NDF * 4,), jnp.float32),
        'w4': conv_w(ks[5], NDF * 8, NDF * 4, 4, 4),
        'g4': 1.0 + 0.02 * jax.random.normal(ks[6], (NDF * 8,), jnp.float32),
        'b4': jnp.zeros((NDF * 8,), jnp.float32),
        'w5': conv_w(ks[7], 1, NDF * 8, 4, 4),
        'b5': 0.02 * jax.random.normal(ks[8], (1,), jnp.float32),
    }


if __name__ == "__main__":
    key = jax.random.PRNGKey(0)
    pkey, xkey = jax.random.split(key)
    params = init_params(pkey)
    prep = prepare_params(params)     # one-time weight prep (hoisted out of fwd)
    # 96x96 is the smallest spatial size for which the final 4x4 valid conv
    # reduces to 1x1 (96 ->5/3/1-> 32 -> 16 -> 8 -> 4 -> 1), so view(-1) -> [N].
    x = jax.random.normal(xkey, (2, 3, 96, 96), jnp.float32)   # NCHW, PyTorch-style
    out = jax.jit(discriminator_forward)(x, prep)
    out = jax.block_until_ready(out)
    assert out.shape == (2,) and out.dtype == jnp.float32
    print("KERNEL_OK")
</pallas_src>

<mosaic_0001>
module attributes {stable_mosaic.version = 11 : i64} {
  func.func @_gemm_lrelu_kernel(%arg0: i32, %arg1: i32, %arg2: memref<512x128xbf16, #tpu.memory_space<vmem>>, %arg3: memref<128x128xbf16, #tpu.memory_space<vmem>>, %arg4: memref<512x128xbf16, #tpu.memory_space<vmem>>) attributes {dimension_semantics = [#tpu.dimension_semantics<parallel>, #tpu.dimension_semantics<parallel>], iteration_bounds = array<i64: 4, 1>, scalar_prefetch = 0 : i64, scratch_operands = 0 : i64, tpu.core_type = #tpu.core_type<tc>, window_params = [{transform_indices = @transform_0, window_bounds = array<i64: 512, 128>}, {transform_indices = @transform_1, window_bounds = array<i64: 128, 128>}, {transform_indices = @transform_2, window_bounds = array<i64: 512, 128>}]} {
    %c0 = arith.constant 0 : index
    %c0_0 = arith.constant 0 : index
    %0 = vector.load %arg2[%c0, %c0_0] : memref<512x128xbf16, #tpu.memory_space<vmem>>, vector<512x128xbf16>
    %c0_1 = arith.constant 0 : index
    %c0_2 = arith.constant 0 : index
    %1 = vector.load %arg3[%c0_1, %c0_2] : memref<128x128xbf16, #tpu.memory_space<vmem>>, vector<128x128xbf16>
    %cst = arith.constant dense<0.000000e+00> : vector<512x128xf32>
    %2 = tpu.matmul %0, %1, %cst {dimension_numbers = #tpu.dot_dimension_numbers<[1], [0], [0], [1], [0, 0, 1, 1], [], []>} : vector<512x128xbf16>, vector<128x128xbf16>, vector<512x128xf32> -> vector<512x128xf32>
    %cst_3 = arith.constant 0.000000e+00 : f32
    %3 = vector.broadcast %cst_3 : f32 to vector<512x128xf32>
    %4 = arith.cmpf oge, %2, %3 : vector<512x128xf32>
    %cst_4 = arith.constant 2.000000e-01 : f32
    %5 = vector.broadcast %cst_4 : f32 to vector<512x128xf32>
    %6 = arith.mulf %5, %2 : vector<512x128xf32>
    %7 = arith.select %4, %2, %6 : vector<512x128xi1>, vector<512x128xf32>
    %8 = arith.truncf %7 : vector<512x128xf32> to vector<512x128xbf16>
    %c0_5 = arith.constant 0 : index
    %c0_6 = arith.constant 0 : index
    %9 = vector.load %arg4[%c0_5, %c0_6] : memref<512x128xbf16, #tpu.memory_space<vmem>>, vector<512x128xbf16>
    tpu.vector_store %arg4[%c0_5, %c0_6], %8 {strides = array<i32>} : memref<512x128xbf16, #tpu.memory_space<vmem>>, vector<512x128xbf16>,
    return
  }
  func.func @transform_0(%arg0: i32, %arg1: i32) -> (i32, i32) {
    %c0_i32 = arith.constant 0 : i32
    %c0_i32_0 = arith.constant 0 : i32
    return %arg0, %c0_i32 : i32, i32
  }
  func.func @transform_1(%arg0: i32, %arg1: i32) -> (i32, i32) {
    %c0_i32 = arith.constant 0 : i32
    %c0_i32_0 = arith.constant 0 : i32
    return %c0_i32, %arg1 : i32, i32
  }
  func.func @transform_2(%arg0: i32, %arg1: i32) -> (i32, i32) {
    %c0_i32 = arith.constant 0 : i32
    return %arg0, %arg1 : i32, i32
  }
}

module attributes {stable_mosaic.version = 11 : i64} {
  func.func @_gemm_bnstats_kernel(%arg0: i32, %arg1: i32, %arg2: memref<256x1024xbf16, #tpu.memory_space<vmem>>, %arg3: memref<1024x128xbf16, #tpu.memory_space<vmem>>, %arg4: memref<256x128xbf16, #tpu.memory_space<vmem>>, %arg5: memref<8x128xf32, #tpu.memory_space<vmem>>, %arg6: memref<8x128xf32, #tpu.memory_space<vmem>>) attributes {dimension_semantics = [#tpu.dimension_semantics<parallel>, #tpu.dimension_semantics<parallel>], iteration_bounds = array<i64: 2, 1>, scalar_prefetch = 0 : i64, scratch_operands = 0 : i64, tpu.core_type = #tpu.core_type<tc>, window_params = [{transform_indices = @transform_0, window_bounds = array<i64: 256, 1024>}, {transform_indices = @transform_1, window_bounds = array<i64: 1024, 128>}, {transform_indices = @transform_2, window_bounds = array<i64: 256, 128>}, {transform_indices = @transform_3, window_bounds = array<i64: 8, 128>}, {transform_indices = @transform_4, window_bounds = array<i64: 8, 128>}]} {
    %c0 = arith.constant 0 : index
    %c0_0 = arith.constant 0 : index
    %0 = vector.load %arg2[%c0, %c0_0] : memref<256x1024xbf16, #tpu.memory_space<vmem>>, vector<256x1024xbf16>
    %c0_1 = arith.constant 0 : index
    %c0_2 = arith.constant 0 : index
    %1 = vector.load %arg3[%c0_1, %c0_2] : memref<1024x128xbf16, #tpu.memory_space<vmem>>, vector<1024x128xbf16>
    %cst = arith.constant dense<0.000000e+00> : vector<256x128xf32>
    %2 = tpu.matmul %0, %1, %cst {dimension_numbers = #tpu.dot_dimension_numbers<[1], [0], [0], [1], [0, 0, 1, 1], [], []>} : vector<256x1024xbf16>, vector<1024x128xbf16>, vector<256x128xf32> -> vector<256x128xf32>
    %3 = arith.truncf %2 : vector<256x128xf32> to vector<256x128xbf16>
    %c0_3 = arith.constant 0 : index
    %c0_4 = arith.constant 0 : index
    %4 = vector.load %arg4[%c0_3, %c0_4] : memref<256x128xbf16, #tpu.memory_space<vmem>>, vector<256x128xbf16>
    tpu.vector_store %arg4[%c0_3, %c0_4], %3 {strides = array<i32>} : memref<256x128xbf16, #tpu.memory_space<vmem>>, vector<256x128xbf16>,
    %cst_5 = arith.constant dense<0.000000e+00> : vector<128xf32>
    %5 = vector.multi_reduction <add>, %2, %cst_5 [0] : vector<256x128xf32> to vector<128xf32>
    %6 = vector.shape_cast %5 : vector<128xf32> to vector<1x128xf32>
    %c0_6 = arith.constant 0 : index
    %c0_7 = arith.constant 0 : index
    %7 = vector.load %arg5[%c0_6, %c0_7] : memref<8x128xf32, #tpu.memory_space<vmem>>, vector<1x128xf32>
    tpu.vector_store %arg5[%c0_6, %c0_7], %6 {strides = array<i32>} : memref<8x128xf32, #tpu.memory_space<vmem>>, vector<1x128xf32>,
    %8 = arith.mulf %2, %2 : vector<256x128xf32>
    %cst_8 = arith.constant dense<0.000000e+00> : vector<128xf32>
    %9 = vector.multi_reduction <add>, %8, %cst_8 [0] : vector<256x128xf32> to vector<128xf32>
    %10 = vector.shape_cast %9 : vector<128xf32> to vector<1x128xf32>
    %c0_9 = arith.constant 0 : index
    %c0_10 = arith.constant 0 : index
    %11 = vector.load %arg6[%c0_9, %c0_10] : memref<8x128xf32, #tpu.memory_space<vmem>>, vector<1x128xf32>
    tpu.vector_store %arg6[%c0_9, %c0_10], %10 {strides = array<i32>} : memref<8x128xf32, #tpu.memory_space<vmem>>, vector<1x128xf32>,
    return
  }
  func.func @transform_0(%arg0: i32, %arg1: i32) -> (i32, i32) {
    %c0_i32 = arith.constant 0 : i32
    %c0_i32_0 = arith.constant 0 : i32
    return %arg0, %c0_i32 : i32, i32
  }
  func.func @transform_1(%arg0: i32, %arg1: i32) -> (i32, i32) {
    %c0_i32 = arith.constant 0 : i32
    %c0_i32_0 = arith.constant 0 : i32
    return %c0_i32, %arg1 : i32, i32
  }
  func.func @transform_2(%arg0: i32, %arg1: i32) -> (i32, i32) {
    %c0_i32 = arith.constant 0 : i32
    return %arg0, %arg1 : i32, i32
  }
  func.func @transform_3(%arg0: i32, %arg1: i32) -> (i32, i32) {
    %c0_i32 = arith.constant 0 : i32
    return %arg0, %arg1 : i32, i32
  }
  func.func @transform_4(%arg0: i32, %arg1: i32) -> (i32, i32) {
    %c0_i32 = arith.constant 0 : i32
    return %arg0, %arg1 : i32, i32
  }
}

module attributes {stable_mosaic.version = 11 : i64} {
  func.func @_affine_lrelu_kernel(%arg0: i32, %arg1: memref<256x128xbf16, #tpu.memory_space<vmem>>, %arg2: memref<1x128xf32, #tpu.memory_space<vmem>>, %arg3: memref<1x128xf32, #tpu.memory_space<vmem>>, %arg4: memref<256x128xbf16, #tpu.memory_space<vmem>>) attributes {dimension_semantics = [#tpu.dimension_semantics<parallel>], iteration_bounds = array<i64: 2>, scalar_prefetch = 0 : i64, scratch_operands = 0 : i64, tpu.core_type = #tpu.core_type<tc>, window_params = [{transform_indices = @transform_0, window_bounds = array<i64: 256, 128>}, {pipeline_mode = #tpu.pipeline_mode<synchronous>, transform_indices = @transform_1, window_bounds = array<i64: 1, 128>}, {pipeline_mode = #tpu.pipeline_mode<synchronous>, transform_indices = @transform_2, window_bounds = array<i64: 1, 128>}, {transform_indices = @transform_3, window_bounds = array<i64: 256, 128>}]} {
    %c0 = arith.constant 0 : index
    %c0_0 = arith.constant 0 : index
    %0 = vector.load %arg1[%c0, %c0_0] : memref<256x128xbf16, #tpu.memory_space<vmem>>, vector<256x128xbf16>
    %1 = arith.extf %0 : vector<256x128xbf16> to vector<256x128xf32>
    %c0_1 = arith.constant 0 : index
    %c0_2 = arith.constant 0 : index
    %2 = vector.load %arg2[%c0_1, %c0_2] : memref<1x128xf32, #tpu.memory_space<vmem>>, vector<1x128xf32>
    %3 = vector.broadcast %2 : vector<1x128xf32> to vector<256x128xf32>
    %4 = arith.mulf %1, %3 : vector<256x128xf32>
    %c0_3 = arith.constant 0 : index
    %c0_4 = arith.constant 0 : index
    %5 = vector.load %arg3[%c0_3, %c0_4] : memref<1x128xf32, #tpu.memory_space<vmem>>, vector<1x128xf32>
    %6 = vector.broadcast %5 : vector<1x128xf32> to vector<256x128xf32>
    %7 = arith.addf %4, %6 : vector<256x128xf32>
    %cst = arith.constant 0.000000e+00 : f32
    %8 = vector.broadcast %cst : f32 to vector<256x128xf32>
    %9 = arith.cmpf oge, %7, %8 : vector<256x128xf32>
    %cst_5 = arith.constant 2.000000e-01 : f32
    %10 = vector.broadcast %cst_5 : f32 to vector<256x128xf32>
    %11 = arith.mulf %10, %7 : vector<256x128xf32>
    %12 = arith.select %9, %7, %11 : vector<256x128xi1>, vector<256x128xf32>
    %13 = arith.truncf %12 : vector<256x128xf32> to vector<256x128xbf16>
    %c0_6 = arith.constant 0 : index
    %c0_7 = arith.constant 0 : index
    %14 = vector.load %arg4[%c0_6, %c0_7] : memref<256x128xbf16, #tpu.memory_space<vmem>>, vector<256x128xbf16>
    tpu.vector_store %arg4[%c0_6, %c0_7], %13 {strides = array<i32>} : memref<256x128xbf16, #tpu.memory_space<vmem>>, vector<256x128xbf16>,
    return
  }
  func.func @transform_0(%arg0: i32) -> (i32, i32) {
    %c0_i32 = arith.constant 0 : i32
    %c0_i32_0 = arith.constant 0 : i32
    return %arg0, %c0_i32 : i32, i32
  }
  func.func @transform_1(%arg0: i32) -> (i32, i32) {
    %c0_i32 = arith.constant 0 : i32
    %c0_i32_0 = arith.constant 0 : i32
    %c0_i32_1 = arith.constant 0 : i32
    return %c0_i32, %c0_i32_0 : i32, i32
  }
  func.func @transform_2(%arg0: i32) -> (i32, i32) {
    %c0_i32 = arith.constant 0 : i32
    %c0_i32_0 = arith.constant 0 : i32
    %c0_i32_1 = arith.constant 0 : i32
    return %c0_i32, %c0_i32_0 : i32, i32
  }
  func.func @transform_3(%arg0: i32) -> (i32, i32) {
    %c0_i32 = arith.constant 0 : i32
    %c0_i32_0 = arith.constant 0 : i32
    return %arg0, %c0_i32 : i32, i32
  }
}

module attributes {stable_mosaic.version = 11 : i64} {
  func.func @_affine_lrelu_kernel(%arg0: i32, %arg1: memref<128x256xbf16, #tpu.memory_space<vmem>>, %arg2: memref<1x256xf32, #tpu.memory_space<vmem>>, %arg3: memref<1x256xf32, #tpu.memory_space<vmem>>, %arg4: memref<128x256xbf16, #tpu.memory_space<vmem>>) attributes {dimension_semantics = [#tpu.dimension_semantics<parallel>], iteration_bounds = array<i64: 1>, scalar_prefetch = 0 : i64, scratch_operands = 0 : i64, tpu.core_type = #tpu.core_type<tc>, window_params = [{transform_indices = @transform_0, window_bounds = array<i64: 128, 256>}, {pipeline_mode = #tpu.pipeline_mode<synchronous>, transform_indices = @transform_1, window_bounds = array<i64: 1, 256>}, {pipeline_mode = #tpu.pipeline_mode<synchronous>, transform_indices = @transform_2, window_bounds = array<i64: 1, 256>}, {transform_indices = @transform_3, window_bounds = array<i64: 128, 256>}]} {
    %c0 = arith.constant 0 : index
    %c0_0 = arith.constant 0 : index
    %0 = vector.load %arg1[%c0, %c0_0] : memref<128x256xbf16, #tpu.memory_space<vmem>>, vector<128x256xbf16>
    %1 = arith.extf %0 : vector<128x256xbf16> to vector<128x256xf32>
    %c0_1 = arith.constant 0 : index
    %c0_2 = arith.constant 0 : index
    %2 = vector.load %arg2[%c0_1, %c0_2] : memref<1x256xf32, #tpu.memory_space<vmem>>, vector<1x256xf32>
    %3 = vector.broadcast %2 : vector<1x256xf32> to vector<128x256xf32>
    %4 = arith.mulf %1, %3 : vector<128x256xf32>
    %c0_3 = arith.constant 0 : index
    %c0_4 = arith.constant 0 : index
    %5 = vector.load %arg3[%c0_3, %c0_4] : memref<1x256xf32, #tpu.memory_space<vmem>>, vector<1x256xf32>
    %6 = vector.broadcast %5 : vector<1x256xf32> to vector<128x256xf32>
    %7 = arith.addf %4, %6 : vector<128x256xf32>
    %cst = arith.constant 0.000000e+00 : f32
    %8 = vector.broadcast %cst : f32 to vector<128x256xf32>
    %9 = arith.cmpf oge, %7, %8 : vector<128x256xf32>
    %cst_5 = arith.constant 2.000000e-01 : f32
    %10 = vector.broadcast %cst_5 : f32 to vector<128x256xf32>
    %11 = arith.mulf %10, %7 : vector<128x256xf32>
    %12 = arith.select %9, %7, %11 : vector<128x256xi1>, vector<128x256xf32>
    %13 = arith.truncf %12 : vector<128x256xf32> to vector<128x256xbf16>
    %c0_6 = arith.constant 0 : index
    %c0_7 = arith.constant 0 : index
    %14 = vector.load %arg4[%c0_6, %c0_7] : memref<128x256xbf16, #tpu.memory_space<vmem>>, vector<128x256xbf16>
    tpu.vector_store %arg4[%c0_6, %c0_7], %13 {strides = array<i32>} : memref<128x256xbf16, #tpu.memory_space<vmem>>, vector<128x256xbf16>,
    return
  }
  func.func @transform_0(%arg0: i32) -> (i32, i32) {
    %c0_i32 = arith.constant 0 : i32
    %c0_i32_0 = arith.constant 0 : i32
    return %arg0, %c0_i32 : i32, i32
  }
  func.func @transform_1(%arg0: i32) -> (i32, i32) {
    %c0_i32 = arith.constant 0 : i32
    %c0_i32_0 = arith.constant 0 : i32
    %c0_i32_1 = arith.constant 0 : i32
    return %c0_i32, %c0_i32_0 : i32, i32
  }
  func.func @transform_2(%arg0: i32) -> (i32, i32) {
    %c0_i32 = arith.constant 0 : i32
    %c0_i32_0 = arith.constant 0 : i32
    %c0_i32_1 = arith.constant 0 : i32
    return %c0_i32, %c0_i32_0 : i32, i32
  }
  func.func @transform_3(%arg0: i32) -> (i32, i32) {
    %c0_i32 = arith.constant 0 : i32
    %c0_i32_0 = arith.constant 0 : i32
    return %arg0, %c0_i32 : i32, i32
  }
}

module attributes {stable_mosaic.version = 11 : i64} {
  func.func @_gemm_bnstats_kernel(%arg0: i32, %arg1: i32, %arg2: i32, %arg3: memref<128x1024xbf16, #tpu.memory_space<vmem>>, %arg4: memref<1024x128xbf16, #tpu.memory_space<vmem>>, %arg5: memref<128x128xbf16, #tpu.memory_space<vmem>>, %arg6: memref<8x128xf32, #tpu.memory_space<vmem>>, %arg7: memref<8x128xf32, #tpu.memory_space<vmem>>, %arg8: memref<128x128xf32, #tpu.memory_space<vmem>>) attributes {dimension_semantics = [#tpu.dimension_semantics<parallel>, #tpu.dimension_semantics<parallel>, #tpu.dimension_semantics<arbitrary>], iteration_bounds = array<i64: 1, 2, 2>, scalar_prefetch = 0 : i64, scratch_operands = 1 : i64, tpu.core_type = #tpu.core_type<tc>, window_params = [{transform_indices = @transform_0, window_bounds = array<i64: 128, 1024>}, {transform_indices = @transform_1, window_bounds = array<i64: 1024, 128>}, {transform_indices = @transform_2, window_bounds = array<i64: 128, 128>}, {transform_indices = @transform_3, window_bounds = array<i64: 8, 128>}, {transform_indices = @transform_4, window_bounds = array<i64: 8, 128>}]} {
    %c0_i32 = arith.constant 0 : i32
    %0 = arith.cmpi eq, %arg2, %c0_i32 : i32
    %1 = arith.extui %0 : i1 to i32
    %c0_i32_0 = arith.constant 0 : i32
    %2 = arith.cmpi ne, %1, %c0_i32_0 : i32
    scf.if %2 {
      %cst_9 = arith.constant 0.000000e+00 : f32
      %12 = vector.broadcast %cst_9 : f32 to vector<128x128xf32>
      %c0_10 = arith.constant 0 : index
      %c0_11 = arith.constant 0 : index
      %13 = vector.load %arg8[%c0_10, %c0_11] : memref<128x128xf32, #tpu.memory_space<vmem>>, vector<128x128xf32>
      tpu.vector_store %arg8[%c0_10, %c0_11], %12 {strides = array<i32>} : memref<128x128xf32, #tpu.memory_space<vmem>>, vector<128x128xf32>,
    } else {
    }
    %c0 = arith.constant 0 : index
    %c0_1 = arith.constant 0 : index
    %3 = vector.load %arg8[%c0, %c0_1] : memref<128x128xf32, #tpu.memory_space<vmem>>, vector<128x128xf32>
    %c0_2 = arith.constant 0 : index
    %c0_3 = arith.constant 0 : index
    %4 = vector.load %arg3[%c0_2, %c0_3] : memref<128x1024xbf16, #tpu.memory_space<vmem>>, vector<128x1024xbf16>
    %c0_4 = arith.constant 0 : index
    %c0_5 = arith.constant 0 : index
    %5 = vector.load %arg4[%c0_4, %c0_5] : memref<1024x128xbf16, #tpu.memory_space<vmem>>, vector<1024x128xbf16>
    %cst = arith.constant dense<0.000000e+00> : vector<128x128xf32>
    %6 = tpu.matmul %4, %5, %cst {dimension_numbers = #tpu.dot_dimension_numbers<[1], [0], [0], [1], [0, 0, 1, 1], [], []>} : vector<128x1024xbf16>, vector<1024x128xbf16>, vector<128x128xf32> -> vector<128x128xf32>
    %7 = arith.addf %3, %6 : vector<128x128xf32>
    %c0_6 = arith.constant 0 : index
    %c0_7 = arith.constant 0 : index
    %8 = vector.load %arg8[%c0_6, %c0_7] : memref<128x128xf32, #tpu.memory_space<vmem>>, vector<128x128xf32>
    tpu.vector_store %arg8[%c0_6, %c0_7], %7 {strides = array<i32>} : memref<128x128xf32, #tpu.memory_space<vmem>>, vector<128x128xf32>,
    %c1_i32 = arith.constant 1 : i32
    %9 = arith.cmpi eq, %arg2, %c1_i32 : i32
    %10 = arith.extui %9 : i1 to i32
    %c0_i32_8 = arith.constant 0 : i32
    %11 = arith.cmpi ne, %10, %c0_i32_8 : i32
    scf.if %11 {
      %c0_9 = arith.constant 0 : index
      %c0_10 = arith.constant 0 : index
      %12 = vector.load %arg8[%c0_9, %c0_10] : memref<128x128xf32, #tpu.memory_space<vmem>>, vector<128x128xf32>
      %13 = arith.truncf %12 : vector<128x128xf32> to vector<128x128xbf16>
      %c0_11 = arith.constant 0 : index
      %c0_12 = arith.constant 0 : index
      %14 = vector.load %arg5[%c0_11, %c0_12] : memref<128x128xbf16, #tpu.memory_space<vmem>>, vector<128x128xbf16>
      tpu.vector_store %arg5[%c0_11, %c0_12], %13 {strides = array<i32>} : memref<128x128xbf16, #tpu.memory_space<vmem>>, vector<128x128xbf16>,
      %cst_13 = arith.constant dense<0.000000e+00> : vector<128xf32>
      %15 = vector.multi_reduction <add>, %12, %cst_13 [0] : vector<128x128xf32> to vector<128xf32>
      %16 = vector.shape_cast %15 : vector<128xf32> to vector<1x128xf32>
      %c0_14 = arith.constant 0 : index
      %c0_15 = arith.constant 0 : index
      %17 = vector.load %arg6[%c0_14, %c0_15] : memref<8x128xf32, #tpu.memory_space<vmem>>, vector<1x128xf32>
      tpu.vector_store %arg6[%c0_14, %c0_15], %16 {strides = array<i32>} : memref<8x128xf32, #tpu.memory_space<vmem>>, vector<1x128xf32>,
      %18 = arith.mulf %12, %12 : vector<128x128xf32>
      %cst_16 = arith.constant dense<0.000000e+00> : vector<128xf32>
      %19 = vector.multi_reduction <add>, %18, %cst_16 [0] : vector<128x128xf32> to vector<128xf32>
      %20 = vector.shape_cast %19 : vector<128xf32> to vector<1x128xf32>
      %c0_17 = arith.constant 0 : index
      %c0_18 = arith.constant 0 : index
      %21 = vector.load %arg7[%c0_17, %c0_18] : memref<8x128xf32, #tpu.memory_space<vmem>>, vector<1x128xf32>
      tpu.vector_store %arg7[%c0_17, %c0_18], %20 {strides = array<i32>} : memref<8x128xf32, #tpu.memory_space<vmem>>, vector<1x128xf32>,
    } else {
    }
    return
  }
  func.func @transform_0(%arg0: i32, %arg1: i32, %arg2: i32) -> (i32, i32) {
    %c0_i32 = arith.constant 0 : i32
    return %arg0, %arg2 : i32, i32
  }
  func.func @transform_1(%arg0: i32, %arg1: i32, %arg2: i32) -> (i32, i32) {
    %c0_i32 = arith.constant 0 : i32
    return %arg2, %arg1 : i32, i32
  }
  func.func @transform_2(%arg0: i32, %arg1: i32, %arg2: i32) -> (i32, i32) {
    %c0_i32 = arith.constant 0 : i32
    return %arg0, %arg1 : i32, i32
  }
  func.func @transform_3(%arg0: i32, %arg1: i32, %arg2: i32) -> (i32, i32) {
    %c0_i32 = arith.constant 0 : i32
    return %arg0, %arg1 : i32, i32
  }
  func.func @transform_4(%arg0: i32, %arg1: i32, %arg2: i32) -> (i32, i32) {
    %c0_i32 = arith.constant 0 : i32
    return %arg0, %arg1 : i32, i32
  }
}

module attributes {stable_mosaic.version = 11 : i64} {
  func.func @_gemm_bnstats_kernel(%arg0: i32, %arg1: i32, %arg2: i32, %arg3: memref<32x1024xbf16, #tpu.memory_space<vmem>>, %arg4: memref<1024x256xbf16, #tpu.memory_space<vmem>>, %arg5: memref<32x256xbf16, #tpu.memory_space<vmem>>, %arg6: memref<8x256xf32, #tpu.memory_space<vmem>>, %arg7: memref<8x256xf32, #tpu.memory_space<vmem>>, %arg8: memref<32x256xf32, #tpu.memory_space<vmem>>) attributes {dimension_semantics = [#tpu.dimension_semantics<parallel>, #tpu.dimension_semantics<parallel>, #tpu.dimension_semantics<arbitrary>], iteration_bounds = array<i64: 1, 2, 4>, scalar_prefetch = 0 : i64, scratch_operands = 1 : i64, tpu.core_type = #tpu.core_type<tc>, window_params = [{transform_indices = @transform_0, window_bounds = array<i64: 32, 1024>}, {transform_indices = @transform_1, window_bounds = array<i64: 1024, 256>}, {transform_indices = @transform_2, window_bounds = array<i64: 32, 256>}, {transform_indices = @transform_3, window_bounds = array<i64: 8, 256>}, {transform_indices = @transform_4, window_bounds = array<i64: 8, 256>}]} {
    %c0_i32 = arith.constant 0 : i32
    %0 = arith.cmpi eq, %arg2, %c0_i32 : i32
    %1 = arith.extui %0 : i1 to i32
    %c0_i32_0 = arith.constant 0 : i32
    %2 = arith.cmpi ne, %1, %c0_i32_0 : i32
    scf.if %2 {
      %cst_9 = arith.constant 0.000000e+00 : f32
      %12 = vector.broadcast %cst_9 : f32 to vector<32x256xf32>
      %c0_10 = arith.constant 0 : index
      %c0_11 = arith.constant 0 : index
      %13 = vector.load %arg8[%c0_10, %c0_11] : memref<32x256xf32, #tpu.memory_space<vmem>>, vector<32x256xf32>
      tpu.vector_store %arg8[%c0_10, %c0_11], %12 {strides = array<i32>} : memref<32x256xf32, #tpu.memory_space<vmem>>, vector<32x256xf32>,
    } else {
    }
    %c0 = arith.constant 0 : index
    %c0_1 = arith.constant 0 : index
    %3 = vector.load %arg8[%c0, %c0_1] : memref<32x256xf32, #tpu.memory_space<vmem>>, vector<32x256xf32>
    %c0_2 = arith.constant 0 : index
    %c0_3 = arith.constant 0 : index
    %4 = vector.load %arg3[%c0_2, %c0_3] : memref<32x1024xbf16, #tpu.memory_space<vmem>>, vector<32x1024xbf16>
    %c0_4 = arith.constant 0 : index
    %c0_5 = arith.constant 0 : index
    %5 = vector.load %arg4[%c0_4, %c0_5] : memref<1024x256xbf16, #tpu.memory_space<vmem>>, vector<1024x256xbf16>
    %cst = arith.constant dense<0.000000e+00> : vector<32x256xf32>
    %6 = tpu.matmul %4, %5, %cst {dimension_numbers = #tpu.dot_dimension_numbers<[1], [0], [0], [1], [0, 0, 1, 1], [], []>} : vector<32x1024xbf16>, vector<1024x256xbf16>, vector<32x256xf32> -> vector<32x256xf32>
    %7 = arith.addf %3, %6 : vector<32x256xf32>
    %c0_6 = arith.constant 0 : index
    %c0_7 = arith.constant 0 : index
    %8 = vector.load %arg8[%c0_6, %c0_7] : memref<32x256xf32, #tpu.memory_space<vmem>>, vector<32x256xf32>
    tpu.vector_store %arg8[%c0_6, %c0_7], %7 {strides = array<i32>} : memref<32x256xf32, #tpu.memory_space<vmem>>, vector<32x256xf32>,
    %c3_i32 = arith.constant 3 : i32
    %9 = arith.cmpi eq, %arg2, %c3_i32 : i32
    %10 = arith.extui %9 : i1 to i32
    %c0_i32_8 = arith.constant 0 : i32
    %11 = arith.cmpi ne, %10, %c0_i32_8 : i32
    scf.if %11 {
      %c0_9 = arith.constant 0 : index
      %c0_10 = arith.constant 0 : index
      %12 = vector.load %arg8[%c0_9, %c0_10] : memref<32x256xf32, #tpu.memory_space<vmem>>, vector<32x256xf32>
      %13 = arith.truncf %12 : vector<32x256xf32> to vector<32x256xbf16>
      %c0_11 = arith.constant 0 : index
      %c0_12 = arith.constant 0 : index
      %14 = vector.load %arg5[%c0_11, %c0_12] : memref<32x256xbf16, #tpu.memory_space<vmem>>, vector<32x256xbf16>
      tpu.vector_store %arg5[%c0_11, %c0_12], %13 {strides = array<i32>} : memref<32x256xbf16, #tpu.memory_space<vmem>>, vector<32x256xbf16>,
      %cst_13 = arith.constant dense<0.000000e+00> : vector<256xf32>
      %15 = vector.multi_reduction <add>, %12, %cst_13 [0] : vector<32x256xf32> to vector<256xf32>
      %16 = vector.shape_cast %15 : vector<256xf32> to vector<1x256xf32>
      %c0_14 = arith.constant 0 : index
      %c0_15 = arith.constant 0 : index
      %17 = vector.load %arg6[%c0_14, %c0_15] : memref<8x256xf32, #tpu.memory_space<vmem>>, vector<1x256xf32>
      tpu.vector_store %arg6[%c0_14, %c0_15], %16 {strides = array<i32>} : memref<8x256xf32, #tpu.memory_space<vmem>>, vector<1x256xf32>,
      %18 = arith.mulf %12, %12 : vector<32x256xf32>
      %cst_16 = arith.constant dense<0.000000e+00> : vector<256xf32>
      %19 = vector.multi_reduction <add>, %18, %cst_16 [0] : vector<32x256xf32> to vector<256xf32>
      %20 = vector.shape_cast %19 : vector<256xf32> to vector<1x256xf32>
      %c0_17 = arith.constant 0 : index
      %c0_18 = arith.constant 0 : index
      %21 = vector.load %arg7[%c0_17, %c0_18] : memref<8x256xf32, #tpu.memory_space<vmem>>, vector<1x256xf32>
      tpu.vector_store %arg7[%c0_17, %c0_18], %20 {strides = array<i32>} : memref<8x256xf32, #tpu.memory_space<vmem>>, vector<1x256xf32>,
    } else {
    }
    return
  }
  func.func @transform_0(%arg0: i32, %arg1: i32, %arg2: i32) -> (i32, i32) {
    %c0_i32 = arith.constant 0 : i32
    return %arg0, %arg2 : i32, i32
  }
  func.func @transform_1(%arg0: i32, %arg1: i32, %arg2: i32) -> (i32, i32) {
    %c0_i32 = arith.constant 0 : i32
    return %arg2, %arg1 : i32, i32
  }
  func.func @transform_2(%arg0: i32, %arg1: i32, %arg2: i32) -> (i32, i32) {
    %c0_i32 = arith.constant 0 : i32
    return %arg0, %arg1 : i32, i32
  }
  func.func @transform_3(%arg0: i32, %arg1: i32, %arg2: i32) -> (i32, i32) {
    %c0_i32 = arith.constant 0 : i32
    return %arg0, %arg1 : i32, i32
  }
  func.func @transform_4(%arg0: i32, %arg1: i32, %arg2: i32) -> (i32, i32) {
    %c0_i32 = arith.constant 0 : i32
    return %arg0, %arg1 : i32, i32
  }
}

module attributes {stable_mosaic.version = 11 : i64} {
  func.func @_affine_lrelu_rowdot_kernel(%arg0: i32, %arg1: memref<32x512xbf16, #tpu.memory_space<vmem>>, %arg2: memref<1x512xf32, #tpu.memory_space<vmem>>, %arg3: memref<1x512xf32, #tpu.memory_space<vmem>>, %arg4: memref<32x512xf32, #tpu.memory_space<vmem>>, %arg5: memref<32x1xf32, #tpu.memory_space<vmem>>) attributes {dimension_semantics = [#tpu.dimension_semantics<parallel>], iteration_bounds = array<i64: 1>, scalar_prefetch = 0 : i64, scratch_operands = 0 : i64, tpu.core_type = #tpu.core_type<tc>, window_params = [{transform_indices = @transform_0, window_bounds = array<i64: 32, 512>}, {pipeline_mode = #tpu.pipeline_mode<synchronous>, transform_indices = @transform_1, window_bounds = array<i64: 1, 512>}, {pipeline_mode = #tpu.pipeline_mode<synchronous>, transform_indices = @transform_2, window_bounds = array<i64: 1, 512>}, {transform_indices = @transform_3, window_bounds = array<i64: 32, 512>}, {transform_indices = @transform_4, window_bounds = array<i64: 32, 1>}]} {
    %c0 = arith.constant 0 : index
    %c0_0 = arith.constant 0 : index
    %0 = vector.load %arg1[%c0, %c0_0] : memref<32x512xbf16, #tpu.memory_space<vmem>>, vector<32x512xbf16>
    %1 = arith.extf %0 : vector<32x512xbf16> to vector<32x512xf32>
    %c0_1 = arith.constant 0 : index
    %c0_2 = arith.constant 0 : index
    %2 = vector.load %arg2[%c0_1, %c0_2] : memref<1x512xf32, #tpu.memory_space<vmem>>, vector<1x512xf32>
    %3 = vector.broadcast %2 : vector<1x512xf32> to vector<32x512xf32>
    %4 = arith.mulf %1, %3 : vector<32x512xf32>
    %c0_3 = arith.constant 0 : index
    %c0_4 = arith.constant 0 : index
    %5 = vector.load %arg3[%c0_3, %c0_4] : memref<1x512xf32, #tpu.memory_space<vmem>>, vector<1x512xf32>
    %6 = vector.broadcast %5 : vector<1x512xf32> to vector<32x512xf32>
    %7 = arith.addf %4, %6 : vector<32x512xf32>
    %cst = arith.constant 0.000000e+00 : f32
    %8 = vector.broadcast %cst : f32 to vector<32x512xf32>
    %9 = arith.cmpf oge, %7, %8 : vector<32x512xf32>
    %cst_5 = arith.constant 2.000000e-01 : f32
    %10 = vector.broadcast %cst_5 : f32 to vector<32x512xf32>
    %11 = arith.mulf %10, %7 : vector<32x512xf32>
    %12 = arith.select %9, %7, %11 : vector<32x512xi1>, vector<32x512xf32>
    %c0_6 = arith.constant 0 : index
    %c0_7 = arith.constant 0 : index
    %13 = vector.load %arg4[%c0_6, %c0_7] : memref<32x512xf32, #tpu.memory_space<vmem>>, vector<32x512xf32>
    %14 = arith.mulf %12, %13 : vector<32x512xf32>
    %cst_8 = arith.constant dense<0.000000e+00> : vector<32xf32>
    %15 = vector.multi_reduction <add>, %14, %cst_8 [1] : vector<32x512xf32> to vector<32xf32>
    %16 = vector.shape_cast %15 : vector<32xf32> to vector<32x1xf32>
    %c0_9 = arith.constant 0 : index
    %c0_10 = arith.constant 0 : index
    %17 = vector.load %arg5[%c0_9, %c0_10] : memref<32x1xf32, #tpu.memory_space<vmem>>, vector<32x1xf32>
    tpu.vector_store %arg5[%c0_9, %c0_10], %16 {strides = array<i32>} : memref<32x1xf32, #tpu.memory_space<vmem>>, vector<32x1xf32>,
    return
  }
  func.func @transform_0(%arg0: i32) -> (i32, i32) {
    %c0_i32 = arith.constant 0 : i32
    %c0_i32_0 = arith.constant 0 : i32
    return %arg0, %c0_i32 : i32, i32
  }
  func.func @transform_1(%arg0: i32) -> (i32, i32) {
    %c0_i32 = arith.constant 0 : i32
    %c0_i32_0 = arith.constant 0 : i32
    %c0_i32_1 = arith.constant 0 : i32
    return %c0_i32, %c0_i32_0 : i32, i32
  }
  func.func @transform_2(%arg0: i32) -> (i32, i32) {
    %c0_i32 = arith.constant 0 : i32
    %c0_i32_0 = arith.constant 0 : i32
    %c0_i32_1 = arith.constant 0 : i32
    return %c0_i32, %c0_i32_0 : i32, i32
  }
  func.func @transform_3(%arg0: i32) -> (i32, i32) {
    %c0_i32 = arith.constant 0 : i32
    %c0_i32_0 = arith.constant 0 : i32
    return %arg0, %c0_i32 : i32, i32
  }
  func.func @transform_4(%arg0: i32) -> (i32, i32) {
    %c0_i32 = arith.constant 0 : i32
    %c0_i32_0 = arith.constant 0 : i32
    return %arg0, %c0_i32 : i32, i32
  }
}

</mosaic_0001>

<llo_original>
// kernel: discriminator_forward.7
$region0: #{discriminator_forward.7}
  #allocation0 [shape = 'u32[]', space=smem, size = 0x4, offset = 0x4, fixed_abs, tag = 'smem constant byte address 0x4 - core index']
  #allocation1 [shape = 'u32[72,128]{1,0:T(1,128)}', space=vmem, size = 0x9000, scoped, tag = 'internal scratch']
  %s0 = inlined_call_operand.vmem [shape: bf16[2048,128], index: 0, kind: input, shape index: {}]
  %s1 = inlined_call_operand.vmem [shape: bf16[128,128], index: 1, kind: input, shape index: {}]
  %s2 = inlined_call_operand.vmem [shape: bf16[2048,128], index: 2, kind: output, shape index: {}]
  %s3 = sld [smem:[#allocation0]]
  $region41: #{discriminator_forward.7} parent=0
    _
  %s5 = ssub.s32 1, %s3
  %s6 = scalar_select 0, %s5, %s3
  loop: start=0, step=1, limit=6
  $region2: #{discriminator_forward.7} parent=0 // loop_pre_header
    _
  $region3: #{discriminator_forward.7} parent=0 // loop_header
    %s8 = sphi 0, %s12
    %p9 = scmp.ge.s32.totalorder %s8, 6
    %s15 = sphi 0, %s27
    %s16 = sphi 0, %s23
    %s17 = sphi 0, %s15
    %s18 = sphi 0, %s16
    %s19 = sphi 0, %s17
    %s20 = sphi 0, %s18
    %s30 = sphi 0, %s32
    %s33 = sphi 0, %s30
    %s34 = sphi 0, %s33
    %s50 = sphi 0, %s34
    %s56 = sphi 0, %s58
    %s59 = sphi 0, %s56
    %s60 = sphi 0, %s59
    %s76 = sphi 0, %s60
    %s84 = sphi 0, %s86
    %s87 = sphi 0, %s84
    %s88 = sphi 0, %s87
    %s104 = sphi 0, %s88
  $region4: #{discriminator_forward.7} parent=0 // loop_header_branch
    %11 = sbr.rel (%p9) target = $region8
  $region5: #{discriminator_forward.7} parent=0 // loop_body
    %s13 = ssub.s32 %s8, 1
    %s14 = ssub.s32 %s8, 2
    %s21 = sadd.s32 1, %s16
    %p22 = scmp.ge.s32.totalorder %s21, 1
    %s23 = scalar_select %p22, 0, %s21
    %s24 = sadd.s32 1, %s15
    %s25 = scalar_select %p22, %s24, %s15
    %p26 = scmp.ge.s32.totalorder %s25, 4
    %s27 = scalar_select %p26, 0, %s25
    %s28 = ssub.s32 %s15, %s27
    %p29 = scmp.eq.s32.totalorder %s28, 0
    %s31 = sadd.s32 %s30, 1
    %s32 = scalar_select %p29, %s30, %s31
    %p35 = pneg %p29
    %p36 = scmp.eq.s32.totalorder %s8, 3
    %p37 = por %p35, %p36
    %p38 = scmp.ne.s32.totalorder %s30, %s33
    %p39 = scmp.eq.s32.totalorder %s8, 0
    %p40 = por %p38, %p39
    %p41 = scmp.ne.s32.totalorder %s30, %s33
    %p42 = scmp.eq.s32.totalorder %s13, 3
    %p43 = por %p41, %p42
    %p44 = scmp.ne.s32.totalorder %s33, %s34
    %p45 = scmp.eq.s32.totalorder %s13, 0
    %p46 = por %p44, %p45
    %p47 = scmp.ne.s32.totalorder %s33, %s34
    %p48 = scmp.eq.s32.totalorder %s14, 3
    %p49 = por %p47, %p48
    %p51 = scmp.ne.s32.totalorder %s34, %s50
    %p52 = scmp.eq.s32.totalorder %s14, 0
    %p53 = por %p51, %p52
    %s54 = ssub.s32 %s16, %s23
    %p55 = scmp.eq.s32.totalorder %s54, 0
    %s57 = sadd.s32 %s56, 1
    %s58 = scalar_select %p55, %s56, %s57
    %p61 = pneg %p55
    %p62 = scmp.eq.s32.totalorder %s8, 3
    %p63 = por %p61, %p62
    %p64 = scmp.ne.s32.totalorder %s56, %s59
    %p65 = scmp.eq.s32.totalorder %s8, 0
    %p66 = por %p64, %p65
    %p67 = scmp.ne.s32.totalorder %s56, %s59
    %p68 = scmp.eq.s32.totalorder %s13, 3
    %p69 = por %p67, %p68
    %p70 = scmp.ne.s32.totalorder %s59, %s60
    %p71 = scmp.eq.s32.totalorder %s13, 0
    %p72 = por %p70, %p71
    %p73 = scmp.ne.s32.totalorder %s59, %s60
    %p74 = scmp.eq.s32.totalorder %s14, 3
    %p75 = por %p73, %p74
    %p77 = scmp.ne.s32.totalorder %s60, %s76
    %p78 = scmp.eq.s32.totalorder %s14, 0
    %p79 = por %p77, %p78
    %s80 = ssub.s32 %s15, %s27
    %s81 = ssub.s32 %s16, %s23
    %s82 = sor.u32 %s80, %s81
    %p83 = scmp.eq.s32.totalorder %s82, 0
    %s85 = sadd.s32 %s84, 1
    %s86 = scalar_select %p83, %s84, %s85
    %p89 = pneg %p83
    %p90 = scmp.eq.s32.totalorder %s8, 3
    %p91 = por %p89, %p90
    %p92 = scmp.ne.s32.totalorder %s84, %s87
    %p93 = scmp.eq.s32.totalorder %s8, 0
    %p94 = por %p92, %p93
    %p95 = scmp.ne.s32.totalorder %s84, %s87
    %p96 = scmp.eq.s32.totalorder %s13, 3
    %p97 = por %p95, %p96
    %p98 = scmp.ne.s32.totalorder %s87, %s88
    %p99 = scmp.eq.s32.totalorder %s13, 0
    %p100 = por %p98, %p99
    %p101 = scmp.ne.s32.totalorder %s87, %s88
    %p102 = scmp.eq.s32.totalorder %s14, 3
    %p103 = por %p101, %p102
    %p105 = scmp.ne.s32.totalorder %s88, %s104
    %p106 = scmp.eq.s32.totalorder %s14, 0
    %p107 = por %p105, %p106
    %p108 = scmp.le.s32.totalorder 1, %s8
    %p109 = scmp.lt.s32.totalorder %s8, 5
    %p110 = pnand %p108, %p109
    %p111 = pneg %p110
    // Predicated region
    $region9: #{discriminator_forward.7} parent=5 // pred_check
      _
    $region10: #{discriminator_forward.7} parent=5 // pred_check_branch
      %113 = sbr.rel (%p110) target = $region12
    $region11: #{discriminator_forward.7} parent=5 // pred_region
      %s114 = ssub.s32 %s8, 1
      // Predicated region
      $region13: #{discriminator_forward.7} parent=11 // pred_check
        %p115 = pneg %p72
      $region14: #{discriminator_forward.7} parent=11 // pred_check_branch
        %117 = sbr.rel (%p115) target = $region16
      $region15: #{discriminator_forward.7} parent=11 // pred_region
        %p118 = scmp.lt.s32.totalorder %s18, 0
        %s119 = scalar_select %p118, %s18, 0
        %s120 = smul.addr %s119, 4
        %s121 = scalar_lea.vmem %s1, %s120
      $region16: #{discriminator_forward.7} parent=11 // pred_fallthru
        _
    $region12: #{discriminator_forward.7} parent=5 // pred_fallthru
      _
    %p122 = scmp.lt.s32.totalorder %s8, 4
    // Predicated region
    $region17: #{discriminator_forward.7} parent=5 // pred_check
      %p123 = pneg %p122
    $region18: #{discriminator_forward.7} parent=5 // pred_check_branch
      %125 = sbr.rel (%p123) target = $region20
    $region19: #{discriminator_forward.7} parent=5 // pred_region
      // Predicated region
      $region21: #{discriminator_forward.7} parent=19 // pred_check
        %p126 = pneg %p40
      $region22: #{discriminator_forward.7} parent=19 // pred_check_branch
        %128 = sbr.rel (%p126) target = $region24
      $region23: #{discriminator_forward.7} parent=19 // pred_region
        %s129 = smul.u32 64, %s15
        %p130 = scmp.lt.s32.totalorder %s129, 255
        %s131 = scalar_select %p130, %s129, 255
        %s132 = smul.addr %s131, 4
        %s133 = scalar_lea.vmem %s0, %s132
        %s134 = smul.u32 64, %s15
      $region24: #{discriminator_forward.7} parent=19 // pred_fallthru
        _
    $region20: #{discriminator_forward.7} parent=5 // pred_fallthru
      _
    %p135 = scmp.le.s32.totalorder 1, %s8
    %p136 = scmp.lt.s32.totalorder %s8, 5
    %p137 = pnand %p135, %p136
    %p138 = pneg %p137
    // Predicated region
    $region25: #{discriminator_forward.7} parent=5 // pred_check
      _
    $region26: #{discriminator_forward.7} parent=5 // pred_check_branch
      %140 = sbr.rel (%p137) target = $region28
    $region27: #{discriminator_forward.7} parent=5 // pred_region
      %s141 = ssub.s32 %s8, 1
      %s142 = smul.u32 64, %s17
      %p143 = scmp.lt.s32.totalorder %s142, 255
      %s144 = scalar_select %p143, %s142, 255
      %s145 = smul.addr %s144, 4
      %s146 = scalar_lea.vmem %s0, %s145
      %p147 = pneg %p46
      %p148 = pneg %p43
      %p149 = scmp.lt.s32.totalorder %s18, 0
      %s150 = scalar_select %p149, %s18, 0
      %s151 = smul.addr %s150, 4
      %s152 = scalar_lea.vmem %s1, %s151
      %p153 = pneg %p72
      %p154 = pneg %p69
      %p155 = pneg %p100
      %p156 = pneg %p97
      %s157 = smul.u32 64, %s17
      %p158 = scmp.lt.s32.totalorder %s157, 255
      %s159 = scalar_select %p158, %s157, 255
      %p160 = scmp.lt.s32.totalorder %s18, 0
      %s161 = scalar_select %p160, %s18, 0
      %s162 = sadd.s32 %s161, %s159
      %s163 = smul.addr %s162, 4
      %s164 = scalar_lea.vmem %s2, %s163
      %s165 = smul.u32 64, %s17
      %p166 = scmp.lt.s32.totalorder %s165, 255
      %s167 = scalar_select %p166, %s165, 255
      %s168 = smul.addr %s167, 4
      %s169 = scalar_lea.vmem %s0, %s168
      %s170 = smul.u32 64, %s17
      %p171 = scmp.lt.s32.totalorder %s18, 0
      %s172 = scalar_select %p171, %s18, 0
      %s173 = smul.addr %s172, 4
      %s174 = scalar_lea.vmem %s1, %s173
      %s175 = smul.u32 64, %s17
      %p176 = scmp.lt.s32.totalorder %s175, 255
      %s177 = scalar_select %p176, %s175, 255
      %p178 = scmp.lt.s32.totalorder %s18, 0
      %s179 = scalar_select %p178, %s18, 0
      %s180 = sadd.s32 %s179, %s177
      %s181 = smul.addr %s180, 4
      %s182 = scalar_lea.vmem %s2, %s181
      %s183 = smul.u32 64, %s17
      %v184 = vld [vmem:[%s169] sm:$0xf]
      %v185 = vld [vmem:[%s169 + $0x4] sm:$0xf]
      %v186 = vld [vmem:[%s169 + $0x8] sm:$0xf]
      %v187 = vld [vmem:[%s169 + $0xc] sm:$0xf]
      %v188 = vld [vmem:[%s169 + $0x10] sm:$0xf]
      %v189 = vld [vmem:[%s169 + $0x14] sm:$0xf]
      %v190 = vld [vmem:[%s169 + $0x18] sm:$0xf]
      %v191 = vld [vmem:[%s169 + $0x1c] sm:$0xf]
      %v192 = vld [vmem:[%s169 + $0x20] sm:$0xf]
      %v193 = vld [vmem:[%s169 + $0x24] sm:$0xf]
      %v194 = vld [vmem:[%s169 + $0x28] sm:$0xf]
      %v195 = vld [vmem:[%s169 + $0x2c] sm:$0xf]
      %v196 = vld [vmem:[%s169 + $0x30] sm:$0xf]
      %v197 = vld [vmem:[%s169 + $0x34] sm:$0xf]
      %v198 = vld [vmem:[%s169 + $0x38] sm:$0xf]
      %v199 = vld [vmem:[%s169 + $0x3c] sm:$0xf]
      %v200 = vld [vmem:[%s169 + $0x40] sm:$0xf]
      %v201 = vld [vmem:[%s169 + $0x44] sm:$0xf]
      %v202 = vld [vmem:[%s169 + $0x48] sm:$0xf]
      %v203 = vld [vmem:[%s169 + $0x4c] sm:$0xf]
      %v204 = vld [vmem:[%s169 + $0x50] sm:$0xf]
      %v205 = vld [vmem:[%s169 + $0x54] sm:$0xf]
      %v206 = vld [vmem:[%s169 + $0x58] sm:$0xf]
      %v207 = vld [vmem:[%s169 + $0x5c] sm:$0xf]
      %v208 = vld [vmem:[%s169 + $0x60] sm:$0xf]
      %v209 = vld [vmem:[%s169 + $0x64] sm:$0xf]
      %v210 = vld [vmem:[%s169 + $0x68] sm:$0xf]
      %v211 = vld [vmem:[%s169 + $0x6c] sm:$0xf]
      %v212 = vld [vmem:[%s169 + $0x70] sm:$0xf]
      %v213 = vld [vmem:[%s169 + $0x74] sm:$0xf]
      %v214 = vld [vmem:[%s169 + $0x78] sm:$0xf]
      %v215 = vld [vmem:[%s169 + $0x7c] sm:$0xf]
      %v216 = vld [vmem:[%s169 + $0x80] sm:$0xf]
      %v217 = vld [vmem:[%s169 + $0x84] sm:$0xf]
      %v218 = vld [vmem:[%s169 + $0x88] sm:$0xf]
      %v219 = vld [vmem:[%s169 + $0x8c] sm:$0xf]
      %v220 = vld [vmem:[%s169 + $0x90] sm:$0xf]
      %v221 = vld [vmem:[%s169 + $0x94] sm:$0xf]
      %v222 = vld [vmem:[%s169 + $0x98] sm:$0xf]
      %v223 = vld [vmem:[%s169 + $0x9c] sm:$0xf]
      %v224 = vld [vmem:[%s169 + $0xa0] sm:$0xf]
      %v225 = vld [vmem:[%s169 + $0xa4] sm:$0xf]
      %v226 = vld [vmem:[%s169 + $0xa8] sm:$0xf]
      %v227 = vld [vmem:[%s169 + $0xac] sm:$0xf]
      %v228 = vld [vmem:[%s169 + $0xb0] sm:$0xf]
      %v229 = vld [vmem:[%s169 + $0xb4] sm:$0xf]
      %v230 = vld [vmem:[%s169 + $0xb8] sm:$0xf]
      %v231 = vld [vmem:[%s169 + $0xbc] sm:$0xf]
      %v232 = vld [vmem:[%s169 + $0xc0] sm:$0xf]
      %v233 = vld [vmem:[%s169 + $0xc4] sm:$0xf]
      %v234 = vld [vmem:[%s169 + $0xc8] sm:$0xf]
      %v235 = vld [vmem:[%s169 + $0xcc] sm:$0xf]
      %v236 = vld [vmem:[%s169 + $0xd0] sm:$0xf]
      %v237 = vld [vmem:[%s169 + $0xd4] sm:$0xf]
      %v238 = vld [vmem:[%s169 + $0xd8] sm:$0xf]
      %v239 = vld [vmem:[%s169 + $0xdc] sm:$0xf]
      %v240 = vld [vmem:[%s169 + $0xe0] sm:$0xf]
      %v241 = vld [vmem:[%s169 + $0xe4] sm:$0xf]
      %v242 = vld [vmem:[%s169 + $0xe8] sm:$0xf]
      %v243 = vld [vmem:[%s169 + $0xec] sm:$0xf]
      %v244 = vld [vmem:[%s169 + $0xf0] sm:$0xf]
      %v245 = vld [vmem:[%s169 + $0xf4] sm:$0xf]
      %v246 = vld [vmem:[%s169 + $0xf8] sm:$0xf]
      %v247 = vld [vmem:[%s169 + $0xfc] sm:$0xf]
      %v248 = vld [vmem:[%s174] sm:$0xf]
      %v249 = vld [vmem:[%s174 + $0x4] sm:$0xf]
      %v250 = vld [vmem:[%s174 + $0x8] sm:$0xf]
      %v251 = vld [vmem:[%s174 + $0xc] sm:$0xf]
      %v252 = vld [vmem:[%s174 + $0x10] sm:$0xf]
      %v253 = vld [vmem:[%s174 + $0x14] sm:$0xf]
      %v254 = vld [vmem:[%s174 + $0x18] sm:$0xf]
      %v255 = vld [vmem:[%s174 + $0x1c] sm:$0xf]
      %v256 = vld [vmem:[%s174 + $0x20] sm:$0xf]
      %v257 = vld [vmem:[%s174 + $0x24] sm:$0xf]
      %v258 = vld [vmem:[%s174 + $0x28] sm:$0xf]
      %v259 = vld [vmem:[%s174 + $0x2c] sm:$0xf]
      %v260 = vld [vmem:[%s174 + $0x30] sm:$0xf]
      %v261 = vld [vmem:[%s174 + $0x34] sm:$0xf]
      %v262 = vld [vmem:[%s174 + $0x38] sm:$0xf]
      %v263 = vld [vmem:[%s174 + $0x3c] sm:$0xf]
      %v328 = vunpack.c.l.b16 %v184
      %v329 = vunpack.c.l.b16 %v185
      %v330 = vunpack.c.l.b16 %v186
      %v331 = vunpack.c.l.b16 %v187
      %v332 = vunpack.c.l.b16 %v188
      %v333 = vunpack.c.l.b16 %v189
      %v334 = vunpack.c.l.b16 %v190
      %v335 = vunpack.c.l.b16 %v191
      %v336 = vunpack.c.l.b16 %v192
      %v337 = vunpack.c.l.b16 %v193
      %v338 = vunpack.c.l.b16 %v194
      %v339 = vunpack.c.l.b16 %v195
      %v340 = vunpack.c.l.b16 %v196
      %v341 = vunpack.c.l.b16 %v197
      %v342 = vunpack.c.l.b16 %v198
      %v343 = vunpack.c.l.b16 %v199
      %v344 = vunpack.c.l.b16 %v200
      %v345 = vunpack.c.l.b16 %v201
      %v346 = vunpack.c.l.b16 %v202
      %v347 = vunpack.c.l.b16 %v203
      %v348 = vunpack.c.l.b16 %v204
      %v349 = vunpack.c.l.b16 %v205
      %v350 = vunpack.c.l.b16 %v206
      %v351 = vunpack.c.l.b16 %v207
      %v352 = vunpack.c.l.b16 %v208
      %v353 = vunpack.c.l.b16 %v209
      %v354 = vunpack.c.l.b16 %v210
      %v355 = vunpack.c.l.b16 %v211
      %v356 = vunpack.c.l.b16 %v212
      %v357 = vunpack.c.l.b16 %v213
      %v358 = vunpack.c.l.b16 %v214
      %v359 = vunpack.c.l.b16 %v215
      %v360 = vunpack.c.l.b16 %v216
      %v361 = vunpack.c.l.b16 %v217
      %v362 = vunpack.c.l.b16 %v218
      %v363 = vunpack.c.l.b16 %v219
      %v364 = vunpack.c.l.b16 %v220
      %v365 = vunpack.c.l.b16 %v221
      %v366 = vunpack.c.l.b16 %v222
      %v367 = vunpack.c.l.b16 %v223
      %v368 = vunpack.c.l.b16 %v224
      %v369 = vunpack.c.l.b16 %v225
      %v370 = vunpack.c.l.b16 %v226
      %v371 = vunpack.c.l.b16 %v227
      %v372 = vunpack.c.l.b16 %v228
      %v373 = vunpack.c.l.b16 %v229
      %v374 = vunpack.c.l.b16 %v230
      %v375 = vunpack.c.l.b16 %v231
      %v376 = vunpack.c.l.b16 %v232
      %v377 = vunpack.c.l.b16 %v233
      %v378 = vunpack.c.l.b16 %v234
      %v379 = vunpack.c.l.b16 %v235
      %v380 = vunpack.c.l.b16 %v236
      %v381 = vunpack.c.l.b16 %v237
      %v382 = vunpack.c.l.b16 %v238
      %v383 = vunpack.c.l.b16 %v239
      %v384 = vunpack.c.l.b16 %v240
      %v385 = vunpack.c.l.b16 %v241
      %v386 = vunpack.c.l.b16 %v242
      %v387 = vunpack.c.l.b16 %v243
      %v388 = vunpack.c.l.b16 %v244
      %v389 = vunpack.c.l.b16 %v245
      %v390 = vunpack.c.l.b16 %v246
      %v391 = vunpack.c.l.b16 %v247
      %v392 = vpack.c.b16 %v329, %v328
      %v393 = vpack.c.b16 %v331, %v330
      %v394 = vpack.c.b16 %v333, %v332
      %v395 = vpack.c.b16 %v335, %v334
      %v396 = vpack.c.b16 %v337, %v336
      %v397 = vpack.c.b16 %v339, %v338
      %v398 = vpack.c.b16 %v341, %v340
      %v399 = vpack.c.b16 %v343, %v342
      %v400 = vpack.c.b16 %v345, %v344
      %v401 = vpack.c.b16 %v347, %v346
      %v402 = vpack.c.b16 %v349, %v348
      %v403 = vpack.c.b16 %v351, %v350
      %v404 = vpack.c.b16 %v353, %v352
      %v405 = vpack.c.b16 %v355, %v354
      %v406 = vpack.c.b16 %v357, %v356
      %v407 = vpack.c.b16 %v359, %v358
      %v408 = vpack.c.b16 %v361, %v360
      %v409 = vpack.c.b16 %v363, %v362
      %v410 = vpack.c.b16 %v365, %v364
      %v411 = vpack.c.b16 %v367, %v366
      %v412 = vpack.c.b16 %v369, %v368
      %v413 = vpack.c.b16 %v371, %v370
      %v414 = vpack.c.b16 %v373, %v372
      %v415 = vpack.c.b16 %v375, %v374
      %v416 = vpack.c.b16 %v377, %v376
      %v417 = vpack.c.b16 %v379, %v378
      %v418 = vpack.c.b16 %v381, %v380
      %v419 = vpack.c.b16 %v383, %v382
      %v420 = vpack.c.b16 %v385, %v384
      %v421 = vpack.c.b16 %v387, %v386
      %v422 = vpack.c.b16 %v389, %v388
      %v423 = vpack.c.b16 %v391, %v390
      %v472 = vunpack.c.l.b16 %v248
      %v473 = vunpack.c.l.b16 %v249
      %v474 = vunpack.c.l.b16 %v250
      %v475 = vunpack.c.l.b16 %v251
      %v476 = vunpack.c.l.b16 %v252
      %v477 = vunpack.c.l.b16 %v253
      %v478 = vunpack.c.l.b16 %v254
      %v479 = vunpack.c.l.b16 %v255
      %v480 = vunpack.c.l.b16 %v256
      %v481 = vunpack.c.l.b16 %v257
      %v482 = vunpack.c.l.b16 %v258
      %v483 = vunpack.c.l.b16 %v259
      %v484 = vunpack.c.l.b16 %v260
      %v485 = vunpack.c.l.b16 %v261
      %v486 = vunpack.c.l.b16 %v262
      %v487 = vunpack.c.l.b16 %v263
      %v488 = vpack.c.b16 %v473, %v472
      %v489 = vpack.c.b16 %v475, %v474
      %v490 = vpack.c.b16 %v477, %v476
      %v491 = vpack.c.b16 %v479, %v478
      %v492 = vpack.c.b16 %v481, %v480
      %v493 = vpack.c.b16 %v483, %v482
      %v494 = vpack.c.b16 %v485, %v484
      %v495 = vpack.c.b16 %v487, %v486
      %504 = vmatpush.bf16.msra.mxu0 %v495
      %505 = vmatpush.bf16.msra.mxu0 %v494
      %506 = vmatpush.bf16.msra.mxu0 %v493
      %507 = vmatpush.bf16.msra.mxu0 %v492
      %508 = vmatpush.bf16.msra.mxu0 %v491
      %509 = vmatpush.bf16.msra.mxu0 %v490
      %510 = vmatpush.bf16.msra.mxu0 %v489
      %511 = vmatpush.bf16.msra.mxu0 %v488
      %512 = vmatmul.bf16.gmra.mxu0 %v392
      %v513 = vpop.f32.mrf.mxu0
      %v514 = vadd.f32 0.0, %v513
      %v515 = vpop.f32.mrf.mxu0
      %v516 = vadd.f32 0.0, %v515
      %517 = vmatmul.bf16.gmra.mxu0 %v393
      %v518 = vpop.f32.mrf.mxu0
      %v519 = vadd.f32 0.0, %v518
      %v520 = vpop.f32.mrf.mxu0
      %v521 = vadd.f32 0.0, %v520
      %522 = vmatmul.bf16.gmra.mxu0 %v394
      %v523 = vpop.f32.mrf.mxu0
      %v524 = vadd.f32 0.0, %v523
      %v525 = vpop.f32.mrf.mxu0
      %v526 = vadd.f32 0.0, %v525
      %527 = vmatmul.bf16.gmra.mxu0 %v395
      %v528 = vpop.f32.mrf.mxu0
      %v529 = vadd.f32 0.0, %v528
      %v530 = vpop.f32.mrf.mxu0
      %v531 = vadd.f32 0.0, %v530
      %532 = vmatmul.bf16.gmra.mxu0 %v396
      %v533 = vpop.f32.mrf.mxu0
      %v534 = vadd.f32 0.0, %v533
      %v535 = vpop.f32.mrf.mxu0
      %v536 = vadd.f32 0.0, %v535
      %537 = vmatmul.bf16.gmra.mxu0 %v397
      %v538 = vpop.f32.mrf.mxu0
      %v539 = vadd.f32 0.0, %v538
      %v540 = vpop.f32.mrf.mxu0
      %v541 = vadd.f32 0.0, %v540
      %542 = vmatmul.bf16.gmra.mxu0 %v398
      %v543 = vpop.f32.mrf.mxu0
      %v544 = vadd.f32 0.0, %v543
      %v545 = vpop.f32.mrf.mxu0
      %v546 = vadd.f32 0.0, %v545
      %547 = vmatmul.bf16.gmra.mxu0 %v399
      %v548 = vpop.f32.mrf.mxu0
      %v549 = vadd.f32 0.0, %v548
      %v550 = vpop.f32.mrf.mxu0
      %v551 = vadd.f32 0.0, %v550
      %552 = vmatmul.bf16.gmra.mxu0 %v400
      %v553 = vpop.f32.mrf.mxu0
      %v554 = vadd.f32 0.0, %v553
      %v555 = vpop.f32.mrf.mxu0
      %v556 = vadd.f32 0.0, %v555
      %557 = vmatmul.bf16.gmra.mxu0 %v401
      %v558 = vpop.f32.mrf.mxu0
      %v559 = vadd.f32 0.0, %v558
      %v560 = vpop.f32.mrf.mxu0
      %v561 = vadd.f32 0.0, %v560
      %562 = vmatmul.bf16.gmra.mxu0 %v402
      %v563 = vpop.f32.mrf.mxu0
      %v564 = vadd.f32 0.0, %v563
      %v565 = vpop.f32.mrf.mxu0
      %v566 = vadd.f32 0.0, %v565
      %567 = vmatmul.bf16.gmra.mxu0 %v403
      %v568 = vpop.f32.mrf.mxu0
      %v569 = vadd.f32 0.0, %v568
      %v570 = vpop.f32.mrf.mxu0
      %v571 = vadd.f32 0.0, %v570
      %572 = vmatmul.bf16.gmra.mxu0 %v404
      %v573 = vpop.f32.mrf.mxu0
      %v574 = vadd.f32 0.0, %v573
      %v575 = vpop.f32.mrf.mxu0
      %v576 = vadd.f32 0.0, %v575
      %577 = vmatmul.bf16.gmra.mxu0 %v405
      %v578 = vpop.f32.mrf.mxu0
      %v579 = vadd.f32 0.0, %v578
      %v580 = vpop.f32.mrf.mxu0
      %v581 = vadd.f32 0.0, %v580
      %582 = vmatmul.bf16.gmra.mxu0 %v406
      %v583 = vpop.f32.mrf.mxu0
      %v584 = vadd.f32 0.0, %v583
      %v585 = vpop.f32.mrf.mxu0
      %v586 = vadd.f32 0.0, %v585
      %587 = vmatmul.bf16.gmra.mxu0 %v407
      %v588 = vpop.f32.mrf.mxu0
      %v589 = vadd.f32 0.0, %v588
      %v590 = vpop.f32.mrf.mxu0
      %v591 = vadd.f32 0.0, %v590
      %592 = vmatmul.bf16.gmra.mxu0 %v408
      %v593 = vpop.f32.mrf.mxu0
      %v594 = vadd.f32 0.0, %v593
      %v595 = vpop.f32.mrf.mxu0
      %v596 = vadd.f32 0.0, %v595
      %597 = vmatmul.bf16.gmra.mxu0 %v409
      %v598 = vpop.f32.mrf.mxu0
      %v599 = vadd.f32 0.0, %v598
      %v600 = vpop.f32.mrf.mxu0
      %v601 = vadd.f32 0.0, %v600
      %602 = vmatmul.bf16.gmra.mxu0 %v410
      %v603 = vpop.f32.mrf.mxu0
      %v604 = vadd.f32 0.0, %v603
      %v605 = vpop.f32.mrf.mxu0
      %v606 = vadd.f32 0.0, %v605
      %607 = vmatmul.bf16.gmra.mxu0 %v411
      %v608 = vpop.f32.mrf.mxu0
      %v609 = vadd.f32 0.0, %v608
      %v610 = vpop.f32.mrf.mxu0
      %v611 = vadd.f32 0.0, %v610
      %612 = vmatmul.bf16.gmra.mxu0 %v412
      %v613 = vpop.f32.mrf.mxu0
      %v614 = vadd.f32 0.0, %v613
      %v615 = vpop.f32.mrf.mxu0
      %v616 = vadd.f32 0.0, %v615
      %617 = vmatmul.bf16.gmra.mxu0 %v413
      %v618 = vpop.f32.mrf.mxu0
      %v619 = vadd.f32 0.0, %v618
      %v620 = vpop.f32.mrf.mxu0
      %v621 = vadd.f32 0.0, %v620
      %622 = vmatmul.bf16.gmra.mxu0 %v414
      %v623 = vpop.f32.mrf.mxu0
      %v624 = vadd.f32 0.0, %v623
      %v625 = vpop.f32.mrf.mxu0
      %v626 = vadd.f32 0.0, %v625
      %627 = vmatmul.bf16.gmra.mxu0 %v415
      %v628 = vpop.f32.mrf.mxu0
      %v629 = vadd.f32 0.0, %v628
      %v630 = vpop.f32.mrf.mxu0
      %v631 = vadd.f32 0.0, %v630
      %632 = vmatmul.bf16.gmra.mxu0 %v416
      %v633 = vpop.f32.mrf.mxu0
      %v634 = vadd.f32 0.0, %v633
      %v635 = vpop.f32.mrf.mxu0
      %v636 = vadd.f32 0.0, %v635
      %637 = vmatmul.bf16.gmra.mxu0 %v417
      %v638 = vpop.f32.mrf.mxu0
      %v639 = vadd.f32 0.0, %v638
      %v640 = vpop.f32.mrf.mxu0
      %v641 = vadd.f32 0.0, %v640
      %642 = vmatmul.bf16.gmra.mxu0 %v418
      %v643 = vpop.f32.mrf.mxu0
      %v644 = vadd.f32 0.0, %v643
      %v645 = vpop.f32.mrf.mxu0
      %v646 = vadd.f32 0.0, %v645
      %647 = vmatmul.bf16.gmra.mxu0 %v419
      %v648 = vpop.f32.mrf.mxu0
      %v649 = vadd.f32 0.0, %v648
      %v650 = vpop.f32.mrf.mxu0
      %v651 = vadd.f32 0.0, %v650
      %652 = vmatmul.bf16.gmra.mxu0 %v420
      %v653 = vpop.f32.mrf.mxu0
      %v654 = vadd.f32 0.0, %v653
      %v655 = vpop.f32.mrf.mxu0
      %v656 = vadd.f32 0.0, %v655
      %657 = vmatmul.bf16.gmra.mxu0 %v421
      %v658 = vpop.f32.mrf.mxu0
      %v659 = vadd.f32 0.0, %v658
      %v660 = vpop.f32.mrf.mxu0
      %v661 = vadd.f32 0.0, %v660
      %662 = vmatmul.bf16.gmra.mxu0 %v422
      %v663 = vpop.f32.mrf.mxu0
      %v664 = vadd.f32 0.0, %v663
      %v665 = vpop.f32.mrf.mxu0
      %v666 = vadd.f32 0.0, %v665
      %667 = vmatmul.bf16.gmra.mxu0 %v423
      %v668 = vpop.f32.mrf.mxu0
      %v669 = vadd.f32 0.0, %v668
      %v670 = vpop.f32.mrf.mxu0
      %v671 = vadd.f32 0.0, %v670
      %672 = vdwg.mxu0
      %vm673 = vcmp.ge.f32.partialorder %v514, 0.0
      %vm674 = vcmp.ge.f32.partialorder %v516, 0.0
      %vm675 = vcmp.ge.f32.partialorder %v519, 0.0
      %vm676 = vcmp.ge.f32.partialorder %v521, 0.0
      %vm677 = vcmp.ge.f32.partialorder %v524, 0.0
      %vm678 = vcmp.ge.f32.partialorder %v526, 0.0
      %vm679 = vcmp.ge.f32.partialorder %v529, 0.0
      %vm680 = vcmp.ge.f32.partialorder %v531, 0.0
      %vm681 = vcmp.ge.f32.partialorder %v534, 0.0
      %vm682 = vcmp.ge.f32.partialorder %v536, 0.0
      %vm683 = vcmp.ge.f32.partialorder %v539, 0.0
      %vm684 = vcmp.ge.f32.partialorder %v541, 0.0
      %vm685 = vcmp.ge.f32.partialorder %v544, 0.0
      %vm686 = vcmp.ge.f32.partialorder %v546, 0.0
      %vm687 = vcmp.ge.f32.partialorder %v549, 0.0
      %vm688 = vcmp.ge.f32.partialorder %v551, 0.0
      %vm689 = vcmp.ge.f32.partialorder %v554, 0.0
      %vm690 = vcmp.ge.f32.partialorder %v556, 0.0
      %vm691 = vcmp.ge.f32.partialorder %v559, 0.0
      %vm692 = vcmp.ge.f32.partialorder %v561, 0.0
      %vm693 = vcmp.ge.f32.partialorder %v564, 0.0
      %vm694 = vcmp.ge.f32.partialorder %v566, 0.0
      %vm695 = vcmp.ge.f32.partialorder %v569, 0.0
      %vm696 = vcmp.ge.f32.partialorder %v571, 0.0
      %vm697 = vcmp.ge.f32.partialorder %v574, 0.0
      %vm698 = vcmp.ge.f32.partialorder %v576, 0.0
      %vm699 = vcmp.ge.f32.partialorder %v579, 0.0
      %vm700 = vcmp.ge.f32.partialorder %v581, 0.0
      %vm701 = vcmp.ge.f32.partialorder %v584, 0.0
      %vm702 = vcmp.ge.f32.partialorder %v586, 0.0
      %vm703 = vcmp.ge.f32.partialorder %v589, 0.0
      %vm704 = vcmp.ge.f32.partialorder %v591, 0.0
      %vm705 = vcmp.ge.f32.partialorder %v594, 0.0
      %vm706 = vcmp.ge.f32.partialorder %v596, 0.0
      %vm707 = vcmp.ge.f32.partialorder %v599, 0.0
      %vm708 = vcmp.ge.f32.partialorder %v601, 0.0
      %vm709 = vcmp.ge.f32.partialorder %v604, 0.0
      %vm710 = vcmp.ge.f32.partialorder %v606, 0.0
      %vm711 = vcmp.ge.f32.partialorder %v609, 0.0
      %vm712 = vcmp.ge.f32.partialorder %v611, 0.0
      %vm713 = vcmp.ge.f32.partialorder %v614, 0.0
      %vm714 = vcmp.ge.f32.partialorder %v616, 0.0
      %vm715 = vcmp.ge.f32.partialorder %v619, 0.0
      %vm716 = vcmp.ge.f32.partialorder %v621, 0.0
      %vm717 = vcmp.ge.f32.partialorder %v624, 0.0
      %vm718 = vcmp.ge.f32.partialorder %v626, 0.0
      %vm719 = vcmp.ge.f32.partialorder %v629, 0.0
      %vm720 = vcmp.ge.f32.partialorder %v631, 0.0
      %vm721 = vcmp.ge.f32.partialorder %v634, 0.0
      %vm722 = vcmp.ge.f32.partialorder %v636, 0.0
      %vm723 = vcmp.ge.f32.partialorder %v639, 0.0
      %vm724 = vcmp.ge.f32.partialorder %v641, 0.0
      %vm725 = vcmp.ge.f32.partialorder %v644, 0.0
      %vm726 = vcmp.ge.f32.partialorder %v646, 0.0
      %vm727 = vcmp.ge.f32.partialorder %v649, 0.0
      %vm728 = vcmp.ge.f32.partialorder %v651, 0.0
      %vm729 = vcmp.ge.f32.partialorder %v654, 0.0
      %vm730 = vcmp.ge.f32.partialorder %v656, 0.0
      %vm731 = vcmp.ge.f32.partialorder %v659, 0.0
      %vm732 = vcmp.ge.f32.partialorder %v661, 0.0
      %vm733 = vcmp.ge.f32.partialorder %v664, 0.0
      %vm734 = vcmp.ge.f32.partialorder %v666, 0.0
      %vm735 = vcmp.ge.f32.partialorder %v669, 0.0
      %vm736 = vcmp.ge.f32.partialorder %v671, 0.0
      %v737 = vmul.f32 %v514, 0.2
      %v738 = vmul.f32 %v516, 0.2
      %v739 = vmul.f32 %v519, 0.2
      %v740 = vmul.f32 %v521, 0.2
      %v741 = vmul.f32 %v524, 0.2
      %v742 = vmul.f32 %v526, 0.2
      %v743 = vmul.f32 %v529, 0.2
      %v744 = vmul.f32 %v531, 0.2
      %v745 = vmul.f32 %v534, 0.2
      %v746 = vmul.f32 %v536, 0.2
      %v747 = vmul.f32 %v539, 0.2
      %v748 = vmul.f32 %v541, 0.2
      %v749 = vmul.f32 %v544, 0.2
      %v750 = vmul.f32 %v546, 0.2
      %v751 = vmul.f32 %v549, 0.2
      %v752 = vmul.f32 %v551, 0.2
      %v753 = vmul.f32 %v554, 0.2
      %v754 = vmul.f32 %v556, 0.2
      %v755 = vmul.f32 %v559, 0.2
      %v756 = vmul.f32 %v561, 0.2
      %v757 = vmul.f32 %v564, 0.2
      %v758 = vmul.f32 %v566, 0.2
      %v759 = vmul.f32 %v569, 0.2
      %v760 = vmul.f32 %v571, 0.2
      %v761 = vmul.f32 %v574, 0.2
      %v762 = vmul.f32 %v576, 0.2
      %v763 = vmul.f32 %v579, 0.2
      %v764 = vmul.f32 %v581, 0.2
      %v765 = vmul.f32 %v584, 0.2
      %v766 = vmul.f32 %v586, 0.2
      %v767 = vmul.f32 %v589, 0.2
      %v768 = vmul.f32 %v591, 0.2
      %v769 = vmul.f32 %v594, 0.2
      %v770 = vmul.f32 %v596, 0.2
      %v771 = vmul.f32 %v599, 0.2
      %v772 = vmul.f32 %v601, 0.2
      %v773 = vmul.f32 %v604, 0.2
      %v774 = vmul.f32 %v606, 0.2
      %v775 = vmul.f32 %v609, 0.2
      %v776 = vmul.f32 %v611, 0.2
      %v777 = vmul.f32 %v614, 0.2
      %v778 = vmul.f32 %v616, 0.2
      %v779 = vmul.f32 %v619, 0.2
      %v780 = vmul.f32 %v621, 0.2
      %v781 = vmul.f32 %v624, 0.2
      %v782 = vmul.f32 %v626, 0.2
      %v783 = vmul.f32 %v629, 0.2
      %v784 = vmul.f32 %v631, 0.2
      %v785 = vmul.f32 %v634, 0.2
      %v786 = vmul.f32 %v636, 0.2
      %v787 = vmul.f32 %v639, 0.2
      %v788 = vmul.f32 %v641, 0.2
      %v789 = vmul.f32 %v644, 0.2
      %v790 = vmul.f32 %v646, 0.2
      %v791 = vmul.f32 %v649, 0.2
      %v792 = vmul.f32 %v651, 0.2
      %v793 = vmul.f32 %v654, 0.2
      %v794 = vmul.f32 %v656, 0.2
      %v795 = vmul.f32 %v659, 0.2
      %v796 = vmul.f32 %v661, 0.2
      %v797 = vmul.f32 %v664, 0.2
      %v798 = vmul.f32 %v666, 0.2
      %v799 = vmul.f32 %v669, 0.2
      %v800 = vmul.f32 %v671, 0.2
      %v801 = vsel %vm673, %v514, %v737
      %v802 = vsel %vm674, %v516, %v738
      %v803 = vsel %vm675, %v519, %v739
      %v804 = vsel %vm676, %v521, %v740
      %v805 = vsel %vm677, %v524, %v741
      %v806 = vsel %vm678, %v526, %v742
      %v807 = vsel %vm679, %v529, %v743
      %v808 = vsel %vm680, %v531, %v744
      %v809 = vsel %vm681, %v534, %v745
      %v810 = vsel %vm682, %v536, %v746
      %v811 = vsel %vm683, %v539, %v747
      %v812 = vsel %vm684, %v541, %v748
      %v813 = vsel %vm685, %v544, %v749
      %v814 = vsel %vm686, %v546, %v750
      %v815 = vsel %vm687, %v549, %v751
      %v816 = vsel %vm688, %v551, %v752
      %v817 = vsel %vm689, %v554, %v753
      %v818 = vsel %vm690, %v556, %v754
      %v819 = vsel %vm691, %v559, %v755
      %v820 = vsel %vm692, %v561, %v756
      %v821 = vsel %vm693, %v564, %v757
      %v822 = vsel %vm694, %v566, %v758
      %v823 = vsel %vm695, %v569, %v759
      %v824 = vsel %vm696, %v571, %v760
      %v825 = vsel %vm697, %v574, %v761
      %v826 = vsel %vm698, %v576, %v762
      %v827 = vsel %vm699, %v579, %v763
      %v828 = vsel %vm700, %v581, %v764
      %v829 = vsel %vm701, %v584, %v765
      %v830 = vsel %vm702, %v586, %v766
      %v831 = vsel %vm703, %v589, %v767
      %v832 = vsel %vm704, %v591, %v768
      %v833 = vsel %vm705, %v594, %v769
      %v834 = vsel %vm706, %v596, %v770
      %v835 = vsel %vm707, %v599, %v771
      %v836 = vsel %vm708, %v601, %v772
      %v837 = vsel %vm709, %v604, %v773
      %v838 = vsel %vm710, %v606, %v774
      %v839 = vsel %vm711, %v609, %v775
      %v840 = vsel %vm712, %v611, %v776
      %v841 = vsel %vm713, %v614, %v777
      %v842 = vsel %vm714, %v616, %v778
      %v843 = vsel %vm715, %v619, %v779
      %v844 = vsel %vm716, %v621, %v780
      %v845 = vsel %vm717, %v624, %v781
      %v846 = vsel %vm718, %v626, %v782
      %v847 = vsel %vm719, %v629, %v783
      %v848 = vsel %vm720, %v631, %v784
      %v849 = vsel %vm721, %v634, %v785
      %v850 = vsel %vm722, %v636, %v786
      %v851 = vsel %vm723, %v639, %v787
      %v852 = vsel %vm724, %v641, %v788
      %v853 = vsel %vm725, %v644, %v789
      %v854 = vsel %vm726, %v646, %v790
      %v855 = vsel %vm727, %v649, %v791
      %v856 = vsel %vm728, %v651, %v792
      %v857 = vsel %vm729, %v654, %v793
      %v858 = vsel %vm730, %v656, %v794
      %v859 = vsel %vm731, %v659, %v795
      %v860 = vsel %vm732, %v661, %v796
      %v861 = vsel %vm733, %v664, %v797
      %v862 = vsel %vm734, %v666, %v798
      %v863 = vsel %vm735, %v669, %v799
      %v864 = vsel %vm736, %v671, %v800
      %v865 = vpack.c.bf16 %v801, %v801
      %v866 = vpack.c.bf16 %v802, %v802
      %v867 = vpack.c.bf16 %v803, %v803
      %v868 = vpack.c.bf16 %v804, %v804
      %v869 = vpack.c.bf16 %v805, %v805
      %v870 = vpack.c.bf16 %v806, %v806
      %v871 = vpack.c.bf16 %v807, %v807
      %v872 = vpack.c.bf16 %v808, %v808
      %v873 = vpack.c.bf16 %v809, %v809
      %v874 = vpack.c.bf16 %v810, %v810
      %v875 = vpack.c.bf16 %v811, %v811
      %v876 = vpack.c.bf16 %v812, %v812
      %v877 = vpack.c.bf16 %v813, %v813
      %v878 = vpack.c.bf16 %v814, %v814
      %v879 = vpack.c.bf16 %v815, %v815
      %v880 = vpack.c.bf16 %v816, %v816
      %v881 = vpack.c.bf16 %v817, %v817
      %v882 = vpack.c.bf16 %v818, %v818
      %v883 = vpack.c.bf16 %v819, %v819
      %v884 = vpack.c.bf16 %v820, %v820
      %v885 = vpack.c.bf16 %v821, %v821
      %v886 = vpack.c.bf16 %v822, %v822
      %v887 = vpack.c.bf16 %v823, %v823
      %v888 = vpack.c.bf16 %v824, %v824
      %v889 = vpack.c.bf16 %v825, %v825
      %v890 = vpack.c.bf16 %v826, %v826
      %v891 = vpack.c.bf16 %v827, %v827
      %v892 = vpack.c.bf16 %v828, %v828
      %v893 = vpack.c.bf16 %v829, %v829
      %v894 = vpack.c.bf16 %v830, %v830
      %v895 = vpack.c.bf16 %v831, %v831
      %v896 = vpack.c.bf16 %v832, %v832
      %v897 = vpack.c.bf16 %v833, %v833
      %v898 = vpack.c.bf16 %v834, %v834
      %v899 = vpack.c.bf16 %v835, %v835
      %v900 = vpack.c.bf16 %v836, %v836
      %v901 = vpack.c.bf16 %v837, %v837
      %v902 = vpack.c.bf16 %v838, %v838
      %v903 = vpack.c.bf16 %v839, %v839
      %v904 = vpack.c.bf16 %v840, %v840
      %v905 = vpack.c.bf16 %v841, %v841
      %v906 = vpack.c.bf16 %v842, %v842
      %v907 = vpack.c.bf16 %v843, %v843
      %v908 = vpack.c.bf16 %v844, %v844
      %v909 = vpack.c.bf16 %v845, %v845
      %v910 = vpack.c.bf16 %v846, %v846
      %v911 = vpack.c.bf16 %v847, %v847
      %v912 = vpack.c.bf16 %v848, %v848
      %v913 = vpack.c.bf16 %v849, %v849
      %v914 = vpack.c.bf16 %v850, %v850
      %v915 = vpack.c.bf16 %v851, %v851
      %v916 = vpack.c.bf16 %v852, %v852
      %v917 = vpack.c.bf16 %v853, %v853
      %v918 = vpack.c.bf16 %v854, %v854
      %v919 = vpack.c.bf16 %v855, %v855
      %v920 = vpack.c.bf16 %v856, %v856
      %v921 = vpack.c.bf16 %v857, %v857
      %v922 = vpack.c.bf16 %v858, %v858
      %v923 = vpack.c.bf16 %v859, %v859
      %v924 = vpack.c.bf16 %v860, %v860
      %v925 = vpack.c.bf16 %v861, %v861
      %v926 = vpack.c.bf16 %v862, %v862
      %v927 = vpack.c.bf16 %v863, %v863
      %v928 = vpack.c.bf16 %v864, %v864
      %929 = vst [vmem:[%s182] sm:$0xf] %v865
      %930 = vst [vmem:[%s182 + $0x4] sm:$0xf] %v866
      %931 = vst [vmem:[%s182 + $0x8] sm:$0xf] %v867
      %932 = vst [vmem:[%s182 + $0xc] sm:$0xf] %v868
      %933 = vst [vmem:[%s182 + $0x10] sm:$0xf] %v869
      %934 = vst [vmem:[%s182 + $0x14] sm:$0xf] %v870
      %935 = vst [vmem:[%s182 + $0x18] sm:$0xf] %v871
      %936 = vst [vmem:[%s182 + $0x1c] sm:$0xf] %v872
      %937 = vst [vmem:[%s182 + $0x20] sm:$0xf] %v873
      %938 = vst [vmem:[%s182 + $0x24] sm:$0xf] %v874
      %939 = vst [vmem:[%s182 + $0x28] sm:$0xf] %v875
      %940 = vst [vmem:[%s182 + $0x2c] sm:$0xf] %v876
      %941 = vst [vmem:[%s182 + $0x30] sm:$0xf] %v877
      %942 = vst [vmem:[%s182 + $0x34] sm:$0xf] %v878
      %943 = vst [vmem:[%s182 + $0x38] sm:$0xf] %v879
      %944 = vst [vmem:[%s182 + $0x3c] sm:$0xf] %v880
      %945 = vst [vmem:[%s182 + $0x40] sm:$0xf] %v881
      %946 = vst [vmem:[%s182 + $0x44] sm:$0xf] %v882
      %947 = vst [vmem:[%s182 + $0x48] sm:$0xf] %v883
      %948 = vst [vmem:[%s182 + $0x4c] sm:$0xf] %v884
      %949 = vst [vmem:[%s182 + $0x50] sm:$0xf] %v885
      %950 = vst [vmem:[%s182 + $0x54] sm:$0xf] %v886
      %951 = vst [vmem:[%s182 + $0x58] sm:$0xf] %v887
      %952 = vst [vmem:[%s182 + $0x5c] sm:$0xf] %v888
      %953 = vst [vmem:[%s182 + $0x60] sm:$0xf] %v889
      %954 = vst [vmem:[%s182 + $0x64] sm:$0xf] %v890
      %955 = vst [vmem:[%s182 + $0x68] sm:$0xf] %v891
      %956 = vst [vmem:[%s182 + $0x6c] sm:$0xf] %v892
      %957 = vst [vmem:[%s182 + $0x70] sm:$0xf] %v893
      %958 = vst [vmem:[%s182 + $0x74] sm:$0xf] %v894
      %959 = vst [vmem:[%s182 + $0x78] sm:$0xf] %v895
      %960 = vst [vmem:[%s182 + $0x7c] sm:$0xf] %v896
      %961 = vst [vmem:[%s182 + $0x80] sm:$0xf] %v897
      %962 = vst [vmem:[%s182 + $0x84] sm:$0xf] %v898
      %963 = vst [vmem:[%s182 + $0x88] sm:$0xf] %v899
      %964 = vst [vmem:[%s182 + $0x8c] sm:$0xf] %v900
      %965 = vst [vmem:[%s182 + $0x90] sm:$0xf] %v901
      %966 = vst [vmem:[%s182 + $0x94] sm:$0xf] %v902
      %967 = vst [vmem:[%s182 + $0x98] sm:$0xf] %v903
      %968 = vst [vmem:[%s182 + $0x9c] sm:$0xf] %v904
      %969 = vst [vmem:[%s182 + $0xa0] sm:$0xf] %v905
      %970 = vst [vmem:[%s182 + $0xa4] sm:$0xf] %v906
      %971 = vst [vmem:[%s182 + $0xa8] sm:$0xf] %v907
      %972 = vst [vmem:[%s182 + $0xac] sm:$0xf] %v908
      %973 = vst [vmem:[%s182 + $0xb0] sm:$0xf] %v909
      %974 = vst [vmem:[%s182 + $0xb4] sm:$0xf] %v910
      %975 = vst [vmem:[%s182 + $0xb8] sm:$0xf] %v911
      %976 = vst [vmem:[%s182 + $0xbc] sm:$0xf] %v912
      %977 = vst [vmem:[%s182 + $0xc0] sm:$0xf] %v913
      %978 = vst [vmem:[%s182 + $0xc4] sm:$0xf] %v914
      %979 = vst [vmem:[%s182 + $0xc8] sm:$0xf] %v915
      %980 = vst [vmem:[%s182 + $0xcc] sm:$0xf] %v916
      %981 = vst [vmem:[%s182 + $0xd0] sm:$0xf] %v917
      %982 = vst [vmem:[%s182 + $0xd4] sm:$0xf] %v918
      %983 = vst [vmem:[%s182 + $0xd8] sm:$0xf] %v919
      %984 = vst [vmem:[%s182 + $0xdc] sm:$0xf] %v920
      %985 = vst [vmem:[%s182 + $0xe0] sm:$0xf] %v921
      %986 = vst [vmem:[%s182 + $0xe4] sm:$0xf] %v922
      %987 = vst [vmem:[%s182 + $0xe8] sm:$0xf] %v923
      %988 = vst [vmem:[%s182 + $0xec] sm:$0xf] %v924
      %989 = vst [vmem:[%s182 + $0xf0] sm:$0xf] %v925
      %990 = vst [vmem:[%s182 + $0xf4] sm:$0xf] %v926
      %991 = vst [vmem:[%s182 + $0xf8] sm:$0xf] %v927
      %992 = vst [vmem:[%s182 + $0xfc] sm:$0xf] %v928
      %s993 = smul.u32 64, %s17
      %p994 = scmp.lt.s32.totalorder %s993, 255
      %s995 = scalar_select %p994, %s993, 255
      %p996 = scmp.lt.s32.totalorder %s18, 0
      %s997 = scalar_select %p996, %s18, 0
      %s998 = sadd.s32 %s997, %s995
      %s999 = smul.addr %s998, 4
      %s1000 = scalar_lea.vmem %s2, %s999
      // Predicated region
      $region29: #{discriminator_forward.7} parent=27 // pred_check
        %p1001 = pneg %p97
      $region30: #{discriminator_forward.7} parent=27 // pred_check_branch
        %1003 = sbr.rel (%p1001) target = $region32
      $region31: #{discriminator_forward.7} parent=27 // pred_region
        %s1004 = smul.u32 64, %s17
      $region32: #{discriminator_forward.7} parent=27 // pred_fallthru
        _
    $region28: #{discriminator_forward.7} parent=5 // pred_fallthru
      _
    %p1005 = scmp.le.s32.totalorder 2, %s8
    // Predicated region
    $region33: #{discriminator_forward.7} parent=5 // pred_check
      %p1006 = pneg %p1005
    $region34: #{discriminator_forward.7} parent=5 // pred_check_branch
      %1008 = sbr.rel (%p1006) target = $region36
    $region35: #{discriminator_forward.7} parent=5 // pred_region
      %s1009 = ssub.s32 %s8, 2
      // Predicated region
      $region37: #{discriminator_forward.7} parent=35 // pred_check
        %p1010 = pneg %p103
      $region38: #{discriminator_forward.7} parent=35 // pred_check_branch
        %1012 = sbr.rel (%p1010) target = $region40
      $region39: #{discriminator_forward.7} parent=35 // pred_region
        %s1013 = smul.u32 64, %s19
        %p1014 = scmp.lt.s32.totalorder %s1013, 255
        %s1015 = scalar_select %p1014, %s1013, 255
        %p1016 = scmp.lt.s32.totalorder %s20, 0
        %s1017 = scalar_select %p1016, %s20, 0
        %s1018 = sadd.s32 %s1017, %s1015
        %s1019 = smul.addr %s1018, 4
        %s1020 = scalar_lea.vmem %s2, %s1019
      $region40: #{discriminator_forward.7} parent=35 // pred_fallthru
        _
    $region36: #{discriminator_forward.7} parent=5 // pred_fallthru
      _
  $region6: #{discriminator_forward.7} parent=0 // loop_footer
    %s12 = sadd.s32 1, %s8
  $region7: #{discriminator_forward.7} parent=0 // loop_footer_branch
    %7 = sbr.rel target = $region3
  $region8: #{discriminator_forward.7} parent=0 // loop_exit
    _

// kernel: discriminator_forward.8
$region0: #{discriminator_forward.8}
  #allocation0 [shape = 'u32[]', space=smem, size = 0x4, offset = 0x4, fixed_abs, tag = 'smem constant byte address 0x4 - core index']
  #allocation1 [shape = 'u32[72,128]{1,0:T(1,128)}', space=vmem, size = 0x9000, scoped, tag = 'internal scratch']
  %s0 = inlined_call_operand.vmem [shape: bf16[512,1024], index: 0, kind: input, shape index: {}]
  %s1 = inlined_call_operand.vmem [shape: bf16[1024,128], index: 1, kind: input, shape index: {}]
  %s2 = inlined_call_operand.vmem [shape: bf16[512,128], index: 2, kind: output, shape index: {0}]
  %s3 = inlined_call_operand.vmem [shape: f32[16,128], index: 3, kind: output, shape index: {1}]
  %s4 = inlined_call_operand.vmem [shape: f32[16,128], index: 4, kind: output, shape index: {2}]
  %5 = xla_tuple %s2, %s3, %s4
  %s6 = sld [smem:[#allocation0]]
  $region57: #{discriminator_forward.8} parent=0
    _
  %s8 = ssub.s32 1, %s6
  %s9 = scalar_select 0, %s8, %s6
  loop: start=0, step=1, limit=4
  $region2: #{discriminator_forward.8} parent=0 // loop_pre_header
    _
  $region3: #{discriminator_forward.8} parent=0 // loop_header
    %s11 = sphi 0, %s15
    %p12 = scmp.ge.s32.totalorder %s11, 4
    %s18 = sphi 0, %s30
    %s19 = sphi 0, %s26
    %s20 = sphi 0, %s18
    %s21 = sphi 0, %s19
    %s22 = sphi 0, %s20
    %s23 = sphi 0, %s21
    %s33 = sphi 0, %s35
    %s36 = sphi 0, %s33
    %s37 = sphi 0, %s36
    %s53 = sphi 0, %s37
    %s59 = sphi 0, %s61
    %s62 = sphi 0, %s59
    %s63 = sphi 0, %s62
    %s79 = sphi 0, %s63
    %s87 = sphi 0, %s89
    %s90 = sphi 0, %s87
    %s91 = sphi 0, %s90
    %s107 = sphi 0, %s91
    %s115 = sphi 0, %s117
    %s118 = sphi 0, %s115
    %s119 = sphi 0, %s118
    %s135 = sphi 0, %s119
    %s143 = sphi 0, %s145
    %s146 = sphi 0, %s143
    %s147 = sphi 0, %s146
    %s163 = sphi 0, %s147
  $region4: #{discriminator_forward.8} parent=0 // loop_header_branch
    %14 = sbr.rel (%p12) target = $region8
  $region5: #{discriminator_forward.8} parent=0 // loop_body
    %s16 = ssub.s32 %s11, 1
    %s17 = ssub.s32 %s11, 2
    %s24 = sadd.s32 1, %s19
    %p25 = scmp.ge.s32.totalorder %s24, 1
    %s26 = scalar_select %p25, 0, %s24
    %s27 = sadd.s32 1, %s18
    %s28 = scalar_select %p25, %s27, %s18
    %p29 = scmp.ge.s32.totalorder %s28, 2
    %s30 = scalar_select %p29, 0, %s28
    %s31 = ssub.s32 %s18, %s30
    %p32 = scmp.eq.s32.totalorder %s31, 0
    %s34 = sadd.s32 %s33, 1
    %s35 = scalar_select %p32, %s33, %s34
    %p38 = pneg %p32
    %p39 = scmp.eq.s32.totalorder %s11, 1
    %p40 = por %p38, %p39
    %p41 = scmp.ne.s32.totalorder %s33, %s36
    %p42 = scmp.eq.s32.totalorder %s11, 0
    %p43 = por %p41, %p42
    %p44 = scmp.ne.s32.totalorder %s33, %s36
    %p45 = scmp.eq.s32.totalorder %s16, 1
    %p46 = por %p44, %p45
    %p47 = scmp.ne.s32.totalorder %s36, %s37
    %p48 = scmp.eq.s32.totalorder %s16, 0
    %p49 = por %p47, %p48
    %p50 = scmp.ne.s32.totalorder %s36, %s37
    %p51 = scmp.eq.s32.totalorder %s17, 1
    %p52 = por %p50, %p51
    %p54 = scmp.ne.s32.totalorder %s37, %s53
    %p55 = scmp.eq.s32.totalorder %s17, 0
    %p56 = por %p54, %p55
    %s57 = ssub.s32 %s19, %s26
    %p58 = scmp.eq.s32.totalorder %s57, 0
    %s60 = sadd.s32 %s59, 1
    %s61 = scalar_select %p58, %s59, %s60
    %p64 = pneg %p58
    %p65 = scmp.eq.s32.totalorder %s11, 1
    %p66 = por %p64, %p65
    %p67 = scmp.ne.s32.totalorder %s59, %s62
    %p68 = scmp.eq.s32.totalorder %s11, 0
    %p69 = por %p67, %p68
    %p70 = scmp.ne.s32.totalorder %s59, %s62
    %p71 = scmp.eq.s32.totalorder %s16, 1
    %p72 = por %p70, %p71
    %p73 = scmp.ne.s32.totalorder %s62, %s63
    %p74 = scmp.eq.s32.totalorder %s16, 0
    %p75 = por %p73, %p74
    %p76 = scmp.ne.s32.totalorder %s62, %s63
    %p77 = scmp.eq.s32.totalorder %s17, 1
    %p78 = por %p76, %p77
    %p80 = scmp.ne.s32.totalorder %s63, %s79
    %p81 = scmp.eq.s32.totalorder %s17, 0
    %p82 = por %p80, %p81
    %s83 = ssub.s32 %s18, %s30
    %s84 = ssub.s32 %s19, %s26
    %s85 = sor.u32 %s83, %s84
    %p86 = scmp.eq.s32.totalorder %s85, 0
    %s88 = sadd.s32 %s87, 1
    %s89 = scalar_select %p86, %s87, %s88
    %p92 = pneg %p86
    %p93 = scmp.eq.s32.totalorder %s11, 1
    %p94 = por %p92, %p93
    %p95 = scmp.ne.s32.totalorder %s87, %s90
    %p96 = scmp.eq.s32.totalorder %s11, 0
    %p97 = por %p95, %p96
    %p98 = scmp.ne.s32.totalorder %s87, %s90
    %p99 = scmp.eq.s32.totalorder %s16, 1
    %p100 = por %p98, %p99
    %p101 = scmp.ne.s32.totalorder %s90, %s91
    %p102 = scmp.eq.s32.totalorder %s16, 0
    %p103 = por %p101, %p102
    %p104 = scmp.ne.s32.totalorder %s90, %s91
    %p105 = scmp.eq.s32.totalorder %s17, 1
    %p106 = por %p104, %p105
    %p108 = scmp.ne.s32.totalorder %s91, %s107
    %p109 = scmp.eq.s32.totalorder %s17, 0
    %p110 = por %p108, %p109
    %s111 = ssub.s32 %s18, %s30
    %s112 = ssub.s32 %s19, %s26
    %s113 = sor.u32 %s111, %s112
    %p114 = scmp.eq.s32.totalorder %s113, 0
    %s116 = sadd.s32 %s115, 1
    %s117 = scalar_select %p114, %s115, %s116
    %p120 = pneg %p114
    %p121 = scmp.eq.s32.totalorder %s11, 1
    %p122 = por %p120, %p121
    %p123 = scmp.ne.s32.totalorder %s115, %s118
    %p124 = scmp.eq.s32.totalorder %s11, 0
    %p125 = por %p123, %p124
    %p126 = scmp.ne.s32.totalorder %s115, %s118
    %p127 = scmp.eq.s32.totalorder %s16, 1
    %p128 = por %p126, %p127
    %p129 = scmp.ne.s32.totalorder %s118, %s119
    %p130 = scmp.eq.s32.totalorder %s16, 0
    %p131 = por %p129, %p130
    %p132 = scmp.ne.s32.totalorder %s118, %s119
    %p133 = scmp.eq.s32.totalorder %s17, 1
    %p134 = por %p132, %p133
    %p136 = scmp.ne.s32.totalorder %s119, %s135
    %p137 = scmp.eq.s32.totalorder %s17, 0
    %p138 = por %p136, %p137
    %s139 = ssub.s32 %s18, %s30
    %s140 = ssub.s32 %s19, %s26
    %s141 = sor.u32 %s139, %s140
    %p142 = scmp.eq.s32.totalorder %s141, 0
    %s144 = sadd.s32 %s143, 1
    %s145 = scalar_select %p142, %s143, %s144
    %p148 = pneg %p142
    %p149 = scmp.eq.s32.totalorder %s11, 1
    %p150 = por %p148, %p149
    %p151 = scmp.ne.s32.totalorder %s143, %s146
    %p152 = scmp.eq.s32.totalorder %s11, 0
    %p153 = por %p151, %p152
    %p154 = scmp.ne.s32.totalorder %s143, %s146
    %p155 = scmp.eq.s32.totalorder %s16, 1
    %p156 = por %p154, %p155
    %p157 = scmp.ne.s32.totalorder %s146, %s147
    %p158 = scmp.eq.s32.totalorder %s16, 0
    %p159 = por %p157, %p158
    %p160 = scmp.ne.s32.totalorder %s146, %s147
    %p161 = scmp.eq.s32.totalorder %s17, 1
    %p162 = por %p160, %p161
    %p164 = scmp.ne.s32.totalorder %s147, %s163
    %p165 = scmp.eq.s32.totalorder %s17, 0
    %p166 = por %p164, %p165
    %p167 = scmp.le.s32.totalorder 1, %s11
    %p168 = scmp.lt.s32.totalorder %s11, 3
    %p169 = pnand %p167, %p168
    %p170 = pneg %p169
    // Predicated region
    $region9: #{discriminator_forward.8} parent=5 // pred_check
      _
    $region10: #{discriminator_forward.8} parent=5 // pred_check_branch
      %172 = sbr.rel (%p169) target = $region12
    $region11: #{discriminator_forward.8} parent=5 // pred_region
      %s173 = ssub.s32 %s11, 1
      // Predicated region
      $region13: #{discriminator_forward.8} parent=11 // pred_check
        %p174 = pneg %p75
      $region14: #{discriminator_forward.8} parent=11 // pred_check_branch
        %176 = sbr.rel (%p174) target = $region16
      $region15: #{discriminator_forward.8} parent=11 // pred_region
        %p177 = scmp.lt.s32.totalorder %s21, 0
        %s178 = scalar_select %p177, %s21, 0
        %s179 = smul.addr %s178, 4
        %s180 = scalar_lea.vmem %s1, %s179
      $region16: #{discriminator_forward.8} parent=11 // pred_fallthru
        _
    $region12: #{discriminator_forward.8} parent=5 // pred_fallthru
      _
    %p181 = scmp.lt.s32.totalorder %s11, 2
    // Predicated region
    $region17: #{discriminator_forward.8} parent=5 // pred_check
      %p182 = pneg %p181
    $region18: #{discriminator_forward.8} parent=5 // pred_check_branch
      %184 = sbr.rel (%p182) target = $region20
    $region19: #{discriminator_forward.8} parent=5 // pred_region
      // Predicated region
      $region21: #{discriminator_forward.8} parent=19 // pred_check
        %p185 = pneg %p43
      $region22: #{discriminator_forward.8} parent=19 // pred_check_branch
        %187 = sbr.rel (%p185) target = $region24
      $region23: #{discriminator_forward.8} parent=19 // pred_region
        %s188 = smul.u32 32, %s18
        %p189 = scmp.lt.s32.totalorder %s188, 63
        %s190 = scalar_select %p189, %s188, 63
        %s191 = smul.addr %s190, 8
        %s192 = smul.addr %s191, 4
        %s193 = scalar_lea.vmem %s0, %s192
        %s194 = smul.u32 32, %s18
      $region24: #{discriminator_forward.8} parent=19 // pred_fallthru
        _
    $region20: #{discriminator_forward.8} parent=5 // pred_fallthru
      _
    %p195 = scmp.le.s32.totalorder 1, %s11
    %p196 = scmp.lt.s32.totalorder %s11, 3
    %p197 = pnand %p195, %p196
    %p198 = pneg %p197
    // Predicated region
    $region25: #{discriminator_forward.8} parent=5 // pred_check
      _
    $region26: #{discriminator_forward.8} parent=5 // pred_check_branch
      %200 = sbr.rel (%p197) target = $region28
    $region27: #{discriminator_forward.8} parent=5 // pred_region
      %s201 = ssub.s32 %s11, 1
      %s202 = smul.u32 32, %s20
      %p203 = scmp.lt.s32.totalorder %s202, 63
      %s204 = scalar_select %p203, %s202, 63
      %s205 = smul.addr %s204, 8
      %s206 = smul.addr %s205, 4
      %s207 = scalar_lea.vmem %s0, %s206
      %p208 = pneg %p49
      %p209 = pneg %p46
      %p210 = scmp.lt.s32.totalorder %s21, 0
      %s211 = scalar_select %p210, %s21, 0
      %s212 = smul.addr %s211, 4
      %s213 = scalar_lea.vmem %s1, %s212
      %p214 = pneg %p75
      %p215 = pneg %p72
      %p216 = pneg %p103
      %p217 = pneg %p100
      %s218 = smul.u32 32, %s20
      %p219 = scmp.lt.s32.totalorder %s218, 63
      %s220 = scalar_select %p219, %s218, 63
      %p221 = scmp.lt.s32.totalorder %s21, 0
      %s222 = scalar_select %p221, %s21, 0
      %s223 = sadd.s32 %s222, %s220
      %s224 = smul.addr %s223, 4
      %s225 = scalar_lea.vmem %s2, %s224
      %p226 = pneg %p131
      %p227 = pneg %p128
      %p228 = scmp.lt.s32.totalorder %s20, 1
      %s229 = scalar_select %p228, %s20, 1
      %p230 = scmp.lt.s32.totalorder %s21, 0
      %s231 = scalar_select %p230, %s21, 0
      %s232 = sadd.s32 %s231, %s229
      %s233 = smul.addr %s232, 8
      %s234 = scalar_lea.vmem %s3, %s233
      %p235 = pneg %p159
      %p236 = pneg %p156
      %p237 = scmp.lt.s32.totalorder %s20, 1
      %s238 = scalar_select %p237, %s20, 1
      %p239 = scmp.lt.s32.totalorder %s21, 0
      %s240 = scalar_select %p239, %s21, 0
      %s241 = sadd.s32 %s240, %s238
      %s242 = smul.addr %s241, 8
      %s243 = scalar_lea.vmem %s4, %s242
      %s244 = smul.u32 32, %s20
      %p245 = scmp.lt.s32.totalorder %s244, 63
      %s246 = scalar_select %p245, %s244, 63
      %s247 = smul.addr %s246, 8
      %s248 = smul.addr %s247, 4
      %s249 = scalar_lea.vmem %s0, %s248
      %s250 = smul.u32 32, %s20
      %p251 = scmp.lt.s32.totalorder %s21, 0
      %s252 = scalar_select %p251, %s21, 0
      %s253 = smul.addr %s252, 4
      %s254 = scalar_lea.vmem %s1, %s253
      %s255 = smul.u32 32, %s20
      %p256 = scmp.lt.s32.totalorder %s255, 63
      %s257 = scalar_select %p256, %s255, 63
      %p258 = scmp.lt.s32.totalorder %s21, 0
      %s259 = scalar_select %p258, %s21, 0
      %s260 = sadd.s32 %s259, %s257
      %s261 = smul.addr %s260, 4
      %s262 = scalar_lea.vmem %s2, %s261
      %s263 = smul.u32 32, %s20
      %p264 = scmp.lt.s32.totalorder %s20, 1
      %s265 = scalar_select %p264, %s20, 1
      %p266 = scmp.lt.s32.totalorder %s21, 0
      %s267 = scalar_select %p266, %s21, 0
      %s268 = sadd.s32 %s267, %s265
      %s269 = smul.addr %s268, 8
      %s270 = scalar_lea.vmem %s3, %s269
      %p271 = scmp.lt.s32.totalorder %s20, 1
      %s272 = scalar_select %p271, %s20, 1
      %p273 = scmp.lt.s32.totalorder %s21, 0
      %s274 = scalar_select %p273, %s21, 0
      %s275 = sadd.s32 %s274, %s272
      %s276 = smul.addr %s275, 8
      %s277 = scalar_lea.vmem %s4, %s276
      %v278 = vld [vmem:[%s249] sm:$0xff]
      %v279 = vld [vmem:[%s249 + $0x8] sm:$0xff]
      %v280 = vld [vmem:[%s249 + $0x10] sm:$0xff]
      %v281 = vld [vmem:[%s249 + $0x18] sm:$0xff]
      %v282 = vld [vmem:[%s249 + $0x20] sm:$0xff]
      %v283 = vld [vmem:[%s249 + $0x28] sm:$0xff]
      %v284 = vld [vmem:[%s249 + $0x30] sm:$0xff]
      %v285 = vld [vmem:[%s249 + $0x38] sm:$0xff]
      %v286 = vld [vmem:[%s249 + $0x40] sm:$0xff]
      %v287 = vld [vmem:[%s249 + $0x48] sm:$0xff]
      %v288 = vld [vmem:[%s249 + $0x50] sm:$0xff]
      %v289 = vld [vmem:[%s249 + $0x58] sm:$0xff]
      %v290 = vld [vmem:[%s249 + $0x60] sm:$0xff]
      %v291 = vld [vmem:[%s249 + $0x68] sm:$0xff]
      %v292 = vld [vmem:[%s249 + $0x70] sm:$0xff]
      %v293 = vld [vmem:[%s249 + $0x78] sm:$0xff]
      %v294 = vld [vmem:[%s249 + $0x80] sm:$0xff]
      %v295 = vld [vmem:[%s249 + $0x88] sm:$0xff]
      %v296 = vld [vmem:[%s249 + $0x90] sm:$0xff]
      %v297 = vld [vmem:[%s249 + $0x98] sm:$0xff]
      %v298 = vld [vmem:[%s249 + $0xa0] sm:$0xff]
      %v299 = vld [vmem:[%s249 + $0xa8] sm:$0xff]
      %v300 = vld [vmem:[%s249 + $0xb0] sm:$0xff]
      %v301 = vld [vmem:[%s249 + $0xb8] sm:$0xff]
      %v302 = vld [vmem:[%s249 + $0xc0] sm:$0xff]
      %v303 = vld [vmem:[%s249 + $0xc8] sm:$0xff]
      %v304 = vld [vmem:[%s249 + $0xd0] sm:$0xff]
      %v305 = vld [vmem:[%s249 + $0xd8] sm:$0xff]
      %v306 = vld [vmem:[%s249 + $0xe0] sm:$0xff]
      %v307 = vld [vmem:[%s249 + $0xe8] sm:$0xff]
      %v308 = vld [vmem:[%s249 + $0xf0] sm:$0xff]
      %v309 = vld [vmem:[%s249 + $0xf8] sm:$0xff]
      %v310 = vld [vmem:[%s249 + $0x100] sm:$0xff]
      %v311 = vld [vmem:[%s249 + $0x108] sm:$0xff]
      %v312 = vld [vmem:[%s249 + $0x110] sm:$0xff]
      %v313 = vld [vmem:[%s249 + $0x118] sm:$0xff]
      %v314 = vld [vmem:[%s249 + $0x120] sm:$0xff]
      %v315 = vld [vmem:[%s249 + $0x128] sm:$0xff]
      %v316 = vld [vmem:[%s249 + $0x130] sm:$0xff]
      %v317 = vld [vmem:[%s249 + $0x138] sm:$0xff]
      %v318 = vld [vmem:[%s249 + $0x140] sm:$0xff]
      %v319 = vld [vmem:[%s249 + $0x148] sm:$0xff]
      %v320 = vld [vmem:[%s249 + $0x150] sm:$0xff]
      %v321 = vld [vmem:[%s249 + $0x158] sm:$0xff]
      %v322 = vld [vmem:[%s249 + $0x160] sm:$0xff]
      %v323 = vld [vmem:[%s249 + $0x168] sm:$0xff]
      %v324 = vld [vmem:[%s249 + $0x170] sm:$0xff]
      %v325 = vld [vmem:[%s249 + $0x178] sm:$0xff]
      %v326 = vld [vmem:[%s249 + $0x180] sm:$0xff]
      %v327 = vld [vmem:[%s249 + $0x188] sm:$0xff]
      %v328 = vld [vmem:[%s249 + $0x190] sm:$0xff]
      %v329 = vld [vmem:[%s249 + $0x198] sm:$0xff]
      %v330 = vld [vmem:[%s249 + $0x1a0] sm:$0xff]
      %v331 = vld [vmem:[%s249 + $0x1a8] sm:$0xff]
      %v332 = vld [vmem:[%s249 + $0x1b0] sm:$0xff]
      %v333 = vld [vmem:[%s249 + $0x1b8] sm:$0xff]
      %v334 = vld [vmem:[%s249 + $0x1c0] sm:$0xff]
      %v335 = vld [vmem:[%s249 + $0x1c8] sm:$0xff]
      %v336 = vld [vmem:[%s249 + $0x1d0] sm:$0xff]
      %v337 = vld [vmem:[%s249 + $0x1d8] sm:$0xff]
      %v338 = vld [vmem:[%s249 + $0x1e0] sm:$0xff]
      %v339 = vld [vmem:[%s249 + $0x1e8] sm:$0xff]
      %v340 = vld [vmem:[%s249 + $0x1f0] sm:$0xff]
      %v341 = vld [vmem:[%s249 + $0x1f8] sm:$0xff]
      %v342 = vld [vmem:[%s249 + $0x200] sm:$0xff]
      %v343 = vld [vmem:[%s249 + $0x208] sm:$0xff]
      %v344 = vld [vmem:[%s249 + $0x210] sm:$0xff]
      %v345 = vld [vmem:[%s249 + $0x218] sm:$0xff]
      %v346 = vld [vmem:[%s249 + $0x220] sm:$0xff]
      %v347 = vld [vmem:[%s249 + $0x228] sm:$0xff]
      %v348 = vld [vmem:[%s249 + $0x230] sm:$0xff]
      %v349 = vld [vmem:[%s249 + $0x238] sm:$0xff]
      %v350 = vld [vmem:[%s249 + $0x240] sm:$0xff]
      %v351 = vld [vmem:[%s249 + $0x248] sm:$0xff]
      %v352 = vld [vmem:[%s249 + $0x250] sm:$0xff]
      %v353 = vld [vmem:[%s249 + $0x258] sm:$0xff]
      %v354 = vld [vmem:[%s249 + $0x260] sm:$0xff]
      %v355 = vld [vmem:[%s249 + $0x268] sm:$0xff]
      %v356 = vld [vmem:[%s249 + $0x270] sm:$0xff]
      %v357 = vld [vmem:[%s249 + $0x278] sm:$0xff]
      %v358 = vld [vmem:[%s249 + $0x280] sm:$0xff]
      %v359 = vld [vmem:[%s249 + $0x288] sm:$0xff]
      %v360 = vld [vmem:[%s249 + $0x290] sm:$0xff]
      %v361 = vld [vmem:[%s249 + $0x298] sm:$0xff]
      %v362 = vld [vmem:[%s249 + $0x2a0] sm:$0xff]
      %v363 = vld [vmem:[%s249 + $0x2a8] sm:$0xff]
      %v364 = vld [vmem:[%s249 + $0x2b0] sm:$0xff]
      %v365 = vld [vmem:[%s249 + $0x2b8] sm:$0xff]
      %v366 = vld [vmem:[%s249 + $0x2c0] sm:$0xff]
      %v367 = vld [vmem:[%s249 + $0x2c8] sm:$0xff]
      %v368 = vld [vmem:[%s249 + $0x2d0] sm:$0xff]
      %v369 = vld [vmem:[%s249 + $0x2d8] sm:$0xff]
      %v370 = vld [vmem:[%s249 + $0x2e0] sm:$0xff]
      %v371 = vld [vmem:[%s249 + $0x2e8] sm:$0xff]
      %v372 = vld [vmem:[%s249 + $0x2f0] sm:$0xff]
      %v373 = vld [vmem:[%s249 + $0x2f8] sm:$0xff]
      %v374 = vld [vmem:[%s249 + $0x300] sm:$0xff]
      %v375 = vld [vmem:[%s249 + $0x308] sm:$0xff]
      %v376 = vld [vmem:[%s249 + $0x310] sm:$0xff]
      %v377 = vld [vmem:[%s249 + $0x318] sm:$0xff]
      %v378 = vld [vmem:[%s249 + $0x320] sm:$0xff]
      %v379 = vld [vmem:[%s249 + $0x328] sm:$0xff]
      %v380 = vld [vmem:[%s249 + $0x330] sm:$0xff]
      %v381 = vld [vmem:[%s249 + $0x338] sm:$0xff]
      %v382 = vld [vmem:[%s249 + $0x340] sm:$0xff]
      %v383 = vld [vmem:[%s249 + $0x348] sm:$0xff]
      %v384 = vld [vmem:[%s249 + $0x350] sm:$0xff]
      %v385 = vld [vmem:[%s249 + $0x358] sm:$0xff]
      %v386 = vld [vmem:[%s249 + $0x360] sm:$0xff]
      %v387 = vld [vmem:[%s249 + $0x368] sm:$0xff]
      %v388 = vld [vmem:[%s249 + $0x370] sm:$0xff]
      %v389 = vld [vmem:[%s249 + $0x378] sm:$0xff]
      %v390 = vld [vmem:[%s249 + $0x380] sm:$0xff]
      %v391 = vld [vmem:[%s249 + $0x388] sm:$0xff]
      %v392 = vld [vmem:[%s249 + $0x390] sm:$0xff]
      %v393 = vld [vmem:[%s249 + $0x398] sm:$0xff]
      %v394 = vld [vmem:[%s249 + $0x3a0] sm:$0xff]
      %v395 = vld [vmem:[%s249 + $0x3a8] sm:$0xff]
      %v396 = vld [vmem:[%s249 + $0x3b0] sm:$0xff]
      %v397 = vld [vmem:[%s249 + $0x3b8] sm:$0xff]
      %v398 = vld [vmem:[%s249 + $0x3c0] sm:$0xff]
      %v399 = vld [vmem:[%s249 + $0x3c8] sm:$0xff]
      %v400 = vld [vmem:[%s249 + $0x3d0] sm:$0xff]
      %v401 = vld [vmem:[%s249 + $0x3d8] sm:$0xff]
      %v402 = vld [vmem:[%s249 + $0x3e0] sm:$0xff]
      %v403 = vld [vmem:[%s249 + $0x3e8] sm:$0xff]
      %v404 = vld [vmem:[%s249 + $0x3f0] sm:$0xff]
      %v405 = vld [vmem:[%s249 + $0x3f8] sm:$0xff]
      %v406 = vld [vmem:[%s254] sm:$0xf]
      %v407 = vld [vmem:[%s254 + $0x4] sm:$0xf]
      %v408 = vld [vmem:[%s254 + $0x8] sm:$0xf]
      %v409 = vld [vmem:[%s254 + $0xc] sm:$0xf]
      %v410 = vld [vmem:[%s254 + $0x10] sm:$0xf]
      %v411 = vld [vmem:[%s254 + $0x14] sm:$0xf]
      %v412 = vld [vmem:[%s254 + $0x18] sm:$0xf]
      %v413 = vld [vmem:[%s254 + $0x1c] sm:$0xf]
      %v414 = vld [vmem:[%s254 + $0x20] sm:$0xf]
      %v415 = vld [vmem:[%s254 + $0x24] sm:$0xf]
      %v416 = vld [vmem:[%s254 + $0x28] sm:$0xf]
      %v417 = vld [vmem:[%s254 + $0x2c] sm:$0xf]
      %v418 = vld [vmem:[%s254 + $0x30] sm:$0xf]
      %v419 = vld [vmem:[%s254 + $0x34] sm:$0xf]
      %v420 = vld [vmem:[%s254 + $0x38] sm:$0xf]
      %v421 = vld [vmem:[%s254 + $0x3c] sm:$0xf]
      %v422 = vld [vmem:[%s254 + $0x40] sm:$0xf]
      %v423 = vld [vmem:[%s254 + $0x44] sm:$0xf]
      %v424 = vld [vmem:[%s254 + $0x48] sm:$0xf]
      %v425 = vld [vmem:[%s254 + $0x4c] sm:$0xf]
      %v426 = vld [vmem:[%s254 + $0x50] sm:$0xf]
      %v427 = vld [vmem:[%s254 + $0x54] sm:$0xf]
      %v428 = vld [vmem:[%s254 + $0x58] sm:$0xf]
      %v429 = vld [vmem:[%s254 + $0x5c] sm:$0xf]
      %v430 = vld [vmem:[%s254 + $0x60] sm:$0xf]
      %v431 = vld [vmem:[%s254 + $0x64] sm:$0xf]
      %v432 = vld [vmem:[%s254 + $0x68] sm:$0xf]
      %v433 = vld [vmem:[%s254 + $0x6c] sm:$0xf]
      %v434 = vld [vmem:[%s254 + $0x70] sm:$0xf]
      %v435 = vld [vmem:[%s254 + $0x74] sm:$0xf]
      %v436 = vld [vmem:[%s254 + $0x78] sm:$0xf]
      %v437 = vld [vmem:[%s254 + $0x7c] sm:$0xf]
      %v438 = vld [vmem:[%s254 + $0x80] sm:$0xf]
      %v439 = vld [vmem:[%s254 + $0x84] sm:$0xf]
      %v440 = vld [vmem:[%s254 + $0x88] sm:$0xf]
      %v441 = vld [vmem:[%s254 + $0x8c] sm:$0xf]
      %v442 = vld [vmem:[%s254 + $0x90] sm:$0xf]
      %v443 = vld [vmem:[%s254 + $0x94] sm:$0xf]
      %v444 = vld [vmem:[%s254 + $0x98] sm:$0xf]
      %v445 = vld [vmem:[%s254 + $0x9c] sm:$0xf]
      %v446 = vld [vmem:[%s254 + $0xa0] sm:$0xf]
      %v447 = vld [vmem:[%s254 + $0xa4] sm:$0xf]
      %v448 = vld [vmem:[%s254 + $0xa8] sm:$0xf]
      %v449 = vld [vmem:[%s254 + $0xac] sm:$0xf]
      %v450 = vld [vmem:[%s254 + $0xb0] sm:$0xf]
      %v451 = vld [vmem:[%s254 + $0xb4] sm:$0xf]
      %v452 = vld [vmem:[%s254 + $0xb8] sm:$0xf]
      %v453 = vld [vmem:[%s254 + $0xbc] sm:$0xf]
      %v454 = vld [vmem:[%s254 + $0xc0] sm:$0xf]
      %v455 = vld [vmem:[%s254 + $0xc4] sm:$0xf]
      %v456 = vld [vmem:[%s254 + $0xc8] sm:$0xf]
      %v457 = vld [vmem:[%s254 + $0xcc] sm:$0xf]
      %v458 = vld [vmem:[%s254 + $0xd0] sm:$0xf]
      %v459 = vld [vmem:[%s254 + $0xd4] sm:$0xf]
      %v460 = vld [vmem:[%s254 + $0xd8] sm:$0xf]
      %v461 = vld [vmem:[%s254 + $0xdc] sm:$0xf]
      %v462 = vld [vmem:[%s254 + $0xe0] sm:$0xf]
      %v463 = vld [vmem:[%s254 + $0xe4] sm:$0xf]
      %v464 = vld [vmem:[%s254 + $0xe8] sm:$0xf]
      %v465 = vld [vmem:[%s254 + $0xec] sm:$0xf]
      %v466 = vld [vmem:[%s254 + $0xf0] sm:$0xf]
      %v467 = vld [vmem:[%s254 + $0xf4] sm:$0xf]
      %v468 = vld [vmem:[%s254 + $0xf8] sm:$0xf]
      %v469 = vld [vmem:[%s254 + $0xfc] sm:$0xf]
      %v470 = vld [vmem:[%s254 + $0x100] sm:$0xf]
      %v471 = vld [vmem:[%s254 + $0x104] sm:$0xf]
      %v472 = vld [vmem:[%s254 + $0x108] sm:$0xf]
      %v473 = vld [vmem:[%s254 + $0x10c] sm:$0xf]
      %v474 = vld [vmem:[%s254 + $0x110] sm:$0xf]
      %v475 = vld [vmem:[%s254 + $0x114] sm:$0xf]
      %v476 = vld [vmem:[%s254 + $0x118] sm:$0xf]
      %v477 = vld [vmem:[%s254 + $0x11c] sm:$0xf]
      %v478 = vld [vmem:[%s254 + $0x120] sm:$0xf]
      %v479 = vld [vmem:[%s254 + $0x124] sm:$0xf]
      %v480 = vld [vmem:[%s254 + $0x128] sm:$0xf]
      %v481 = vld [vmem:[%s254 + $0x12c] sm:$0xf]
      %v482 = vld [vmem:[%s254 + $0x130] sm:$0xf]
      %v483 = vld [vmem:[%s254 + $0x134] sm:$0xf]
      %v484 = vld [vmem:[%s254 + $0x138] sm:$0xf]
      %v485 = vld [vmem:[%s254 + $0x13c] sm:$0xf]
      %v486 = vld [vmem:[%s254 + $0x140] sm:$0xf]
      %v487 = vld [vmem:[%s254 + $0x144] sm:$0xf]
      %v488 = vld [vmem:[%s254 + $0x148] sm:$0xf]
      %v489 = vld [vmem:[%s254 + $0x14c] sm:$0xf]
      %v490 = vld [vmem:[%s254 + $0x150] sm:$0xf]
      %v491 = vld [vmem:[%s254 + $0x154] sm:$0xf]
      %v492 = vld [vmem:[%s254 + $0x158] sm:$0xf]
      %v493 = vld [vmem:[%s254 + $0x15c] sm:$0xf]
      %v494 = vld [vmem:[%s254 + $0x160] sm:$0xf]
      %v495 = vld [vmem:[%s254 + $0x164] sm:$0xf]
      %v496 = vld [vmem:[%s254 + $0x168] sm:$0xf]
      %v497 = vld [vmem:[%s254 + $0x16c] sm:$0xf]
      %v498 = vld [vmem:[%s254 + $0x170] sm:$0xf]
      %v499 = vld [vmem:[%s254 + $0x174] sm:$0xf]
      %v500 = vld [vmem:[%s254 + $0x178] sm:$0xf]
      %v501 = vld [vmem:[%s254 + $0x17c] sm:$0xf]
      %v502 = vld [vmem:[%s254 + $0x180] sm:$0xf]
      %v503 = vld [vmem:[%s254 + $0x184] sm:$0xf]
      %v504 = vld [vmem:[%s254 + $0x188] sm:$0xf]
      %v505 = vld [vmem:[%s254 + $0x18c] sm:$0xf]
      %v506 = vld [vmem:[%s254 + $0x190] sm:$0xf]
      %v507 = vld [vmem:[%s254 + $0x194] sm:$0xf]
      %v508 = vld [vmem:[%s254 + $0x198] sm:$0xf]
      %v509 = vld [vmem:[%s254 + $0x19c] sm:$0xf]
      %v510 = vld [vmem:[%s254 + $0x1a0] sm:$0xf]
      %v511 = vld [vmem:[%s254 + $0x1a4] sm:$0xf]
      %v512 = vld [vmem:[%s254 + $0x1a8] sm:$0xf]
      %v513 = vld [vmem:[%s254 + $0x1ac] sm:$0xf]
      %v514 = vld [vmem:[%s254 + $0x1b0] sm:$0xf]
      %v515 = vld [vmem:[%s254 + $0x1b4] sm:$0xf]
      %v516 = vld [vmem:[%s254 + $0x1b8] sm:$0xf]
      %v517 = vld [vmem:[%s254 + $0x1bc] sm:$0xf]
      %v518 = vld [vmem:[%s254 + $0x1c0] sm:$0xf]
      %v519 = vld [vmem:[%s254 + $0x1c4] sm:$0xf]
      %v520 = vld [vmem:[%s254 + $0x1c8] sm:$0xf]
      %v521 = vld [vmem:[%s254 + $0x1cc] sm:$0xf]
      %v522 = vld [vmem:[%s254 + $0x1d0] sm:$0xf]
      %v523 = vld [vmem:[%s254 + $0x1d4] sm:$0xf]
      %v524 = vld [vmem:[%s254 + $0x1d8] sm:$0xf]
      %v525 = vld [vmem:[%s254 + $0x1dc] sm:$0xf]
      %v526 = vld [vmem:[%s254 + $0x1e0] sm:$0xf]
      %v527 = vld [vmem:[%s254 + $0x1e4] sm:$0xf]
      %v528 = vld [vmem:[%s254 + $0x1e8] sm:$0xf]
      %v529 = vld [vmem:[%s254 + $0x1ec] sm:$0xf]
      %v530 = vld [vmem:[%s254 + $0x1f0] sm:$0xf]
      %v531 = vld [vmem:[%s254 + $0x1f4] sm:$0xf]
      %v532 = vld [vmem:[%s254 + $0x1f8] sm:$0xf]
      %v533 = vld [vmem:[%s254 + $0x1fc] sm:$0xf]
      %v662 = vunpack.c.l.b16 %v278
      %v663 = vunpack.c.h.b16 %v278
      %v664 = vunpack.c.l.b16 %v279
      %v665 = vunpack.c.h.b16 %v279
      %v666 = vunpack.c.l.b16 %v280
      %v667 = vunpack.c.h.b16 %v280
      %v668 = vunpack.c.l.b16 %v281
      %v669 = vunpack.c.h.b16 %v281
      %v670 = vunpack.c.l.b16 %v282
      %v671 = vunpack.c.h.b16 %v282
      %v672 = vunpack.c.l.b16 %v283
      %v673 = vunpack.c.h.b16 %v283
      %v674 = vunpack.c.l.b16 %v284
      %v675 = vunpack.c.h.b16 %v284
      %v676 = vunpack.c.l.b16 %v285
      %v677 = vunpack.c.h.b16 %v285
      %v678 = vunpack.c.l.b16 %v286
      %v679 = vunpack.c.h.b16 %v286
      %v680 = vunpack.c.l.b16 %v287
      %v681 = vunpack.c.h.b16 %v287
      %v682 = vunpack.c.l.b16 %v288
      %v683 = vunpack.c.h.b16 %v288
      %v684 = vunpack.c.l.b16 %v289
      %v685 = vunpack.c.h.b16 %v289
      %v686 = vunpack.c.l.b16 %v290
      %v687 = vunpack.c.h.b16 %v290
      %v688 = vunpack.c.l.b16 %v291
      %v689 = vunpack.c.h.b16 %v291
      %v690 = vunpack.c.l.b16 %v292
      %v691 = vunpack.c.h.b16 %v292
      %v692 = vunpack.c.l.b16 %v293
      %v693 = vunpack.c.h.b16 %v293
      %v694 = vunpack.c.l.b16 %v294
      %v695 = vunpack.c.h.b16 %v294
      %v696 = vunpack.c.l.b16 %v295
      %v697 = vunpack.c.h.b16 %v295
      %v698 = vunpack.c.l.b16 %v296
      %v699 = vunpack.c.h.b16 %v296
      %v700 = vunpack.c.l.b16 %v297
      %v701 = vunpack.c.h.b16 %v297
      %v702 = vunpack.c.l.b16 %v298
      %v703 = vunpack.c.h.b16 %v298
      %v704 = vunpack.c.l.b16 %v299
      %v705 = vunpack.c.h.b16 %v299
      %v706 = vunpack.c.l.b16 %v300
      %v707 = vunpack.c.h.b16 %v300
      %v708 = vunpack.c.l.b16 %v301
      %v709 = vunpack.c.h.b16 %v301
      %v710 = vunpack.c.l.b16 %v302
      %v711 = vunpack.c.h.b16 %v302
      %v712 = vunpack.c.l.b16 %v303
      %v713 = vunpack.c.h.b16 %v303
      %v714 = vunpack.c.l.b16 %v304
      %v715 = vunpack.c.h.b16 %v304
      %v716 = vunpack.c.l.b16 %v305
      %v717 = vunpack.c.h.b16 %v305
      %v718 = vunpack.c.l.b16 %v306
      %v719 = vunpack.c.h.b16 %v306
      %v720 = vunpack.c.l.b16 %v307
      %v721 = vunpack.c.h.b16 %v307
      %v722 = vunpack.c.l.b16 %v308
      %v723 = vunpack.c.h.b16 %v308
      %v724 = vunpack.c.l.b16 %v309
      %v725 = vunpack.c.h.b16 %v309
      %v726 = vunpack.c.l.b16 %v310
      %v727 = vunpack.c.h.b16 %v310
      %v728 = vunpack.c.l.b16 %v311
      %v729 = vunpack.c.h.b16 %v311
      %v730 = vunpack.c.l.b16 %v312
      %v731 = vunpack.c.h.b16 %v312
      %v732 = vunpack.c.l.b16 %v313
      %v733 = vunpack.c.h.b16 %v313
      %v734 = vunpack.c.l.b16 %v314
      %v735 = vunpack.c.h.b16 %v314
      %v736 = vunpack.c.l.b16 %v315
      %v737 = vunpack.c.h.b16 %v315
      %v738 = vunpack.c.l.b16 %v316
      %v739 = vunpack.c.h.b16 %v316
      %v740 = vunpack.c.l.b16 %v317
      %v741 = vunpack.c.h.b16 %v317
      %v742 = vunpack.c.l.b16 %v318
      %v743 = vunpack.c.h.b16 %v318
      %v744 = vunpack.c.l.b16 %v319
      %v745 = vunpack.c.h.b16 %v319
      %v746 = vunpack.c.l.b16 %v320
      %v747 = vunpack.c.h.b16 %v320
      %v748 = vunpack.c.l.b16 %v321
      %v749 = vunpack.c.h.b16 %v321
      %v750 = vunpack.c.l.b16 %v322
      %v751 = vunpack.c.h.b16 %v322
      %v752 = vunpack.c.l.b16 %v323
      %v753 = vunpack.c.h.b16 %v323
      %v754 = vunpack.c.l.b16 %v324
      %v755 = vunpack.c.h.b16 %v324
      %v756 = vunpack.c.l.b16 %v325
      %v757 = vunpack.c.h.b16 %v325
      %v758 = vunpack.c.l.b16 %v326
      %v759 = vunpack.c.h.b16 %v326
      %v760 = vunpack.c.l.b16 %v327
      %v761 = vunpack.c.h.b16 %v327
      %v762 = vunpack.c.l.b16 %v328
      %v763 = vunpack.c.h.b16 %v328
      %v764 = vunpack.c.l.b16 %v329
      %v765 = vunpack.c.h.b16 %v329
      %v766 = vunpack.c.l.b16 %v330
      %v767 = vunpack.c.h.b16 %v330
      %v768 = vunpack.c.l.b16 %v331
      %v769 = vunpack.c.h.b16 %v331
      %v770 = vunpack.c.l.b16 %v332
      %v771 = vunpack.c.h.b16 %v332
      %v772 = vunpack.c.l.b16 %v333
      %v773 = vunpack.c.h.b16 %v333
      %v774 = vunpack.c.l.b16 %v334
      %v775 = vunpack.c.h.b16 %v334
      %v776 = vunpack.c.l.b16 %v335
      %v777 = vunpack.c.h.b16 %v335
      %v778 = vunpack.c.l.b16 %v336
      %v779 = vunpack.c.h.b16 %v336
      %v780 = vunpack.c.l.b16 %v337
      %v781 = vunpack.c.h.b16 %v337
      %v782 = vunpack.c.l.b16 %v338
      %v783 = vunpack.c.h.b16 %v338
      %v784 = vunpack.c.l.b16 %v339
      %v785 = vunpack.c.h.b16 %v339
      %v786 = vunpack.c.l.b16 %v340
      %v787 = vunpack.c.h.b16 %v340
      %v788 = vunpack.c.l.b16 %v341
      %v789 = vunpack.c.h.b16 %v341
      %v790 = vunpack.c.l.b16 %v342
      %v791 = vunpack.c.h.b16 %v342
      %v792 = vunpack.c.l.b16 %v343
      %v793 = vunpack.c.h.b16 %v343
      %v794 = vunpack.c.l.b16 %v344
      %v795 = vunpack.c.h.b16 %v344
      %v796 = vunpack.c.l.b16 %v345
      %v797 = vunpack.c.h.b16 %v345
      %v798 = vunpack.c.l.b16 %v346
      %v799 = vunpack.c.h.b16 %v346
      %v800 = vunpack.c.l.b16 %v347
      %v801 = vunpack.c.h.b16 %v347
      %v802 = vunpack.c.l.b16 %v348
      %v803 = vunpack.c.h.b16 %v348
      %v804 = vunpack.c.l.b16 %v349
      %v805 = vunpack.c.h.b16 %v349
      %v806 = vunpack.c.l.b16 %v350
      %v807 = vunpack.c.h.b16 %v350
      %v808 = vunpack.c.l.b16 %v351
      %v809 = vunpack.c.h.b16 %v351
      %v810 = vunpack.c.l.b16 %v352
      %v811 = vunpack.c.h.b16 %v352
      %v812 = vunpack.c.l.b16 %v353
      %v813 = vunpack.c.h.b16 %v353
      %v814 = vunpack.c.l.b16 %v354
      %v815 = vunpack.c.h.b16 %v354
      %v816 = vunpack.c.l.b16 %v355
      %v817 = vunpack.c.h.b16 %v355
      %v818 = vunpack.c.l.b16 %v356
      %v819 = vunpack.c.h.b16 %v356
      %v820 = vunpack.c.l.b16 %v357
      %v821 = vunpack.c.h.b16 %v357
      %v822 = vunpack.c.l.b16 %v358
      %v823 = vunpack.c.h.b16 %v358
      %v824 = vunpack.c.l.b16 %v359
      %v825 = vunpack.c.h.b16 %v359
      %v826 = vunpack.c.l.b16 %v360
      %v827 = vunpack.c.h.b16 %v360
      %v828 = vunpack.c.l.b16 %v361
      %v829 = vunpack.c.h.b16 %v361
      %v830 = vunpack.c.l.b16 %v362
      %v831 = vunpack.c.h.b16 %v362
      %v832 = vunpack.c.l.b16 %v363
      %v833 = vunpack.c.h.b16 %v363
      %v834 = vunpack.c.l.b16 %v364
      %v835 = vunpack.c.h.b16 %v364
      %v836 = vunpack.c.l.b16 %v365
      %v837 = vunpack.c.h.b16 %v365
      %v838 = vunpack.c.l.b16 %v366
      %v839 = vunpack.c.h.b16 %v366
      %v840 = vunpack.c.l.b16 %v367
      %v841 = vunpack.c.h.b16 %v367
      %v842 = vunpack.c.l.b16 %v368
      %v843 = vunpack.c.h.b16 %v368
      %v844 = vunpack.c.l.b16 %v369
      %v845 = vunpack.c.h.b16 %v369
      %v846 = vunpack.c.l.b16 %v370
      %v847 = vunpack.c.h.b16 %v370
      %v848 = vunpack.c.l.b16 %v371
      %v849 = vunpack.c.h.b16 %v371
      %v850 = vunpack.c.l.b16 %v372
      %v851 = vunpack.c.h.b16 %v372
      %v852 = vunpack.c.l.b16 %v373
      %v853 = vunpack.c.h.b16 %v373
      %v854 = vunpack.c.l.b16 %v374
      %v855 = vunpack.c.h.b16 %v374
      %v856 = vunpack.c.l.b16 %v375
      %v857 = vunpack.c.h.b16 %v375
      %v858 = vunpack.c.l.b16 %v376
      %v859 = vunpack.c.h.b16 %v376
      %v860 = vunpack.c.l.b16 %v377
      %v861 = vunpack.c.h.b16 %v377
      %v862 = vunpack.c.l.b16 %v378
      %v863 = vunpack.c.h.b16 %v378
      %v864 = vunpack.c.l.b16 %v379
      %v865 = vunpack.c.h.b16 %v379
      %v866 = vunpack.c.l.b16 %v380
      %v867 = vunpack.c.h.b16 %v380
      %v868 = vunpack.c.l.b16 %v381
      %v869 = vunpack.c.h.b16 %v381
      %v870 = vunpack.c.l.b16 %v382
      %v871 = vunpack.c.h.b16 %v382
      %v872 = vunpack.c.l.b16 %v383
      %v873 = vunpack.c.h.b16 %v383
      %v874 = vunpack.c.l.b16 %v384
      %v875 = vunpack.c.h.b16 %v384
      %v876 = vunpack.c.l.b16 %v385
      %v877 = vunpack.c.h.b16 %v385
      %v878 = vunpack.c.l.b16 %v386
      %v879 = vunpack.c.h.b16 %v386
      %v880 = vunpack.c.l.b16 %v387
      %v881 = vunpack.c.h.b16 %v387
      %v882 = vunpack.c.l.b16 %v388
      %v883 = vunpack.c.h.b16 %v388
      %v884 = vunpack.c.l.b16 %v389
      %v885 = vunpack.c.h.b16 %v389
      %v886 = vunpack.c.l.b16 %v390
      %v887 = vunpack.c.h.b16 %v390
      %v888 = vunpack.c.l.b16 %v391
      %v889 = vunpack.c.h.b16 %v391
      %v890 = vunpack.c.l.b16 %v392
      %v891 = vunpack.c.h.b16 %v392
      %v892 = vunpack.c.l.b16 %v393
      %v893 = vunpack.c.h.b16 %v393
      %v894 = vunpack.c.l.b16 %v394
      %v895 = vunpack.c.h.b16 %v394
      %v896 = vunpack.c.l.b16 %v395
      %v897 = vunpack.c.h.b16 %v395
      %v898 = vunpack.c.l.b16 %v396
      %v899 = vunpack.c.h.b16 %v396
      %v900 = vunpack.c.l.b16 %v397
      %v901 = vunpack.c.h.b16 %v397
      %v902 = vunpack.c.l.b16 %v398
      %v903 = vunpack.c.h.b16 %v398
      %v904 = vunpack.c.l.b16 %v399
      %v905 = vunpack.c.h.b16 %v399
      %v906 = vunpack.c.l.b16 %v400
      %v907 = vunpack.c.h.b16 %v400
      %v908 = vunpack.c.l.b16 %v401
      %v909 = vunpack.c.h.b16 %v401
      %v910 = vunpack.c.l.b16 %v402
      %v911 = vunpack.c.h.b16 %v402
      %v912 = vunpack.c.l.b16 %v403
      %v913 = vunpack.c.h.b16 %v403
      %v914 = vunpack.c.l.b16 %v404
      %v915 = vunpack.c.h.b16 %v404
      %v916 = vunpack.c.l.b16 %v405
      %v917 = vunpack.c.h.b16 %v405
      %v918 = vpack.c.b16 %v670, %v662
      %v919 = vpack.c.b16 %v671, %v663
      %v920 = vpack.c.b16 %v672, %v664
      %v921 = vpack.c.b16 %v673, %v665
      %v922 = vpack.c.b16 %v674, %v666
      %v923 = vpack.c.b16 %v675, %v667
      %v924 = vpack.c.b16 %v676, %v668
      %v925 = vpack.c.b16 %v677, %v669
      %v926 = vpack.c.b16 %v686, %v678
      %v927 = vpack.c.b16 %v687, %v679
      %v928 = vpack.c.b16 %v688, %v680
      %v929 = vpack.c.b16 %v689, %v681
      %v930 = vpack.c.b16 %v690, %v682
      %v931 = vpack.c.b16 %v691, %v683
      %v932 = vpack.c.b16 %v692, %v684
      %v933 = vpack.c.b16 %v693, %v685
      %v934 = vpack.c.b16 %v702, %v694
      %v935 = vpack.c.b16 %v703, %v695
      %v936 = vpack.c.b16 %v704, %v696
      %v937 = vpack.c.b16 %v705, %v697
      %v938 = vpack.c.b16 %v706, %v698
      %v939 = vpack.c.b16 %v707, %v699
      %v940 = vpack.c.b16 %v708, %v700
      %v941 = vpack.c.b16 %v709, %v701
      %v942 = vpack.c.b16 %v718, %v710
      %v943 = vpack.c.b16 %v719, %v711
      %v944 = vpack.c.b16 %v720, %v712
      %v945 = vpack.c.b16 %v721, %v713
      %v946 = vpack.c.b16 %v722, %v714
      %v947 = vpack.c.b16 %v723, %v715
      %v948 = vpack.c.b16 %v724, %v716
      %v949 = vpack.c.b16 %v725, %v717
      %v950 = vpack.c.b16 %v734, %v726
      %v951 = vpack.c.b16 %v735, %v727
      %v952 = vpack.c.b16 %v736, %v728
      %v953 = vpack.c.b16 %v737, %v729
      %v954 = vpack.c.b16 %v738, %v730
      %v955 = vpack.c.b16 %v739, %v731
      %v956 = vpack.c.b16 %v740, %v732
      %v957 = vpack.c.b16 %v741, %v733
      %v958 = vpack.c.b16 %v750, %v742
      %v959 = vpack.c.b16 %v751, %v743
      %v960 = vpack.c.b16 %v752, %v744
      %v961 = vpack.c.b16 %v753, %v745
      %v962 = vpack.c.b16 %v754, %v746
      %v963 = vpack.c.b16 %v755, %v747
      %v964 = vpack.c.b16 %v756, %v748
      %v965 = vpack.c.b16 %v757, %v749
      %v966 = vpack.c.b16 %v766, %v758
      %v967 = vpack.c.b16 %v767, %v759
      %v968 = vpack.c.b16 %v768, %v760
      %v969 = vpack.c.b16 %v769, %v761
      %v970 = vpack.c.b16 %v770, %v762
      %v971 = vpack.c.b16 %v771, %v763
      %v972 = vpack.c.b16 %v772, %v764
      %v973 = vpack.c.b16 %v773, %v765
      %v974 = vpack.c.b16 %v782, %v774
      %v975 = vpack.c.b16 %v783, %v775
      %v976 = vpack.c.b16 %v784, %v776
      %v977 = vpack.c.b16 %v785, %v777
      %v978 = vpack.c.b16 %v786, %v778
      %v979 = vpack.c.b16 %v787, %v779
      %v980 = vpack.c.b16 %v788, %v780
      %v981 = vpack.c.b16 %v789, %v781
      %v982 = vpack.c.b16 %v798, %v790
      %v983 = vpack.c.b16 %v799, %v791
      %v984 = vpack.c.b16 %v800, %v792
      %v985 = vpack.c.b16 %v801, %v793
      %v986 = vpack.c.b16 %v802, %v794
      %v987 = vpack.c.b16 %v803, %v795
      %v988 = vpack.c.b16 %v804, %v796
      %v989 = vpack.c.b16 %v805, %v797
      %v990 = vpack.c.b16 %v814, %v806
      %v991 = vpack.c.b16 %v815, %v807
      %v992 = vpack.c.b16 %v816, %v808
      %v993 = vpack.c.b16 %v817, %v809
      %v994 = vpack.c.b16 %v818, %v810
      %v995 = vpack.c.b16 %v819, %v811
      %v996 = vpack.c.b16 %v820, %v812
      %v997 = vpack.c.b16 %v821, %v813
      %v998 = vpack.c.b16 %v830, %v822
      %v999 = vpack.c.b16 %v831, %v823
      %v1000 = vpack.c.b16 %v832, %v824
      %v1001 = vpack.c.b16 %v833, %v825
      %v1002 = vpack.c.b16 %v834, %v826
      %v1003 = vpack.c.b16 %v835, %v827
      %v1004 = vpack.c.b16 %v836, %v828
      %v1005 = vpack.c.b16 %v837, %v829
      %v1006 = vpack.c.b16 %v846, %v838
      %v1007 = vpack.c.b16 %v847, %v839
      %v1008 = vpack.c.b16 %v848, %v840
      %v1009 = vpack.c.b16 %v849, %v841
      %v1010 = vpack.c.b16 %v850, %v842
      %v1011 = vpack.c.b16 %v851, %v843
      %v1012 = vpack.c.b16 %v852, %v844
      %v1013 = vpack.c.b16 %v853, %v845
      %v1014 = vpack.c.b16 %v862, %v854
      %v1015 = vpack.c.b16 %v863, %v855
      %v1016 = vpack.c.b16 %v864, %v856
      %v1017 = vpack.c.b16 %v865, %v857
      %v1018 = vpack.c.b16 %v866, %v858
      %v1019 = vpack.c.b16 %v867, %v859
      %v1020 = vpack.c.b16 %v868, %v860
      %v1021 = vpack.c.b16 %v869, %v861
      %v1022 = vpack.c.b16 %v878, %v870
      %v1023 = vpack.c.b16 %v879, %v871
      %v1024 = vpack.c.b16 %v880, %v872
      %v1025 = vpack.c.b16 %v881, %v873
      %v1026 = vpack.c.b16 %v882, %v874
      %v1027 = vpack.c.b16 %v883, %v875
      %v1028 = vpack.c.b16 %v884, %v876
      %v1029 = vpack.c.b16 %v885, %v877
      %v1030 = vpack.c.b16 %v894, %v886
      %v1031 = vpack.c.b16 %v895, %v887
      %v1032 = vpack.c.b16 %v896, %v888
      %v1033 = vpack.c.b16 %v897, %v889
      %v1034 = vpack.c.b16 %v898, %v890
      %v1035 = vpack.c.b16 %v899, %v891
      %v1036 = vpack.c.b16 %v900, %v892
      %v1037 = vpack.c.b16 %v901, %v893
      %v1038 = vpack.c.b16 %v910, %v902
      %v1039 = vpack.c.b16 %v911, %v903
      %v1040 = vpack.c.b16 %v912, %v904
      %v1041 = vpack.c.b16 %v913, %v905
      %v1042 = vpack.c.b16 %v914, %v906
      %v1043 = vpack.c.b16 %v915, %v907
      %v1044 = vpack.c.b16 %v916, %v908
      %v1045 = vpack.c.b16 %v917, %v909
      %v1302 = vunpack.c.l.b16 %v406
      %v1303 = vunpack.c.l.b16 %v407
      %v1304 = vunpack.c.l.b16 %v408
      %v1305 = vunpack.c.l.b16 %v409
      %v1306 = vunpack.c.l.b16 %v410
      %v1307 = vunpack.c.l.b16 %v411
      %v1308 = vunpack.c.l.b16 %v412
      %v1309 = vunpack.c.l.b16 %v413
      %v1310 = vunpack.c.l.b16 %v414
      %v1311 = vunpack.c.l.b16 %v415
      %v1312 = vunpack.c.l.b16 %v416
      %v1313 = vunpack.c.l.b16 %v417
      %v1314 = vunpack.c.l.b16 %v418
      %v1315 = vunpack.c.l.b16 %v419
      %v1316 = vunpack.c.l.b16 %v420
      %v1317 = vunpack.c.l.b16 %v421
      %v1318 = vunpack.c.l.b16 %v422
      %v1319 = vunpack.c.l.b16 %v423
      %v1320 = vunpack.c.l.b16 %v424
      %v1321 = vunpack.c.l.b16 %v425
      %v1322 = vunpack.c.l.b16 %v426
      %v1323 = vunpack.c.l.b16 %v427
      %v1324 = vunpack.c.l.b16 %v428
      %v1325 = vunpack.c.l.b16 %v429
      %v1326 = vunpack.c.l.b16 %v430
      %v1327 = vunpack.c.l.b16 %v431
      %v1328 = vunpack.c.l.b16 %v432
      %v1329 = vunpack.c.l.b16 %v433
      %v1330 = vunpack.c.l.b16 %v434
      %v1331 = vunpack.c.l.b16 %v435
      %v1332 = vunpack.c.l.b16 %v436
      %v1333 = vunpack.c.l.b16 %v437
      %v1334 = vunpack.c.l.b16 %v438
      %v1335 = vunpack.c.l.b16 %v439
      %v1336 = vunpack.c.l.b16 %v440
      %v1337 = vunpack.c.l.b16 %v441
      %v1338 = vunpack.c.l.b16 %v442
      %v1339 = vunpack.c.l.b16 %v443
      %v1340 = vunpack.c.l.b16 %v444
      %v1341 = vunpack.c.l.b16 %v445
      %v1342 = vunpack.c.l.b16 %v446
      %v1343 = vunpack.c.l.b16 %v447
      %v1344 = vunpack.c.l.b16 %v448
      %v1345 = vunpack.c.l.b16 %v449
      %v1346 = vunpack.c.l.b16 %v450
      %v1347 = vunpack.c.l.b16 %v451
      %v1348 = vunpack.c.l.b16 %v452
      %v1349 = vunpack.c.l.b16 %v453
      %v1350 = vunpack.c.l.b16 %v454
      %v1351 = vunpack.c.l.b16 %v455
      %v1352 = vunpack.c.l.b16 %v456
      %v1353 = vunpack.c.l.b16 %v457
      %v1354 = vunpack.c.l.b16 %v458
      %v1355 = vunpack.c.l.b16 %v459
      %v1356 = vunpack.c.l.b16 %v460
      %v1357 = vunpack.c.l.b16 %v461
      %v1358 = vunpack.c.l.b16 %v462
      %v1359 = vunpack.c.l.b16 %v463
      %v1360 = vunpack.c.l.b16 %v464
      %v1361 = vunpack.c.l.b16 %v465
      %v1362 = vunpack.c.l.b16 %v466
      %v1363 = vunpack.c.l.b16 %v467
      %v1364 = vunpack.c.l.b16 %v468
      %v1365 = vunpack.c.l.b16 %v469
      %v1366 = vunpack.c.l.b16 %v470
      %v1367 = vunpack.c.l.b16 %v471
      %v1368 = vunpack.c.l.b16 %v472
      %v1369 = vunpack.c.l.b16 %v473
      %v1370 = vunpack.c.l.b16 %v474
      %v1371 = vunpack.c.l.b16 %v475
      %v1372 = vunpack.c.l.b16 %v476
      %v1373 = vunpack.c.l.b16 %v477
      %v1374 = vunpack.c.l.b16 %v478
      %v1375 = vunpack.c.l.b16 %v479
      %v1376 = vunpack.c.l.b16 %v480
      %v1377 = vunpack.c.l.b16 %v481
      %v1378 = vunpack.c.l.b16 %v482
      %v1379 = vunpack.c.l.b16 %v483
      %v1380 = vunpack.c.l.b16 %v484
      %v1381 = vunpack.c.l.b16 %v485
      %v1382 = vunpack.c.l.b16 %v486
      %v1383 = vunpack.c.l.b16 %v487
      %v1384 = vunpack.c.l.b16 %v488
      %v1385 = vunpack.c.l.b16 %v489
      %v1386 = vunpack.c.l.b16 %v490
      %v1387 = vunpack.c.l.b16 %v491
      %v1388 = vunpack.c.l.b16 %v492
      %v1389 = vunpack.c.l.b16 %v493
      %v1390 = vunpack.c.l.b16 %v494
      %v1391 = vunpack.c.l.b16 %v495
      %v1392 = vunpack.c.l.b16 %v496
      %v1393 = vunpack.c.l.b16 %v497
      %v1394 = vunpack.c.l.b16 %v498
      %v1395 = vunpack.c.l.b16 %v499
      %v1396 = vunpack.c.l.b16 %v500
      %v1397 = vunpack.c.l.b16 %v501
      %v1398 = vunpack.c.l.b16 %v502
      %v1399 = vunpack.c.l.b16 %v503
      %v1400 = vunpack.c.l.b16 %v504
      %v1401 = vunpack.c.l.b16 %v505
      %v1402 = vunpack.c.l.b16 %v506
      %v1403 = vunpack.c.l.b16 %v507
      %v1404 = vunpack.c.l.b16 %v508
      %v1405 = vunpack.c.l.b16 %v509
      %v1406 = vunpack.c.l.b16 %v510
      %v1407 = vunpack.c.l.b16 %v511
      %v1408 = vunpack.c.l.b16 %v512
      %v1409 = vunpack.c.l.b16 %v513
      %v1410 = vunpack.c.l.b16 %v514
      %v1411 = vunpack.c.l.b16 %v515
      %v1412 = vunpack.c.l.b16 %v516
      %v1413 = vunpack.c.l.b16 %v517
      %v1414 = vunpack.c.l.b16 %v518
      %v1415 = vunpack.c.l.b16 %v519
      %v1416 = vunpack.c.l.b16 %v520
      %v1417 = vunpack.c.l.b16 %v521
      %v1418 = vunpack.c.l.b16 %v522
      %v1419 = vunpack.c.l.b16 %v523
      %v1420 = vunpack.c.l.b16 %v524
      %v1421 = vunpack.c.l.b16 %v525
      %v1422 = vunpack.c.l.b16 %v526
      %v1423 = vunpack.c.l.b16 %v527
      %v1424 = vunpack.c.l.b16 %v528
      %v1425 = vunpack.c.l.b16 %v529
      %v1426 = vunpack.c.l.b16 %v530
      %v1427 = vunpack.c.l.b16 %v531
      %v1428 = vunpack.c.l.b16 %v532
      %v1429 = vunpack.c.l.b16 %v533
      %v1430 = vpack.c.b16 %v1303, %v1302
      %v1431 = vpack.c.b16 %v1305, %v1304
      %v1432 = vpack.c.b16 %v1307, %v1306
      %v1433 = vpack.c.b16 %v1309, %v1308
      %v1434 = vpack.c.b16 %v1311, %v1310
      %v1435 = vpack.c.b16 %v1313, %v1312
      %v1436 = vpack.c.b16 %v1315, %v1314
      %v1437 = vpack.c.b16 %v1317, %v1316
      %v1438 = vpack.c.b16 %v1319, %v1318
      %v1439 = vpack.c.b16 %v1321, %v1320
      %v1440 = vpack.c.b16 %v1323, %v1322
      %v1441 = vpack.c.b16 %v1325, %v1324
      %v1442 = vpack.c.b16 %v1327, %v1326
      %v1443 = vpack.c.b16 %v1329, %v1328
      %v1444 = vpack.c.b16 %v1331, %v1330
      %v1445 = vpack.c.b16 %v1333, %v1332
      %v1446 = vpack.c.b16 %v1335, %v1334
      %v1447 = vpack.c.b16 %v1337, %v1336
      %v1448 = vpack.c.b16 %v1339, %v1338
      %v1449 = vpack.c.b16 %v1341, %v1340
      %v1450 = vpack.c.b16 %v1343, %v1342
      %v1451 = vpack.c.b16 %v1345, %v1344
      %v1452 = vpack.c.b16 %v1347, %v1346
      %v1453 = vpack.c.b16 %v1349, %v1348
      %v1454 = vpack.c.b16 %v1351, %v1350
      %v1455 = vpack.c.b16 %v1353, %v1352
      %v1456 = vpack.c.b16 %v1355, %v1354
      %v1457 = vpack.c.b16 %v1357, %v1356
      %v1458 = vpack.c.b16 %v1359, %v1358
      %v1459 = vpack.c.b16 %v1361, %v1360
      %v1460 = vpack.c.b16 %v1363, %v1362
      %v1461 = vpack.c.b16 %v1365, %v1364
      %v1462 = vpack.c.b16 %v1367, %v1366
      %v1463 = vpack.c.b16 %v1369, %v1368
      %v1464 = vpack.c.b16 %v1371, %v1370
      %v1465 = vpack.c.b16 %v1373, %v1372
      %v1466 = vpack.c.b16 %v1375, %v1374
      %v1467 = vpack.c.b16 %v1377, %v1376
      %v1468 = vpack.c.b16 %v1379, %v1378
      %v1469 = vpack.c.b16 %v1381, %v1380
      %v1470 = vpack.c.b16 %v1383, %v1382
      %v1471 = vpack.c.b16 %v1385, %v1384
      %v1472 = vpack.c.b16 %v1387, %v1386
      %v1473 = vpack.c.b16 %v1389, %v1388
      %v1474 = vpack.c.b16 %v1391, %v1390
      %v1475 = vpack.c.b16 %v1393, %v1392
      %v1476 = vpack.c.b16 %v1395, %v1394
      %v1477 = vpack.c.b16 %v1397, %v1396
      %v1478 = vpack.c.b16 %v1399, %v1398
      %v1479 = vpack.c.b16 %v1401, %v1400
      %v1480 = vpack.c.b16 %v1403, %v1402
      %v1481 = vpack.c.b16 %v1405, %v1404
      %v1482 = vpack.c.b16 %v1407, %v1406
      %v1483 = vpack.c.b16 %v1409, %v1408
      %v1484 = vpack.c.b16 %v1411, %v1410
      %v1485 = vpack.c.b16 %v1413, %v1412
      %v1486 = vpack.c.b16 %v1415, %v1414
      %v1487 = vpack.c.b16 %v1417, %v1416
      %v1488 = vpack.c.b16 %v1419, %v1418
      %v1489 = vpack.c.b16 %v1421, %v1420
      %v1490 = vpack.c.b16 %v1423, %v1422
      %v1491 = vpack.c.b16 %v1425, %v1424
      %v1492 = vpack.c.b16 %v1427, %v1426
      %v1493 = vpack.c.b16 %v1429, %v1428
      %1558 = vmatpush.bf16.msra.mxu0 %v1437
      %1559 = vmatpush.bf16.msra.mxu0 %v1436
      %1560 = vmatpush.bf16.msra.mxu0 %v1435
      %1561 = vmatpush.bf16.msra.mxu0 %v1434
      %1562 = vmatpush.bf16.msra.mxu0 %v1433
      %1563 = vmatpush.bf16.msra.mxu0 %v1432
      %1564 = vmatpush.bf16.msra.mxu0 %v1431
      %1565 = vmatpush.bf16.msra.mxu0 %v1430
      %1566 = vmatmul.bf16.gmra.mxu0 %v918
      %v1567 = vpop.f32.mrf.mxu0
      %v1568 = vadd.f32 0.0, %v1567
      %v1569 = vpop.f32.mrf.mxu0
      %v1570 = vadd.f32 0.0, %v1569
      %1571 = vmatmul.bf16.gmra.mxu0 %v926
      %v1572 = vpop.f32.mrf.mxu0
      %v1573 = vadd.f32 0.0, %v1572
      %v1574 = vpop.f32.mrf.mxu0
      %v1575 = vadd.f32 0.0, %v1574
      %1576 = vmatmul.bf16.gmra.mxu0 %v934
      %v1577 = vpop.f32.mrf.mxu0
      %v1578 = vadd.f32 0.0, %v1577
      %v1579 = vpop.f32.mrf.mxu0
      %v1580 = vadd.f32 0.0, %v1579
      %1581 = vmatmul.bf16.gmra.mxu0 %v942
      %v1582 = vpop.f32.mrf.mxu0
      %v1583 = vadd.f32 0.0, %v1582
      %v1584 = vpop.f32.mrf.mxu0
      %v1585 = vadd.f32 0.0, %v1584
      %1586 = vmatmul.bf16.gmra.mxu0 %v950
      %v1587 = vpop.f32.mrf.mxu0
      %v1588 = vadd.f32 0.0, %v1587
      %v1589 = vpop.f32.mrf.mxu0
      %v1590 = vadd.f32 0.0, %v1589
      %1591 = vmatmul.bf16.gmra.mxu0 %v958
      %v1592 = vpop.f32.mrf.mxu0
      %v1593 = vadd.f32 0.0, %v1592
      %v1594 = vpop.f32.mrf.mxu0
      %v1595 = vadd.f32 0.0, %v1594
      %1596 = vmatmul.bf16.gmra.mxu0 %v966
      %v1597 = vpop.f32.mrf.mxu0
      %v1598 = vadd.f32 0.0, %v1597
      %v1599 = vpop.f32.mrf.mxu0
      %v1600 = vadd.f32 0.0, %v1599
      %1601 = vmatmul.bf16.gmra.mxu0 %v974
      %v1602 = vpop.f32.mrf.mxu0
      %v1603 = vadd.f32 0.0, %v1602
      %v1604 = vpop.f32.mrf.mxu0
      %v1605 = vadd.f32 0.0, %v1604
      %1606 = vmatmul.bf16.gmra.mxu0 %v982
      %v1607 = vpop.f32.mrf.mxu0
      %v1608 = vadd.f32 0.0, %v1607
      %v1609 = vpop.f32.mrf.mxu0
      %v1610 = vadd.f32 0.0, %v1609
      %1611 = vmatmul.bf16.gmra.mxu0 %v990
      %v1612 = vpop.f32.mrf.mxu0
      %v1613 = vadd.f32 0.0, %v1612
      %v1614 = vpop.f32.mrf.mxu0
      %v1615 = vadd.f32 0.0, %v1614
      %1616 = vmatmul.bf16.gmra.mxu0 %v998
      %v1617 = vpop.f32.mrf.mxu0
      %v1618 = vadd.f32 0.0, %v1617
      %v1619 = vpop.f32.mrf.mxu0
      %v1620 = vadd.f32 0.0, %v1619
      %1621 = vmatmul.bf16.gmra.mxu0 %v1006
      %v1622 = vpop.f32.mrf.mxu0
      %v1623 = vadd.f32 0.0, %v1622
      %v1624 = vpop.f32.mrf.mxu0
      %v1625 = vadd.f32 0.0, %v1624
      %1626 = vmatmul.bf16.gmra.mxu0 %v1014
      %v1627 = vpop.f32.mrf.mxu0
      %v1628 = vadd.f32 0.0, %v1627
      %v1629 = vpop.f32.mrf.mxu0
      %v1630 = vadd.f32 0.0, %v1629
      %1631 = vmatmul.bf16.gmra.mxu0 %v1022
      %v1632 = vpop.f32.mrf.mxu0
      %v1633 = vadd.f32 0.0, %v1632
      %v1634 = vpop.f32.mrf.mxu0
      %v1635 = vadd.f32 0.0, %v1634
      %1636 = vmatmul.bf16.gmra.mxu0 %v1030
      %v1637 = vpop.f32.mrf.mxu0
      %v1638 = vadd.f32 0.0, %v1637
      %v1639 = vpop.f32.mrf.mxu0
      %v1640 = vadd.f32 0.0, %v1639
      %1641 = vmatmul.bf16.gmra.mxu0 %v1038
      %v1642 = vpop.f32.mrf.mxu0
      %v1643 = vadd.f32 0.0, %v1642
      %v1644 = vpop.f32.mrf.mxu0
      %v1645 = vadd.f32 0.0, %v1644
      %1646 = vdwg.mxu0
      %1647 = vmatpush.bf16.msra.mxu0 %v1445
      %1648 = vmatpush.bf16.msra.mxu0 %v1444
      %1649 = vmatpush.bf16.msra.mxu0 %v1443
      %1650 = vmatpush.bf16.msra.mxu0 %v1442
      %1651 = vmatpush.bf16.msra.mxu0 %v1441
      %1652 = vmatpush.bf16.msra.mxu0 %v1440
      %1653 = vmatpush.bf16.msra.mxu0 %v1439
      %1654 = vmatpush.bf16.msra.mxu0 %v1438
      %1655 = vmatmul.bf16.gmra.mxu0 %v919
      %v1656 = vpop.f32.mrf.mxu0
      %v1657 = vadd.f32 %v1568, %v1656
      %v1658 = vpop.f32.mrf.mxu0
      %v1659 = vadd.f32 %v1570, %v1658
      %1660 = vmatmul.bf16.gmra.mxu0 %v927
      %v1661 = vpop.f32.mrf.mxu0
      %v1662 = vadd.f32 %v1573, %v1661
      %v1663 = vpop.f32.mrf.mxu0
      %v1664 = vadd.f32 %v1575, %v1663
      %1665 = vmatmul.bf16.gmra.mxu0 %v935
      %v1666 = vpop.f32.mrf.mxu0
      %v1667 = vadd.f32 %v1578, %v1666
      %v1668 = vpop.f32.mrf.mxu0
      %v1669 = vadd.f32 %v1580, %v1668
      %1670 = vmatmul.bf16.gmra.mxu0 %v943
      %v1671 = vpop.f32.mrf.mxu0
      %v1672 = vadd.f32 %v1583, %v1671
      %v1673 = vpop.f32.mrf.mxu0
      %v1674 = vadd.f32 %v1585, %v1673
      %1675 = vmatmul.bf16.gmra.mxu0 %v951
      %v1676 = vpop.f32.mrf.mxu0
      %v1677 = vadd.f32 %v1588, %v1676
      %v1678 = vpop.f32.mrf.mxu0
      %v1679 = vadd.f32 %v1590, %v1678
      %1680 = vmatmul.bf16.gmra.mxu0 %v959
      %v1681 = vpop.f32.mrf.mxu0
      %v1682 = vadd.f32 %v1593, %v1681
      %v1683 = vpop.f32.mrf.mxu0
      %v1684 = vadd.f32 %v1595, %v1683
      %1685 = vmatmul.bf16.gmra.mxu0 %v967
      %v1686 = vpop.f32.mrf.mxu0
      %v1687 = vadd.f32 %v1598, %v1686
      %v1688 = vpop.f32.mrf.mxu0
      %v1689 = vadd.f32 %v1600, %v1688
      %1690 = vmatmul.bf16.gmra.mxu0 %v975
      %v1691 = vpop.f32.mrf.mxu0
      %v1692 = vadd.f32 %v1603, %v1691
      %v1693 = vpop.f32.mrf.mxu0
      %v1694 = vadd.f32 %v1605, %v1693
      %1695 = vmatmul.bf16.gmra.mxu0 %v983
      %v1696 = vpop.f32.mrf.mxu0
      %v1697 = vadd.f32 %v1608, %v1696
      %v1698 = vpop.f32.mrf.mxu0
      %v1699 = vadd.f32 %v1610, %v1698
      %1700 = vmatmul.bf16.gmra.mxu0 %v991
      %v1701 = vpop.f32.mrf.mxu0
      %v1702 = vadd.f32 %v1613, %v1701
      %v1703 = vpop.f32.mrf.mxu0
      %v1704 = vadd.f32 %v1615, %v1703
      %1705 = vmatmul.bf16.gmra.mxu0 %v999
      %v1706 = vpop.f32.mrf.mxu0
      %v1707 = vadd.f32 %v1618, %v1706
      %v1708 = vpop.f32.mrf.mxu0
      %v1709 = vadd.f32 %v1620, %v1708
      %1710 = vmatmul.bf16.gmra.mxu0 %v1007
      %v1711 = vpop.f32.mrf.mxu0
      %v1712 = vadd.f32 %v1623, %v1711
      %v1713 = vpop.f32.mrf.mxu0
      %v1714 = vadd.f32 %v1625, %v1713
      %1715 = vmatmul.bf16.gmra.mxu0 %v1015
      %v1716 = vpop.f32.mrf.mxu0
      %v1717 = vadd.f32 %v1628, %v1716
      %v1718 = vpop.f32.mrf.mxu0
      %v1719 = vadd.f32 %v1630, %v1718
      %1720 = vmatmul.bf16.gmra.mxu0 %v1023
      %v1721 = vpop.f32.mrf.mxu0
      %v1722 = vadd.f32 %v1633, %v1721
      %v1723 = vpop.f32.mrf.mxu0
      %v1724 = vadd.f32 %v1635, %v1723
      %1725 = vmatmul.bf16.gmra.mxu0 %v1031
      %v1726 = vpop.f32.mrf.mxu0
      %v1727 = vadd.f32 %v1638, %v1726
      %v1728 = vpop.f32.mrf.mxu0
      %v1729 = vadd.f32 %v1640, %v1728
      %1730 = vmatmul.bf16.gmra.mxu0 %v1039
      %v1731 = vpop.f32.mrf.mxu0
      %v1732 = vadd.f32 %v1643, %v1731
      %v1733 = vpop.f32.mrf.mxu0
      %v1734 = vadd.f32 %v1645, %v1733
      %1735 = vdwg.mxu0
      %1736 = vmatpush.bf16.msra.mxu0 %v1453
      %1737 = vmatpush.bf16.msra.mxu0 %v1452
      %1738 = vmatpush.bf16.msra.mxu0 %v1451
      %1739 = vmatpush.bf16.msra.mxu0 %v1450
      %1740 = vmatpush.bf16.msra.mxu0 %v1449
      %1741 = vmatpush.bf16.msra.mxu0 %v1448
      %1742 = vmatpush.bf16.msra.mxu0 %v1447
      %1743 = vmatpush.bf16.msra.mxu0 %v1446
      %1744 = vmatmul.bf16.gmra.mxu0 %v920
      %v1745 = vpop.f32.mrf.mxu0
      %v1746 = vadd.f32 %v1657, %v1745
      %v1747 = vpop.f32.mrf.mxu0
      %v1748 = vadd.f32 %v1659, %v1747
      %1749 = vmatmul.bf16.gmra.mxu0 %v928
      %v1750 = vpop.f32.mrf.mxu0
      %v1751 = vadd.f32 %v1662, %v1750
      %v1752 = vpop.f32.mrf.mxu0
      %v1753 = vadd.f32 %v1664, %v1752
      %1754 = vmatmul.bf16.gmra.mxu0 %v936
      %v1755 = vpop.f32.mrf.mxu0
      %v1756 = vadd.f32 %v1667, %v1755
      %v1757 = vpop.f32.mrf.mxu0
      %v1758 = vadd.f32 %v1669, %v1757
      %1759 = vmatmul.bf16.gmra.mxu0 %v944
      %v1760 = vpop.f32.mrf.mxu0
      %v1761 = vadd.f32 %v1672, %v1760
      %v1762 = vpop.f32.mrf.mxu0
      %v1763 = vadd.f32 %v1674, %v1762
      %1764 = vmatmul.bf16.gmra.mxu0 %v952
      %v1765 = vpop.f32.mrf.mxu0
      %v1766 = vadd.f32 %v1677, %v1765
      %v1767 = vpop.f32.mrf.mxu0
      %v1768 = vadd.f32 %v1679, %v1767
      %1769 = vmatmul.bf16.gmra.mxu0 %v960
      %v1770 = vpop.f32.mrf.mxu0
      %v1771 = vadd.f32 %v1682, %v1770
      %v1772 = vpop.f32.mrf.mxu0
      %v1773 = vadd.f32 %v1684, %v1772
      %1774 = vmatmul.bf16.gmra.mxu0 %v968
      %v1775 = vpop.f32.mrf.mxu0
      %v1776 = vadd.f32 %v1687, %v1775
      %v1777 = vpop.f32.mrf.mxu0
      %v1778 = vadd.f32 %v1689, %v1777
      %1779 = vmatmul.bf16.gmra.mxu0 %v976
      %v1780 = vpop.f32.mrf.mxu0
      %v1781 = vadd.f32 %v1692, %v1780
      %v1782 = vpop.f32.mrf.mxu0
      %v1783 = vadd.f32 %v1694, %v1782
      %1784 = vmatmul.bf16.gmra.mxu0 %v984
      %v1785 = vpop.f32.mrf.mxu0
      %v1786 = vadd.f32 %v1697, %v1785
      %v1787 = vpop.f32.mrf.mxu0
      %v1788 = vadd.f32 %v1699, %v1787
      %1789 = vmatmul.bf16.gmra.mxu0 %v992
      %v1790 = vpop.f32.mrf.mxu0
      %v1791 = vadd.f32 %v1702, %v1790
      %v1792 = vpop.f32.mrf.mxu0
      %v1793 = vadd.f32 %v1704, %v1792
      %1794 = vmatmul.bf16.gmra.mxu0 %v1000
      %v1795 = vpop.f32.mrf.mxu0
      %v1796 = vadd.f32 %v1707, %v1795
      %v1797 = vpop.f32.mrf.mxu0
      %v1798 = vadd.f32 %v1709, %v1797
      %1799 = vmatmul.bf16.gmra.mxu0 %v1008
      %v1800 = vpop.f32.mrf.mxu0
      %v1801 = vadd.f32 %v1712, %v1800
      %v1802 = vpop.f32.mrf.mxu0
      %v1803 = vadd.f32 %v1714, %v1802
      %1804 = vmatmul.bf16.gmra.mxu0 %v1016
      %v1805 = vpop.f32.mrf.mxu0
      %v1806 = vadd.f32 %v1717, %v1805
      %v1807 = vpop.f32.mrf.mxu0
      %v1808 = vadd.f32 %v1719, %v1807
      %1809 = vmatmul.bf16.gmra.mxu0 %v1024
      %v1810 = vpop.f32.mrf.mxu0
      %v1811 = vadd.f32 %v1722, %v1810
      %v1812 = vpop.f32.mrf.mxu0
      %v1813 = vadd.f32 %v1724, %v1812
      %1814 = vmatmul.bf16.gmra.mxu0 %v1032
      %v1815 = vpop.f32.mrf.mxu0
      %v1816 = vadd.f32 %v1727, %v1815
      %v1817 = vpop.f32.mrf.mxu0
      %v1818 = vadd.f32 %v1729, %v1817
      %1819 = vmatmul.bf16.gmra.mxu0 %v1040
      %v1820 = vpop.f32.mrf.mxu0
      %v1821 = vadd.f32 %v1732, %v1820
      %v1822 = vpop.f32.mrf.mxu0
      %v1823 = vadd.f32 %v1734, %v1822
      %1824 = vdwg.mxu0
      %1825 = vmatpush.bf16.msra.mxu0 %v1461
      %1826 = vmatpush.bf16.msra.mxu0 %v1460
      %1827 = vmatpush.bf16.msra.mxu0 %v1459
      %1828 = vmatpush.bf16.msra.mxu0 %v1458
      %1829 = vmatpush.bf16.msra.mxu0 %v1457
      %1830 = vmatpush.bf16.msra.mxu0 %v1456
      %1831 = vmatpush.bf16.msra.mxu0 %v1455
      %1832 = vmatpush.bf16.msra.mxu0 %v1454
      %1833 = vmatmul.bf16.gmra.mxu0 %v921
      %v1834 = vpop.f32.mrf.mxu0
      %v1835 = vadd.f32 %v1746, %v1834
      %v1836 = vpop.f32.mrf.mxu0
      %v1837 = vadd.f32 %v1748, %v1836
      %1838 = vmatmul.bf16.gmra.mxu0 %v929
      %v1839 = vpop.f32.mrf.mxu0
      %v1840 = vadd.f32 %v1751, %v1839
      %v1841 = vpop.f32.mrf.mxu0
      %v1842 = vadd.f32 %v1753, %v1841
      %1843 = vmatmul.bf16.gmra.mxu0 %v937
      %v1844 = vpop.f32.mrf.mxu0
      %v1845 = vadd.f32 %v1756, %v1844
      %v1846 = vpop.f32.mrf.mxu0
      %v1847 = vadd.f32 %v1758, %v1846
      %1848 = vmatmul.bf16.gmra.mxu0 %v945
      %v1849 = vpop.f32.mrf.mxu0
      %v1850 = vadd.f32 %v1761, %v1849
      %v1851 = vpop.f32.mrf.mxu0
      %v1852 = vadd.f32 %v1763, %v1851
      %1853 = vmatmul.bf16.gmra.mxu0 %v953
      %v1854 = vpop.f32.mrf.mxu0
      %v1855 = vadd.f32 %v1766, %v1854
      %v1856 = vpop.f32.mrf.mxu0
      %v1857 = vadd.f32 %v1768, %v1856
      %1858 = vmatmul.bf16.gmra.mxu0 %v961
      %v1859 = vpop.f32.mrf.mxu0
      %v1860 = vadd.f32 %v1771, %v1859
      %v1861 = vpop.f32.mrf.mxu0
      %v1862 = vadd.f32 %v1773, %v1861
      %1863 = vmatmul.bf16.gmra.mxu0 %v969
      %v1864 = vpop.f32.mrf.mxu0
      %v1865 = vadd.f32 %v1776, %v1864
      %v1866 = vpop.f32.mrf.mxu0
      %v1867 = vadd.f32 %v1778, %v1866
      %1868 = vmatmul.bf16.gmra.mxu0 %v977
      %v1869 = vpop.f32.mrf.mxu0
      %v1870 = vadd.f32 %v1781, %v1869
      %v1871 = vpop.f32.mrf.mxu0
      %v1872 = vadd.f32 %v1783, %v1871
      %1873 = vmatmul.bf16.gmra.mxu0 %v985
      %v1874 = vpop.f32.mrf.mxu0
      %v1875 = vadd.f32 %v1786, %v1874
      %v1876 = vpop.f32.mrf.mxu0
      %v1877 = vadd.f32 %v1788, %v1876
      %1878 = vmatmul.bf16.gmra.mxu0 %v993
      %v1879 = vpop.f32.mrf.mxu0
      %v1880 = vadd.f32 %v1791, %v1879
      %v1881 = vpop.f32.mrf.mxu0
      %v1882 = vadd.f32 %v1793, %v1881
      %1883 = vmatmul.bf16.gmra.mxu0 %v1001
      %v1884 = vpop.f32.mrf.mxu0
      %v1885 = vadd.f32 %v1796, %v1884
      %v1886 = vpop.f32.mrf.mxu0
      %v1887 = vadd.f32 %v1798, %v1886
      %1888 = vmatmul.bf16.gmra.mxu0 %v1009
      %v1889 = vpop.f32.mrf.mxu0
      %v1890 = vadd.f32 %v1801, %v1889
      %v1891 = vpop.f32.mrf.mxu0
      %v1892 = vadd.f32 %v1803, %v1891
      %1893 = vmatmul.bf16.gmra.mxu0 %v1017
      %v1894 = vpop.f32.mrf.mxu0
      %v1895 = vadd.f32 %v1806, %v1894
      %v1896 = vpop.f32.mrf.mxu0
      %v1897 = vadd.f32 %v1808, %v1896
      %1898 = vmatmul.bf16.gmra.mxu0 %v1025
      %v1899 = vpop.f32.mrf.mxu0
      %v1900 = vadd.f32 %v1811, %v1899
      %v1901 = vpop.f32.mrf.mxu0
      %v1902 = vadd.f32 %v1813, %v1901
      %1903 = vmatmul.bf16.gmra.mxu0 %v1033
      %v1904 = vpop.f32.mrf.mxu0
      %v1905 = vadd.f32 %v1816, %v1904
      %v1906 = vpop.f32.mrf.mxu0
      %v1907 = vadd.f32 %v1818, %v1906
      %1908 = vmatmul.bf16.gmra.mxu0 %v1041
      %v1909 = vpop.f32.mrf.mxu0
      %v1910 = vadd.f32 %v1821, %v1909
      %v1911 = vpop.f32.mrf.mxu0
      %v1912 = vadd.f32 %v1823, %v1911
      %1913 = vdwg.mxu0
      %1914 = vmatpush.bf16.msra.mxu0 %v1469
      %1915 = vmatpush.bf16.msra.mxu0 %v1468
      %1916 = vmatpush.bf16.msra.mxu0 %v1467
      %1917 = vmatpush.bf16.msra.mxu0 %v1466
      %1918 = vmatpush.bf16.msra.mxu0 %v1465
      %1919 = vmatpush.bf16.msra.mxu0 %v1464
      %1920 = vmatpush.bf16.msra.mxu0 %v1463
      %1921 = vmatpush.bf16.msra.mxu0 %v1462
      %1922 = vmatmul.bf16.gmra.mxu0 %v922
      %v1923 = vpop.f32.mrf.mxu0
      %v1924 = vadd.f32 %v1835, %v1923
      %v1925 = vpop.f32.mrf.mxu0
      %v1926 = vadd.f32 %v1837, %v1925
      %1927 = vmatmul.bf16.gmra.mxu0 %v930
      %v1928 = vpop.f32.mrf.mxu0
      %v1929 = vadd.f32 %v1840, %v1928
      %v1930 = vpop.f32.mrf.mxu0
      %v1931 = vadd.f32 %v1842, %v1930
      %1932 = vmatmul.bf16.gmra.mxu0 %v938
      %v1933 = vpop.f32.mrf.mxu0
      %v1934 = vadd.f32 %v1845, %v1933
      %v1935 = vpop.f32.mrf.mxu0
      %v1936 = vadd.f32 %v1847, %v1935
      %1937 = vmatmul.bf16.gmra.mxu0 %v946
      %v1938 = vpop.f32.mrf.mxu0
      %v1939 = vadd.f32 %v1850, %v1938
      %v1940 = vpop.f32.mrf.mxu0
      %v1941 = vadd.f32 %v1852, %v1940
      %1942 = vmatmul.bf16.gmra.mxu0 %v954
      %v1943 = vpop.f32.mrf.mxu0
      %v1944 = vadd.f32 %v1855, %v1943
      %v1945 = vpop.f32.mrf.mxu0
      %v1946 = vadd.f32 %v1857, %v1945
      %1947 = vmatmul.bf16.gmra.mxu0 %v962
      %v1948 = vpop.f32.mrf.mxu0
      %v1949 = vadd.f32 %v1860, %v1948
      %v1950 = vpop.f32.mrf.mxu0
      %v1951 = vadd.f32 %v1862, %v1950
      %1952 = vmatmul.bf16.gmra.mxu0 %v970
      %v1953 = vpop.f32.mrf.mxu0
      %v1954 = vadd.f32 %v1865, %v1953
      %v1955 = vpop.f32.mrf.mxu0
      %v1956 = vadd.f32 %v1867, %v1955
      %1957 = vmatmul.bf16.gmra.mxu0 %v978
      %v1958 = vpop.f32.mrf.mxu0
      %v1959 = vadd.f32 %v1870, %v1958
      %v1960 = vpop.f32.mrf.mxu0
      %v1961 = vadd.f32 %v1872, %v1960
      %1962 = vmatmul.bf16.gmra.mxu0 %v986
      %v1963 = vpop.f32.mrf.mxu0
      %v1964 = vadd.f32 %v1875, %v1963
      %v1965 = vpop.f32.mrf.mxu0
      %v1966 = vadd.f32 %v1877, %v1965
      %1967 = vmatmul.bf16.gmra.mxu0 %v994
      %v1968 = vpop.f32.mrf.mxu0
      %v1969 = vadd.f32 %v1880, %v1968
      %v1970 = vpop.f32.mrf.mxu0
      %v1971 = vadd.f32 %v1882, %v1970
      %1972 = vmatmul.bf16.gmra.mxu0 %v1002
      %v1973 = vpop.f32.mrf.mxu0
      %v1974 = vadd.f32 %v1885, %v1973
      %v1975 = vpop.f32.mrf.mxu0
      %v1976 = vadd.f32 %v1887, %v1975
      %1977 = vmatmul.bf16.gmra.mxu0 %v1010
      %v1978 = vpop.f32.mrf.mxu0
      %v1979 = vadd.f32 %v1890, %v1978
      %v1980 = vpop.f32.mrf.mxu0
      %v1981 = vadd.f32 %v1892, %v1980
      %1982 = vmatmul.bf16.gmra.mxu0 %v1018
      %v1983 = vpop.f32.mrf.mxu0
      %v1984 = vadd.f32 %v1895, %v1983
      %v1985 = vpop.f32.mrf.mxu0
      %v1986 = vadd.f32 %v1897, %v1985
      %1987 = vmatmul.bf16.gmra.mxu0 %v1026
      %v1988 = vpop.f32.mrf.mxu0
      %v1989 = vadd.f32 %v1900, %v1988
      %v1990 = vpop.f32.mrf.mxu0
      %v1991 = vadd.f32 %v1902, %v1990
      %1992 = vmatmul.bf16.gmra.mxu0 %v1034
      %v1993 = vpop.f32.mrf.mxu0
      %v1994 = vadd.f32 %v1905, %v1993
      %v1995 = vpop.f32.mrf.mxu0
      %v1996 = vadd.f32 %v1907, %v1995
      %1997 = vmatmul.bf16.gmra.mxu0 %v1042
      %v1998 = vpop.f32.mrf.mxu0
      %v1999 = vadd.f32 %v1910, %v1998
      %v2000 = vpop.f32.mrf.mxu0
      %v2001 = vadd.f32 %v1912, %v2000
      %2002 = vdwg.mxu0
      %2003 = vmatpush.bf16.msra.mxu0 %v1477
      %2004 = vmatpush.bf16.msra.mxu0 %v1476
      %2005 = vmatpush.bf16.msra.mxu0 %v1475
      %2006 = vmatpush.bf16.msra.mxu0 %v1474
      %2007 = vmatpush.bf16.msra.mxu0 %v1473
      %2008 = vmatpush.bf16.msra.mxu0 %v1472
      %2009 = vmatpush.bf16.msra.mxu0 %v1471
      %2010 = vmatpush.bf16.msra.mxu0 %v1470
      %2011 = vmatmul.bf16.gmra.mxu0 %v923
      %v2012 = vpop.f32.mrf.mxu0
      %v2013 = vadd.f32 %v1924, %v2012
      %v2014 = vpop.f32.mrf.mxu0
      %v2015 = vadd.f32 %v1926, %v2014
      %2016 = vmatmul.bf16.gmra.mxu0 %v931
      %v2017 = vpop.f32.mrf.mxu0
      %v2018 = vadd.f32 %v1929, %v2017
      %v2019 = vpop.f32.mrf.mxu0
      %v2020 = vadd.f32 %v1931, %v2019
      %2021 = vmatmul.bf16.gmra.mxu0 %v939
      %v2022 = vpop.f32.mrf.mxu0
      %v2023 = vadd.f32 %v1934, %v2022
      %v2024 = vpop.f32.mrf.mxu0
      %v2025 = vadd.f32 %v1936, %v2024
      %2026 = vmatmul.bf16.gmra.mxu0 %v947
      %v2027 = vpop.f32.mrf.mxu0
      %v2028 = vadd.f32 %v1939, %v2027
      %v2029 = vpop.f32.mrf.mxu0
      %v2030 = vadd.f32 %v1941, %v2029
      %2031 = vmatmul.bf16.gmra.mxu0 %v955
      %v2032 = vpop.f32.mrf.mxu0
      %v2033 = vadd.f32 %v1944, %v2032
      %v2034 = vpop.f32.mrf.mxu0
      %v2035 = vadd.f32 %v1946, %v2034
      %2036 = vmatmul.bf16.gmra.mxu0 %v963
      %v2037 = vpop.f32.mrf.mxu0
      %v2038 = vadd.f32 %v1949, %v2037
      %v2039 = vpop.f32.mrf.mxu0
      %v2040 = vadd.f32 %v1951, %v2039
      %2041 = vmatmul.bf16.gmra.mxu0 %v971
      %v2042 = vpop.f32.mrf.mxu0
      %v2043 = vadd.f32 %v1954, %v2042
      %v2044 = vpop.f32.mrf.mxu0
      %v2045 = vadd.f32 %v1956, %v2044
      %2046 = vmatmul.bf16.gmra.mxu0 %v979
      %v2047 = vpop.f32.mrf.mxu0
      %v2048 = vadd.f32 %v1959, %v2047
      %v2049 = vpop.f32.mrf.mxu0
      %v2050 = vadd.f32 %v1961, %v2049
      %2051 = vmatmul.bf16.gmra.mxu0 %v987
      %v2052 = vpop.f32.mrf.mxu0
      %v2053 = vadd.f32 %v1964, %v2052
      %v2054 = vpop.f32.mrf.mxu0
      %v2055 = vadd.f32 %v1966, %v2054
      %2056 = vmatmul.bf16.gmra.mxu0 %v995
      %v2057 = vpop.f32.mrf.mxu0
      %v2058 = vadd.f32 %v1969, %v2057
      %v2059 = vpop.f32.mrf.mxu0
      %v2060 = vadd.f32 %v1971, %v2059
      %2061 = vmatmul.bf16.gmra.mxu0 %v1003
      %v2062 = vpop.f32.mrf.mxu0
      %v2063 = vadd.f32 %v1974, %v2062
      %v2064 = vpop.f32.mrf.mxu0
      %v2065 = vadd.f32 %v1976, %v2064
      %2066 = vmatmul.bf16.gmra.mxu0 %v1011
      %v2067 = vpop.f32.mrf.mxu0
      %v2068 = vadd.f32 %v1979, %v2067
      %v2069 = vpop.f32.mrf.mxu0
      %v2070 = vadd.f32 %v1981, %v2069
      %2071 = vmatmul.bf16.gmra.mxu0 %v1019
      %v2072 = vpop.f32.mrf.mxu0
      %v2073 = vadd.f32 %v1984, %v2072
      %v2074 = vpop.f32.mrf.mxu0
      %v2075 = vadd.f32 %v1986, %v2074
      %2076 = vmatmul.bf16.gmra.mxu0 %v1027
      %v2077 = vpop.f32.mrf.mxu0
      %v2078 = vadd.f32 %v1989, %v2077
      %v2079 = vpop.f32.mrf.mxu0
      %v2080 = vadd.f32 %v1991, %v2079
      %2081 = vmatmul.bf16.gmra.mxu0 %v1035
      %v2082 = vpop.f32.mrf.mxu0
      %v2083 = vadd.f32 %v1994, %v2082
      %v2084 = vpop.f32.mrf.mxu0
      %v2085 = vadd.f32 %v1996, %v2084
      %2086 = vmatmul.bf16.gmra.mxu0 %v1043
      %v2087 = vpop.f32.mrf.mxu0
      %v2088 = vadd.f32 %v1999, %v2087
      %v2089 = vpop.f32.mrf.mxu0
      %v2090 = vadd.f32 %v2001, %v2089
      %2091 = vdwg.mxu0
      %2092 = vmatpush.bf16.msra.mxu0 %v1485
      %2093 = vmatpush.bf16.msra.mxu0 %v1484
      %2094 = vmatpush.bf16.msra.mxu0 %v1483
      %2095 = vmatpush.bf16.msra.mxu0 %v1482
      %2096 = vmatpush.bf16.msra.mxu0 %v1481
      %2097 = vmatpush.bf16.msra.mxu0 %v1480
      %2098 = vmatpush.bf16.msra.mxu0 %v1479
      %2099 = vmatpush.bf16.msra.mxu0 %v1478
      %2100 = vmatmul.bf16.gmra.mxu0 %v924
      %v2101 = vpop.f32.mrf.mxu0
      %v2102 = vadd.f32 %v2013, %v2101
      %v2103 = vpop.f32.mrf.mxu0
      %v2104 = vadd.f32 %v2015, %v2103
      %2105 = vmatmul.bf16.gmra.mxu0 %v932
      %v2106 = vpop.f32.mrf.mxu0
      %v2107 = vadd.f32 %v2018, %v2106
      %v2108 = vpop.f32.mrf.mxu0
      %v2109 = vadd.f32 %v2020, %v2108
      %2110 = vmatmul.bf16.gmra.mxu0 %v940
      %v2111 = vpop.f32.mrf.mxu0
      %v2112 = vadd.f32 %v2023, %v2111
      %v2113 = vpop.f32.mrf.mxu0
      %v2114 = vadd.f32 %v2025, %v2113
      %2115 = vmatmul.bf16.gmra.mxu0 %v948
      %v2116 = vpop.f32.mrf.mxu0
      %v2117 = vadd.f32 %v2028, %v2116
      %v2118 = vpop.f32.mrf.mxu0
      %v2119 = vadd.f32 %v2030, %v2118
      %2120 = vmatmul.bf16.gmra.mxu0 %v956
      %v2121 = vpop.f32.mrf.mxu0
      %v2122 = vadd.f32 %v2033, %v2121
      %v2123 = vpop.f32.mrf.mxu0
      %v2124 = vadd.f32 %v2035, %v2123
      %2125 = vmatmul.bf16.gmra.mxu0 %v964
      %v2126 = vpop.f32.mrf.mxu0
      %v2127 = vadd.f32 %v2038, %v2126
      %v2128 = vpop.f32.mrf.mxu0
      %v2129 = vadd.f32 %v2040, %v2128
      %2130 = vmatmul.bf16.gmra.mxu0 %v972
      %v2131 = vpop.f32.mrf.mxu0
      %v2132 = vadd.f32 %v2043, %v2131
      %v2133 = vpop.f32.mrf.mxu0
      %v2134 = vadd.f32 %v2045, %v2133
      %2135 = vmatmul.bf16.gmra.mxu0 %v980
      %v2136 = vpop.f32.mrf.mxu0
      %v2137 = vadd.f32 %v2048, %v2136
      %v2138 = vpop.f32.mrf.mxu0
      %v2139 = vadd.f32 %v2050, %v2138
      %2140 = vmatmul.bf16.gmra.mxu0 %v988
      %v2141 = vpop.f32.mrf.mxu0
      %v2142 = vadd.f32 %v2053, %v2141
      %v2143 = vpop.f32.mrf.mxu0
      %v2144 = vadd.f32 %v2055, %v2143
      %2145 = vmatmul.bf16.gmra.mxu0 %v996
      %v2146 = vpop.f32.mrf.mxu0
      %v2147 = vadd.f32 %v2058, %v2146
      %v2148 = vpop.f32.mrf.mxu0
      %v2149 = vadd.f32 %v2060, %v2148
      %2150 = vmatmul.bf16.gmra.mxu0 %v1004
      %v2151 = vpop.f32.mrf.mxu0
      %v2152 = vadd.f32 %v2063, %v2151
      %v2153 = vpop.f32.mrf.mxu0
      %v2154 = vadd.f32 %v2065, %v2153
      %2155 = vmatmul.bf16.gmra.mxu0 %v1012
      %v2156 = vpop.f32.mrf.mxu0
      %v2157 = vadd.f32 %v2068, %v2156
      %v2158 = vpop.f32.mrf.mxu0
      %v2159 = vadd.f32 %v2070, %v2158
      %2160 = vmatmul.bf16.gmra.mxu0 %v1020
      %v2161 = vpop.f32.mrf.mxu0
      %v2162 = vadd.f32 %v2073, %v2161
      %v2163 = vpop.f32.mrf.mxu0
      %v2164 = vadd.f32 %v2075, %v2163
      %2165 = vmatmul.bf16.gmra.mxu0 %v1028
      %v2166 = vpop.f32.mrf.mxu0
      %v2167 = vadd.f32 %v2078, %v2166
      %v2168 = vpop.f32.mrf.mxu0
      %v2169 = vadd.f32 %v2080, %v2168
      %2170 = vmatmul.bf16.gmra.mxu0 %v1036
      %v2171 = vpop.f32.mrf.mxu0
      %v2172 = vadd.f32 %v2083, %v2171
      %v2173 = vpop.f32.mrf.mxu0
      %v2174 = vadd.f32 %v2085, %v2173
      %2175 = vmatmul.bf16.gmra.mxu0 %v1044
      %v2176 = vpop.f32.mrf.mxu0
      %v2177 = vadd.f32 %v2088, %v2176
      %v2178 = vpop.f32.mrf.mxu0
      %v2179 = vadd.f32 %v2090, %v2178
      %2180 = vdwg.mxu0
      %2181 = vmatpush.bf16.msra.mxu0 %v1493
      %2182 = vmatpush.bf16.msra.mxu0 %v1492
      %2183 = vmatpush.bf16.msra.mxu0 %v1491
      %2184 = vmatpush.bf16.msra.mxu0 %v1490
      %2185 = vmatpush.bf16.msra.mxu0 %v1489
      %2186 = vmatpush.bf16.msra.mxu0 %v1488
      %2187 = vmatpush.bf16.msra.mxu0 %v1487
      %2188 = vmatpush.bf16.msra.mxu0 %v1486
      %2189 = vmatmul.bf16.gmra.mxu0 %v925
      %v2190 = vpop.f32.mrf.mxu0
      %v2191 = vadd.f32 %v2102, %v2190
      %v2192 = vpop.f32.mrf.mxu0
      %v2193 = vadd.f32 %v2104, %v2192
      %2194 = vmatmul.bf16.gmra.mxu0 %v933
      %v2195 = vpop.f32.mrf.mxu0
      %v2196 = vadd.f32 %v2107, %v2195
      %v2197 = vpop.f32.mrf.mxu0
      %v2198 = vadd.f32 %v2109, %v2197
      %2199 = vmatmul.bf16.gmra.mxu0 %v941
      %v2200 = vpop.f32.mrf.mxu0
      %v2201 = vadd.f32 %v2112, %v2200
      %v2202 = vpop.f32.mrf.mxu0
      %v2203 = vadd.f32 %v2114, %v2202
      %2204 = vmatmul.bf16.gmra.mxu0 %v949
      %v2205 = vpop.f32.mrf.mxu0
      %v2206 = vadd.f32 %v2117, %v2205
      %v2207 = vpop.f32.mrf.mxu0
      %v2208 = vadd.f32 %v2119, %v2207
      %2209 = vmatmul.bf16.gmra.mxu0 %v957
      %v2210 = vpop.f32.mrf.mxu0
      %v2211 = vadd.f32 %v2122, %v2210
      %v2212 = vpop.f32.mrf.mxu0
      %v2213 = vadd.f32 %v2124, %v2212
      %2214 = vmatmul.bf16.gmra.mxu0 %v965
      %v2215 = vpop.f32.mrf.mxu0
      %v2216 = vadd.f32 %v2127, %v2215
      %v2217 = vpop.f32.mrf.mxu0
      %v2218 = vadd.f32 %v2129, %v2217
      %2219 = vmatmul.bf16.gmra.mxu0 %v973
      %v2220 = vpop.f32.mrf.mxu0
      %v2221 = vadd.f32 %v2132, %v2220
      %v2222 = vpop.f32.mrf.mxu0
      %v2223 = vadd.f32 %v2134, %v2222
      %2224 = vmatmul.bf16.gmra.mxu0 %v981
      %v2225 = vpop.f32.mrf.mxu0
      %v2226 = vadd.f32 %v2137, %v2225
      %v2227 = vpop.f32.mrf.mxu0
      %v2228 = vadd.f32 %v2139, %v2227
      %2229 = vmatmul.bf16.gmra.mxu0 %v989
      %v2230 = vpop.f32.mrf.mxu0
      %v2231 = vadd.f32 %v2142, %v2230
      %v2232 = vpop.f32.mrf.mxu0
      %v2233 = vadd.f32 %v2144, %v2232
      %2234 = vmatmul.bf16.gmra.mxu0 %v997
      %v2235 = vpop.f32.mrf.mxu0
      %v2236 = vadd.f32 %v2147, %v2235
      %v2237 = vpop.f32.mrf.mxu0
      %v2238 = vadd.f32 %v2149, %v2237
      %2239 = vmatmul.bf16.gmra.mxu0 %v1005
      %v2240 = vpop.f32.mrf.mxu0
      %v2241 = vadd.f32 %v2152, %v2240
      %v2242 = vpop.f32.mrf.mxu0
      %v2243 = vadd.f32 %v2154, %v2242
      %2244 = vmatmul.bf16.gmra.mxu0 %v1013
      %v2245 = vpop.f32.mrf.mxu0
      %v2246 = vadd.f32 %v2157, %v2245
      %v2247 = vpop.f32.mrf.mxu0
      %v2248 = vadd.f32 %v2159, %v2247
      %2249 = vmatmul.bf16.gmra.mxu0 %v1021
      %v2250 = vpop.f32.mrf.mxu0
      %v2251 = vadd.f32 %v2162, %v2250
      %v2252 = vpop.f32.mrf.mxu0
      %v2253 = vadd.f32 %v2164, %v2252
      %2254 = vmatmul.bf16.gmra.mxu0 %v1029
      %v2255 = vpop.f32.mrf.mxu0
      %v2256 = vadd.f32 %v2167, %v2255
      %v2257 = vpop.f32.mrf.mxu0
      %v2258 = vadd.f32 %v2169, %v2257
      %2259 = vmatmul.bf16.gmra.mxu0 %v1037
      %v2260 = vpop.f32.mrf.mxu0
      %v2261 = vadd.f32 %v2172, %v2260
      %v2262 = vpop.f32.mrf.mxu0
      %v2263 = vadd.f32 %v2174, %v2262
      %2264 = vmatmul.bf16.gmra.mxu0 %v1045
      %v2265 = vpop.f32.mrf.mxu0
      %v2266 = vadd.f32 %v2177, %v2265
      %v2267 = vpop.f32.mrf.mxu0
      %v2268 = vadd.f32 %v2179, %v2267
      %2269 = vdwg.mxu0
      %v2270 = vpack.c.bf16 %v2191, %v2191
      %v2271 = vpack.c.bf16 %v2193, %v2193
      %v2272 = vpack.c.bf16 %v2196, %v2196
      %v2273 = vpack.c.bf16 %v2198, %v2198
      %v2274 = vpack.c.bf16 %v2201, %v2201
      %v2275 = vpack.c.bf16 %v2203, %v2203
      %v2276 = vpack.c.bf16 %v2206, %v2206
      %v2277 = vpack.c.bf16 %v2208, %v2208
      %v2278 = vpack.c.bf16 %v2211, %v2211
      %v2279 = vpack.c.bf16 %v2213, %v2213
      %v2280 = vpack.c.bf16 %v2216, %v2216
      %v2281 = vpack.c.bf16 %v2218, %v2218
      %v2282 = vpack.c.bf16 %v2221, %v2221
      %v2283 = vpack.c.bf16 %v2223, %v2223
      %v2284 = vpack.c.bf16 %v2226, %v2226
      %v2285 = vpack.c.bf16 %v2228, %v2228
      %v2286 = vpack.c.bf16 %v2231, %v2231
      %v2287 = vpack.c.bf16 %v2233, %v2233
      %v2288 = vpack.c.bf16 %v2236, %v2236
      %v2289 = vpack.c.bf16 %v2238, %v2238
      %v2290 = vpack.c.bf16 %v2241, %v2241
      %v2291 = vpack.c.bf16 %v2243, %v2243
      %v2292 = vpack.c.bf16 %v2246, %v2246
      %v2293 = vpack.c.bf16 %v2248, %v2248
      %v2294 = vpack.c.bf16 %v2251, %v2251
      %v2295 = vpack.c.bf16 %v2253, %v2253
      %v2296 = vpack.c.bf16 %v2256, %v2256
      %v2297 = vpack.c.bf16 %v2258, %v2258
      %v2298 = vpack.c.bf16 %v2261, %v2261
      %v2299 = vpack.c.bf16 %v2263, %v2263
      %v2300 = vpack.c.bf16 %v2266, %v2266
      %v2301 = vpack.c.bf16 %v2268, %v2268
      %2302 = vst [vmem:[%s262] sm:$0xf] %v2270
      %2303 = vst [vmem:[%s262 + $0x4] sm:$0xf] %v2271
      %2304 = vst [vmem:[%s262 + $0x8] sm:$0xf] %v2272
      %2305 = vst [vmem:[%s262 + $0xc] sm:$0xf] %v2273
      %2306 = vst [vmem:[%s262 + $0x10] sm:$0xf] %v2274
      %2307 = vst [vmem:[%s262 + $0x14] sm:$0xf] %v2275
      %2308 = vst [vmem:[%s262 + $0x18] sm:$0xf] %v2276
      %2309 = vst [vmem:[%s262 + $0x1c] sm:$0xf] %v2277
      %2310 = vst [vmem:[%s262 + $0x20] sm:$0xf] %v2278
      %2311 = vst [vmem:[%s262 + $0x24] sm:$0xf] %v2279
      %2312 = vst [vmem:[%s262 + $0x28] sm:$0xf] %v2280
      %2313 = vst [vmem:[%s262 + $0x2c] sm:$0xf] %v2281
      %2314 = vst [vmem:[%s262 + $0x30] sm:$0xf] %v2282
      %2315 = vst [vmem:[%s262 + $0x34] sm:$0xf] %v2283
      %2316 = vst [vmem:[%s262 + $0x38] sm:$0xf] %v2284
      %2317 = vst [vmem:[%s262 + $0x3c] sm:$0xf] %v2285
      %2318 = vst [vmem:[%s262 + $0x40] sm:$0xf] %v2286
      %2319 = vst [vmem:[%s262 + $0x44] sm:$0xf] %v2287
      %2320 = vst [vmem:[%s262 + $0x48] sm:$0xf] %v2288
      %2321 = vst [vmem:[%s262 + $0x4c] sm:$0xf] %v2289
      %2322 = vst [vmem:[%s262 + $0x50] sm:$0xf] %v2290
      %2323 = vst [vmem:[%s262 + $0x54] sm:$0xf] %v2291
      %2324 = vst [vmem:[%s262 + $0x58] sm:$0xf] %v2292
      %2325 = vst [vmem:[%s262 + $0x5c] sm:$0xf] %v2293
      %2326 = vst [vmem:[%s262 + $0x60] sm:$0xf] %v2294
      %2327 = vst [vmem:[%s262 + $0x64] sm:$0xf] %v2295
      %2328 = vst [vmem:[%s262 + $0x68] sm:$0xf] %v2296
      %2329 = vst [vmem:[%s262 + $0x6c] sm:$0xf] %v2297
      %2330 = vst [vmem:[%s262 + $0x70] sm:$0xf] %v2298
      %2331 = vst [vmem:[%s262 + $0x74] sm:$0xf] %v2299
      %2332 = vst [vmem:[%s262 + $0x78] sm:$0xf] %v2300
      %2333 = vst [vmem:[%s262 + $0x7c] sm:$0xf] %v2301
      %v2334 = vadd.f32 %v2191, %v2193
      %v2335 = vadd.f32 %v2334, %v2196
      %v2336 = vadd.f32 %v2335, %v2198
      %v2337 = vadd.f32 %v2336, %v2201
      %v2338 = vadd.f32 %v2337, %v2203
      %v2339 = vadd.f32 %v2338, %v2206
      %v2340 = vadd.f32 %v2339, %v2208
      %v2341 = vadd.f32 %v2340, %v2211
      %v2342 = vadd.f32 %v2341, %v2213
      %v2343 = vadd.f32 %v2342, %v2216
      %v2344 = vadd.f32 %v2343, %v2218
      %v2345 = vadd.f32 %v2344, %v2221
      %v2346 = vadd.f32 %v2345, %v2223
      %v2347 = vadd.f32 %v2346, %v2226
      %v2348 = vadd.f32 %v2347, %v2228
      %v2349 = vadd.f32 %v2348, %v2231
      %v2350 = vadd.f32 %v2349, %v2233
      %v2351 = vadd.f32 %v2350, %v2236
      %v2352 = vadd.f32 %v2351, %v2238
      %v2353 = vadd.f32 %v2352, %v2241
      %v2354 = vadd.f32 %v2353, %v2243
      %v2355 = vadd.f32 %v2354, %v2246
      %v2356 = vadd.f32 %v2355, %v2248
      %v2357 = vadd.f32 %v2356, %v2251
      %v2358 = vadd.f32 %v2357, %v2253
      %v2359 = vadd.f32 %v2358, %v2256
      %v2360 = vadd.f32 %v2359, %v2258
      %v2361 = vadd.f32 %v2360, %v2261
      %v2362 = vadd.f32 %v2361, %v2263
      %v2363 = vadd.f32 %v2362, %v2266
      %v2364 = vadd.f32 %v2363, %v2268
      %v2365 = vrot.slane %v2364, 4
      %v2366 = vadd.f32 %v2364, %v2365
      %v2367 = vrot.slane %v2366, 2
      %v2368 = vadd.f32 %v2366, %v2367
      %v2369 = vrot.slane %v2368, 1
      %v2370 = vadd.f32 %v2368, %v2369
      %2371 = vst [vmem:[%s270] sm:$0x1] %v2370
      %v2372 = vmul.f32 %v2191, %v2191
      %v2373 = vmul.f32 %v2193, %v2193
      %v2374 = vmul.f32 %v2196, %v2196
      %v2375 = vmul.f32 %v2198, %v2198
      %v2376 = vmul.f32 %v2201, %v2201
      %v2377 = vmul.f32 %v2203, %v2203
      %v2378 = vmul.f32 %v2206, %v2206
      %v2379 = vmul.f32 %v2208, %v2208
      %v2380 = vmul.f32 %v2211, %v2211
      %v2381 = vmul.f32 %v2213, %v2213
      %v2382 = vmul.f32 %v2216, %v2216
      %v2383 = vmul.f32 %v2218, %v2218
      %v2384 = vmul.f32 %v2221, %v2221
      %v2385 = vmul.f32 %v2223, %v2223
      %v2386 = vmul.f32 %v2226, %v2226
      %v2387 = vmul.f32 %v2228, %v2228
      %v2388 = vmul.f32 %v2231, %v2231
      %v2389 = vmul.f32 %v2233, %v2233
      %v2390 = vmul.f32 %v2236, %v2236
      %v2391 = vmul.f32 %v2238, %v2238
      %v2392 = vmul.f32 %v2241, %v2241
      %v2393 = vmul.f32 %v2243, %v2243
      %v2394 = vmul.f32 %v2246, %v2246
      %v2395 = vmul.f32 %v2248, %v2248
      %v2396 = vmul.f32 %v2251, %v2251
      %v2397 = vmul.f32 %v2253, %v2253
      %v2398 = vmul.f32 %v2256, %v2256
      %v2399 = vmul.f32 %v2258, %v2258
      %v2400 = vmul.f32 %v2261, %v2261
      %v2401 = vmul.f32 %v2263, %v2263
      %v2402 = vmul.f32 %v2266, %v2266
      %v2403 = vmul.f32 %v2268, %v2268
      %v2404 = vadd.f32 %v2372, %v2373
      %v2405 = vadd.f32 %v2404, %v2374
      %v2406 = vadd.f32 %v2405, %v2375
      %v2407 = vadd.f32 %v2406, %v2376
      %v2408 = vadd.f32 %v2407, %v2377
      %v2409 = vadd.f32 %v2408, %v2378
      %v2410 = vadd.f32 %v2409, %v2379
      %v2411 = vadd.f32 %v2410, %v2380
      %v2412 = vadd.f32 %v2411, %v2381
      %v2413 = vadd.f32 %v2412, %v2382
      %v2414 = vadd.f32 %v2413, %v2383
      %v2415 = vadd.f32 %v2414, %v2384
      %v2416 = vadd.f32 %v2415, %v2385
      %v2417 = vadd.f32 %v2416, %v2386
      %v2418 = vadd.f32 %v2417, %v2387
      %v2419 = vadd.f32 %v2418, %v2388
      %v2420 = vadd.f32 %v2419, %v2389
      %v2421 = vadd.f32 %v2420, %v2390
      %v2422 = vadd.f32 %v2421, %v2391
      %v2423 = vadd.f32 %v2422, %v2392
      %v2424 = vadd.f32 %v2423, %v2393
      %v2425 = vadd.f32 %v2424, %v2394
      %v2426 = vadd.f32 %v2425, %v2395
      %v2427 = vadd.f32 %v2426, %v2396
      %v2428 = vadd.f32 %v2427, %v2397
      %v2429 = vadd.f32 %v2428, %v2398
      %v2430 = vadd.f32 %v2429, %v2399
      %v2431 = vadd.f32 %v2430, %v2400
      %v2432 = vadd.f32 %v2431, %v2401
      %v2433 = vadd.f32 %v2432, %v2402
      %v2434 = vadd.f32 %v2433, %v2403
      %v2435 = vrot.slane %v2434, 4
      %v2436 = vadd.f32 %v2434, %v2435
      %v2437 = vrot.slane %v2436, 2
      %v2438 = vadd.f32 %v2436, %v2437
      %v2439 = vrot.slane %v2438, 1
      %v2440 = vadd.f32 %v2438, %v2439
      %2441 = vst [vmem:[%s277] sm:$0x1] %v2440
      %s2442 = smul.u32 32, %s20
      %p2443 = scmp.lt.s32.totalorder %s2442, 63
      %s2444 = scalar_select %p2443, %s2442, 63
      %p2445 = scmp.lt.s32.totalorder %s21, 0
      %s2446 = scalar_select %p2445, %s21, 0
      %s2447 = sadd.s32 %s2446, %s2444
      %s2448 = smul.addr %s2447, 4
      %s2449 = scalar_lea.vmem %s2, %s2448
      %p2450 = scmp.lt.s32.totalorder %s20, 1
      %s2451 = scalar_select %p2450, %s20, 1
      %p2452 = scmp.lt.s32.totalorder %s21, 0
      %s2453 = scalar_select %p2452, %s21, 0
      %s2454 = sadd.s32 %s2453, %s2451
      %s2455 = smul.addr %s2454, 8
      %s2456 = scalar_lea.vmem %s3, %s2455
      %p2457 = scmp.lt.s32.totalorder %s20, 1
      %s2458 = scalar_select %p2457, %s20, 1
      %p2459 = scmp.lt.s32.totalorder %s21, 0
      %s2460 = scalar_select %p2459, %s21, 0
      %s2461 = sadd.s32 %s2460, %s2458
      %s2462 = smul.addr %s2461, 8
      %s2463 = scalar_lea.vmem %s4, %s2462
      // Predicated region
      $region29: #{discriminator_forward.8} parent=27 // pred_check
        %p2464 = pneg %p100
      $region30: #{discriminator_forward.8} parent=27 // pred_check_branch
        %2466 = sbr.rel (%p2464) target = $region32
      $region31: #{discriminator_forward.8} parent=27 // pred_region
        %s2467 = smul.u32 32, %s20
      $region32: #{discriminator_forward.8} parent=27 // pred_fallthru
        _
      // Predicated region
      $region33: #{discriminator_forward.8} parent=27 // pred_check
        %p2468 = pneg %p128
      $region34: #{discriminator_forward.8} parent=27 // pred_check_branch
        %2470 = sbr.rel (%p2468) target = $region36
      $region35: #{discriminator_forward.8} parent=27 // pred_region
        _
      $region36: #{discriminator_forward.8} parent=27 // pred_fallthru
        _
      // Predicated region
      $region37: #{discriminator_forward.8} parent=27 // pred_check
        %p2471 = pneg %p156
      $region38: #{discriminator_forward.8} parent=27 // pred_check_branch
        %2473 = sbr.rel (%p2471) target = $region40
      $region39: #{discriminator_forward.8} parent=27 // pred_region
        _
      $region40: #{discriminator_forward.8} parent=27 // pred_fallthru
        _
    $region28: #{discriminator_forward.8} parent=5 // pred_fallthru
      _
    %p2474 = scmp.le.s32.totalorder 2, %s11
    // Predicated region
    $region41: #{discriminator_forward.8} parent=5 // pred_check
      %p2475 = pneg %p2474
    $region42: #{discriminator_forward.8} parent=5 // pred_check_branch
      %2477 = sbr.rel (%p2475) target = $region44
    $region43: #{discriminator_forward.8} parent=5 // pred_region
      %s2478 = ssub.s32 %s11, 2
      // Predicated region
      $region45: #{discriminator_forward.8} parent=43 // pred_check
        %p2479 = pneg %p106
      $region46: #{discriminator_forward.8} parent=43 // pred_check_branch
        %2481 = sbr.rel (%p2479) target = $region48
      $region47: #{discriminator_forward.8} parent=43 // pred_region
        %s2482 = smul.u32 32, %s22
        %p2483 = scmp.lt.s32.totalorder %s2482, 63
        %s2484 = scalar_select %p2483, %s2482, 63
        %p2485 = scmp.lt.s32.totalorder %s23, 0
        %s2486 = scalar_select %p2485, %s23, 0
        %s2487 = sadd.s32 %s2486, %s2484
        %s2488 = smul.addr %s2487, 4
        %s2489 = scalar_lea.vmem %s2, %s2488
      $region48: #{discriminator_forward.8} parent=43 // pred_fallthru
        _
      // Predicated region
      $region49: #{discriminator_forward.8} parent=43 // pred_check
        %p2490 = pneg %p134
      $region50: #{discriminator_forward.8} parent=43 // pred_check_branch
        %2492 = sbr.rel (%p2490) target = $region52
      $region51: #{discriminator_forward.8} parent=43 // pred_region
        %p2493 = scmp.lt.s32.totalorder %s22, 1
        %s2494 = scalar_select %p2493, %s22, 1
        %p2495 = scmp.lt.s32.totalorder %s23, 0
        %s2496 = scalar_select %p2495, %s23, 0
        %s2497 = sadd.s32 %s2496, %s2494
        %s2498 = smul.addr %s2497, 8
        %s2499 = scalar_lea.vmem %s3, %s2498
      $region52: #{discriminator_forward.8} parent=43 // pred_fallthru
        _
      // Predicated region
      $region53: #{discriminator_forward.8} parent=43 // pred_check
        %p2500 = pneg %p162
      $region54: #{discriminator_forward.8} parent=43 // pred_check_branch
        %2502 = sbr.rel (%p2500) target = $region56
      $region55: #{discriminator_forward.8} parent=43 // pred_region
        %p2503 = scmp.lt.s32.totalorder %s22, 1
        %s2504 = scalar_select %p2503, %s22, 1
        %p2505 = scmp.lt.s32.totalorder %s23, 0
        %s2506 = scalar_select %p2505, %s23, 0
        %s2507 = sadd.s32 %s2506, %s2504
        %s2508 = smul.addr %s2507, 8
        %s2509 = scalar_lea.vmem %s4, %s2508
      $region56: #{discriminator_forward.8} parent=43 // pred_fallthru
        _
    $region44: #{discriminator_forward.8} parent=5 // pred_fallthru
      _
  $region6: #{discriminator_forward.8} parent=0 // loop_footer
    %s15 = sadd.s32 1, %s11
  $region7: #{discriminator_forward.8} parent=0 // loop_footer_branch
    %10 = sbr.rel target = $region3
  $region8: #{discriminator_forward.8} parent=0 // loop_exit
    _

// kernel: discriminator_forward.9
$region0: #{discriminator_forward.9}
  #allocation0 [shape = 'u32[]', space=smem, size = 0x4, offset = 0x4, fixed_abs, tag = 'smem constant byte address 0x4 - core index']
  #allocation1 [shape = 'u32[72,128]{1,0:T(1,128)}', space=vmem, size = 0x9000, scoped, tag = 'internal scratch']
  %s0 = inlined_call_operand.vmem [shape: bf16[512,128], index: 0, kind: input, shape index: {}]
  %s1 = inlined_call_operand.vmem [shape: f32[1,128], index: 1, kind: input, shape index: {}]
  %s2 = inlined_call_operand.vmem [shape: f32[1,128], index: 2, kind: input, shape index: {}]
  %s3 = inlined_call_operand.vmem [shape: bf16[512,128], index: 3, kind: output, shape index: {}]
  %s4 = sld [smem:[#allocation0]]
  $region45: #{discriminator_forward.9} parent=0
    _
  %s6 = ssub.s32 1, %s4
  %s7 = scalar_select 0, %s6, %s4
  loop: start=0, step=1, limit=4
  $region2: #{discriminator_forward.9} parent=0 // loop_pre_header
    _
  $region3: #{discriminator_forward.9} parent=0 // loop_header
    %s9 = sphi 0, %s13
    %p10 = scmp.ge.s32.totalorder %s9, 4
    %s19 = sphi 0, %s21
    %s22 = sphi 0, %s19
    %s23 = sphi 0, %s22
    %s39 = sphi 0, %s23
    %s43 = sphi 0, %s43
    %s45 = sphi 0, %s43
    %s46 = sphi 0, %s45
    %s60 = sphi 0, %s46
    %s64 = sphi 0, %s64
    %s66 = sphi 0, %s64
    %s67 = sphi 0, %s66
    %s81 = sphi 0, %s67
    %s87 = sphi 0, %s89
    %s90 = sphi 0, %s87
    %s91 = sphi 0, %s90
    %s107 = sphi 0, %s91
  $region4: #{discriminator_forward.9} parent=0 // loop_header_branch
    %12 = sbr.rel (%p10) target = $region8
  $region5: #{discriminator_forward.9} parent=0 // loop_body
    %s14 = ssub.s32 %s9, 1
    %s15 = ssub.s32 %s9, 2
    %s16 = sadd.s32 %s9, 1
    %s17 = ssub.s32 %s9, %s16
    %p18 = scmp.eq.s32.totalorder %s17, 0
    %s20 = sadd.s32 %s19, 1
    %s21 = scalar_select %p18, %s19, %s20
    %p24 = pneg %p18
    %p25 = scmp.eq.s32.totalorder %s9, 1
    %p26 = por %p24, %p25
    %p27 = scmp.ne.s32.totalorder %s19, %s22
    %p28 = scmp.eq.s32.totalorder %s9, 0
    %p29 = por %p27, %p28
    %p30 = scmp.ne.s32.totalorder %s19, %s22
    %p31 = scmp.eq.s32.totalorder %s14, 1
    %p32 = por %p30, %p31
    %p33 = scmp.ne.s32.totalorder %s22, %s23
    %p34 = scmp.eq.s32.totalorder %s14, 0
    %p35 = por %p33, %p34
    %p36 = scmp.ne.s32.totalorder %s22, %s23
    %p37 = scmp.eq.s32.totalorder %s15, 1
    %p38 = por %p36, %p37
    %p40 = scmp.ne.s32.totalorder %s23, %s39
    %p41 = scmp.eq.s32.totalorder %s15, 0
    %p42 = por %p40, %p41
    %s44 = sadd.s32 %s43, 1
    %p47 = scmp.eq.s32.totalorder %s9, 1
    %p48 = scmp.ne.s32.totalorder %s43, %s45
    %p49 = scmp.eq.s32.totalorder %s9, 0
    %p50 = por %p48, %p49
    %p51 = scmp.ne.s32.totalorder %s43, %s45
    %p52 = scmp.eq.s32.totalorder %s14, 1
    %p53 = por %p51, %p52
    %p54 = scmp.ne.s32.totalorder %s45, %s46
    %p55 = scmp.eq.s32.totalorder %s14, 0
    %p56 = por %p54, %p55
    %p57 = scmp.ne.s32.totalorder %s45, %s46
    %p58 = scmp.eq.s32.totalorder %s15, 1
    %p59 = por %p57, %p58
    %p61 = scmp.ne.s32.totalorder %s46, %s60
    %p62 = scmp.eq.s32.totalorder %s15, 0
    %p63 = por %p61, %p62
    %s65 = sadd.s32 %s64, 1
    %p68 = scmp.eq.s32.totalorder %s9, 1
    %p69 = scmp.ne.s32.totalorder %s64, %s66
    %p70 = scmp.eq.s32.totalorder %s9, 0
    %p71 = por %p69, %p70
    %p72 = scmp.ne.s32.totalorder %s64, %s66
    %p73 = scmp.eq.s32.totalorder %s14, 1
    %p74 = por %p72, %p73
    %p75 = scmp.ne.s32.totalorder %s66, %s67
    %p76 = scmp.eq.s32.totalorder %s14, 0
    %p77 = por %p75, %p76
    %p78 = scmp.ne.s32.totalorder %s66, %s67
    %p79 = scmp.eq.s32.totalorder %s15, 1
    %p80 = por %p78, %p79
    %p82 = scmp.ne.s32.totalorder %s67, %s81
    %p83 = scmp.eq.s32.totalorder %s15, 0
    %p84 = por %p82, %p83
    %s85 = ssub.s32 %s9, %s16
    %p86 = scmp.eq.s32.totalorder %s85, 0
    %s88 = sadd.s32 %s87, 1
    %s89 = scalar_select %p86, %s87, %s88
    %p92 = pneg %p86
    %p93 = scmp.eq.s32.totalorder %s9, 1
    %p94 = por %p92, %p93
    %p95 = scmp.ne.s32.totalorder %s87, %s90
    %p96 = scmp.eq.s32.totalorder %s9, 0
    %p97 = por %p95, %p96
    %p98 = scmp.ne.s32.totalorder %s87, %s90
    %p99 = scmp.eq.s32.totalorder %s14, 1
    %p100 = por %p98, %p99
    %p101 = scmp.ne.s32.totalorder %s90, %s91
    %p102 = scmp.eq.s32.totalorder %s14, 0
    %p103 = por %p101, %p102
    %p104 = scmp.ne.s32.totalorder %s90, %s91
    %p105 = scmp.eq.s32.totalorder %s15, 1
    %p106 = por %p104, %p105
    %p108 = scmp.ne.s32.totalorder %s91, %s107
    %p109 = scmp.eq.s32.totalorder %s15, 0
    %p110 = por %p108, %p109
    %p111 = scmp.le.s32.totalorder 1, %s9
    %p112 = scmp.lt.s32.totalorder %s9, 3
    %p113 = pnand %p111, %p112
    %p114 = pneg %p113
    // Predicated region
    $region9: #{discriminator_forward.9} parent=5 // pred_check
      _
    $region10: #{discriminator_forward.9} parent=5 // pred_check_branch
      %116 = sbr.rel (%p113) target = $region12
    $region11: #{discriminator_forward.9} parent=5 // pred_region
      %s117 = ssub.s32 %s9, 1
      // Predicated region
      $region13: #{discriminator_forward.9} parent=11 // pred_check
        %p118 = pneg %p56
      $region14: #{discriminator_forward.9} parent=11 // pred_check_branch
        %120 = sbr.rel (%p118) target = $region16
      $region15: #{discriminator_forward.9} parent=11 // pred_region
        _
      $region16: #{discriminator_forward.9} parent=11 // pred_fallthru
        _
      // Predicated region
      $region17: #{discriminator_forward.9} parent=11 // pred_check
        %p121 = pneg %p77
      $region18: #{discriminator_forward.9} parent=11 // pred_check_branch
        %123 = sbr.rel (%p121) target = $region20
      $region19: #{discriminator_forward.9} parent=11 // pred_region
        _
      $region20: #{discriminator_forward.9} parent=11 // pred_fallthru
        _
    $region12: #{discriminator_forward.9} parent=5 // pred_fallthru
      _
    %p124 = scmp.lt.s32.totalorder %s9, 2
    // Predicated region
    $region21: #{discriminator_forward.9} parent=5 // pred_check
      %p125 = pneg %p124
    $region22: #{discriminator_forward.9} parent=5 // pred_check_branch
      %127 = sbr.rel (%p125) target = $region24
    $region23: #{discriminator_forward.9} parent=5 // pred_region
      // Predicated region
      $region25: #{discriminator_forward.9} parent=23 // pred_check
        %p128 = pneg %p29
      $region26: #{discriminator_forward.9} parent=23 // pred_check_branch
        %130 = sbr.rel (%p128) target = $region28
      $region27: #{discriminator_forward.9} parent=23 // pred_region
        %s131 = smul.u32 32, %s9
        %p132 = scmp.lt.s32.totalorder %s131, 63
        %s133 = scalar_select %p132, %s131, 63
        %s134 = smul.addr %s133, 4
        %s135 = scalar_lea.vmem %s0, %s134
        %s136 = smul.u32 32, %s9
      $region28: #{discriminator_forward.9} parent=23 // pred_fallthru
        _
    $region24: #{discriminator_forward.9} parent=5 // pred_fallthru
      _
    %p137 = scmp.le.s32.totalorder 1, %s9
    %p138 = scmp.lt.s32.totalorder %s9, 3
    %p139 = pnand %p137, %p138
    %p140 = pneg %p139
    // Predicated region
    $region29: #{discriminator_forward.9} parent=5 // pred_check
      _
    $region30: #{discriminator_forward.9} parent=5 // pred_check_branch
      %142 = sbr.rel (%p139) target = $region32
    $region31: #{discriminator_forward.9} parent=5 // pred_region
      %s143 = ssub.s32 %s9, 1
      %s144 = smul.u32 32, %s14
      %p145 = scmp.lt.s32.totalorder %s144, 63
      %s146 = scalar_select %p145, %s144, 63
      %s147 = smul.addr %s146, 4
      %s148 = scalar_lea.vmem %s0, %s147
      %p149 = pneg %p35
      %p150 = pneg %p32
      %p151 = pneg %p56
      %p152 = pneg %p53
      %p153 = pneg %p77
      %p154 = pneg %p74
      %p155 = pneg %p103
      %p156 = pneg %p100
      %s157 = smul.u32 32, %s14
      %p158 = scmp.lt.s32.totalorder %s157, 63
      %s159 = scalar_select %p158, %s157, 63
      %s160 = smul.addr %s159, 4
      %s161 = scalar_lea.vmem %s3, %s160
      %s162 = smul.u32 32, %s14
      %p163 = scmp.lt.s32.totalorder %s162, 63
      %s164 = scalar_select %p163, %s162, 63
      %s165 = smul.addr %s164, 4
      %s166 = scalar_lea.vmem %s0, %s165
      %s167 = smul.u32 32, %s14
      %s168 = smul.u32 32, %s14
      %p169 = scmp.lt.s32.totalorder %s168, 63
      %s170 = scalar_select %p169, %s168, 63
      %s171 = smul.addr %s170, 4
      %s172 = scalar_lea.vmem %s3, %s171
      %s173 = smul.u32 32, %s14
      %v174 = vld [vmem:[%s166] sm:$0xf]
      %v175 = vld [vmem:[%s166 + $0x4] sm:$0xf]
      %v176 = vld [vmem:[%s166 + $0x8] sm:$0xf]
      %v177 = vld [vmem:[%s166 + $0xc] sm:$0xf]
      %v178 = vld [vmem:[%s166 + $0x10] sm:$0xf]
      %v179 = vld [vmem:[%s166 + $0x14] sm:$0xf]
      %v180 = vld [vmem:[%s166 + $0x18] sm:$0xf]
      %v181 = vld [vmem:[%s166 + $0x1c] sm:$0xf]
      %v182 = vld [vmem:[%s166 + $0x20] sm:$0xf]
      %v183 = vld [vmem:[%s166 + $0x24] sm:$0xf]
      %v184 = vld [vmem:[%s166 + $0x28] sm:$0xf]
      %v185 = vld [vmem:[%s166 + $0x2c] sm:$0xf]
      %v186 = vld [vmem:[%s166 + $0x30] sm:$0xf]
      %v187 = vld [vmem:[%s166 + $0x34] sm:$0xf]
      %v188 = vld [vmem:[%s166 + $0x38] sm:$0xf]
      %v189 = vld [vmem:[%s166 + $0x3c] sm:$0xf]
      %v190 = vld [vmem:[%s166 + $0x40] sm:$0xf]
      %v191 = vld [vmem:[%s166 + $0x44] sm:$0xf]
      %v192 = vld [vmem:[%s166 + $0x48] sm:$0xf]
      %v193 = vld [vmem:[%s166 + $0x4c] sm:$0xf]
      %v194 = vld [vmem:[%s166 + $0x50] sm:$0xf]
      %v195 = vld [vmem:[%s166 + $0x54] sm:$0xf]
      %v196 = vld [vmem:[%s166 + $0x58] sm:$0xf]
      %v197 = vld [vmem:[%s166 + $0x5c] sm:$0xf]
      %v198 = vld [vmem:[%s166 + $0x60] sm:$0xf]
      %v199 = vld [vmem:[%s166 + $0x64] sm:$0xf]
      %v200 = vld [vmem:[%s166 + $0x68] sm:$0xf]
      %v201 = vld [vmem:[%s166 + $0x6c] sm:$0xf]
      %v202 = vld [vmem:[%s166 + $0x70] sm:$0xf]
      %v203 = vld [vmem:[%s166 + $0x74] sm:$0xf]
      %v204 = vld [vmem:[%s166 + $0x78] sm:$0xf]
      %v205 = vld [vmem:[%s166 + $0x7c] sm:$0xf]
      %v206 = vunpack.c.l.bf16 %v174
      %v207 = vunpack.c.l.bf16 %v175
      %v208 = vunpack.c.l.bf16 %v176
      %v209 = vunpack.c.l.bf16 %v177
      %v210 = vunpack.c.l.bf16 %v178
      %v211 = vunpack.c.l.bf16 %v179
      %v212 = vunpack.c.l.bf16 %v180
      %v213 = vunpack.c.l.bf16 %v181
      %v214 = vunpack.c.l.bf16 %v182
      %v215 = vunpack.c.l.bf16 %v183
      %v216 = vunpack.c.l.bf16 %v184
      %v217 = vunpack.c.l.bf16 %v185
      %v218 = vunpack.c.l.bf16 %v186
      %v219 = vunpack.c.l.bf16 %v187
      %v220 = vunpack.c.l.bf16 %v188
      %v221 = vunpack.c.l.bf16 %v189
      %v222 = vunpack.c.l.bf16 %v190
      %v223 = vunpack.c.l.bf16 %v191
      %v224 = vunpack.c.l.bf16 %v192
      %v225 = vunpack.c.l.bf16 %v193
      %v226 = vunpack.c.l.bf16 %v194
      %v227 = vunpack.c.l.bf16 %v195
      %v228 = vunpack.c.l.bf16 %v196
      %v229 = vunpack.c.l.bf16 %v197
      %v230 = vunpack.c.l.bf16 %v198
      %v231 = vunpack.c.l.bf16 %v199
      %v232 = vunpack.c.l.bf16 %v200
      %v233 = vunpack.c.l.bf16 %v201
      %v234 = vunpack.c.l.bf16 %v202
      %v235 = vunpack.c.l.bf16 %v203
      %v236 = vunpack.c.l.bf16 %v204
      %v237 = vunpack.c.l.bf16 %v205
      %v238 = vld [vmem:[%s1] sm:$0x1]
      %v240 = vperm.slane %v238, 0
      %v242 = vmul.f32 %v206, %v240
      %v243 = vmul.f32 %v207, %v240
      %v244 = vmul.f32 %v208, %v240
      %v245 = vmul.f32 %v209, %v240
      %v246 = vmul.f32 %v210, %v240
      %v247 = vmul.f32 %v211, %v240
      %v248 = vmul.f32 %v212, %v240
      %v249 = vmul.f32 %v213, %v240
      %v250 = vmul.f32 %v214, %v240
      %v251 = vmul.f32 %v215, %v240
      %v252 = vmul.f32 %v216, %v240
      %v253 = vmul.f32 %v217, %v240
      %v254 = vmul.f32 %v218, %v240
      %v255 = vmul.f32 %v219, %v240
      %v256 = vmul.f32 %v220, %v240
      %v257 = vmul.f32 %v221, %v240
      %v258 = vmul.f32 %v222, %v240
      %v259 = vmul.f32 %v223, %v240
      %v260 = vmul.f32 %v224, %v240
      %v261 = vmul.f32 %v225, %v240
      %v262 = vmul.f32 %v226, %v240
      %v263 = vmul.f32 %v227, %v240
      %v264 = vmul.f32 %v228, %v240
      %v265 = vmul.f32 %v229, %v240
      %v266 = vmul.f32 %v230, %v240
      %v267 = vmul.f32 %v231, %v240
      %v268 = vmul.f32 %v232, %v240
      %v269 = vmul.f32 %v233, %v240
      %v270 = vmul.f32 %v234, %v240
      %v271 = vmul.f32 %v235, %v240
      %v272 = vmul.f32 %v236, %v240
      %v273 = vmul.f32 %v237, %v240
      %v274 = vld [vmem:[%s2] sm:$0x1]
      %v276 = vperm.slane %v274, 0
      %v278 = vadd.f32 %v242, %v276
      %v279 = vadd.f32 %v243, %v276
      %v280 = vadd.f32 %v244, %v276
      %v281 = vadd.f32 %v245, %v276
      %v282 = vadd.f32 %v246, %v276
      %v283 = vadd.f32 %v247, %v276
      %v284 = vadd.f32 %v248, %v276
      %v285 = vadd.f32 %v249, %v276
      %v286 = vadd.f32 %v250, %v276
      %v287 = vadd.f32 %v251, %v276
      %v288 = vadd.f32 %v252, %v276
      %v289 = vadd.f32 %v253, %v276
      %v290 = vadd.f32 %v254, %v276
      %v291 = vadd.f32 %v255, %v276
      %v292 = vadd.f32 %v256, %v276
      %v293 = vadd.f32 %v257, %v276
      %v294 = vadd.f32 %v258, %v276
      %v295 = vadd.f32 %v259, %v276
      %v296 = vadd.f32 %v260, %v276
      %v297 = vadd.f32 %v261, %v276
      %v298 = vadd.f32 %v262, %v276
      %v299 = vadd.f32 %v263, %v276
      %v300 = vadd.f32 %v264, %v276
      %v301 = vadd.f32 %v265, %v276
      %v302 = vadd.f32 %v266, %v276
      %v303 = vadd.f32 %v267, %v276
      %v304 = vadd.f32 %v268, %v276
      %v305 = vadd.f32 %v269, %v276
      %v306 = vadd.f32 %v270, %v276
      %v307 = vadd.f32 %v271, %v276
      %v308 = vadd.f32 %v272, %v276
      %v309 = vadd.f32 %v273, %v276
      %vm310 = vcmp.ge.f32.partialorder %v278, 0.0
      %vm311 = vcmp.ge.f32.partialorder %v279, 0.0
      %vm312 = vcmp.ge.f32.partialorder %v280, 0.0
      %vm313 = vcmp.ge.f32.partialorder %v281, 0.0
      %vm314 = vcmp.ge.f32.partialorder %v282, 0.0
      %vm315 = vcmp.ge.f32.partialorder %v283, 0.0
      %vm316 = vcmp.ge.f32.partialorder %v284, 0.0
      %vm317 = vcmp.ge.f32.partialorder %v285, 0.0
      %vm318 = vcmp.ge.f32.partialorder %v286, 0.0
      %vm319 = vcmp.ge.f32.partialorder %v287, 0.0
      %vm320 = vcmp.ge.f32.partialorder %v288, 0.0
      %vm321 = vcmp.ge.f32.partialorder %v289, 0.0
      %vm322 = vcmp.ge.f32.partialorder %v290, 0.0
      %vm323 = vcmp.ge.f32.partialorder %v291, 0.0
      %vm324 = vcmp.ge.f32.partialorder %v292, 0.0
      %vm325 = vcmp.ge.f32.partialorder %v293, 0.0
      %vm326 = vcmp.ge.f32.partialorder %v294, 0.0
      %vm327 = vcmp.ge.f32.partialorder %v295, 0.0
      %vm328 = vcmp.ge.f32.partialorder %v296, 0.0
      %vm329 = vcmp.ge.f32.partialorder %v297, 0.0
      %vm330 = vcmp.ge.f32.partialorder %v298, 0.0
      %vm331 = vcmp.ge.f32.partialorder %v299, 0.0
      %vm332 = vcmp.ge.f32.partialorder %v300, 0.0
      %vm333 = vcmp.ge.f32.partialorder %v301, 0.0
      %vm334 = vcmp.ge.f32.partialorder %v302, 0.0
      %vm335 = vcmp.ge.f32.partialorder %v303, 0.0
      %vm336 = vcmp.ge.f32.partialorder %v304, 0.0
      %vm337 = vcmp.ge.f32.partialorder %v305, 0.0
      %vm338 = vcmp.ge.f32.partialorder %v306, 0.0
      %vm339 = vcmp.ge.f32.partialorder %v307, 0.0
      %vm340 = vcmp.ge.f32.partialorder %v308, 0.0
      %vm341 = vcmp.ge.f32.partialorder %v309, 0.0
      %v342 = vmul.f32 %v278, 0.2
      %v343 = vmul.f32 %v279, 0.2
      %v344 = vmul.f32 %v280, 0.2
      %v345 = vmul.f32 %v281, 0.2
      %v346 = vmul.f32 %v282, 0.2
      %v347 = vmul.f32 %v283, 0.2
      %v348 = vmul.f32 %v284, 0.2
      %v349 = vmul.f32 %v285, 0.2
      %v350 = vmul.f32 %v286, 0.2
      %v351 = vmul.f32 %v287, 0.2
      %v352 = vmul.f32 %v288, 0.2
      %v353 = vmul.f32 %v289, 0.2
      %v354 = vmul.f32 %v290, 0.2
      %v355 = vmul.f32 %v291, 0.2
      %v356 = vmul.f32 %v292, 0.2
      %v357 = vmul.f32 %v293, 0.2
      %v358 = vmul.f32 %v294, 0.2
      %v359 = vmul.f32 %v295, 0.2
      %v360 = vmul.f32 %v296, 0.2
      %v361 = vmul.f32 %v297, 0.2
      %v362 = vmul.f32 %v298, 0.2
      %v363 = vmul.f32 %v299, 0.2
      %v364 = vmul.f32 %v300, 0.2
      %v365 = vmul.f32 %v301, 0.2
      %v366 = vmul.f32 %v302, 0.2
      %v367 = vmul.f32 %v303, 0.2
      %v368 = vmul.f32 %v304, 0.2
      %v369 = vmul.f32 %v305, 0.2
      %v370 = vmul.f32 %v306, 0.2
      %v371 = vmul.f32 %v307, 0.2
      %v372 = vmul.f32 %v308, 0.2
      %v373 = vmul.f32 %v309, 0.2
      %v374 = vsel %vm310, %v278, %v342
      %v375 = vsel %vm311, %v279, %v343
      %v376 = vsel %vm312, %v280, %v344
      %v377 = vsel %vm313, %v281, %v345
      %v378 = vsel %vm314, %v282, %v346
      %v379 = vsel %vm315, %v283, %v347
      %v380 = vsel %vm316, %v284, %v348
      %v381 = vsel %vm317, %v285, %v349
      %v382 = vsel %vm318, %v286, %v350
      %v383 = vsel %vm319, %v287, %v351
      %v384 = vsel %vm320, %v288, %v352
      %v385 = vsel %vm321, %v289, %v353
      %v386 = vsel %vm322, %v290, %v354
      %v387 = vsel %vm323, %v291, %v355
      %v388 = vsel %vm324, %v292, %v356
      %v389 = vsel %vm325, %v293, %v357
      %v390 = vsel %vm326, %v294, %v358
      %v391 = vsel %vm327, %v295, %v359
      %v392 = vsel %vm328, %v296, %v360
      %v393 = vsel %vm329, %v297, %v361
      %v394 = vsel %vm330, %v298, %v362
      %v395 = vsel %vm331, %v299, %v363
      %v396 = vsel %vm332, %v300, %v364
      %v397 = vsel %vm333, %v301, %v365
      %v398 = vsel %vm334, %v302, %v366
      %v399 = vsel %vm335, %v303, %v367
      %v400 = vsel %vm336, %v304, %v368
      %v401 = vsel %vm337, %v305, %v369
      %v402 = vsel %vm338, %v306, %v370
      %v403 = vsel %vm339, %v307, %v371
      %v404 = vsel %vm340, %v308, %v372
      %v405 = vsel %vm341, %v309, %v373
      %v406 = vpack.c.bf16 %v374, %v374
      %v407 = vpack.c.bf16 %v375, %v375
      %v408 = vpack.c.bf16 %v376, %v376
      %v409 = vpack.c.bf16 %v377, %v377
      %v410 = vpack.c.bf16 %v378, %v378
      %v411 = vpack.c.bf16 %v379, %v379
      %v412 = vpack.c.bf16 %v380, %v380
      %v413 = vpack.c.bf16 %v381, %v381
      %v414 = vpack.c.bf16 %v382, %v382
      %v415 = vpack.c.bf16 %v383, %v383
      %v416 = vpack.c.bf16 %v384, %v384
      %v417 = vpack.c.bf16 %v385, %v385
      %v418 = vpack.c.bf16 %v386, %v386
      %v419 = vpack.c.bf16 %v387, %v387
      %v420 = vpack.c.bf16 %v388, %v388
      %v421 = vpack.c.bf16 %v389, %v389
      %v422 = vpack.c.bf16 %v390, %v390
      %v423 = vpack.c.bf16 %v391, %v391
      %v424 = vpack.c.bf16 %v392, %v392
      %v425 = vpack.c.bf16 %v393, %v393
      %v426 = vpack.c.bf16 %v394, %v394
      %v427 = vpack.c.bf16 %v395, %v395
      %v428 = vpack.c.bf16 %v396, %v396
      %v429 = vpack.c.bf16 %v397, %v397
      %v430 = vpack.c.bf16 %v398, %v398
      %v431 = vpack.c.bf16 %v399, %v399
      %v432 = vpack.c.bf16 %v400, %v400
      %v433 = vpack.c.bf16 %v401, %v401
      %v434 = vpack.c.bf16 %v402, %v402
      %v435 = vpack.c.bf16 %v403, %v403
      %v436 = vpack.c.bf16 %v404, %v404
      %v437 = vpack.c.bf16 %v405, %v405
      %438 = vst [vmem:[%s172] sm:$0xf] %v406
      %439 = vst [vmem:[%s172 + $0x4] sm:$0xf] %v407
      %440 = vst [vmem:[%s172 + $0x8] sm:$0xf] %v408
      %441 = vst [vmem:[%s172 + $0xc] sm:$0xf] %v409
      %442 = vst [vmem:[%s172 + $0x10] sm:$0xf] %v410
      %443 = vst [vmem:[%s172 + $0x14] sm:$0xf] %v411
      %444 = vst [vmem:[%s172 + $0x18] sm:$0xf] %v412
      %445 = vst [vmem:[%s172 + $0x1c] sm:$0xf] %v413
      %446 = vst [vmem:[%s172 + $0x20] sm:$0xf] %v414
      %447 = vst [vmem:[%s172 + $0x24] sm:$0xf] %v415
      %448 = vst [vmem:[%s172 + $0x28] sm:$0xf] %v416
      %449 = vst [vmem:[%s172 + $0x2c] sm:$0xf] %v417
      %450 = vst [vmem:[%s172 + $0x30] sm:$0xf] %v418
      %451 = vst [vmem:[%s172 + $0x34] sm:$0xf] %v419
      %452 = vst [vmem:[%s172 + $0x38] sm:$0xf] %v420
      %453 = vst [vmem:[%s172 + $0x3c] sm:$0xf] %v421
      %454 = vst [vmem:[%s172 + $0x40] sm:$0xf] %v422
      %455 = vst [vmem:[%s172 + $0x44] sm:$0xf] %v423
      %456 = vst [vmem:[%s172 + $0x48] sm:$0xf] %v424
      %457 = vst [vmem:[%s172 + $0x4c] sm:$0xf] %v425
      %458 = vst [vmem:[%s172 + $0x50] sm:$0xf] %v426
      %459 = vst [vmem:[%s172 + $0x54] sm:$0xf] %v427
      %460 = vst [vmem:[%s172 + $0x58] sm:$0xf] %v428
      %461 = vst [vmem:[%s172 + $0x5c] sm:$0xf] %v429
      %462 = vst [vmem:[%s172 + $0x60] sm:$0xf] %v430
      %463 = vst [vmem:[%s172 + $0x64] sm:$0xf] %v431
      %464 = vst [vmem:[%s172 + $0x68] sm:$0xf] %v432
      %465 = vst [vmem:[%s172 + $0x6c] sm:$0xf] %v433
      %466 = vst [vmem:[%s172 + $0x70] sm:$0xf] %v434
      %467 = vst [vmem:[%s172 + $0x74] sm:$0xf] %v435
      %468 = vst [vmem:[%s172 + $0x78] sm:$0xf] %v436
      %469 = vst [vmem:[%s172 + $0x7c] sm:$0xf] %v437
      %s470 = smul.u32 32, %s14
      %p471 = scmp.lt.s32.totalorder %s470, 63
      %s472 = scalar_select %p471, %s470, 63
      %s473 = smul.addr %s472, 4
      %s474 = scalar_lea.vmem %s3, %s473
      // Predicated region
      $region33: #{discriminator_forward.9} parent=31 // pred_check
        %p475 = pneg %p100
      $region34: #{discriminator_forward.9} parent=31 // pred_check_branch
        %477 = sbr.rel (%p475) target = $region36
      $region35: #{discriminator_forward.9} parent=31 // pred_region
        %s478 = smul.u32 32, %s14
      $region36: #{discriminator_forward.9} parent=31 // pred_fallthru
        _
    $region32: #{discriminator_forward.9} parent=5 // pred_fallthru
      _
    %p479 = scmp.le.s32.totalorder 2, %s9
    // Predicated region
    $region37: #{discriminator_forward.9} parent=5 // pred_check
      %p480 = pneg %p479
    $region38: #{discriminator_forward.9} parent=5 // pred_check_branch
      %482 = sbr.rel (%p480) target = $region40
    $region39: #{discriminator_forward.9} parent=5 // pred_region
      %s483 = ssub.s32 %s9, 2
      // Predicated region
      $region41: #{discriminator_forward.9} parent=39 // pred_check
        %p484 = pneg %p106
      $region42: #{discriminator_forward.9} parent=39 // pred_check_branch
        %486 = sbr.rel (%p484) target = $region44
      $region43: #{discriminator_forward.9} parent=39 // pred_region
        %s487 = smul.u32 32, %s15
        %p488 = scmp.lt.s32.totalorder %s487, 63
        %s489 = scalar_select %p488, %s487, 63
        %s490 = smul.addr %s489, 4
        %s491 = scalar_lea.vmem %s3, %s490
      $region44: #{discriminator_forward.9} parent=39 // pred_fallthru
        _
    $region40: #{discriminator_forward.9} parent=5 // pred_fallthru
      _
  $region6: #{discriminator_forward.9} parent=0 // loop_footer
    %s13 = sadd.s32 1, %s9
  $region7: #{discriminator_forward.9} parent=0 // loop_footer_branch
    %8 = sbr.rel target = $region3
  $region8: #{discriminator_forward.9} parent=0 // loop_exit
    _

// kernel: discriminator_forward.11
$region0: #{discriminator_forward.11}
  #allocation0 [shape = 'u32[]', space=smem, size = 0x4, offset = 0x4, fixed_abs, tag = 'smem constant byte address 0x4 - core index']
  #allocation1 [shape = 'u32[72,128]{1,0:T(1,128)}', space=vmem, size = 0x9000, scoped, tag = 'internal scratch']
  %s0 = inlined_call_operand.vmem [shape: bf16[128,256], index: 0, kind: input, shape index: {}]
  %s1 = inlined_call_operand.vmem [shape: f32[1,256], index: 1, kind: input, shape index: {}]
  %s2 = inlined_call_operand.vmem [shape: f32[1,256], index: 2, kind: input, shape index: {}]
  %s3 = inlined_call_operand.vmem [shape: bf16[128,256], index: 3, kind: output, shape index: {}]
  %s4 = sld [smem:[#allocation0]]
  $region22: #{discriminator_forward.11} parent=0
    _
  %s6 = ssub.s32 1, %s4
  %s7 = scalar_select 0, %s6, %s4
  // Predicated region
  $region2: #{discriminator_forward.11} parent=0 // pred_check
    _
  $region3: #{discriminator_forward.11} parent=0 // pred_check_branch
    %9 = sbr.rel (0) target = $region5
  $region4: #{discriminator_forward.11} parent=0 // pred_region
    _
  $region5: #{discriminator_forward.11} parent=0 // pred_fallthru
    _
  // Predicated region
  $region6: #{discriminator_forward.11} parent=0 // pred_check
    _
  $region7: #{discriminator_forward.11} parent=0 // pred_check_branch
    %11 = sbr.rel (0) target = $region9
  $region8: #{discriminator_forward.11} parent=0 // pred_region
    _
  $region9: #{discriminator_forward.11} parent=0 // pred_fallthru
    _
  // Predicated region
  $region10: #{discriminator_forward.11} parent=0 // pred_check
    _
  $region11: #{discriminator_forward.11} parent=0 // pred_check_branch
    %13 = sbr.rel (0) target = $region13
  $region12: #{discriminator_forward.11} parent=0 // pred_region
    _
  $region13: #{discriminator_forward.11} parent=0 // pred_fallthru
    _
  %v14 = vld [vmem:[%s0] sm:$0xff]
  %v15 = vld [vmem:[%s0 + $0x8] sm:$0xff]
  %v16 = vld [vmem:[%s0 + $0x10] sm:$0xff]
  %v17 = vld [vmem:[%s0 + $0x18] sm:$0xff]
  %v18 = vld [vmem:[%s0 + $0x20] sm:$0xff]
  %v19 = vld [vmem:[%s0 + $0x28] sm:$0xff]
  %v20 = vld [vmem:[%s0 + $0x30] sm:$0xff]
  %v21 = vld [vmem:[%s0 + $0x38] sm:$0xff]
  %v22 = vld [vmem:[%s0 + $0x40] sm:$0xff]
  %v23 = vld [vmem:[%s0 + $0x48] sm:$0xff]
  %v24 = vld [vmem:[%s0 + $0x50] sm:$0xff]
  %v25 = vld [vmem:[%s0 + $0x58] sm:$0xff]
  %v26 = vld [vmem:[%s0 + $0x60] sm:$0xff]
  %v27 = vld [vmem:[%s0 + $0x68] sm:$0xff]
  %v28 = vld [vmem:[%s0 + $0x70] sm:$0xff]
  %v29 = vld [vmem:[%s0 + $0x78] sm:$0xff]
  %v30 = vunpack.c.l.bf16 %v14
  %v31 = vunpack.c.h.bf16 %v14
  %v32 = vunpack.c.l.bf16 %v15
  %v33 = vunpack.c.h.bf16 %v15
  %v34 = vunpack.c.l.bf16 %v16
  %v35 = vunpack.c.h.bf16 %v16
  %v36 = vunpack.c.l.bf16 %v17
  %v37 = vunpack.c.h.bf16 %v17
  %v38 = vunpack.c.l.bf16 %v18
  %v39 = vunpack.c.h.bf16 %v18
  %v40 = vunpack.c.l.bf16 %v19
  %v41 = vunpack.c.h.bf16 %v19
  %v42 = vunpack.c.l.bf16 %v20
  %v43 = vunpack.c.h.bf16 %v20
  %v44 = vunpack.c.l.bf16 %v21
  %v45 = vunpack.c.h.bf16 %v21
  %v46 = vunpack.c.l.bf16 %v22
  %v47 = vunpack.c.h.bf16 %v22
  %v48 = vunpack.c.l.bf16 %v23
  %v49 = vunpack.c.h.bf16 %v23
  %v50 = vunpack.c.l.bf16 %v24
  %v51 = vunpack.c.h.bf16 %v24
  %v52 = vunpack.c.l.bf16 %v25
  %v53 = vunpack.c.h.bf16 %v25
  %v54 = vunpack.c.l.bf16 %v26
  %v55 = vunpack.c.h.bf16 %v26
  %v56 = vunpack.c.l.bf16 %v27
  %v57 = vunpack.c.h.bf16 %v27
  %v58 = vunpack.c.l.bf16 %v28
  %v59 = vunpack.c.h.bf16 %v28
  %v60 = vunpack.c.l.bf16 %v29
  %v61 = vunpack.c.h.bf16 %v29
  %v62 = vld [vmem:[%s1] sm:$0x3]
  %v64 = vperm.slane %v62, 0
  %v65 = vperm.slane %v62, 1
  %v68 = vmul.f32 %v30, %v64
  %v69 = vmul.f32 %v31, %v65
  %v70 = vmul.f32 %v32, %v64
  %v71 = vmul.f32 %v33, %v65
  %v72 = vmul.f32 %v34, %v64
  %v73 = vmul.f32 %v35, %v65
  %v74 = vmul.f32 %v36, %v64
  %v75 = vmul.f32 %v37, %v65
  %v76 = vmul.f32 %v38, %v64
  %v77 = vmul.f32 %v39, %v65
  %v78 = vmul.f32 %v40, %v64
  %v79 = vmul.f32 %v41, %v65
  %v80 = vmul.f32 %v42, %v64
  %v81 = vmul.f32 %v43, %v65
  %v82 = vmul.f32 %v44, %v64
  %v83 = vmul.f32 %v45, %v65
  %v84 = vmul.f32 %v46, %v64
  %v85 = vmul.f32 %v47, %v65
  %v86 = vmul.f32 %v48, %v64
  %v87 = vmul.f32 %v49, %v65
  %v88 = vmul.f32 %v50, %v64
  %v89 = vmul.f32 %v51, %v65
  %v90 = vmul.f32 %v52, %v64
  %v91 = vmul.f32 %v53, %v65
  %v92 = vmul.f32 %v54, %v64
  %v93 = vmul.f32 %v55, %v65
  %v94 = vmul.f32 %v56, %v64
  %v95 = vmul.f32 %v57, %v65
  %v96 = vmul.f32 %v58, %v64
  %v97 = vmul.f32 %v59, %v65
  %v98 = vmul.f32 %v60, %v64
  %v99 = vmul.f32 %v61, %v65
  %v100 = vld [vmem:[%s2] sm:$0x3]
  %v102 = vperm.slane %v100, 0
  %v103 = vperm.slane %v100, 1
  %v106 = vadd.f32 %v68, %v102
  %v107 = vadd.f32 %v69, %v103
  %v108 = vadd.f32 %v70, %v102
  %v109 = vadd.f32 %v71, %v103
  %v110 = vadd.f32 %v72, %v102
  %v111 = vadd.f32 %v73, %v103
  %v112 = vadd.f32 %v74, %v102
  %v113 = vadd.f32 %v75, %v103
  %v114 = vadd.f32 %v76, %v102
  %v115 = vadd.f32 %v77, %v103
  %v116 = vadd.f32 %v78, %v102
  %v117 = vadd.f32 %v79, %v103
  %v118 = vadd.f32 %v80, %v102
  %v119 = vadd.f32 %v81, %v103
  %v120 = vadd.f32 %v82, %v102
  %v121 = vadd.f32 %v83, %v103
  %v122 = vadd.f32 %v84, %v102
  %v123 = vadd.f32 %v85, %v103
  %v124 = vadd.f32 %v86, %v102
  %v125 = vadd.f32 %v87, %v103
  %v126 = vadd.f32 %v88, %v102
  %v127 = vadd.f32 %v89, %v103
  %v128 = vadd.f32 %v90, %v102
  %v129 = vadd.f32 %v91, %v103
  %v130 = vadd.f32 %v92, %v102
  %v131 = vadd.f32 %v93, %v103
  %v132 = vadd.f32 %v94, %v102
  %v133 = vadd.f32 %v95, %v103
  %v134 = vadd.f32 %v96, %v102
  %v135 = vadd.f32 %v97, %v103
  %v136 = vadd.f32 %v98, %v102
  %v137 = vadd.f32 %v99, %v103
  %vm138 = vcmp.ge.f32.partialorder %v106, 0.0
  %vm139 = vcmp.ge.f32.partialorder %v107, 0.0
  %vm140 = vcmp.ge.f32.partialorder %v108, 0.0
  %vm141 = vcmp.ge.f32.partialorder %v109, 0.0
  %vm142 = vcmp.ge.f32.partialorder %v110, 0.0
  %vm143 = vcmp.ge.f32.partialorder %v111, 0.0
  %vm144 = vcmp.ge.f32.partialorder %v112, 0.0
  %vm145 = vcmp.ge.f32.partialorder %v113, 0.0
  %vm146 = vcmp.ge.f32.partialorder %v114, 0.0
  %vm147 = vcmp.ge.f32.partialorder %v115, 0.0
  %vm148 = vcmp.ge.f32.partialorder %v116, 0.0
  %vm149 = vcmp.ge.f32.partialorder %v117, 0.0
  %vm150 = vcmp.ge.f32.partialorder %v118, 0.0
  %vm151 = vcmp.ge.f32.partialorder %v119, 0.0
  %vm152 = vcmp.ge.f32.partialorder %v120, 0.0
  %vm153 = vcmp.ge.f32.partialorder %v121, 0.0
  %vm154 = vcmp.ge.f32.partialorder %v122, 0.0
  %vm155 = vcmp.ge.f32.partialorder %v123, 0.0
  %vm156 = vcmp.ge.f32.partialorder %v124, 0.0
  %vm157 = vcmp.ge.f32.partialorder %v125, 0.0
  %vm158 = vcmp.ge.f32.partialorder %v126, 0.0
  %vm159 = vcmp.ge.f32.partialorder %v127, 0.0
  %vm160 = vcmp.ge.f32.partialorder %v128, 0.0
  %vm161 = vcmp.ge.f32.partialorder %v129, 0.0
  %vm162 = vcmp.ge.f32.partialorder %v130, 0.0
  %vm163 = vcmp.ge.f32.partialorder %v131, 0.0
  %vm164 = vcmp.ge.f32.partialorder %v132, 0.0
  %vm165 = vcmp.ge.f32.partialorder %v133, 0.0
  %vm166 = vcmp.ge.f32.partialorder %v134, 0.0
  %vm167 = vcmp.ge.f32.partialorder %v135, 0.0
  %vm168 = vcmp.ge.f32.partialorder %v136, 0.0
  %vm169 = vcmp.ge.f32.partialorder %v137, 0.0
  %v170 = vmul.f32 %v106, 0.2
  %v171 = vmul.f32 %v107, 0.2
  %v172 = vmul.f32 %v108, 0.2
  %v173 = vmul.f32 %v109, 0.2
  %v174 = vmul.f32 %v110, 0.2
  %v175 = vmul.f32 %v111, 0.2
  %v176 = vmul.f32 %v112, 0.2
  %v177 = vmul.f32 %v113, 0.2
  %v178 = vmul.f32 %v114, 0.2
  %v179 = vmul.f32 %v115, 0.2
  %v180 = vmul.f32 %v116, 0.2
  %v181 = vmul.f32 %v117, 0.2
  %v182 = vmul.f32 %v118, 0.2
  %v183 = vmul.f32 %v119, 0.2
  %v184 = vmul.f32 %v120, 0.2
  %v185 = vmul.f32 %v121, 0.2
  %v186 = vmul.f32 %v122, 0.2
  %v187 = vmul.f32 %v123, 0.2
  %v188 = vmul.f32 %v124, 0.2
  %v189 = vmul.f32 %v125, 0.2
  %v190 = vmul.f32 %v126, 0.2
  %v191 = vmul.f32 %v127, 0.2
  %v192 = vmul.f32 %v128, 0.2
  %v193 = vmul.f32 %v129, 0.2
  %v194 = vmul.f32 %v130, 0.2
  %v195 = vmul.f32 %v131, 0.2
  %v196 = vmul.f32 %v132, 0.2
  %v197 = vmul.f32 %v133, 0.2
  %v198 = vmul.f32 %v134, 0.2
  %v199 = vmul.f32 %v135, 0.2
  %v200 = vmul.f32 %v136, 0.2
  %v201 = vmul.f32 %v137, 0.2
  %v202 = vsel %vm138, %v106, %v170
  %v203 = vsel %vm139, %v107, %v171
  %v204 = vsel %vm140, %v108, %v172
  %v205 = vsel %vm141, %v109, %v173
  %v206 = vsel %vm142, %v110, %v174
  %v207 = vsel %vm143, %v111, %v175
  %v208 = vsel %vm144, %v112, %v176
  %v209 = vsel %vm145, %v113, %v177
  %v210 = vsel %vm146, %v114, %v178
  %v211 = vsel %vm147, %v115, %v179
  %v212 = vsel %vm148, %v116, %v180
  %v213 = vsel %vm149, %v117, %v181
  %v214 = vsel %vm150, %v118, %v182
  %v215 = vsel %vm151, %v119, %v183
  %v216 = vsel %vm152, %v120, %v184
  %v217 = vsel %vm153, %v121, %v185
  %v218 = vsel %vm154, %v122, %v186
  %v219 = vsel %vm155, %v123, %v187
  %v220 = vsel %vm156, %v124, %v188
  %v221 = vsel %vm157, %v125, %v189
  %v222 = vsel %vm158, %v126, %v190
  %v223 = vsel %vm159, %v127, %v191
  %v224 = vsel %vm160, %v128, %v192
  %v225 = vsel %vm161, %v129, %v193
  %v226 = vsel %vm162, %v130, %v194
  %v227 = vsel %vm163, %v131, %v195
  %v228 = vsel %vm164, %v132, %v196
  %v229 = vsel %vm165, %v133, %v197
  %v230 = vsel %vm166, %v134, %v198
  %v231 = vsel %vm167, %v135, %v199
  %v232 = vsel %vm168, %v136, %v200
  %v233 = vsel %vm169, %v137, %v201
  %v234 = vpack.c.bf16 %v203, %v202
  %v235 = vpack.c.bf16 %v205, %v204
  %v236 = vpack.c.bf16 %v207, %v206
  %v237 = vpack.c.bf16 %v209, %v208
  %v238 = vpack.c.bf16 %v211, %v210
  %v239 = vpack.c.bf16 %v213, %v212
  %v240 = vpack.c.bf16 %v215, %v214
  %v241 = vpack.c.bf16 %v217, %v216
  %v242 = vpack.c.bf16 %v219, %v218
  %v243 = vpack.c.bf16 %v221, %v220
  %v244 = vpack.c.bf16 %v223, %v222
  %v245 = vpack.c.bf16 %v225, %v224
  %v246 = vpack.c.bf16 %v227, %v226
  %v247 = vpack.c.bf16 %v229, %v228
  %v248 = vpack.c.bf16 %v231, %v230
  %v249 = vpack.c.bf16 %v233, %v232
  %250 = vst [vmem:[%s3] sm:$0xff] %v234
  %251 = vst [vmem:[%s3 + $0x8] sm:$0xff] %v235
  %252 = vst [vmem:[%s3 + $0x10] sm:$0xff] %v236
  %253 = vst [vmem:[%s3 + $0x18] sm:$0xff] %v237
  %254 = vst [vmem:[%s3 + $0x20] sm:$0xff] %v238
  %255 = vst [vmem:[%s3 + $0x28] sm:$0xff] %v239
  %256 = vst [vmem:[%s3 + $0x30] sm:$0xff] %v240
  %257 = vst [vmem:[%s3 + $0x38] sm:$0xff] %v241
  %258 = vst [vmem:[%s3 + $0x40] sm:$0xff] %v242
  %259 = vst [vmem:[%s3 + $0x48] sm:$0xff] %v243
  %260 = vst [vmem:[%s3 + $0x50] sm:$0xff] %v244
  %261 = vst [vmem:[%s3 + $0x58] sm:$0xff] %v245
  %262 = vst [vmem:[%s3 + $0x60] sm:$0xff] %v246
  %263 = vst [vmem:[%s3 + $0x68] sm:$0xff] %v247
  %264 = vst [vmem:[%s3 + $0x70] sm:$0xff] %v248
  %265 = vst [vmem:[%s3 + $0x78] sm:$0xff] %v249
  // Predicated region
  $region14: #{discriminator_forward.11} parent=0 // pred_check
    _
  $region15: #{discriminator_forward.11} parent=0 // pred_check_branch
    %267 = sbr.rel (0) target = $region17
  $region16: #{discriminator_forward.11} parent=0 // pred_region
    _
  $region17: #{discriminator_forward.11} parent=0 // pred_fallthru
    _
  // Predicated region
  $region18: #{discriminator_forward.11} parent=0 // pred_check
    _
  $region19: #{discriminator_forward.11} parent=0 // pred_check_branch
    %269 = sbr.rel (0) target = $region21
  $region20: #{discriminator_forward.11} parent=0 // pred_region
    _
  $region21: #{discriminator_forward.11} parent=0 // pred_fallthru
    _

// kernel: discriminator_forward.10
$region0: #{discriminator_forward.10}
  #allocation0 [shape = 'u32[]', space=smem, size = 0x4, offset = 0x4, fixed_abs, tag = 'smem constant byte address 0x4 - core index']
  #allocation1 [shape = 'u32[72,128]{1,0:T(1,128)}', space=vmem, size = 0x9000, scoped, tag = 'internal scratch']
  #allocation2 [shape = 'f32[128,128]{1,0:T(8,128)}', space=vmem, size = 0x10000, scoped, tag = 'scratch operand']
  %s0 = inlined_call_operand.vmem [shape: bf16[128,2048], index: 0, kind: input, shape index: {}]
  %s1 = inlined_call_operand.vmem [shape: bf16[2048,256], index: 1, kind: input, shape index: {}]
  %s2 = inlined_call_operand.vmem [shape: bf16[128,256], index: 2, kind: output, shape index: {0}]
  %s3 = inlined_call_operand.vmem [shape: f32[8,256], index: 3, kind: output, shape index: {1}]
  %s4 = inlined_call_operand.vmem [shape: f32[8,256], index: 4, kind: output, shape index: {2}]
  %5 = xla_tuple %s2, %s3, %s4
  %s6 = sld [smem:[#allocation0]]
  $region166: #{discriminator_forward.10} parent=0
    _
  %s8 = ssub.s32 1, %s6
  %s9 = scalar_select 0, %s8, %s6
  $region1: #{discriminator_forward.10} parent=0
    #allocation3 [shape = 'u8[524288]{0}', space=vmem, size = 0x80000, scoped, tag = 'input window, operand 0']
    #allocation4 [shape = 'u8[524288]{0}', space=vmem, size = 0x80000, scoped, tag = 'input window, operand 1']
    #allocation5 [shape = 'u8[65536]{0}', space=vmem, size = 0x10000, scoped, tag = 'output window, operand 0']
    loop: start=0, step=1, limit=6
    $region2: #{discriminator_forward.10} parent=1 // loop_pre_header
      _
    $region3: #{discriminator_forward.10} parent=1 // loop_header
      %s11 = sphi 0, %s15
      %p12 = scmp.ge.s32.totalorder %s11, 6
      %s18 = sphi 0, %s37
      %s19 = sphi 0, %s33
      %s20 = sphi 0, %s29
      %s21 = sphi 0, %s18
      %s22 = sphi 0, %s19
      %s23 = sphi 0, %s20
      %s24 = sphi 0, %s21
      %s25 = sphi 0, %s22
      %s26 = sphi 0, %s23
      %s42 = sphi 0, %s44
      %s45 = sphi 0, %s42
      %s46 = sphi 0, %s45
      %s62 = sphi 0, %s46
      %s70 = sphi 0, %s72
      %s73 = sphi 0, %s70
      %s74 = sphi 0, %s73
      %s90 = sphi 0, %s74
      %s98 = sphi 0, %s100
      %s101 = sphi 0, %s98
      %s102 = sphi 0, %s101
      %s118 = sphi 0, %s102
      %s126 = sphi 0, %s128
      %s129 = sphi 0, %s126
      %s130 = sphi 0, %s129
      %s146 = sphi 0, %s130
      %s154 = sphi 0, %s156
      %s157 = sphi 0, %s154
      %s158 = sphi 0, %s157
      %s174 = sphi 0, %s158
    $region4: #{discriminator_forward.10} parent=1 // loop_header_branch
      %14 = sbr.rel (%p12) target = $region8
    $region5: #{discriminator_forward.10} parent=1 // loop_body
      %s16 = ssub.s32 %s11, 1
      %s17 = ssub.s32 %s11, 2
      %s27 = sadd.s32 1, %s20
      %p28 = scmp.ge.s32.totalorder %s27, 2
      %s29 = scalar_select %p28, 0, %s27
      %s30 = sadd.s32 1, %s19
      %s31 = scalar_select %p28, %s30, %s19
      %p32 = scmp.ge.s32.totalorder %s31, 2
      %s33 = scalar_select %p32, 0, %s31
      %s34 = sadd.s32 1, %s18
      %s35 = scalar_select %p32, %s34, %s18
      %p36 = scmp.ge.s32.totalorder %s35, 1
      %s37 = scalar_select %p36, 0, %s35
      %s38 = ssub.s32 %s18, %s37
      %s39 = ssub.s32 %s20, %s29
      %s40 = sor.u32 %s38, %s39
      %p41 = scmp.eq.s32.totalorder %s40, 0
      %s43 = sadd.s32 %s42, 1
      %s44 = scalar_select %p41, %s42, %s43
      %p47 = pneg %p41
      %p48 = scmp.eq.s32.totalorder %s11, 3
      %p49 = por %p47, %p48
      %p50 = scmp.ne.s32.totalorder %s42, %s45
      %p51 = scmp.eq.s32.totalorder %s11, 0
      %p52 = por %p50, %p51
      %p53 = scmp.ne.s32.totalorder %s42, %s45
      %p54 = scmp.eq.s32.totalorder %s16, 3
      %p55 = por %p53, %p54
      %p56 = scmp.ne.s32.totalorder %s45, %s46
      %p57 = scmp.eq.s32.totalorder %s16, 0
      %p58 = por %p56, %p57
      %p59 = scmp.ne.s32.totalorder %s45, %s46
      %p60 = scmp.eq.s32.totalorder %s17, 3
      %p61 = por %p59, %p60
      %p63 = scmp.ne.s32.totalorder %s46, %s62
      %p64 = scmp.eq.s32.totalorder %s17, 0
      %p65 = por %p63, %p64
      %s66 = ssub.s32 %s20, %s29
      %s67 = ssub.s32 %s19, %s33
      %s68 = sor.u32 %s66, %s67
      %p69 = scmp.eq.s32.totalorder %s68, 0
      %s71 = sadd.s32 %s70, 1
      %s72 = scalar_select %p69, %s70, %s71
      %p75 = pneg %p69
      %p76 = scmp.eq.s32.totalorder %s11, 3
      %p77 = por %p75, %p76
      %p78 = scmp.ne.s32.totalorder %s70, %s73
      %p79 = scmp.eq.s32.totalorder %s11, 0
      %p80 = por %p78, %p79
      %p81 = scmp.ne.s32.totalorder %s70, %s73
      %p82 = scmp.eq.s32.totalorder %s16, 3
      %p83 = por %p81, %p82
      %p84 = scmp.ne.s32.totalorder %s73, %s74
      %p85 = scmp.eq.s32.totalorder %s16, 0
      %p86 = por %p84, %p85
      %p87 = scmp.ne.s32.totalorder %s73, %s74
      %p88 = scmp.eq.s32.totalorder %s17, 3
      %p89 = por %p87, %p88
      %p91 = scmp.ne.s32.totalorder %s74, %s90
      %p92 = scmp.eq.s32.totalorder %s17, 0
      %p93 = por %p91, %p92
      %s94 = ssub.s32 %s18, %s37
      %s95 = ssub.s32 %s19, %s33
      %s96 = sor.u32 %s94, %s95
      %p97 = scmp.eq.s32.totalorder %s96, 0
      %s99 = sadd.s32 %s98, 1
      %s100 = scalar_select %p97, %s98, %s99
      %p103 = pneg %p97
      %p104 = scmp.eq.s32.totalorder %s11, 3
      %p105 = por %p103, %p104
      %p106 = scmp.ne.s32.totalorder %s98, %s101
      %p107 = scmp.eq.s32.totalorder %s11, 0
      %p108 = por %p106, %p107
      %p109 = scmp.ne.s32.totalorder %s98, %s101
      %p110 = scmp.eq.s32.totalorder %s16, 3
      %p111 = por %p109, %p110
      %p112 = scmp.ne.s32.totalorder %s101, %s102
      %p113 = scmp.eq.s32.totalorder %s16, 0
      %p114 = por %p112, %p113
      %p115 = scmp.ne.s32.totalorder %s101, %s102
      %p116 = scmp.eq.s32.totalorder %s17, 3
      %p117 = por %p115, %p116
      %p119 = scmp.ne.s32.totalorder %s102, %s118
      %p120 = scmp.eq.s32.totalorder %s17, 0
      %p121 = por %p119, %p120
      %s122 = ssub.s32 %s18, %s37
      %s123 = ssub.s32 %s19, %s33
      %s124 = sor.u32 %s122, %s123
      %p125 = scmp.eq.s32.totalorder %s124, 0
      %s127 = sadd.s32 %s126, 1
      %s128 = scalar_select %p125, %s126, %s127
      %p131 = pneg %p125
      %p132 = scmp.eq.s32.totalorder %s11, 3
      %p133 = por %p131, %p132
      %p134 = scmp.ne.s32.totalorder %s126, %s129
      %p135 = scmp.eq.s32.totalorder %s11, 0
      %p136 = por %p134, %p135
      %p137 = scmp.ne.s32.totalorder %s126, %s129
      %p138 = scmp.eq.s32.totalorder %s16, 3
      %p139 = por %p137, %p138
      %p140 = scmp.ne.s32.totalorder %s129, %s130
      %p141 = scmp.eq.s32.totalorder %s16, 0
      %p142 = por %p140, %p141
      %p143 = scmp.ne.s32.totalorder %s129, %s130
      %p144 = scmp.eq.s32.totalorder %s17, 3
      %p145 = por %p143, %p144
      %p147 = scmp.ne.s32.totalorder %s130, %s146
      %p148 = scmp.eq.s32.totalorder %s17, 0
      %p149 = por %p147, %p148
      %s150 = ssub.s32 %s18, %s37
      %s151 = ssub.s32 %s19, %s33
      %s152 = sor.u32 %s150, %s151
      %p153 = scmp.eq.s32.totalorder %s152, 0
      %s155 = sadd.s32 %s154, 1
      %s156 = scalar_select %p153, %s154, %s155
      %p159 = pneg %p153
      %p160 = scmp.eq.s32.totalorder %s11, 3
      %p161 = por %p159, %p160
      %p162 = scmp.ne.s32.totalorder %s154, %s157
      %p163 = scmp.eq.s32.totalorder %s11, 0
      %p164 = por %p162, %p163
      %p165 = scmp.ne.s32.totalorder %s154, %s157
      %p166 = scmp.eq.s32.totalorder %s16, 3
      %p167 = por %p165, %p166
      %p168 = scmp.ne.s32.totalorder %s157, %s158
      %p169 = scmp.eq.s32.totalorder %s16, 0
      %p170 = por %p168, %p169
      %p171 = scmp.ne.s32.totalorder %s157, %s158
      %p172 = scmp.eq.s32.totalorder %s17, 3
      %p173 = por %p171, %p172
      %p175 = scmp.ne.s32.totalorder %s158, %s174
      %p176 = scmp.eq.s32.totalorder %s17, 0
      %p177 = por %p175, %p176
      %p178 = scmp.le.s32.totalorder 1, %s11
      %p179 = scmp.lt.s32.totalorder %s11, 5
      %p180 = pnand %p178, %p179
      %p181 = pneg %p180
      // Predicated region
      $region9: #{discriminator_forward.10} parent=5 // pred_check
        _
      $region10: #{discriminator_forward.10} parent=5 // pred_check_branch
        %183 = sbr.rel (%p180) target = $region12
      $region11: #{discriminator_forward.10} parent=5 // pred_region
        %s184 = ssub.s32 %s11, 1
      $region12: #{discriminator_forward.10} parent=5 // pred_fallthru
        _
      %p185 = scmp.lt.s32.totalorder %s11, 4
      // Predicated region
      $region13: #{discriminator_forward.10} parent=5 // pred_check
        %p186 = pneg %p185
      $region14: #{discriminator_forward.10} parent=5 // pred_check_branch
        %188 = sbr.rel (%p186) target = $region16
      $region15: #{discriminator_forward.10} parent=5 // pred_region
        // Predicated region
        $region17: #{discriminator_forward.10} parent=15 // pred_check
          %p189 = pneg %p52
        $region18: #{discriminator_forward.10} parent=15 // pred_check_branch
          %191 = sbr.rel (%p189) target = $region20
        $region19: #{discriminator_forward.10} parent=15 // pred_region
          %s192 = sand.u32 %s42, 1
          %s193 = sand.u32 %s42, 1
          %s194 = smul.addr %s193, 512
          %s195 = scalar_lea.vmem [#allocation3], %s194
          %s196 = smul.u32 16, %s18
          %s197 = smul.u32 8, %s20
          %s198 = smul.addr %s196, 16
          %s199 = sadd.s32 %s197, %s198
          %s200 = smul.addr %s199, 4
          %s201 = scalar_lea.vmem %s0, %s200
          // Predicated region
          $region21: #{discriminator_forward.10} parent=19 // pred_check
            _
          $region22: #{discriminator_forward.10} parent=19 // pred_check_branch
            %203 = sbr.rel (0) target = $region24
          $region23: #{discriminator_forward.10} parent=19 // pred_region
            // Predicated region
            $region25: #{discriminator_forward.10} parent=23 // pred_check
              _
            $region26: #{discriminator_forward.10} parent=23 // pred_check_branch
              %205 = sbr.rel (0) target = $region28
            $region27: #{discriminator_forward.10} parent=23 // pred_region
              loop: start=0, step=1, limit=1
              $region29: #{discriminator_forward.10} parent=27 // loop_pre_header
                _
              $region30: #{discriminator_forward.10} parent=27 // loop_header
                %s207 = sphi 0, %s211
                %p208 = scmp.ge.s32.totalorder %s207, 1
                %s212 = sphi %s201, %s201
                %s213 = sphi %s195, %s195
              $region31: #{discriminator_forward.10} parent=27 // loop_header_branch
                %210 = sbr.rel (%p208) target = $region35
              $region32: #{discriminator_forward.10} parent=27 // loop_body
                %v214 = vld [vmem:[%s212] sm:$0xff]
                %215 = vst [vmem:[%s213] sm:$0xff] %v214
                %v216 = vld [vmem:[%s212 + $0x8] sm:$0xff]
                %217 = vst [vmem:[%s213 + $0x8] sm:$0xff] %v216
                %v218 = vld [vmem:[%s212 + $0x10] sm:$0xff]
                %219 = vst [vmem:[%s213 + $0x10] sm:$0xff] %v218
                %v220 = vld [vmem:[%s212 + $0x18] sm:$0xff]
                %221 = vst [vmem:[%s213 + $0x18] sm:$0xff] %v220
                %v222 = vld [vmem:[%s212 + $0x40] sm:$0xff]
                %223 = vst [vmem:[%s213 + $0x20] sm:$0xff] %v222
                %v224 = vld [vmem:[%s212 + $0x48] sm:$0xff]
                %225 = vst [vmem:[%s213 + $0x28] sm:$0xff] %v224
                %v226 = vld [vmem:[%s212 + $0x50] sm:$0xff]
                %227 = vst [vmem:[%s213 + $0x30] sm:$0xff] %v226
                %v228 = vld [vmem:[%s212 + $0x58] sm:$0xff]
                %229 = vst [vmem:[%s213 + $0x38] sm:$0xff] %v228
                %v230 = vld [vmem:[%s212 + $0x80] sm:$0xff]
                %231 = vst [vmem:[%s213 + $0x40] sm:$0xff] %v230
                %v232 = vld [vmem:[%s212 + $0x88] sm:$0xff]
                %233 = vst [vmem:[%s213 + $0x48] sm:$0xff] %v232
                %v234 = vld [vmem:[%s212 + $0x90] sm:$0xff]
                %235 = vst [vmem:[%s213 + $0x50] sm:$0xff] %v234
                %v236 = vld [vmem:[%s212 + $0x98] sm:$0xff]
                %237 = vst [vmem:[%s213 + $0x58] sm:$0xff] %v236
                %v238 = vld [vmem:[%s212 + $0xc0] sm:$0xff]
                %239 = vst [vmem:[%s213 + $0x60] sm:$0xff] %v238
                %v240 = vld [vmem:[%s212 + $0xc8] sm:$0xff]
                %241 = vst [vmem:[%s213 + $0x68] sm:$0xff] %v240
                %v242 = vld [vmem:[%s212 + $0xd0] sm:$0xff]
                %243 = vst [vmem:[%s213 + $0x70] sm:$0xff] %v242
                %v244 = vld [vmem:[%s212 + $0xd8] sm:$0xff]
                %245 = vst [vmem:[%s213 + $0x78] sm:$0xff] %v244
                %v246 = vld [vmem:[%s212 + $0x100] sm:$0xff]
                %247 = vst [vmem:[%s213 + $0x80] sm:$0xff] %v246
                %v248 = vld [vmem:[%s212 + $0x108] sm:$0xff]
                %249 = vst [vmem:[%s213 + $0x88] sm:$0xff] %v248
                %v250 = vld [vmem:[%s212 + $0x110] sm:$0xff]
                %251 = vst [vmem:[%s213 + $0x90] sm:$0xff] %v250
                %v252 = vld [vmem:[%s212 + $0x118] sm:$0xff]
                %253 = vst [vmem:[%s213 + $0x98] sm:$0xff] %v252
                %v254 = vld [vmem:[%s212 + $0x140] sm:$0xff]
                %255 = vst [vmem:[%s213 + $0xa0] sm:$0xff] %v254
                %v256 = vld [vmem:[%s212 + $0x148] sm:$0xff]
                %257 = vst [vmem:[%s213 + $0xa8] sm:$0xff] %v256
                %v258 = vld [vmem:[%s212 + $0x150] sm:$0xff]
                %259 = vst [vmem:[%s213 + $0xb0] sm:$0xff] %v258
                %v260 = vld [vmem:[%s212 + $0x158] sm:$0xff]
                %261 = vst [vmem:[%s213 + $0xb8] sm:$0xff] %v260
                %v262 = vld [vmem:[%s212 + $0x180] sm:$0xff]
                %263 = vst [vmem:[%s213 + $0xc0] sm:$0xff] %v262
                %v264 = vld [vmem:[%s212 + $0x188] sm:$0xff]
                %265 = vst [vmem:[%s213 + $0xc8] sm:$0xff] %v264
                %v266 = vld [vmem:[%s212 + $0x190] sm:$0xff]
                %267 = vst [vmem:[%s213 + $0xd0] sm:$0xff] %v266
                %v268 = vld [vmem:[%s212 + $0x198] sm:$0xff]
                %269 = vst [vmem:[%s213 + $0xd8] sm:$0xff] %v268
                %v270 = vld [vmem:[%s212 + $0x1c0] sm:$0xff]
                %271 = vst [vmem:[%s213 + $0xe0] sm:$0xff] %v270
                %v272 = vld [vmem:[%s212 + $0x1c8] sm:$0xff]
                %273 = vst [vmem:[%s213 + $0xe8] sm:$0xff] %v272
                %v274 = vld [vmem:[%s212 + $0x1d0] sm:$0xff]
                %275 = vst [vmem:[%s213 + $0xf0] sm:$0xff] %v274
                %v276 = vld [vmem:[%s212 + $0x1d8] sm:$0xff]
                %277 = vst [vmem:[%s213 + $0xf8] sm:$0xff] %v276
                %v278 = vld [vmem:[%s212 + $0x200] sm:$0xff]
                %279 = vst [vmem:[%s213 + $0x100] sm:$0xff] %v278
                %v280 = vld [vmem:[%s212 + $0x208] sm:$0xff]
                %281 = vst [vmem:[%s213 + $0x108] sm:$0xff] %v280
                %v282 = vld [vmem:[%s212 + $0x210] sm:$0xff]
                %283 = vst [vmem:[%s213 + $0x110] sm:$0xff] %v282
                %v284 = vld [vmem:[%s212 + $0x218] sm:$0xff]
                %285 = vst [vmem:[%s213 + $0x118] sm:$0xff] %v284
                %v286 = vld [vmem:[%s212 + $0x240] sm:$0xff]
                %287 = vst [vmem:[%s213 + $0x120] sm:$0xff] %v286
                %v288 = vld [vmem:[%s212 + $0x248] sm:$0xff]
                %289 = vst [vmem:[%s213 + $0x128] sm:$0xff] %v288
                %v290 = vld [vmem:[%s212 + $0x250] sm:$0xff]
                %291 = vst [vmem:[%s213 + $0x130] sm:$0xff] %v290
                %v292 = vld [vmem:[%s212 + $0x258] sm:$0xff]
                %293 = vst [vmem:[%s213 + $0x138] sm:$0xff] %v292
                %v294 = vld [vmem:[%s212 + $0x280] sm:$0xff]
                %295 = vst [vmem:[%s213 + $0x140] sm:$0xff] %v294
                %v296 = vld [vmem:[%s212 + $0x288] sm:$0xff]
                %297 = vst [vmem:[%s213 + $0x148] sm:$0xff] %v296
                %v298 = vld [vmem:[%s212 + $0x290] sm:$0xff]
                %299 = vst [vmem:[%s213 + $0x150] sm:$0xff] %v298
                %v300 = vld [vmem:[%s212 + $0x298] sm:$0xff]
                %301 = vst [vmem:[%s213 + $0x158] sm:$0xff] %v300
                %v302 = vld [vmem:[%s212 + $0x2c0] sm:$0xff]
                %303 = vst [vmem:[%s213 + $0x160] sm:$0xff] %v302
                %v304 = vld [vmem:[%s212 + $0x2c8] sm:$0xff]
                %305 = vst [vmem:[%s213 + $0x168] sm:$0xff] %v304
                %v306 = vld [vmem:[%s212 + $0x2d0] sm:$0xff]
                %307 = vst [vmem:[%s213 + $0x170] sm:$0xff] %v306
                %v308 = vld [vmem:[%s212 + $0x2d8] sm:$0xff]
                %309 = vst [vmem:[%s213 + $0x178] sm:$0xff] %v308
                %v310 = vld [vmem:[%s212 + $0x300] sm:$0xff]
                %311 = vst [vmem:[%s213 + $0x180] sm:$0xff] %v310
                %v312 = vld [vmem:[%s212 + $0x308] sm:$0xff]
                %313 = vst [vmem:[%s213 + $0x188] sm:$0xff] %v312
                %v314 = vld [vmem:[%s212 + $0x310] sm:$0xff]
                %315 = vst [vmem:[%s213 + $0x190] sm:$0xff] %v314
                %v316 = vld [vmem:[%s212 + $0x318] sm:$0xff]
                %317 = vst [vmem:[%s213 + $0x198] sm:$0xff] %v316
                %v318 = vld [vmem:[%s212 + $0x340] sm:$0xff]
                %319 = vst [vmem:[%s213 + $0x1a0] sm:$0xff] %v318
                %v320 = vld [vmem:[%s212 + $0x348] sm:$0xff]
                %321 = vst [vmem:[%s213 + $0x1a8] sm:$0xff] %v320
                %v322 = vld [vmem:[%s212 + $0x350] sm:$0xff]
                %323 = vst [vmem:[%s213 + $0x1b0] sm:$0xff] %v322
                %v324 = vld [vmem:[%s212 + $0x358] sm:$0xff]
                %325 = vst [vmem:[%s213 + $0x1b8] sm:$0xff] %v324
                %v326 = vld [vmem:[%s212 + $0x380] sm:$0xff]
                %327 = vst [vmem:[%s213 + $0x1c0] sm:$0xff] %v326
                %v328 = vld [vmem:[%s212 + $0x388] sm:$0xff]
                %329 = vst [vmem:[%s213 + $0x1c8] sm:$0xff] %v328
                %v330 = vld [vmem:[%s212 + $0x390] sm:$0xff]
                %331 = vst [vmem:[%s213 + $0x1d0] sm:$0xff] %v330
                %v332 = vld [vmem:[%s212 + $0x398] sm:$0xff]
                %333 = vst [vmem:[%s213 + $0x1d8] sm:$0xff] %v332
                %v334 = vld [vmem:[%s212 + $0x3c0] sm:$0xff]
                %335 = vst [vmem:[%s213 + $0x1e0] sm:$0xff] %v334
                %v336 = vld [vmem:[%s212 + $0x3c8] sm:$0xff]
                %337 = vst [vmem:[%s213 + $0x1e8] sm:$0xff] %v336
                %v338 = vld [vmem:[%s212 + $0x3d0] sm:$0xff]
                %339 = vst [vmem:[%s213 + $0x1f0] sm:$0xff] %v338
                %v340 = vld [vmem:[%s212 + $0x3d8] sm:$0xff]
                %341 = vst [vmem:[%s213 + $0x1f8] sm:$0xff] %v340
              $region33: #{discriminator_forward.10} parent=27 // loop_footer
                %s211 = sadd.s32 1, %s207
              $region34: #{discriminator_forward.10} parent=27 // loop_footer_branch
                %206 = sbr.rel target = $region30
              $region35: #{discriminator_forward.10} parent=27 // loop_exit
                _
            $region28: #{discriminator_forward.10} parent=23 // pred_fallthru
              _
            // Predicated region
            $region36: #{discriminator_forward.10} parent=23 // pred_check
              _
            $region37: #{discriminator_forward.10} parent=23 // pred_check_branch
              %343 = sbr.rel target = $region39
            $region38: #{discriminator_forward.10} parent=23 // pred_region
              _
            $region39: #{discriminator_forward.10} parent=23 // pred_fallthru
              _
          $region24: #{discriminator_forward.10} parent=19 // pred_fallthru
            _
          %344 = vnop
        $region20: #{discriminator_forward.10} parent=15 // pred_fallthru
          _
        // Predicated region
        $region40: #{discriminator_forward.10} parent=15 // pred_check
          %p345 = pneg %p80
        $region41: #{discriminator_forward.10} parent=15 // pred_check_branch
          %347 = sbr.rel (%p345) target = $region43
        $region42: #{discriminator_forward.10} parent=15 // pred_region
          %s348 = sand.u32 %s70, 1
          %s349 = sand.u32 %s70, 1
          %s350 = smul.addr %s349, 512
          %s351 = scalar_lea.vmem [#allocation4], %s350
          %s352 = smul.u32 128, %s20
          %s353 = smul.addr %s352, 2
          %s354 = sadd.s32 %s19, %s353
          %s355 = smul.addr %s354, 4
          %s356 = scalar_lea.vmem %s1, %s355
          // Predicated region
          $region44: #{discriminator_forward.10} parent=42 // pred_check
            _
          $region45: #{discriminator_forward.10} parent=42 // pred_check_branch
            %358 = sbr.rel (0) target = $region47
          $region46: #{discriminator_forward.10} parent=42 // pred_region
            // Predicated region
            $region48: #{discriminator_forward.10} parent=46 // pred_check
              _
            $region49: #{discriminator_forward.10} parent=46 // pred_check_branch
              %360 = sbr.rel target = $region51
            $region50: #{discriminator_forward.10} parent=46 // pred_region
              // Predicated region
              $region63: #{discriminator_forward.10} parent=50 // pred_check
                _
              $region64: #{discriminator_forward.10} parent=50 // pred_check_branch
                %630 = sbr.rel (0) target = $region66
              $region65: #{discriminator_forward.10} parent=50 // pred_region
                loop: start=0, step=1, limit=1
                $region67: #{discriminator_forward.10} parent=65 // loop_pre_header
                  _
                $region68: #{discriminator_forward.10} parent=65 // loop_header
                  %s632 = sphi 0, %s636
                  %p633 = scmp.ge.s32.totalorder %s632, 1
                  %s637 = sphi %s356, %s356
                  %s638 = sphi %s351, %s351
                $region69: #{discriminator_forward.10} parent=65 // loop_header_branch
                  %635 = sbr.rel (%p633) target = $region73
                $region70: #{discriminator_forward.10} parent=65 // loop_body
                  _
                $region71: #{discriminator_forward.10} parent=65 // loop_footer
                  %s636 = sadd.s32 1, %s632
                $region72: #{discriminator_forward.10} parent=65 // loop_footer_branch
                  %631 = sbr.rel target = $region68
                $region73: #{discriminator_forward.10} parent=65 // loop_exit
                  _
                %s640 = ssub.s32 16, 1
                loop: start=0, step=1, limit=1
                $region74: #{discriminator_forward.10} parent=65 // loop_pre_header
                  _
                $region75: #{discriminator_forward.10} parent=65 // loop_header
                  %s642 = sphi 0, %s646
                  %p643 = scmp.ge.s32.totalorder %s642, 1
                  %s647 = sphi %s356, %s356
                  %s648 = sphi %s351, %s351
                $region76: #{discriminator_forward.10} parent=65 // loop_header_branch
                  %645 = sbr.rel (%p643) target = $region80
                $region77: #{discriminator_forward.10} parent=65 // loop_body
                  %v649 = vld [vmem:[%s647] sm:%s640]
                  %650 = vst [vmem:[%s648] sm:%s640] %v649
                  %v651 = vld [vmem:[%s647 + $0x8] sm:%s640]
                  %652 = vst [vmem:[%s648 + $0x4] sm:%s640] %v651
                  %v653 = vld [vmem:[%s647 + $0x10] sm:%s640]
                  %654 = vst [vmem:[%s648 + $0x8] sm:%s640] %v653
                  %v655 = vld [vmem:[%s647 + $0x18] sm:%s640]
                  %656 = vst [vmem:[%s648 + $0xc] sm:%s640] %v655
                  %v657 = vld [vmem:[%s647 + $0x20] sm:%s640]
                  %658 = vst [vmem:[%s648 + $0x10] sm:%s640] %v657
                  %v659 = vld [vmem:[%s647 + $0x28] sm:%s640]
                  %660 = vst [vmem:[%s648 + $0x14] sm:%s640] %v659
                  %v661 = vld [vmem:[%s647 + $0x30] sm:%s640]
                  %662 = vst [vmem:[%s648 + $0x18] sm:%s640] %v661
                  %v663 = vld [vmem:[%s647 + $0x38] sm:%s640]
                  %664 = vst [vmem:[%s648 + $0x1c] sm:%s640] %v663
                  %v665 = vld [vmem:[%s647 + $0x40] sm:%s640]
                  %666 = vst [vmem:[%s648 + $0x20] sm:%s640] %v665
                  %v667 = vld [vmem:[%s647 + $0x48] sm:%s640]
                  %668 = vst [vmem:[%s648 + $0x24] sm:%s640] %v667
                  %v669 = vld [vmem:[%s647 + $0x50] sm:%s640]
                  %670 = vst [vmem:[%s648 + $0x28] sm:%s640] %v669
                  %v671 = vld [vmem:[%s647 + $0x58] sm:%s640]
                  %672 = vst [vmem:[%s648 + $0x2c] sm:%s640] %v671
                  %v673 = vld [vmem:[%s647 + $0x60] sm:%s640]
                  %674 = vst [vmem:[%s648 + $0x30] sm:%s640] %v673
                  %v675 = vld [vmem:[%s647 + $0x68] sm:%s640]
                  %676 = vst [vmem:[%s648 + $0x34] sm:%s640] %v675
                  %v677 = vld [vmem:[%s647 + $0x70] sm:%s640]
                  %678 = vst [vmem:[%s648 + $0x38] sm:%s640] %v677
                  %v679 = vld [vmem:[%s647 + $0x78] sm:%s640]
                  %680 = vst [vmem:[%s648 + $0x3c] sm:%s640] %v679
                  %v681 = vld [vmem:[%s647 + $0x80] sm:%s640]
                  %682 = vst [vmem:[%s648 + $0x40] sm:%s640] %v681
                  %v683 = vld [vmem:[%s647 + $0x88] sm:%s640]
                  %684 = vst [vmem:[%s648 + $0x44] sm:%s640] %v683
                  %v685 = vld [vmem:[%s647 + $0x90] sm:%s640]
                  %686 = vst [vmem:[%s648 + $0x48] sm:%s640] %v685
                  %v687 = vld [vmem:[%s647 + $0x98] sm:%s640]
                  %688 = vst [vmem:[%s648 + $0x4c] sm:%s640] %v687
                  %v689 = vld [vmem:[%s647 + $0xa0] sm:%s640]
                  %690 = vst [vmem:[%s648 + $0x50] sm:%s640] %v689
                  %v691 = vld [vmem:[%s647 + $0xa8] sm:%s640]
                  %692 = vst [vmem:[%s648 + $0x54] sm:%s640] %v691
                  %v693 = vld [vmem:[%s647 + $0xb0] sm:%s640]
                  %694 = vst [vmem:[%s648 + $0x58] sm:%s640] %v693
                  %v695 = vld [vmem:[%s647 + $0xb8] sm:%s640]
                  %696 = vst [vmem:[%s648 + $0x5c] sm:%s640] %v695
                  %v697 = vld [vmem:[%s647 + $0xc0] sm:%s640]
                  %698 = vst [vmem:[%s648 + $0x60] sm:%s640] %v697
                  %v699 = vld [vmem:[%s647 + $0xc8] sm:%s640]
                  %700 = vst [vmem:[%s648 + $0x64] sm:%s640] %v699
                  %v701 = vld [vmem:[%s647 + $0xd0] sm:%s640]
                  %702 = vst [vmem:[%s648 + $0x68] sm:%s640] %v701
                  %v703 = vld [vmem:[%s647 + $0xd8] sm:%s640]
                  %704 = vst [vmem:[%s648 + $0x6c] sm:%s640] %v703
                  %v705 = vld [vmem:[%s647 + $0xe0] sm:%s640]
                  %706 = vst [vmem:[%s648 + $0x70] sm:%s640] %v705
                  %v707 = vld [vmem:[%s647 + $0xe8] sm:%s640]
                  %708 = vst [vmem:[%s648 + $0x74] sm:%s640] %v707
                  %v709 = vld [vmem:[%s647 + $0xf0] sm:%s640]
                  %710 = vst [vmem:[%s648 + $0x78] sm:%s640] %v709
                  %v711 = vld [vmem:[%s647 + $0xf8] sm:%s640]
                  %712 = vst [vmem:[%s648 + $0x7c] sm:%s640] %v711
                  %v713 = vld [vmem:[%s647 + $0x100] sm:%s640]
                  %714 = vst [vmem:[%s648 + $0x80] sm:%s640] %v713
                  %v715 = vld [vmem:[%s647 + $0x108] sm:%s640]
                  %716 = vst [vmem:[%s648 + $0x84] sm:%s640] %v715
                  %v717 = vld [vmem:[%s647 + $0x110] sm:%s640]
                  %718 = vst [vmem:[%s648 + $0x88] sm:%s640] %v717
                  %v719 = vld [vmem:[%s647 + $0x118] sm:%s640]
                  %720 = vst [vmem:[%s648 + $0x8c] sm:%s640] %v719
                  %v721 = vld [vmem:[%s647 + $0x120] sm:%s640]
                  %722 = vst [vmem:[%s648 + $0x90] sm:%s640] %v721
                  %v723 = vld [vmem:[%s647 + $0x128] sm:%s640]
                  %724 = vst [vmem:[%s648 + $0x94] sm:%s640] %v723
                  %v725 = vld [vmem:[%s647 + $0x130] sm:%s640]
                  %726 = vst [vmem:[%s648 + $0x98] sm:%s640] %v725
                  %v727 = vld [vmem:[%s647 + $0x138] sm:%s640]
                  %728 = vst [vmem:[%s648 + $0x9c] sm:%s640] %v727
                  %v729 = vld [vmem:[%s647 + $0x140] sm:%s640]
                  %730 = vst [vmem:[%s648 + $0xa0] sm:%s640] %v729
                  %v731 = vld [vmem:[%s647 + $0x148] sm:%s640]
                  %732 = vst [vmem:[%s648 + $0xa4] sm:%s640] %v731
                  %v733 = vld [vmem:[%s647 + $0x150] sm:%s640]
                  %734 = vst [vmem:[%s648 + $0xa8] sm:%s640] %v733
                  %v735 = vld [vmem:[%s647 + $0x158] sm:%s640]
                  %736 = vst [vmem:[%s648 + $0xac] sm:%s640] %v735
                  %v737 = vld [vmem:[%s647 + $0x160] sm:%s640]
                  %738 = vst [vmem:[%s648 + $0xb0] sm:%s640] %v737
                  %v739 = vld [vmem:[%s647 + $0x168] sm:%s640]
                  %740 = vst [vmem:[%s648 + $0xb4] sm:%s640] %v739
                  %v741 = vld [vmem:[%s647 + $0x170] sm:%s640]
                  %742 = vst [vmem:[%s648 + $0xb8] sm:%s640] %v741
                  %v743 = vld [vmem:[%s647 + $0x178] sm:%s640]
                  %744 = vst [vmem:[%s648 + $0xbc] sm:%s640] %v743
                  %v745 = vld [vmem:[%s647 + $0x180] sm:%s640]
                  %746 = vst [vmem:[%s648 + $0xc0] sm:%s640] %v745
                  %v747 = vld [vmem:[%s647 + $0x188] sm:%s640]
                  %748 = vst [vmem:[%s648 + $0xc4] sm:%s640] %v747
                  %v749 = vld [vmem:[%s647 + $0x190] sm:%s640]
                  %750 = vst [vmem:[%s648 + $0xc8] sm:%s640] %v749
                  %v751 = vld [vmem:[%s647 + $0x198] sm:%s640]
                  %752 = vst [vmem:[%s648 + $0xcc] sm:%s640] %v751
                  %v753 = vld [vmem:[%s647 + $0x1a0] sm:%s640]
                  %754 = vst [vmem:[%s648 + $0xd0] sm:%s640] %v753
                  %v755 = vld [vmem:[%s647 + $0x1a8] sm:%s640]
                  %756 = vst [vmem:[%s648 + $0xd4] sm:%s640] %v755
                  %v757 = vld [vmem:[%s647 + $0x1b0] sm:%s640]
                  %758 = vst [vmem:[%s648 + $0xd8] sm:%s640] %v757
                  %v759 = vld [vmem:[%s647 + $0x1b8] sm:%s640]
                  %760 = vst [vmem:[%s648 + $0xdc] sm:%s640] %v759
                  %v761 = vld [vmem:[%s647 + $0x1c0] sm:%s640]
                  %762 = vst [vmem:[%s648 + $0xe0] sm:%s640] %v761
                  %v763 = vld [vmem:[%s647 + $0x1c8] sm:%s640]
                  %764 = vst [vmem:[%s648 + $0xe4] sm:%s640] %v763
                  %v765 = vld [vmem:[%s647 + $0x1d0] sm:%s640]
                  %766 = vst [vmem:[%s648 + $0xe8] sm:%s640] %v765
                  %v767 = vld [vmem:[%s647 + $0x1d8] sm:%s640]
                  %768 = vst [vmem:[%s648 + $0xec] sm:%s640] %v767
                  %v769 = vld [vmem:[%s647 + $0x1e0] sm:%s640]
                  %770 = vst [vmem:[%s648 + $0xf0] sm:%s640] %v769
                  %v771 = vld [vmem:[%s647 + $0x1e8] sm:%s640]
                  %772 = vst [vmem:[%s648 + $0xf4] sm:%s640] %v771
                  %v773 = vld [vmem:[%s647 + $0x1f0] sm:%s640]
                  %774 = vst [vmem:[%s648 + $0xf8] sm:%s640] %v773
                  %v775 = vld [vmem:[%s647 + $0x1f8] sm:%s640]
                  %776 = vst [vmem:[%s648 + $0xfc] sm:%s640] %v775
                  %v777 = vld [vmem:[%s647 + $0x200] sm:%s640]
                  %778 = vst [vmem:[%s648 + $0x100] sm:%s640] %v777
                  %v779 = vld [vmem:[%s647 + $0x208] sm:%s640]
                  %780 = vst [vmem:[%s648 + $0x104] sm:%s640] %v779
                  %v781 = vld [vmem:[%s647 + $0x210] sm:%s640]
                  %782 = vst [vmem:[%s648 + $0x108] sm:%s640] %v781
                  %v783 = vld [vmem:[%s647 + $0x218] sm:%s640]
                  %784 = vst [vmem:[%s648 + $0x10c] sm:%s640] %v783
                  %v785 = vld [vmem:[%s647 + $0x220] sm:%s640]
                  %786 = vst [vmem:[%s648 + $0x110] sm:%s640] %v785
                  %v787 = vld [vmem:[%s647 + $0x228] sm:%s640]
                  %788 = vst [vmem:[%s648 + $0x114] sm:%s640] %v787
                  %v789 = vld [vmem:[%s647 + $0x230] sm:%s640]
                  %790 = vst [vmem:[%s648 + $0x118] sm:%s640] %v789
                  %v791 = vld [vmem:[%s647 + $0x238] sm:%s640]
                  %792 = vst [vmem:[%s648 + $0x11c] sm:%s640] %v791
                  %v793 = vld [vmem:[%s647 + $0x240] sm:%s640]
                  %794 = vst [vmem:[%s648 + $0x120] sm:%s640] %v793
                  %v795 = vld [vmem:[%s647 + $0x248] sm:%s640]
                  %796 = vst [vmem:[%s648 + $0x124] sm:%s640] %v795
                  %v797 = vld [vmem:[%s647 + $0x250] sm:%s640]
                  %798 = vst [vmem:[%s648 + $0x128] sm:%s640] %v797
                  %v799 = vld [vmem:[%s647 + $0x258] sm:%s640]
                  %800 = vst [vmem:[%s648 + $0x12c] sm:%s640] %v799
                  %v801 = vld [vmem:[%s647 + $0x260] sm:%s640]
                  %802 = vst [vmem:[%s648 + $0x130] sm:%s640] %v801
                  %v803 = vld [vmem:[%s647 + $0x268] sm:%s640]
                  %804 = vst [vmem:[%s648 + $0x134] sm:%s640] %v803
                  %v805 = vld [vmem:[%s647 + $0x270] sm:%s640]
                  %806 = vst [vmem:[%s648 + $0x138] sm:%s640] %v805
                  %v807 = vld [vmem:[%s647 + $0x278] sm:%s640]
                  %808 = vst [vmem:[%s648 + $0x13c] sm:%s640] %v807
                  %v809 = vld [vmem:[%s647 + $0x280] sm:%s640]
                  %810 = vst [vmem:[%s648 + $0x140] sm:%s640] %v809
                  %v811 = vld [vmem:[%s647 + $0x288] sm:%s640]
                  %812 = vst [vmem:[%s648 + $0x144] sm:%s640] %v811
                  %v813 = vld [vmem:[%s647 + $0x290] sm:%s640]
                  %814 = vst [vmem:[%s648 + $0x148] sm:%s640] %v813
                  %v815 = vld [vmem:[%s647 + $0x298] sm:%s640]
                  %816 = vst [vmem:[%s648 + $0x14c] sm:%s640] %v815
                  %v817 = vld [vmem:[%s647 + $0x2a0] sm:%s640]
                  %818 = vst [vmem:[%s648 + $0x150] sm:%s640] %v817
                  %v819 = vld [vmem:[%s647 + $0x2a8] sm:%s640]
                  %820 = vst [vmem:[%s648 + $0x154] sm:%s640] %v819
                  %v821 = vld [vmem:[%s647 + $0x2b0] sm:%s640]
                  %822 = vst [vmem:[%s648 + $0x158] sm:%s640] %v821
                  %v823 = vld [vmem:[%s647 + $0x2b8] sm:%s640]
                  %824 = vst [vmem:[%s648 + $0x15c] sm:%s640] %v823
                  %v825 = vld [vmem:[%s647 + $0x2c0] sm:%s640]
                  %826 = vst [vmem:[%s648 + $0x160] sm:%s640] %v825
                  %v827 = vld [vmem:[%s647 + $0x2c8] sm:%s640]
                  %828 = vst [vmem:[%s648 + $0x164] sm:%s640] %v827
                  %v829 = vld [vmem:[%s647 + $0x2d0] sm:%s640]
                  %830 = vst [vmem:[%s648 + $0x168] sm:%s640] %v829
                  %v831 = vld [vmem:[%s647 + $0x2d8] sm:%s640]
                  %832 = vst [vmem:[%s648 + $0x16c] sm:%s640] %v831
                  %v833 = vld [vmem:[%s647 + $0x2e0] sm:%s640]
                  %834 = vst [vmem:[%s648 + $0x170] sm:%s640] %v833
                  %v835 = vld [vmem:[%s647 + $0x2e8] sm:%s640]
                  %836 = vst [vmem:[%s648 + $0x174] sm:%s640] %v835
                  %v837 = vld [vmem:[%s647 + $0x2f0] sm:%s640]
                  %838 = vst [vmem:[%s648 + $0x178] sm:%s640] %v837
                  %v839 = vld [vmem:[%s647 + $0x2f8] sm:%s640]
                  %840 = vst [vmem:[%s648 + $0x17c] sm:%s640] %v839
                  %v841 = vld [vmem:[%s647 + $0x300] sm:%s640]
                  %842 = vst [vmem:[%s648 + $0x180] sm:%s640] %v841
                  %v843 = vld [vmem:[%s647 + $0x308] sm:%s640]
                  %844 = vst [vmem:[%s648 + $0x184] sm:%s640] %v843
                  %v845 = vld [vmem:[%s647 + $0x310] sm:%s640]
                  %846 = vst [vmem:[%s648 + $0x188] sm:%s640] %v845
                  %v847 = vld [vmem:[%s647 + $0x318] sm:%s640]
                  %848 = vst [vmem:[%s648 + $0x18c] sm:%s640] %v847
                  %v849 = vld [vmem:[%s647 + $0x320] sm:%s640]
                  %850 = vst [vmem:[%s648 + $0x190] sm:%s640] %v849
                  %v851 = vld [vmem:[%s647 + $0x328] sm:%s640]
                  %852 = vst [vmem:[%s648 + $0x194] sm:%s640] %v851
                  %v853 = vld [vmem:[%s647 + $0x330] sm:%s640]
                  %854 = vst [vmem:[%s648 + $0x198] sm:%s640] %v853
                  %v855 = vld [vmem:[%s647 + $0x338] sm:%s640]
                  %856 = vst [vmem:[%s648 + $0x19c] sm:%s640] %v855
                  %v857 = vld [vmem:[%s647 + $0x340] sm:%s640]
                  %858 = vst [vmem:[%s648 + $0x1a0] sm:%s640] %v857
                  %v859 = vld [vmem:[%s647 + $0x348] sm:%s640]
                  %860 = vst [vmem:[%s648 + $0x1a4] sm:%s640] %v859
                  %v861 = vld [vmem:[%s647 + $0x350] sm:%s640]
                  %862 = vst [vmem:[%s648 + $0x1a8] sm:%s640] %v861
                  %v863 = vld [vmem:[%s647 + $0x358] sm:%s640]
                  %864 = vst [vmem:[%s648 + $0x1ac] sm:%s640] %v863
                  %v865 = vld [vmem:[%s647 + $0x360] sm:%s640]
                  %866 = vst [vmem:[%s648 + $0x1b0] sm:%s640] %v865
                  %v867 = vld [vmem:[%s647 + $0x368] sm:%s640]
                  %868 = vst [vmem:[%s648 + $0x1b4] sm:%s640] %v867
                  %v869 = vld [vmem:[%s647 + $0x370] sm:%s640]
                  %870 = vst [vmem:[%s648 + $0x1b8] sm:%s640] %v869
                  %v871 = vld [vmem:[%s647 + $0x378] sm:%s640]
                  %872 = vst [vmem:[%s648 + $0x1bc] sm:%s640] %v871
                  %v873 = vld [vmem:[%s647 + $0x380] sm:%s640]
                  %874 = vst [vmem:[%s648 + $0x1c0] sm:%s640] %v873
                  %v875 = vld [vmem:[%s647 + $0x388] sm:%s640]
                  %876 = vst [vmem:[%s648 + $0x1c4] sm:%s640] %v875
                  %v877 = vld [vmem:[%s647 + $0x390] sm:%s640]
                  %878 = vst [vmem:[%s648 + $0x1c8] sm:%s640] %v877
                  %v879 = vld [vmem:[%s647 + $0x398] sm:%s640]
                  %880 = vst [vmem:[%s648 + $0x1cc] sm:%s640] %v879
                  %v881 = vld [vmem:[%s647 + $0x3a0] sm:%s640]
                  %882 = vst [vmem:[%s648 + $0x1d0] sm:%s640] %v881
                  %v883 = vld [vmem:[%s647 + $0x3a8] sm:%s640]
                  %884 = vst [vmem:[%s648 + $0x1d4] sm:%s640] %v883
                  %v885 = vld [vmem:[%s647 + $0x3b0] sm:%s640]
                  %886 = vst [vmem:[%s648 + $0x1d8] sm:%s640] %v885
                  %v887 = vld [vmem:[%s647 + $0x3b8] sm:%s640]
                  %888 = vst [vmem:[%s648 + $0x1dc] sm:%s640] %v887
                  %v889 = vld [vmem:[%s647 + $0x3c0] sm:%s640]
                  %890 = vst [vmem:[%s648 + $0x1e0] sm:%s640] %v889
                  %v891 = vld [vmem:[%s647 + $0x3c8] sm:%s640]
                  %892 = vst [vmem:[%s648 + $0x1e4] sm:%s640] %v891
                  %v893 = vld [vmem:[%s647 + $0x3d0] sm:%s640]
                  %894 = vst [vmem:[%s648 + $0x1e8] sm:%s640] %v893
                  %v895 = vld [vmem:[%s647 + $0x3d8] sm:%s640]
                  %896 = vst [vmem:[%s648 + $0x1ec] sm:%s640] %v895
                  %v897 = vld [vmem:[%s647 + $0x3e0] sm:%s640]
                  %898 = vst [vmem:[%s648 + $0x1f0] sm:%s640] %v897
                  %v899 = vld [vmem:[%s647 + $0x3e8] sm:%s640]
                  %900 = vst [vmem:[%s648 + $0x1f4] sm:%s640] %v899
                  %v901 = vld [vmem:[%s647 + $0x3f0] sm:%s640]
                  %902 = vst [vmem:[%s648 + $0x1f8] sm:%s640] %v901
                  %v903 = vld [vmem:[%s647 + $0x3f8] sm:%s640]
                  %904 = vst [vmem:[%s648 + $0x1fc] sm:%s640] %v903
                $region78: #{discriminator_forward.10} parent=65 // loop_footer
                  %s646 = sadd.s32 1, %s642
                $region79: #{discriminator_forward.10} parent=65 // loop_footer_branch
                  %641 = sbr.rel target = $region75
                $region80: #{discriminator_forward.10} parent=65 // loop_exit
                  _
              $region66: #{discriminator_forward.10} parent=50 // pred_fallthru
                _
            $region51: #{discriminator_forward.10} parent=46 // pred_fallthru
              _
            // Predicated region
            $region52: #{discriminator_forward.10} parent=46 // pred_check
              _
            $region53: #{discriminator_forward.10} parent=46 // pred_check_branch
              %362 = sbr.rel (0) target = $region55
            $region54: #{discriminator_forward.10} parent=46 // pred_region
              %s364 = ssub.s32 16, 1
              loop: start=0, step=1, limit=1
              $region56: #{discriminator_forward.10} parent=54 // loop_pre_header
                _
              $region57: #{discriminator_forward.10} parent=54 // loop_header
                %s366 = sphi 0, %s370
                %p367 = scmp.ge.s32.totalorder %s366, 1
                %s371 = sphi %s356, %s356
                %s372 = sphi %s351, %s351
              $region58: #{discriminator_forward.10} parent=54 // loop_header_branch
                %369 = sbr.rel (%p367) target = $region62
              $region59: #{discriminator_forward.10} parent=54 // loop_body
                %v373 = vld [vmem:[%s371] sm:%s364]
                %374 = vst [vmem:[%s372] sm:%s364] %v373
                %v375 = vld [vmem:[%s371 + $0x8] sm:%s364]
                %376 = vst [vmem:[%s372 + $0x4] sm:%s364] %v375
                %v377 = vld [vmem:[%s371 + $0x10] sm:%s364]
                %378 = vst [vmem:[%s372 + $0x8] sm:%s364] %v377
                %v379 = vld [vmem:[%s371 + $0x18] sm:%s364]
                %380 = vst [vmem:[%s372 + $0xc] sm:%s364] %v379
                %v381 = vld [vmem:[%s371 + $0x20] sm:%s364]
                %382 = vst [vmem:[%s372 + $0x10] sm:%s364] %v381
                %v383 = vld [vmem:[%s371 + $0x28] sm:%s364]
                %384 = vst [vmem:[%s372 + $0x14] sm:%s364] %v383
                %v385 = vld [vmem:[%s371 + $0x30] sm:%s364]
                %386 = vst [vmem:[%s372 + $0x18] sm:%s364] %v385
                %v387 = vld [vmem:[%s371 + $0x38] sm:%s364]
                %388 = vst [vmem:[%s372 + $0x1c] sm:%s364] %v387
                %v389 = vld [vmem:[%s371 + $0x40] sm:%s364]
                %390 = vst [vmem:[%s372 + $0x20] sm:%s364] %v389
                %v391 = vld [vmem:[%s371 + $0x48] sm:%s364]
                %392 = vst [vmem:[%s372 + $0x24] sm:%s364] %v391
                %v393 = vld [vmem:[%s371 + $0x50] sm:%s364]
                %394 = vst [vmem:[%s372 + $0x28] sm:%s364] %v393
                %v395 = vld [vmem:[%s371 + $0x58] sm:%s364]
                %396 = vst [vmem:[%s372 + $0x2c] sm:%s364] %v395
                %v397 = vld [vmem:[%s371 + $0x60] sm:%s364]
                %398 = vst [vmem:[%s372 + $0x30] sm:%s364] %v397
                %v399 = vld [vmem:[%s371 + $0x68] sm:%s364]
                %400 = vst [vmem:[%s372 + $0x34] sm:%s364] %v399
                %v401 = vld [vmem:[%s371 + $0x70] sm:%s364]
                %402 = vst [vmem:[%s372 + $0x38] sm:%s364] %v401
                %v403 = vld [vmem:[%s371 + $0x78] sm:%s364]
                %404 = vst [vmem:[%s372 + $0x3c] sm:%s364] %v403
                %v405 = vld [vmem:[%s371 + $0x80] sm:%s364]
                %406 = vst [vmem:[%s372 + $0x40] sm:%s364] %v405
                %v407 = vld [vmem:[%s371 + $0x88] sm:%s364]
                %408 = vst [vmem:[%s372 + $0x44] sm:%s364] %v407
                %v409 = vld [vmem:[%s371 + $0x90] sm:%s364]
                %410 = vst [vmem:[%s372 + $0x48] sm:%s364] %v409
                %v411 = vld [vmem:[%s371 + $0x98] sm:%s364]
                %412 = vst [vmem:[%s372 + $0x4c] sm:%s364] %v411
                %v413 = vld [vmem:[%s371 + $0xa0] sm:%s364]
                %414 = vst [vmem:[%s372 + $0x50] sm:%s364] %v413
                %v415 = vld [vmem:[%s371 + $0xa8] sm:%s364]
                %416 = vst [vmem:[%s372 + $0x54] sm:%s364] %v415
                %v417 = vld [vmem:[%s371 + $0xb0] sm:%s364]
                %418 = vst [vmem:[%s372 + $0x58] sm:%s364] %v417
                %v419 = vld [vmem:[%s371 + $0xb8] sm:%s364]
                %420 = vst [vmem:[%s372 + $0x5c] sm:%s364] %v419
                %v421 = vld [vmem:[%s371 + $0xc0] sm:%s364]
                %422 = vst [vmem:[%s372 + $0x60] sm:%s364] %v421
                %v423 = vld [vmem:[%s371 + $0xc8] sm:%s364]
                %424 = vst [vmem:[%s372 + $0x64] sm:%s364] %v423
                %v425 = vld [vmem:[%s371 + $0xd0] sm:%s364]
                %426 = vst [vmem:[%s372 + $0x68] sm:%s364] %v425
                %v427 = vld [vmem:[%s371 + $0xd8] sm:%s364]
                %428 = vst [vmem:[%s372 + $0x6c] sm:%s364] %v427
                %v429 = vld [vmem:[%s371 + $0xe0] sm:%s364]
                %430 = vst [vmem:[%s372 + $0x70] sm:%s364] %v429
                %v431 = vld [vmem:[%s371 + $0xe8] sm:%s364]
                %432 = vst [vmem:[%s372 + $0x74] sm:%s364] %v431
                %v433 = vld [vmem:[%s371 + $0xf0] sm:%s364]
                %434 = vst [vmem:[%s372 + $0x78] sm:%s364] %v433
                %v435 = vld [vmem:[%s371 + $0xf8] sm:%s364]
                %436 = vst [vmem:[%s372 + $0x7c] sm:%s364] %v435
                %v437 = vld [vmem:[%s371 + $0x100] sm:%s364]
                %438 = vst [vmem:[%s372 + $0x80] sm:%s364] %v437
                %v439 = vld [vmem:[%s371 + $0x108] sm:%s364]
                %440 = vst [vmem:[%s372 + $0x84] sm:%s364] %v439
                %v441 = vld [vmem:[%s371 + $0x110] sm:%s364]
                %442 = vst [vmem:[%s372 + $0x88] sm:%s364] %v441
                %v443 = vld [vmem:[%s371 + $0x118] sm:%s364]
                %444 = vst [vmem:[%s372 + $0x8c] sm:%s364] %v443
                %v445 = vld [vmem:[%s371 + $0x120] sm:%s364]
                %446 = vst [vmem:[%s372 + $0x90] sm:%s364] %v445
                %v447 = vld [vmem:[%s371 + $0x128] sm:%s364]
                %448 = vst [vmem:[%s372 + $0x94] sm:%s364] %v447
                %v449 = vld [vmem:[%s371 + $0x130] sm:%s364]
                %450 = vst [vmem:[%s372 + $0x98] sm:%s364] %v449
                %v451 = vld [vmem:[%s371 + $0x138] sm:%s364]
                %452 = vst [vmem:[%s372 + $0x9c] sm:%s364] %v451
                %v453 = vld [vmem:[%s371 + $0x140] sm:%s364]
                %454 = vst [vmem:[%s372 + $0xa0] sm:%s364] %v453
                %v455 = vld [vmem:[%s371 + $0x148] sm:%s364]
                %456 = vst [vmem:[%s372 + $0xa4] sm:%s364] %v455
                %v457 = vld [vmem:[%s371 + $0x150] sm:%s364]
                %458 = vst [vmem:[%s372 + $0xa8] sm:%s364] %v457
                %v459 = vld [vmem:[%s371 + $0x158] sm:%s364]
                %460 = vst [vmem:[%s372 + $0xac] sm:%s364] %v459
                %v461 = vld [vmem:[%s371 + $0x160] sm:%s364]
                %462 = vst [vmem:[%s372 + $0xb0] sm:%s364] %v461
                %v463 = vld [vmem:[%s371 + $0x168] sm:%s364]
                %464 = vst [vmem:[%s372 + $0xb4] sm:%s364] %v463
                %v465 = vld [vmem:[%s371 + $0x170] sm:%s364]
                %466 = vst [vmem:[%s372 + $0xb8] sm:%s364] %v465
                %v467 = vld [vmem:[%s371 + $0x178] sm:%s364]
                %468 = vst [vmem:[%s372 + $0xbc] sm:%s364] %v467
                %v469 = vld [vmem:[%s371 + $0x180] sm:%s364]
                %470 = vst [vmem:[%s372 + $0xc0] sm:%s364] %v469
                %v471 = vld [vmem:[%s371 + $0x188] sm:%s364]
                %472 = vst [vmem:[%s372 + $0xc4] sm:%s364] %v471
                %v473 = vld [vmem:[%s371 + $0x190] sm:%s364]
                %474 = vst [vmem:[%s372 + $0xc8] sm:%s364] %v473
                %v475 = vld [vmem:[%s371 + $0x198] sm:%s364]
                %476 = vst [vmem:[%s372 + $0xcc] sm:%s364] %v475
                %v477 = vld [vmem:[%s371 + $0x1a0] sm:%s364]
                %478 = vst [vmem:[%s372 + $0xd0] sm:%s364] %v477
                %v479 = vld [vmem:[%s371 + $0x1a8] sm:%s364]
                %480 = vst [vmem:[%s372 + $0xd4] sm:%s364] %v479
                %v481 = vld [vmem:[%s371 + $0x1b0] sm:%s364]
                %482 = vst [vmem:[%s372 + $0xd8] sm:%s364] %v481
                %v483 = vld [vmem:[%s371 + $0x1b8] sm:%s364]
                %484 = vst [vmem:[%s372 + $0xdc] sm:%s364] %v483
                %v485 = vld [vmem:[%s371 + $0x1c0] sm:%s364]
                %486 = vst [vmem:[%s372 + $0xe0] sm:%s364] %v485
                %v487 = vld [vmem:[%s371 + $0x1c8] sm:%s364]
                %488 = vst [vmem:[%s372 + $0xe4] sm:%s364] %v487
                %v489 = vld [vmem:[%s371 + $0x1d0] sm:%s364]
                %490 = vst [vmem:[%s372 + $0xe8] sm:%s364] %v489
                %v491 = vld [vmem:[%s371 + $0x1d8] sm:%s364]
                %492 = vst [vmem:[%s372 + $0xec] sm:%s364] %v491
                %v493 = vld [vmem:[%s371 + $0x1e0] sm:%s364]
                %494 = vst [vmem:[%s372 + $0xf0] sm:%s364] %v493
                %v495 = vld [vmem:[%s371 + $0x1e8] sm:%s364]
                %496 = vst [vmem:[%s372 + $0xf4] sm:%s364] %v495
                %v497 = vld [vmem:[%s371 + $0x1f0] sm:%s364]
                %498 = vst [vmem:[%s372 + $0xf8] sm:%s364] %v497
                %v499 = vld [vmem:[%s371 + $0x1f8] sm:%s364]
                %500 = vst [vmem:[%s372 + $0xfc] sm:%s364] %v499
                %v501 = vld [vmem:[%s371 + $0x200] sm:%s364]
                %502 = vst [vmem:[%s372 + $0x100] sm:%s364] %v501
                %v503 = vld [vmem:[%s371 + $0x208] sm:%s364]
                %504 = vst [vmem:[%s372 + $0x104] sm:%s364] %v503
                %v505 = vld [vmem:[%s371 + $0x210] sm:%s364]
                %506 = vst [vmem:[%s372 + $0x108] sm:%s364] %v505
                %v507 = vld [vmem:[%s371 + $0x218] sm:%s364]
                %508 = vst [vmem:[%s372 + $0x10c] sm:%s364] %v507
                %v509 = vld [vmem:[%s371 + $0x220] sm:%s364]
                %510 = vst [vmem:[%s372 + $0x110] sm:%s364] %v509
                %v511 = vld [vmem:[%s371 + $0x228] sm:%s364]
                %512 = vst [vmem:[%s372 + $0x114] sm:%s364] %v511
                %v513 = vld [vmem:[%s371 + $0x230] sm:%s364]
                %514 = vst [vmem:[%s372 + $0x118] sm:%s364] %v513
                %v515 = vld [vmem:[%s371 + $0x238] sm:%s364]
                %516 = vst [vmem:[%s372 + $0x11c] sm:%s364] %v515
                %v517 = vld [vmem:[%s371 + $0x240] sm:%s364]
                %518 = vst [vmem:[%s372 + $0x120] sm:%s364] %v517
                %v519 = vld [vmem:[%s371 + $0x248] sm:%s364]
                %520 = vst [vmem:[%s372 + $0x124] sm:%s364] %v519
                %v521 = vld [vmem:[%s371 + $0x250] sm:%s364]
                %522 = vst [vmem:[%s372 + $0x128] sm:%s364] %v521
                %v523 = vld [vmem:[%s371 + $0x258] sm:%s364]
                %524 = vst [vmem:[%s372 + $0x12c] sm:%s364] %v523
                %v525 = vld [vmem:[%s371 + $0x260] sm:%s364]
                %526 = vst [vmem:[%s372 + $0x130] sm:%s364] %v525
                %v527 = vld [vmem:[%s371 + $0x268] sm:%s364]
                %528 = vst [vmem:[%s372 + $0x134] sm:%s364] %v527
                %v529 = vld [vmem:[%s371 + $0x270] sm:%s364]
                %530 = vst [vmem:[%s372 + $0x138] sm:%s364] %v529
                %v531 = vld [vmem:[%s371 + $0x278] sm:%s364]
                %532 = vst [vmem:[%s372 + $0x13c] sm:%s364] %v531
                %v533 = vld [vmem:[%s371 + $0x280] sm:%s364]
                %534 = vst [vmem:[%s372 + $0x140] sm:%s364] %v533
                %v535 = vld [vmem:[%s371 + $0x288] sm:%s364]
                %536 = vst [vmem:[%s372 + $0x144] sm:%s364] %v535
                %v537 = vld [vmem:[%s371 + $0x290] sm:%s364]
                %538 = vst [vmem:[%s372 + $0x148] sm:%s364] %v537
                %v539 = vld [vmem:[%s371 + $0x298] sm:%s364]
                %540 = vst [vmem:[%s372 + $0x14c] sm:%s364] %v539
                %v541 = vld [vmem:[%s371 + $0x2a0] sm:%s364]
                %542 = vst [vmem:[%s372 + $0x150] sm:%s364] %v541
                %v543 = vld [vmem:[%s371 + $0x2a8] sm:%s364]
                %544 = vst [vmem:[%s372 + $0x154] sm:%s364] %v543
                %v545 = vld [vmem:[%s371 + $0x2b0] sm:%s364]
                %546 = vst [vmem:[%s372 + $0x158] sm:%s364] %v545
                %v547 = vld [vmem:[%s371 + $0x2b8] sm:%s364]
                %548 = vst [vmem:[%s372 + $0x15c] sm:%s364] %v547
                %v549 = vld [vmem:[%s371 + $0x2c0] sm:%s364]
                %550 = vst [vmem:[%s372 + $0x160] sm:%s364] %v549
                %v551 = vld [vmem:[%s371 + $0x2c8] sm:%s364]
                %552 = vst [vmem:[%s372 + $0x164] sm:%s364] %v551
                %v553 = vld [vmem:[%s371 + $0x2d0] sm:%s364]
                %554 = vst [vmem:[%s372 + $0x168] sm:%s364] %v553
                %v555 = vld [vmem:[%s371 + $0x2d8] sm:%s364]
                %556 = vst [vmem:[%s372 + $0x16c] sm:%s364] %v555
                %v557 = vld [vmem:[%s371 + $0x2e0] sm:%s364]
                %558 = vst [vmem:[%s372 + $0x170] sm:%s364] %v557
                %v559 = vld [vmem:[%s371 + $0x2e8] sm:%s364]
                %560 = vst [vmem:[%s372 + $0x174] sm:%s364] %v559
                %v561 = vld [vmem:[%s371 + $0x2f0] sm:%s364]
                %562 = vst [vmem:[%s372 + $0x178] sm:%s364] %v561
                %v563 = vld [vmem:[%s371 + $0x2f8] sm:%s364]
                %564 = vst [vmem:[%s372 + $0x17c] sm:%s364] %v563
                %v565 = vld [vmem:[%s371 + $0x300] sm:%s364]
                %566 = vst [vmem:[%s372 + $0x180] sm:%s364] %v565
                %v567 = vld [vmem:[%s371 + $0x308] sm:%s364]
                %568 = vst [vmem:[%s372 + $0x184] sm:%s364] %v567
                %v569 = vld [vmem:[%s371 + $0x310] sm:%s364]
                %570 = vst [vmem:[%s372 + $0x188] sm:%s364] %v569
                %v571 = vld [vmem:[%s371 + $0x318] sm:%s364]
                %572 = vst [vmem:[%s372 + $0x18c] sm:%s364] %v571
                %v573 = vld [vmem:[%s371 + $0x320] sm:%s364]
                %574 = vst [vmem:[%s372 + $0x190] sm:%s364] %v573
                %v575 = vld [vmem:[%s371 + $0x328] sm:%s364]
                %576 = vst [vmem:[%s372 + $0x194] sm:%s364] %v575
                %v577 = vld [vmem:[%s371 + $0x330] sm:%s364]
                %578 = vst [vmem:[%s372 + $0x198] sm:%s364] %v577
                %v579 = vld [vmem:[%s371 + $0x338] sm:%s364]
                %580 = vst [vmem:[%s372 + $0x19c] sm:%s364] %v579
                %v581 = vld [vmem:[%s371 + $0x340] sm:%s364]
                %582 = vst [vmem:[%s372 + $0x1a0] sm:%s364] %v581
                %v583 = vld [vmem:[%s371 + $0x348] sm:%s364]
                %584 = vst [vmem:[%s372 + $0x1a4] sm:%s364] %v583
                %v585 = vld [vmem:[%s371 + $0x350] sm:%s364]
                %586 = vst [vmem:[%s372 + $0x1a8] sm:%s364] %v585
                %v587 = vld [vmem:[%s371 + $0x358] sm:%s364]
                %588 = vst [vmem:[%s372 + $0x1ac] sm:%s364] %v587
                %v589 = vld [vmem:[%s371 + $0x360] sm:%s364]
                %590 = vst [vmem:[%s372 + $0x1b0] sm:%s364] %v589
                %v591 = vld [vmem:[%s371 + $0x368] sm:%s364]
                %592 = vst [vmem:[%s372 + $0x1b4] sm:%s364] %v591
                %v593 = vld [vmem:[%s371 + $0x370] sm:%s364]
                %594 = vst [vmem:[%s372 + $0x1b8] sm:%s364] %v593
                %v595 = vld [vmem:[%s371 + $0x378] sm:%s364]
                %596 = vst [vmem:[%s372 + $0x1bc] sm:%s364] %v595
                %v597 = vld [vmem:[%s371 + $0x380] sm:%s364]
                %598 = vst [vmem:[%s372 + $0x1c0] sm:%s364] %v597
                %v599 = vld [vmem:[%s371 + $0x388] sm:%s364]
                %600 = vst [vmem:[%s372 + $0x1c4] sm:%s364] %v599
                %v601 = vld [vmem:[%s371 + $0x390] sm:%s364]
                %602 = vst [vmem:[%s372 + $0x1c8] sm:%s364] %v601
                %v603 = vld [vmem:[%s371 + $0x398] sm:%s364]
                %604 = vst [vmem:[%s372 + $0x1cc] sm:%s364] %v603
                %v605 = vld [vmem:[%s371 + $0x3a0] sm:%s364]
                %606 = vst [vmem:[%s372 + $0x1d0] sm:%s364] %v605
                %v607 = vld [vmem:[%s371 + $0x3a8] sm:%s364]
                %608 = vst [vmem:[%s372 + $0x1d4] sm:%s364] %v607
                %v609 = vld [vmem:[%s371 + $0x3b0] sm:%s364]
                %610 = vst [vmem:[%s372 + $0x1d8] sm:%s364] %v609
                %v611 = vld [vmem:[%s371 + $0x3b8] sm:%s364]
                %612 = vst [vmem:[%s372 + $0x1dc] sm:%s364] %v611
                %v613 = vld [vmem:[%s371 + $0x3c0] sm:%s364]
                %614 = vst [vmem:[%s372 + $0x1e0] sm:%s364] %v613
                %v615 = vld [vmem:[%s371 + $0x3c8] sm:%s364]
                %616 = vst [vmem:[%s372 + $0x1e4] sm:%s364] %v615
                %v617 = vld [vmem:[%s371 + $0x3d0] sm:%s364]
                %618 = vst [vmem:[%s372 + $0x1e8] sm:%s364] %v617
                %v619 = vld [vmem:[%s371 + $0x3d8] sm:%s364]
                %620 = vst [vmem:[%s372 + $0x1ec] sm:%s364] %v619
                %v621 = vld [vmem:[%s371 + $0x3e0] sm:%s364]
                %622 = vst [vmem:[%s372 + $0x1f0] sm:%s364] %v621
                %v623 = vld [vmem:[%s371 + $0x3e8] sm:%s364]
                %624 = vst [vmem:[%s372 + $0x1f4] sm:%s364] %v623
                %v625 = vld [vmem:[%s371 + $0x3f0] sm:%s364]
                %626 = vst [vmem:[%s372 + $0x1f8] sm:%s364] %v625
                %v627 = vld [vmem:[%s371 + $0x3f8] sm:%s364]
                %628 = vst [vmem:[%s372 + $0x1fc] sm:%s364] %v627
              $region60: #{discriminator_forward.10} parent=54 // loop_footer
                %s370 = sadd.s32 1, %s366
              $region61: #{discriminator_forward.10} parent=54 // loop_footer_branch
                %365 = sbr.rel target = $region57
              $region62: #{discriminator_forward.10} parent=54 // loop_exit
                _
            $region55: #{discriminator_forward.10} parent=46 // pred_fallthru
              _
          $region47: #{discriminator_forward.10} parent=42 // pred_fallthru
            _
          %905 = vnop
        $region43: #{discriminator_forward.10} parent=15 // pred_fallthru
          _
      $region16: #{discriminator_forward.10} parent=5 // pred_fallthru
        _
      %p906 = scmp.le.s32.totalorder 1, %s11
      %p907 = scmp.lt.s32.totalorder %s11, 5
      %p908 = pnand %p906, %p907
      %p909 = pneg %p908
      // Predicated region
      $region81: #{discriminator_forward.10} parent=5 // pred_check
        _
      $region82: #{discriminator_forward.10} parent=5 // pred_check_branch
        %911 = sbr.rel (%p908) target = $region84
      $region83: #{discriminator_forward.10} parent=5 // pred_region
        %s912 = ssub.s32 %s11, 1
        %s913 = sand.u32 %s45, 1
        %s914 = sand.u32 %s45, 1
        %s915 = smul.addr %s914, 512
        %s916 = scalar_lea.vmem [#allocation3], %s915
        // Predicated region
        $region85: #{discriminator_forward.10} parent=83 // pred_check
          %p917 = pneg %p58
        $region86: #{discriminator_forward.10} parent=83 // pred_check_branch
          %919 = sbr.rel (%p917) target = $region88
        $region87: #{discriminator_forward.10} parent=83 // pred_region
          _
        $region88: #{discriminator_forward.10} parent=83 // pred_fallthru
          _
        %s920 = sand.u32 %s73, 1
        %s921 = sand.u32 %s73, 1
        %s922 = smul.addr %s921, 512
        %s923 = scalar_lea.vmem [#allocation4], %s922
        // Predicated region
        $region89: #{discriminator_forward.10} parent=83 // pred_check
          %p924 = pneg %p86
        $region90: #{discriminator_forward.10} parent=83 // pred_check_branch
          %926 = sbr.rel (%p924) target = $region92
        $region91: #{discriminator_forward.10} parent=83 // pred_region
          _
        $region92: #{discriminator_forward.10} parent=83 // pred_fallthru
          _
        %s927 = sand.u32 %s45, 1
        %s928 = sand.u32 %s45, 1
        %s929 = smul.addr %s928, 512
        %s930 = scalar_lea.vmem [#allocation3], %s929
        %p931 = pneg %p58
        %p932 = pneg %p55
        %s933 = sand.u32 %s73, 1
        %s934 = sand.u32 %s73, 1
        %s935 = smul.addr %s934, 512
        %s936 = scalar_lea.vmem [#allocation4], %s935
        %p937 = pneg %p86
        %p938 = pneg %p83
        %p939 = pneg %p114
        %p940 = pneg %p111
        %s941 = sand.u32 %s101, 1
        %s942 = sand.u32 %s101, 1
        %s943 = smul.addr %s942, 64
        %s944 = scalar_lea.vmem [#allocation5], %s943
        %p945 = pneg %p142
        %p946 = pneg %p139
        %p947 = scmp.lt.s32.totalorder %s21, 0
        %s948 = scalar_select %p947, %s21, 0
        %p949 = scmp.lt.s32.totalorder %s22, 1
        %s950 = scalar_select %p949, %s22, 1
        %s951 = smul.addr %s948, 2
        %s952 = sadd.s32 %s950, %s951
        %s953 = smul.addr %s952, 8
        %s954 = scalar_lea.vmem %s3, %s953
        %p955 = pneg %p170
        %p956 = pneg %p167
        %p957 = scmp.lt.s32.totalorder %s21, 0
        %s958 = scalar_select %p957, %s21, 0
        %p959 = scmp.lt.s32.totalorder %s22, 1
        %s960 = scalar_select %p959, %s22, 1
        %s961 = smul.addr %s958, 2
        %s962 = sadd.s32 %s960, %s961
        %s963 = smul.addr %s962, 8
        %s964 = scalar_lea.vmem %s4, %s963
        %s965 = smul.u32 16, %s21
        %s966 = smul.u32 8, %s23
        %s967 = smul.u32 128, %s23
        %s968 = smul.u32 16, %s21
        %p969 = scmp.lt.s32.totalorder %s21, 0
        %s970 = scalar_select %p969, %s21, 0
        %p971 = scmp.lt.s32.totalorder %s22, 1
        %s972 = scalar_select %p971, %s22, 1
        %s973 = smul.addr %s970, 2
        %s974 = sadd.s32 %s972, %s973
        %s975 = smul.addr %s974, 8
        %s976 = scalar_lea.vmem %s3, %s975
        %p977 = scmp.lt.s32.totalorder %s21, 0
        %s978 = scalar_select %p977, %s21, 0
        %p979 = scmp.lt.s32.totalorder %s22, 1
        %s980 = scalar_select %p979, %s22, 1
        %s981 = smul.addr %s978, 2
        %s982 = sadd.s32 %s980, %s981
        %s983 = smul.addr %s982, 8
        %s984 = scalar_lea.vmem %s4, %s983
        %p985 = scmp.eq.s32.totalorder %s23, 0
        // Predicated region
        $region93: #{discriminator_forward.10} parent=83 // pred_check
          %p986 = pneg %p985
        $region94: #{discriminator_forward.10} parent=83 // pred_check_branch
          %988 = sbr.rel (%p986) target = $region96
        $region95: #{discriminator_forward.10} parent=83 // pred_region
          %989 = vst [vmem:[#allocation2] sm:$0xff] 0.0
          %990 = vst [vmem:[#allocation2 + $0x8] sm:$0xff] 0.0
          %991 = vst [vmem:[#allocation2 + $0x10] sm:$0xff] 0.0
          %992 = vst [vmem:[#allocation2 + $0x18] sm:$0xff] 0.0
          %993 = vst [vmem:[#allocation2 + $0x20] sm:$0xff] 0.0
          %994 = vst [vmem:[#allocation2 + $0x28] sm:$0xff] 0.0
          %995 = vst [vmem:[#allocation2 + $0x30] sm:$0xff] 0.0
          %996 = vst [vmem:[#allocation2 + $0x38] sm:$0xff] 0.0
          %997 = vst [vmem:[#allocation2 + $0x40] sm:$0xff] 0.0
          %998 = vst [vmem:[#allocation2 + $0x48] sm:$0xff] 0.0
          %999 = vst [vmem:[#allocation2 + $0x50] sm:$0xff] 0.0
          %1000 = vst [vmem:[#allocation2 + $0x58] sm:$0xff] 0.0
          %1001 = vst [vmem:[#allocation2 + $0x60] sm:$0xff] 0.0
          %1002 = vst [vmem:[#allocation2 + $0x68] sm:$0xff] 0.0
          %1003 = vst [vmem:[#allocation2 + $0x70] sm:$0xff] 0.0
          %1004 = vst [vmem:[#allocation2 + $0x78] sm:$0xff] 0.0
        $region96: #{discriminator_forward.10} parent=83 // pred_fallthru
          _
        %v1005 = vld [vmem:[#allocation2] sm:$0xff]
        %v1006 = vld [vmem:[#allocation2 + $0x8] sm:$0xff]
        %v1007 = vld [vmem:[#allocation2 + $0x10] sm:$0xff]
        %v1008 = vld [vmem:[#allocation2 + $0x18] sm:$0xff]
        %v1009 = vld [vmem:[#allocation2 + $0x20] sm:$0xff]
        %v1010 = vld [vmem:[#allocation2 + $0x28] sm:$0xff]
        %v1011 = vld [vmem:[#allocation2 + $0x30] sm:$0xff]
        %v1012 = vld [vmem:[#allocation2 + $0x38] sm:$0xff]
        %v1013 = vld [vmem:[#allocation2 + $0x40] sm:$0xff]
        %v1014 = vld [vmem:[#allocation2 + $0x48] sm:$0xff]
        %v1015 = vld [vmem:[#allocation2 + $0x50] sm:$0xff]
        %v1016 = vld [vmem:[#allocation2 + $0x58] sm:$0xff]
        %v1017 = vld [vmem:[#allocation2 + $0x60] sm:$0xff]
        %v1018 = vld [vmem:[#allocation2 + $0x68] sm:$0xff]
        %v1019 = vld [vmem:[#allocation2 + $0x70] sm:$0xff]
        %v1020 = vld [vmem:[#allocation2 + $0x78] sm:$0xff]
        %v1021 = vld [vmem:[%s916] sm:$0xff]
        %v1022 = vld [vmem:[%s916 + $0x8] sm:$0xff]
        %v1023 = vld [vmem:[%s916 + $0x10] sm:$0xff]
        %v1024 = vld [vmem:[%s916 + $0x18] sm:$0xff]
        %v1025 = vld [vmem:[%s916 + $0x20] sm:$0xff]
        %v1026 = vld [vmem:[%s916 + $0x28] sm:$0xff]
        %v1027 = vld [vmem:[%s916 + $0x30] sm:$0xff]
        %v1028 = vld [vmem:[%s916 + $0x38] sm:$0xff]
        %v1029 = vld [vmem:[%s916 + $0x40] sm:$0xff]
        %v1030 = vld [vmem:[%s916 + $0x48] sm:$0xff]
        %v1031 = vld [vmem:[%s916 + $0x50] sm:$0xff]
        %v1032 = vld [vmem:[%s916 + $0x58] sm:$0xff]
        %v1033 = vld [vmem:[%s916 + $0x60] sm:$0xff]
        %v1034 = vld [vmem:[%s916 + $0x68] sm:$0xff]
        %v1035 = vld [vmem:[%s916 + $0x70] sm:$0xff]
        %v1036 = vld [vmem:[%s916 + $0x78] sm:$0xff]
        %v1037 = vld [vmem:[%s916 + $0x80] sm:$0xff]
        %v1038 = vld [vmem:[%s916 + $0x88] sm:$0xff]
        %v1039 = vld [vmem:[%s916 + $0x90] sm:$0xff]
        %v1040 = vld [vmem:[%s916 + $0x98] sm:$0xff]
        %v1041 = vld [vmem:[%s916 + $0xa0] sm:$0xff]
        %v1042 = vld [vmem:[%s916 + $0xa8] sm:$0xff]
        %v1043 = vld [vmem:[%s916 + $0xb0] sm:$0xff]
        %v1044 = vld [vmem:[%s916 + $0xb8] sm:$0xff]
        %v1045 = vld [vmem:[%s916 + $0xc0] sm:$0xff]
        %v1046 = vld [vmem:[%s916 + $0xc8] sm:$0xff]
        %v1047 = vld [vmem:[%s916 + $0xd0] sm:$0xff]
        %v1048 = vld [vmem:[%s916 + $0xd8] sm:$0xff]
        %v1049 = vld [vmem:[%s916 + $0xe0] sm:$0xff]
        %v1050 = vld [vmem:[%s916 + $0xe8] sm:$0xff]
        %v1051 = vld [vmem:[%s916 + $0xf0] sm:$0xff]
        %v1052 = vld [vmem:[%s916 + $0xf8] sm:$0xff]
        %v1053 = vld [vmem:[%s916 + $0x100] sm:$0xff]
        %v1054 = vld [vmem:[%s916 + $0x108] sm:$0xff]
        %v1055 = vld [vmem:[%s916 + $0x110] sm:$0xff]
        %v1056 = vld [vmem:[%s916 + $0x118] sm:$0xff]
        %v1057 = vld [vmem:[%s916 + $0x120] sm:$0xff]
        %v1058 = vld [vmem:[%s916 + $0x128] sm:$0xff]
        %v1059 = vld [vmem:[%s916 + $0x130] sm:$0xff]
        %v1060 = vld [vmem:[%s916 + $0x138] sm:$0xff]
        %v1061 = vld [vmem:[%s916 + $0x140] sm:$0xff]
        %v1062 = vld [vmem:[%s916 + $0x148] sm:$0xff]
        %v1063 = vld [vmem:[%s916 + $0x150] sm:$0xff]
        %v1064 = vld [vmem:[%s916 + $0x158] sm:$0xff]
        %v1065 = vld [vmem:[%s916 + $0x160] sm:$0xff]
        %v1066 = vld [vmem:[%s916 + $0x168] sm:$0xff]
        %v1067 = vld [vmem:[%s916 + $0x170] sm:$0xff]
        %v1068 = vld [vmem:[%s916 + $0x178] sm:$0xff]
        %v1069 = vld [vmem:[%s916 + $0x180] sm:$0xff]
        %v1070 = vld [vmem:[%s916 + $0x188] sm:$0xff]
        %v1071 = vld [vmem:[%s916 + $0x190] sm:$0xff]
        %v1072 = vld [vmem:[%s916 + $0x198] sm:$0xff]
        %v1073 = vld [vmem:[%s916 + $0x1a0] sm:$0xff]
        %v1074 = vld [vmem:[%s916 + $0x1a8] sm:$0xff]
        %v1075 = vld [vmem:[%s916 + $0x1b0] sm:$0xff]
        %v1076 = vld [vmem:[%s916 + $0x1b8] sm:$0xff]
        %v1077 = vld [vmem:[%s916 + $0x1c0] sm:$0xff]
        %v1078 = vld [vmem:[%s916 + $0x1c8] sm:$0xff]
        %v1079 = vld [vmem:[%s916 + $0x1d0] sm:$0xff]
        %v1080 = vld [vmem:[%s916 + $0x1d8] sm:$0xff]
        %v1081 = vld [vmem:[%s916 + $0x1e0] sm:$0xff]
        %v1082 = vld [vmem:[%s916 + $0x1e8] sm:$0xff]
        %v1083 = vld [vmem:[%s916 + $0x1f0] sm:$0xff]
        %v1084 = vld [vmem:[%s916 + $0x1f8] sm:$0xff]
        %v1085 = vld [vmem:[%s923] sm:$0xf]
        %v1086 = vld [vmem:[%s923 + $0x4] sm:$0xf]
        %v1087 = vld [vmem:[%s923 + $0x8] sm:$0xf]
        %v1088 = vld [vmem:[%s923 + $0xc] sm:$0xf]
        %v1089 = vld [vmem:[%s923 + $0x10] sm:$0xf]
        %v1090 = vld [vmem:[%s923 + $0x14] sm:$0xf]
        %v1091 = vld [vmem:[%s923 + $0x18] sm:$0xf]
        %v1092 = vld [vmem:[%s923 + $0x1c] sm:$0xf]
        %v1093 = vld [vmem:[%s923 + $0x20] sm:$0xf]
        %v1094 = vld [vmem:[%s923 + $0x24] sm:$0xf]
        %v1095 = vld [vmem:[%s923 + $0x28] sm:$0xf]
        %v1096 = vld [vmem:[%s923 + $0x2c] sm:$0xf]
        %v1097 = vld [vmem:[%s923 + $0x30] sm:$0xf]
        %v1098 = vld [vmem:[%s923 + $0x34] sm:$0xf]
        %v1099 = vld [vmem:[%s923 + $0x38] sm:$0xf]
        %v1100 = vld [vmem:[%s923 + $0x3c] sm:$0xf]
        %v1101 = vld [vmem:[%s923 + $0x40] sm:$0xf]
        %v1102 = vld [vmem:[%s923 + $0x44] sm:$0xf]
        %v1103 = vld [vmem:[%s923 + $0x48] sm:$0xf]
        %v1104 = vld [vmem:[%s923 + $0x4c] sm:$0xf]
        %v1105 = vld [vmem:[%s923 + $0x50] sm:$0xf]
        %v1106 = vld [vmem:[%s923 + $0x54] sm:$0xf]
        %v1107 = vld [vmem:[%s923 + $0x58] sm:$0xf]
        %v1108 = vld [vmem:[%s923 + $0x5c] sm:$0xf]
        %v1109 = vld [vmem:[%s923 + $0x60] sm:$0xf]
        %v1110 = vld [vmem:[%s923 + $0x64] sm:$0xf]
        %v1111 = vld [vmem:[%s923 + $0x68] sm:$0xf]
        %v1112 = vld [vmem:[%s923 + $0x6c] sm:$0xf]
        %v1113 = vld [vmem:[%s923 + $0x70] sm:$0xf]
        %v1114 = vld [vmem:[%s923 + $0x74] sm:$0xf]
        %v1115 = vld [vmem:[%s923 + $0x78] sm:$0xf]
        %v1116 = vld [vmem:[%s923 + $0x7c] sm:$0xf]
        %v1117 = vld [vmem:[%s923 + $0x80] sm:$0xf]
        %v1118 = vld [vmem:[%s923 + $0x84] sm:$0xf]
        %v1119 = vld [vmem:[%s923 + $0x88] sm:$0xf]
        %v1120 = vld [vmem:[%s923 + $0x8c] sm:$0xf]
        %v1121 = vld [vmem:[%s923 + $0x90] sm:$0xf]
        %v1122 = vld [vmem:[%s923 + $0x94] sm:$0xf]
        %v1123 = vld [vmem:[%s923 + $0x98] sm:$0xf]
        %v1124 = vld [vmem:[%s923 + $0x9c] sm:$0xf]
        %v1125 = vld [vmem:[%s923 + $0xa0] sm:$0xf]
        %v1126 = vld [vmem:[%s923 + $0xa4] sm:$0xf]
        %v1127 = vld [vmem:[%s923 + $0xa8] sm:$0xf]
        %v1128 = vld [vmem:[%s923 + $0xac] sm:$0xf]
        %v1129 = vld [vmem:[%s923 + $0xb0] sm:$0xf]
        %v1130 = vld [vmem:[%s923 + $0xb4] sm:$0xf]
        %v1131 = vld [vmem:[%s923 + $0xb8] sm:$0xf]
        %v1132 = vld [vmem:[%s923 + $0xbc] sm:$0xf]
        %v1133 = vld [vmem:[%s923 + $0xc0] sm:$0xf]
        %v1134 = vld [vmem:[%s923 + $0xc4] sm:$0xf]
        %v1135 = vld [vmem:[%s923 + $0xc8] sm:$0xf]
        %v1136 = vld [vmem:[%s923 + $0xcc] sm:$0xf]
        %v1137 = vld [vmem:[%s923 + $0xd0] sm:$0xf]
        %v1138 = vld [vmem:[%s923 + $0xd4] sm:$0xf]
        %v1139 = vld [vmem:[%s923 + $0xd8] sm:$0xf]
        %v1140 = vld [vmem:[%s923 + $0xdc] sm:$0xf]
        %v1141 = vld [vmem:[%s923 + $0xe0] sm:$0xf]
        %v1142 = vld [vmem:[%s923 + $0xe4] sm:$0xf]
        %v1143 = vld [vmem:[%s923 + $0xe8] sm:$0xf]
        %v1144 = vld [vmem:[%s923 + $0xec] sm:$0xf]
        %v1145 = vld [vmem:[%s923 + $0xf0] sm:$0xf]
        %v1146 = vld [vmem:[%s923 + $0xf4] sm:$0xf]
        %v1147 = vld [vmem:[%s923 + $0xf8] sm:$0xf]
        %v1148 = vld [vmem:[%s923 + $0xfc] sm:$0xf]
        %v1149 = vld [vmem:[%s923 + $0x100] sm:$0xf]
        %v1150 = vld [vmem:[%s923 + $0x104] sm:$0xf]
        %v1151 = vld [vmem:[%s923 + $0x108] sm:$0xf]
        %v1152 = vld [vmem:[%s923 + $0x10c] sm:$0xf]
        %v1153 = vld [vmem:[%s923 + $0x110] sm:$0xf]
        %v1154 = vld [vmem:[%s923 + $0x114] sm:$0xf]
        %v1155 = vld [vmem:[%s923 + $0x118] sm:$0xf]
        %v1156 = vld [vmem:[%s923 + $0x11c] sm:$0xf]
        %v1157 = vld [vmem:[%s923 + $0x120] sm:$0xf]
        %v1158 = vld [vmem:[%s923 + $0x124] sm:$0xf]
        %v1159 = vld [vmem:[%s923 + $0x128] sm:$0xf]
        %v1160 = vld [vmem:[%s923 + $0x12c] sm:$0xf]
        %v1161 = vld [vmem:[%s923 + $0x130] sm:$0xf]
        %v1162 = vld [vmem:[%s923 + $0x134] sm:$0xf]
        %v1163 = vld [vmem:[%s923 + $0x138] sm:$0xf]
        %v1164 = vld [vmem:[%s923 + $0x13c] sm:$0xf]
        %v1165 = vld [vmem:[%s923 + $0x140] sm:$0xf]
        %v1166 = vld [vmem:[%s923 + $0x144] sm:$0xf]
        %v1167 = vld [vmem:[%s923 + $0x148] sm:$0xf]
        %v1168 = vld [vmem:[%s923 + $0x14c] sm:$0xf]
        %v1169 = vld [vmem:[%s923 + $0x150] sm:$0xf]
        %v1170 = vld [vmem:[%s923 + $0x154] sm:$0xf]
        %v1171 = vld [vmem:[%s923 + $0x158] sm:$0xf]
        %v1172 = vld [vmem:[%s923 + $0x15c] sm:$0xf]
        %v1173 = vld [vmem:[%s923 + $0x160] sm:$0xf]
        %v1174 = vld [vmem:[%s923 + $0x164] sm:$0xf]
        %v1175 = vld [vmem:[%s923 + $0x168] sm:$0xf]
        %v1176 = vld [vmem:[%s923 + $0x16c] sm:$0xf]
        %v1177 = vld [vmem:[%s923 + $0x170] sm:$0xf]
        %v1178 = vld [vmem:[%s923 + $0x174] sm:$0xf]
        %v1179 = vld [vmem:[%s923 + $0x178] sm:$0xf]
        %v1180 = vld [vmem:[%s923 + $0x17c] sm:$0xf]
        %v1181 = vld [vmem:[%s923 + $0x180] sm:$0xf]
        %v1182 = vld [vmem:[%s923 + $0x184] sm:$0xf]
        %v1183 = vld [vmem:[%s923 + $0x188] sm:$0xf]
        %v1184 = vld [vmem:[%s923 + $0x18c] sm:$0xf]
        %v1185 = vld [vmem:[%s923 + $0x190] sm:$0xf]
        %v1186 = vld [vmem:[%s923 + $0x194] sm:$0xf]
        %v1187 = vld [vmem:[%s923 + $0x198] sm:$0xf]
        %v1188 = vld [vmem:[%s923 + $0x19c] sm:$0xf]
        %v1189 = vld [vmem:[%s923 + $0x1a0] sm:$0xf]
        %v1190 = vld [vmem:[%s923 + $0x1a4] sm:$0xf]
        %v1191 = vld [vmem:[%s923 + $0x1a8] sm:$0xf]
        %v1192 = vld [vmem:[%s923 + $0x1ac] sm:$0xf]
        %v1193 = vld [vmem:[%s923 + $0x1b0] sm:$0xf]
        %v1194 = vld [vmem:[%s923 + $0x1b4] sm:$0xf]
        %v1195 = vld [vmem:[%s923 + $0x1b8] sm:$0xf]
        %v1196 = vld [vmem:[%s923 + $0x1bc] sm:$0xf]
        %v1197 = vld [vmem:[%s923 + $0x1c0] sm:$0xf]
        %v1198 = vld [vmem:[%s923 + $0x1c4] sm:$0xf]
        %v1199 = vld [vmem:[%s923 + $0x1c8] sm:$0xf]
        %v1200 = vld [vmem:[%s923 + $0x1cc] sm:$0xf]
        %v1201 = vld [vmem:[%s923 + $0x1d0] sm:$0xf]
        %v1202 = vld [vmem:[%s923 + $0x1d4] sm:$0xf]
        %v1203 = vld [vmem:[%s923 + $0x1d8] sm:$0xf]
        %v1204 = vld [vmem:[%s923 + $0x1dc] sm:$0xf]
        %v1205 = vld [vmem:[%s923 + $0x1e0] sm:$0xf]
        %v1206 = vld [vmem:[%s923 + $0x1e4] sm:$0xf]
        %v1207 = vld [vmem:[%s923 + $0x1e8] sm:$0xf]
        %v1208 = vld [vmem:[%s923 + $0x1ec] sm:$0xf]
        %v1209 = vld [vmem:[%s923 + $0x1f0] sm:$0xf]
        %v1210 = vld [vmem:[%s923 + $0x1f4] sm:$0xf]
        %v1211 = vld [vmem:[%s923 + $0x1f8] sm:$0xf]
        %v1212 = vld [vmem:[%s923 + $0x1fc] sm:$0xf]
        %v1277 = vunpack.c.l.b16 %v1021
        %v1278 = vunpack.c.h.b16 %v1021
        %v1279 = vunpack.c.l.b16 %v1022
        %v1280 = vunpack.c.h.b16 %v1022
        %v1281 = vunpack.c.l.b16 %v1023
        %v1282 = vunpack.c.h.b16 %v1023
        %v1283 = vunpack.c.l.b16 %v1024
        %v1284 = vunpack.c.h.b16 %v1024
        %v1285 = vunpack.c.l.b16 %v1025
        %v1286 = vunpack.c.h.b16 %v1025
        %v1287 = vunpack.c.l.b16 %v1026
        %v1288 = vunpack.c.h.b16 %v1026
        %v1289 = vunpack.c.l.b16 %v1027
        %v1290 = vunpack.c.h.b16 %v1027
        %v1291 = vunpack.c.l.b16 %v1028
        %v1292 = vunpack.c.h.b16 %v1028
        %v1293 = vunpack.c.l.b16 %v1029
        %v1294 = vunpack.c.h.b16 %v1029
        %v1295 = vunpack.c.l.b16 %v1030
        %v1296 = vunpack.c.h.b16 %v1030
        %v1297 = vunpack.c.l.b16 %v1031
        %v1298 = vunpack.c.h.b16 %v1031
        %v1299 = vunpack.c.l.b16 %v1032
        %v1300 = vunpack.c.h.b16 %v1032
        %v1301 = vunpack.c.l.b16 %v1033
        %v1302 = vunpack.c.h.b16 %v1033
        %v1303 = vunpack.c.l.b16 %v1034
        %v1304 = vunpack.c.h.b16 %v1034
        %v1305 = vunpack.c.l.b16 %v1035
        %v1306 = vunpack.c.h.b16 %v1035
        %v1307 = vunpack.c.l.b16 %v1036
        %v1308 = vunpack.c.h.b16 %v1036
        %v1309 = vunpack.c.l.b16 %v1037
        %v1310 = vunpack.c.h.b16 %v1037
        %v1311 = vunpack.c.l.b16 %v1038
        %v1312 = vunpack.c.h.b16 %v1038
        %v1313 = vunpack.c.l.b16 %v1039
        %v1314 = vunpack.c.h.b16 %v1039
        %v1315 = vunpack.c.l.b16 %v1040
        %v1316 = vunpack.c.h.b16 %v1040
        %v1317 = vunpack.c.l.b16 %v1041
        %v1318 = vunpack.c.h.b16 %v1041
        %v1319 = vunpack.c.l.b16 %v1042
        %v1320 = vunpack.c.h.b16 %v1042
        %v1321 = vunpack.c.l.b16 %v1043
        %v1322 = vunpack.c.h.b16 %v1043
        %v1323 = vunpack.c.l.b16 %v1044
        %v1324 = vunpack.c.h.b16 %v1044
        %v1325 = vunpack.c.l.b16 %v1045
        %v1326 = vunpack.c.h.b16 %v1045
        %v1327 = vunpack.c.l.b16 %v1046
        %v1328 = vunpack.c.h.b16 %v1046
        %v1329 = vunpack.c.l.b16 %v1047
        %v1330 = vunpack.c.h.b16 %v1047
        %v1331 = vunpack.c.l.b16 %v1048
        %v1332 = vunpack.c.h.b16 %v1048
        %v1333 = vunpack.c.l.b16 %v1049
        %v1334 = vunpack.c.h.b16 %v1049
        %v1335 = vunpack.c.l.b16 %v1050
        %v1336 = vunpack.c.h.b16 %v1050
        %v1337 = vunpack.c.l.b16 %v1051
        %v1338 = vunpack.c.h.b16 %v1051
        %v1339 = vunpack.c.l.b16 %v1052
        %v1340 = vunpack.c.h.b16 %v1052
        %v1341 = vunpack.c.l.b16 %v1053
        %v1342 = vunpack.c.h.b16 %v1053
        %v1343 = vunpack.c.l.b16 %v1054
        %v1344 = vunpack.c.h.b16 %v1054
        %v1345 = vunpack.c.l.b16 %v1055
        %v1346 = vunpack.c.h.b16 %v1055
        %v1347 = vunpack.c.l.b16 %v1056
        %v1348 = vunpack.c.h.b16 %v1056
        %v1349 = vunpack.c.l.b16 %v1057
        %v1350 = vunpack.c.h.b16 %v1057
        %v1351 = vunpack.c.l.b16 %v1058
        %v1352 = vunpack.c.h.b16 %v1058
        %v1353 = vunpack.c.l.b16 %v1059
        %v1354 = vunpack.c.h.b16 %v1059
        %v1355 = vunpack.c.l.b16 %v1060
        %v1356 = vunpack.c.h.b16 %v1060
        %v1357 = vunpack.c.l.b16 %v1061
        %v1358 = vunpack.c.h.b16 %v1061
        %v1359 = vunpack.c.l.b16 %v1062
        %v1360 = vunpack.c.h.b16 %v1062
        %v1361 = vunpack.c.l.b16 %v1063
        %v1362 = vunpack.c.h.b16 %v1063
        %v1363 = vunpack.c.l.b16 %v1064
        %v1364 = vunpack.c.h.b16 %v1064
        %v1365 = vunpack.c.l.b16 %v1065
        %v1366 = vunpack.c.h.b16 %v1065
        %v1367 = vunpack.c.l.b16 %v1066
        %v1368 = vunpack.c.h.b16 %v1066
        %v1369 = vunpack.c.l.b16 %v1067
        %v1370 = vunpack.c.h.b16 %v1067
        %v1371 = vunpack.c.l.b16 %v1068
        %v1372 = vunpack.c.h.b16 %v1068
        %v1373 = vunpack.c.l.b16 %v1069
        %v1374 = vunpack.c.h.b16 %v1069
        %v1375 = vunpack.c.l.b16 %v1070
        %v1376 = vunpack.c.h.b16 %v1070
        %v1377 = vunpack.c.l.b16 %v1071
        %v1378 = vunpack.c.h.b16 %v1071
        %v1379 = vunpack.c.l.b16 %v1072
        %v1380 = vunpack.c.h.b16 %v1072
        %v1381 = vunpack.c.l.b16 %v1073
        %v1382 = vunpack.c.h.b16 %v1073
        %v1383 = vunpack.c.l.b16 %v1074
        %v1384 = vunpack.c.h.b16 %v1074
        %v1385 = vunpack.c.l.b16 %v1075
        %v1386 = vunpack.c.h.b16 %v1075
        %v1387 = vunpack.c.l.b16 %v1076
        %v1388 = vunpack.c.h.b16 %v1076
        %v1389 = vunpack.c.l.b16 %v1077
        %v1390 = vunpack.c.h.b16 %v1077
        %v1391 = vunpack.c.l.b16 %v1078
        %v1392 = vunpack.c.h.b16 %v1078
        %v1393 = vunpack.c.l.b16 %v1079
        %v1394 = vunpack.c.h.b16 %v1079
        %v1395 = vunpack.c.l.b16 %v1080
        %v1396 = vunpack.c.h.b16 %v1080
        %v1397 = vunpack.c.l.b16 %v1081
        %v1398 = vunpack.c.h.b16 %v1081
        %v1399 = vunpack.c.l.b16 %v1082
        %v1400 = vunpack.c.h.b16 %v1082
        %v1401 = vunpack.c.l.b16 %v1083
        %v1402 = vunpack.c.h.b16 %v1083
        %v1403 = vunpack.c.l.b16 %v1084
        %v1404 = vunpack.c.h.b16 %v1084
        %v1405 = vpack.c.b16 %v1285, %v1277
        %v1406 = vpack.c.b16 %v1286, %v1278
        %v1407 = vpack.c.b16 %v1287, %v1279
        %v1408 = vpack.c.b16 %v1288, %v1280
        %v1409 = vpack.c.b16 %v1289, %v1281
        %v1410 = vpack.c.b16 %v1290, %v1282
        %v1411 = vpack.c.b16 %v1291, %v1283
        %v1412 = vpack.c.b16 %v1292, %v1284
        %v1413 = vpack.c.b16 %v1301, %v1293
        %v1414 = vpack.c.b16 %v1302, %v1294
        %v1415 = vpack.c.b16 %v1303, %v1295
        %v1416 = vpack.c.b16 %v1304, %v1296
        %v1417 = vpack.c.b16 %v1305, %v1297
        %v1418 = vpack.c.b16 %v1306, %v1298
        %v1419 = vpack.c.b16 %v1307, %v1299
        %v1420 = vpack.c.b16 %v1308, %v1300
        %v1421 = vpack.c.b16 %v1317, %v1309
        %v1422 = vpack.c.b16 %v1318, %v1310
        %v1423 = vpack.c.b16 %v1319, %v1311
        %v1424 = vpack.c.b16 %v1320, %v1312
        %v1425 = vpack.c.b16 %v1321, %v1313
        %v1426 = vpack.c.b16 %v1322, %v1314
        %v1427 = vpack.c.b16 %v1323, %v1315
        %v1428 = vpack.c.b16 %v1324, %v1316
        %v1429 = vpack.c.b16 %v1333, %v1325
        %v1430 = vpack.c.b16 %v1334, %v1326
        %v1431 = vpack.c.b16 %v1335, %v1327
        %v1432 = vpack.c.b16 %v1336, %v1328
        %v1433 = vpack.c.b16 %v1337, %v1329
        %v1434 = vpack.c.b16 %v1338, %v1330
        %v1435 = vpack.c.b16 %v1339, %v1331
        %v1436 = vpack.c.b16 %v1340, %v1332
        %v1437 = vpack.c.b16 %v1349, %v1341
        %v1438 = vpack.c.b16 %v1350, %v1342
        %v1439 = vpack.c.b16 %v1351, %v1343
        %v1440 = vpack.c.b16 %v1352, %v1344
        %v1441 = vpack.c.b16 %v1353, %v1345
        %v1442 = vpack.c.b16 %v1354, %v1346
        %v1443 = vpack.c.b16 %v1355, %v1347
        %v1444 = vpack.c.b16 %v1356, %v1348
        %v1445 = vpack.c.b16 %v1365, %v1357
        %v1446 = vpack.c.b16 %v1366, %v1358
        %v1447 = vpack.c.b16 %v1367, %v1359
        %v1448 = vpack.c.b16 %v1368, %v1360
        %v1449 = vpack.c.b16 %v1369, %v1361
        %v1450 = vpack.c.b16 %v1370, %v1362
        %v1451 = vpack.c.b16 %v1371, %v1363
        %v1452 = vpack.c.b16 %v1372, %v1364
        %v1453 = vpack.c.b16 %v1381, %v1373
        %v1454 = vpack.c.b16 %v1382, %v1374
        %v1455 = vpack.c.b16 %v1383, %v1375
        %v1456 = vpack.c.b16 %v1384, %v1376
        %v1457 = vpack.c.b16 %v1385, %v1377
        %v1458 = vpack.c.b16 %v1386, %v1378
        %v1459 = vpack.c.b16 %v1387, %v1379
        %v1460 = vpack.c.b16 %v1388, %v1380
        %v1461 = vpack.c.b16 %v1397, %v1389
        %v1462 = vpack.c.b16 %v1398, %v1390
        %v1463 = vpack.c.b16 %v1399, %v1391
        %v1464 = vpack.c.b16 %v1400, %v1392
        %v1465 = vpack.c.b16 %v1401, %v1393
        %v1466 = vpack.c.b16 %v1402, %v1394
        %v1467 = vpack.c.b16 %v1403, %v1395
        %v1468 = vpack.c.b16 %v1404, %v1396
        %v1661 = vunpack.c.l.b16 %v1085
        %v1662 = vunpack.c.l.b16 %v1086
        %v1663 = vunpack.c.l.b16 %v1087
        %v1664 = vunpack.c.l.b16 %v1088
        %v1665 = vunpack.c.l.b16 %v1089
        %v1666 = vunpack.c.l.b16 %v1090
        %v1667 = vunpack.c.l.b16 %v1091
        %v1668 = vunpack.c.l.b16 %v1092
        %v1669 = vunpack.c.l.b16 %v1093
        %v1670 = vunpack.c.l.b16 %v1094
        %v1671 = vunpack.c.l.b16 %v1095
        %v1672 = vunpack.c.l.b16 %v1096
        %v1673 = vunpack.c.l.b16 %v1097
        %v1674 = vunpack.c.l.b16 %v1098
        %v1675 = vunpack.c.l.b16 %v1099
        %v1676 = vunpack.c.l.b16 %v1100
        %v1677 = vunpack.c.l.b16 %v1101
        %v1678 = vunpack.c.l.b16 %v1102
        %v1679 = vunpack.c.l.b16 %v1103
        %v1680 = vunpack.c.l.b16 %v1104
        %v1681 = vunpack.c.l.b16 %v1105
        %v1682 = vunpack.c.l.b16 %v1106
        %v1683 = vunpack.c.l.b16 %v1107
        %v1684 = vunpack.c.l.b16 %v1108
        %v1685 = vunpack.c.l.b16 %v1109
        %v1686 = vunpack.c.l.b16 %v1110
        %v1687 = vunpack.c.l.b16 %v1111
        %v1688 = vunpack.c.l.b16 %v1112
        %v1689 = vunpack.c.l.b16 %v1113
        %v1690 = vunpack.c.l.b16 %v1114
        %v1691 = vunpack.c.l.b16 %v1115
        %v1692 = vunpack.c.l.b16 %v1116
        %v1693 = vunpack.c.l.b16 %v1117
        %v1694 = vunpack.c.l.b16 %v1118
        %v1695 = vunpack.c.l.b16 %v1119
        %v1696 = vunpack.c.l.b16 %v1120
        %v1697 = vunpack.c.l.b16 %v1121
        %v1698 = vunpack.c.l.b16 %v1122
        %v1699 = vunpack.c.l.b16 %v1123
        %v1700 = vunpack.c.l.b16 %v1124
        %v1701 = vunpack.c.l.b16 %v1125
        %v1702 = vunpack.c.l.b16 %v1126
        %v1703 = vunpack.c.l.b16 %v1127
        %v1704 = vunpack.c.l.b16 %v1128
        %v1705 = vunpack.c.l.b16 %v1129
        %v1706 = vunpack.c.l.b16 %v1130
        %v1707 = vunpack.c.l.b16 %v1131
        %v1708 = vunpack.c.l.b16 %v1132
        %v1709 = vunpack.c.l.b16 %v1133
        %v1710 = vunpack.c.l.b16 %v1134
        %v1711 = vunpack.c.l.b16 %v1135
        %v1712 = vunpack.c.l.b16 %v1136
        %v1713 = vunpack.c.l.b16 %v1137
        %v1714 = vunpack.c.l.b16 %v1138
        %v1715 = vunpack.c.l.b16 %v1139
        %v1716 = vunpack.c.l.b16 %v1140
        %v1717 = vunpack.c.l.b16 %v1141
        %v1718 = vunpack.c.l.b16 %v1142
        %v1719 = vunpack.c.l.b16 %v1143
        %v1720 = vunpack.c.l.b16 %v1144
        %v1721 = vunpack.c.l.b16 %v1145
        %v1722 = vunpack.c.l.b16 %v1146
        %v1723 = vunpack.c.l.b16 %v1147
        %v1724 = vunpack.c.l.b16 %v1148
        %v1725 = vunpack.c.l.b16 %v1149
        %v1726 = vunpack.c.l.b16 %v1150
        %v1727 = vunpack.c.l.b16 %v1151
        %v1728 = vunpack.c.l.b16 %v1152
        %v1729 = vunpack.c.l.b16 %v1153
        %v1730 = vunpack.c.l.b16 %v1154
        %v1731 = vunpack.c.l.b16 %v1155
        %v1732 = vunpack.c.l.b16 %v1156
        %v1733 = vunpack.c.l.b16 %v1157
        %v1734 = vunpack.c.l.b16 %v1158
        %v1735 = vunpack.c.l.b16 %v1159
        %v1736 = vunpack.c.l.b16 %v1160
        %v1737 = vunpack.c.l.b16 %v1161
        %v1738 = vunpack.c.l.b16 %v1162
        %v1739 = vunpack.c.l.b16 %v1163
        %v1740 = vunpack.c.l.b16 %v1164
        %v1741 = vunpack.c.l.b16 %v1165
        %v1742 = vunpack.c.l.b16 %v1166
        %v1743 = vunpack.c.l.b16 %v1167
        %v1744 = vunpack.c.l.b16 %v1168
        %v1745 = vunpack.c.l.b16 %v1169
        %v1746 = vunpack.c.l.b16 %v1170
        %v1747 = vunpack.c.l.b16 %v1171
        %v1748 = vunpack.c.l.b16 %v1172
        %v1749 = vunpack.c.l.b16 %v1173
        %v1750 = vunpack.c.l.b16 %v1174
        %v1751 = vunpack.c.l.b16 %v1175
        %v1752 = vunpack.c.l.b16 %v1176
        %v1753 = vunpack.c.l.b16 %v1177
        %v1754 = vunpack.c.l.b16 %v1178
        %v1755 = vunpack.c.l.b16 %v1179
        %v1756 = vunpack.c.l.b16 %v1180
        %v1757 = vunpack.c.l.b16 %v1181
        %v1758 = vunpack.c.l.b16 %v1182
        %v1759 = vunpack.c.l.b16 %v1183
        %v1760 = vunpack.c.l.b16 %v1184
        %v1761 = vunpack.c.l.b16 %v1185
        %v1762 = vunpack.c.l.b16 %v1186
        %v1763 = vunpack.c.l.b16 %v1187
        %v1764 = vunpack.c.l.b16 %v1188
        %v1765 = vunpack.c.l.b16 %v1189
        %v1766 = vunpack.c.l.b16 %v1190
        %v1767 = vunpack.c.l.b16 %v1191
        %v1768 = vunpack.c.l.b16 %v1192
        %v1769 = vunpack.c.l.b16 %v1193
        %v1770 = vunpack.c.l.b16 %v1194
        %v1771 = vunpack.c.l.b16 %v1195
        %v1772 = vunpack.c.l.b16 %v1196
        %v1773 = vunpack.c.l.b16 %v1197
        %v1774 = vunpack.c.l.b16 %v1198
        %v1775 = vunpack.c.l.b16 %v1199
        %v1776 = vunpack.c.l.b16 %v1200
        %v1777 = vunpack.c.l.b16 %v1201
        %v1778 = vunpack.c.l.b16 %v1202
        %v1779 = vunpack.c.l.b16 %v1203
        %v1780 = vunpack.c.l.b16 %v1204
        %v1781 = vunpack.c.l.b16 %v1205
        %v1782 = vunpack.c.l.b16 %v1206
        %v1783 = vunpack.c.l.b16 %v1207
        %v1784 = vunpack.c.l.b16 %v1208
        %v1785 = vunpack.c.l.b16 %v1209
        %v1786 = vunpack.c.l.b16 %v1210
        %v1787 = vunpack.c.l.b16 %v1211
        %v1788 = vunpack.c.l.b16 %v1212
        %v1789 = vpack.c.b16 %v1662, %v1661
        %v1790 = vpack.c.b16 %v1664, %v1663
        %v1791 = vpack.c.b16 %v1666, %v1665
        %v1792 = vpack.c.b16 %v1668, %v1667
        %v1793 = vpack.c.b16 %v1670, %v1669
        %v1794 = vpack.c.b16 %v1672, %v1671
        %v1795 = vpack.c.b16 %v1674, %v1673
        %v1796 = vpack.c.b16 %v1676, %v1675
        %v1797 = vpack.c.b16 %v1678, %v1677
        %v1798 = vpack.c.b16 %v1680, %v1679
        %v1799 = vpack.c.b16 %v1682, %v1681
        %v1800 = vpack.c.b16 %v1684, %v1683
        %v1801 = vpack.c.b16 %v1686, %v1685
        %v1802 = vpack.c.b16 %v1688, %v1687
        %v1803 = vpack.c.b16 %v1690, %v1689
        %v1804 = vpack.c.b16 %v1692, %v1691
        %v1805 = vpack.c.b16 %v1694, %v1693
        %v1806 = vpack.c.b16 %v1696, %v1695
        %v1807 = vpack.c.b16 %v1698, %v1697
        %v1808 = vpack.c.b16 %v1700, %v1699
        %v1809 = vpack.c.b16 %v1702, %v1701
        %v1810 = vpack.c.b16 %v1704, %v1703
        %v1811 = vpack.c.b16 %v1706, %v1705
        %v1812 = vpack.c.b16 %v1708, %v1707
        %v1813 = vpack.c.b16 %v1710, %v1709
        %v1814 = vpack.c.b16 %v1712, %v1711
        %v1815 = vpack.c.b16 %v1714, %v1713
        %v1816 = vpack.c.b16 %v1716, %v1715
        %v1817 = vpack.c.b16 %v1718, %v1717
        %v1818 = vpack.c.b16 %v1720, %v1719
        %v1819 = vpack.c.b16 %v1722, %v1721
        %v1820 = vpack.c.b16 %v1724, %v1723
        %v1821 = vpack.c.b16 %v1726, %v1725
        %v1822 = vpack.c.b16 %v1728, %v1727
        %v1823 = vpack.c.b16 %v1730, %v1729
        %v1824 = vpack.c.b16 %v1732, %v1731
        %v1825 = vpack.c.b16 %v1734, %v1733
        %v1826 = vpack.c.b16 %v1736, %v1735
        %v1827 = vpack.c.b16 %v1738, %v1737
        %v1828 = vpack.c.b16 %v1740, %v1739
        %v1829 = vpack.c.b16 %v1742, %v1741
        %v1830 = vpack.c.b16 %v1744, %v1743
        %v1831 = vpack.c.b16 %v1746, %v1745
        %v1832 = vpack.c.b16 %v1748, %v1747
        %v1833 = vpack.c.b16 %v1750, %v1749
        %v1834 = vpack.c.b16 %v1752, %v1751
        %v1835 = vpack.c.b16 %v1754, %v1753
        %v1836 = vpack.c.b16 %v1756, %v1755
        %v1837 = vpack.c.b16 %v1758, %v1757
        %v1838 = vpack.c.b16 %v1760, %v1759
        %v1839 = vpack.c.b16 %v1762, %v1761
        %v1840 = vpack.c.b16 %v1764, %v1763
        %v1841 = vpack.c.b16 %v1766, %v1765
        %v1842 = vpack.c.b16 %v1768, %v1767
        %v1843 = vpack.c.b16 %v1770, %v1769
        %v1844 = vpack.c.b16 %v1772, %v1771
        %v1845 = vpack.c.b16 %v1774, %v1773
        %v1846 = vpack.c.b16 %v1776, %v1775
        %v1847 = vpack.c.b16 %v1778, %v1777
        %v1848 = vpack.c.b16 %v1780, %v1779
        %v1849 = vpack.c.b16 %v1782, %v1781
        %v1850 = vpack.c.b16 %v1784, %v1783
        %v1851 = vpack.c.b16 %v1786, %v1785
        %v1852 = vpack.c.b16 %v1788, %v1787
        %1917 = vmatpush.bf16.msra.mxu0 %v1796
        %1918 = vmatpush.bf16.msra.mxu0 %v1795
        %1919 = vmatpush.bf16.msra.mxu0 %v1794
        %1920 = vmatpush.bf16.msra.mxu0 %v1793
        %1921 = vmatpush.bf16.msra.mxu0 %v1792
        %1922 = vmatpush.bf16.msra.mxu0 %v1791
        %1923 = vmatpush.bf16.msra.mxu0 %v1790
        %1924 = vmatpush.bf16.msra.mxu0 %v1789
        %1925 = vmatmul.bf16.gmra.mxu0 %v1405
        %v1926 = vpop.f32.mrf.mxu0
        %v1927 = vadd.f32 0.0, %v1926
        %v1928 = vpop.f32.mrf.mxu0
        %v1929 = vadd.f32 0.0, %v1928
        %1930 = vmatmul.bf16.gmra.mxu0 %v1413
        %v1931 = vpop.f32.mrf.mxu0
        %v1932 = vadd.f32 0.0, %v1931
        %v1933 = vpop.f32.mrf.mxu0
        %v1934 = vadd.f32 0.0, %v1933
        %1935 = vmatmul.bf16.gmra.mxu0 %v1421
        %v1936 = vpop.f32.mrf.mxu0
        %v1937 = vadd.f32 0.0, %v1936
        %v1938 = vpop.f32.mrf.mxu0
        %v1939 = vadd.f32 0.0, %v1938
        %1940 = vmatmul.bf16.gmra.mxu0 %v1429
        %v1941 = vpop.f32.mrf.mxu0
        %v1942 = vadd.f32 0.0, %v1941
        %v1943 = vpop.f32.mrf.mxu0
        %v1944 = vadd.f32 0.0, %v1943
        %1945 = vmatmul.bf16.gmra.mxu0 %v1437
        %v1946 = vpop.f32.mrf.mxu0
        %v1947 = vadd.f32 0.0, %v1946
        %v1948 = vpop.f32.mrf.mxu0
        %v1949 = vadd.f32 0.0, %v1948
        %1950 = vmatmul.bf16.gmra.mxu0 %v1445
        %v1951 = vpop.f32.mrf.mxu0
        %v1952 = vadd.f32 0.0, %v1951
        %v1953 = vpop.f32.mrf.mxu0
        %v1954 = vadd.f32 0.0, %v1953
        %1955 = vmatmul.bf16.gmra.mxu0 %v1453
        %v1956 = vpop.f32.mrf.mxu0
        %v1957 = vadd.f32 0.0, %v1956
        %v1958 = vpop.f32.mrf.mxu0
        %v1959 = vadd.f32 0.0, %v1958
        %1960 = vmatmul.bf16.gmra.mxu0 %v1461
        %v1961 = vpop.f32.mrf.mxu0
        %v1962 = vadd.f32 0.0, %v1961
        %v1963 = vpop.f32.mrf.mxu0
        %v1964 = vadd.f32 0.0, %v1963
        %1965 = vdwg.mxu0
        %1966 = vmatpush.bf16.msra.mxu0 %v1804
        %1967 = vmatpush.bf16.msra.mxu0 %v1803
        %1968 = vmatpush.bf16.msra.mxu0 %v1802
        %1969 = vmatpush.bf16.msra.mxu0 %v1801
        %1970 = vmatpush.bf16.msra.mxu0 %v1800
        %1971 = vmatpush.bf16.msra.mxu0 %v1799
        %1972 = vmatpush.bf16.msra.mxu0 %v1798
        %1973 = vmatpush.bf16.msra.mxu0 %v1797
        %1974 = vmatmul.bf16.gmra.mxu0 %v1406
        %v1975 = vpop.f32.mrf.mxu0
        %v1976 = vadd.f32 %v1927, %v1975
        %v1977 = vpop.f32.mrf.mxu0
        %v1978 = vadd.f32 %v1929, %v1977
        %1979 = vmatmul.bf16.gmra.mxu0 %v1414
        %v1980 = vpop.f32.mrf.mxu0
        %v1981 = vadd.f32 %v1932, %v1980
        %v1982 = vpop.f32.mrf.mxu0
        %v1983 = vadd.f32 %v1934, %v1982
        %1984 = vmatmul.bf16.gmra.mxu0 %v1422
        %v1985 = vpop.f32.mrf.mxu0
        %v1986 = vadd.f32 %v1937, %v1985
        %v1987 = vpop.f32.mrf.mxu0
        %v1988 = vadd.f32 %v1939, %v1987
        %1989 = vmatmul.bf16.gmra.mxu0 %v1430
        %v1990 = vpop.f32.mrf.mxu0
        %v1991 = vadd.f32 %v1942, %v1990
        %v1992 = vpop.f32.mrf.mxu0
        %v1993 = vadd.f32 %v1944, %v1992
        %1994 = vmatmul.bf16.gmra.mxu0 %v1438
        %v1995 = vpop.f32.mrf.mxu0
        %v1996 = vadd.f32 %v1947, %v1995
        %v1997 = vpop.f32.mrf.mxu0
        %v1998 = vadd.f32 %v1949, %v1997
        %1999 = vmatmul.bf16.gmra.mxu0 %v1446
        %v2000 = vpop.f32.mrf.mxu0
        %v2001 = vadd.f32 %v1952, %v2000
        %v2002 = vpop.f32.mrf.mxu0
        %v2003 = vadd.f32 %v1954, %v2002
        %2004 = vmatmul.bf16.gmra.mxu0 %v1454
        %v2005 = vpop.f32.mrf.mxu0
        %v2006 = vadd.f32 %v1957, %v2005
        %v2007 = vpop.f32.mrf.mxu0
        %v2008 = vadd.f32 %v1959, %v2007
        %2009 = vmatmul.bf16.gmra.mxu0 %v1462
        %v2010 = vpop.f32.mrf.mxu0
        %v2011 = vadd.f32 %v1962, %v2010
        %v2012 = vpop.f32.mrf.mxu0
        %v2013 = vadd.f32 %v1964, %v2012
        %2014 = vdwg.mxu0
        %2015 = vmatpush.bf16.msra.mxu0 %v1812
        %2016 = vmatpush.bf16.msra.mxu0 %v1811
        %2017 = vmatpush.bf16.msra.mxu0 %v1810
        %2018 = vmatpush.bf16.msra.mxu0 %v1809
        %2019 = vmatpush.bf16.msra.mxu0 %v1808
        %2020 = vmatpush.bf16.msra.mxu0 %v1807
        %2021 = vmatpush.bf16.msra.mxu0 %v1806
        %2022 = vmatpush.bf16.msra.mxu0 %v1805
        %2023 = vmatmul.bf16.gmra.mxu0 %v1407
        %v2024 = vpop.f32.mrf.mxu0
        %v2025 = vadd.f32 %v1976, %v2024
        %v2026 = vpop.f32.mrf.mxu0
        %v2027 = vadd.f32 %v1978, %v2026
        %2028 = vmatmul.bf16.gmra.mxu0 %v1415
        %v2029 = vpop.f32.mrf.mxu0
        %v2030 = vadd.f32 %v1981, %v2029
        %v2031 = vpop.f32.mrf.mxu0
        %v2032 = vadd.f32 %v1983, %v2031
        %2033 = vmatmul.bf16.gmra.mxu0 %v1423
        %v2034 = vpop.f32.mrf.mxu0
        %v2035 = vadd.f32 %v1986, %v2034
        %v2036 = vpop.f32.mrf.mxu0
        %v2037 = vadd.f32 %v1988, %v2036
        %2038 = vmatmul.bf16.gmra.mxu0 %v1431
        %v2039 = vpop.f32.mrf.mxu0
        %v2040 = vadd.f32 %v1991, %v2039
        %v2041 = vpop.f32.mrf.mxu0
        %v2042 = vadd.f32 %v1993, %v2041
        %2043 = vmatmul.bf16.gmra.mxu0 %v1439
        %v2044 = vpop.f32.mrf.mxu0
        %v2045 = vadd.f32 %v1996, %v2044
        %v2046 = vpop.f32.mrf.mxu0
        %v2047 = vadd.f32 %v1998, %v2046
        %2048 = vmatmul.bf16.gmra.mxu0 %v1447
        %v2049 = vpop.f32.mrf.mxu0
        %v2050 = vadd.f32 %v2001, %v2049
        %v2051 = vpop.f32.mrf.mxu0
        %v2052 = vadd.f32 %v2003, %v2051
        %2053 = vmatmul.bf16.gmra.mxu0 %v1455
        %v2054 = vpop.f32.mrf.mxu0
        %v2055 = vadd.f32 %v2006, %v2054
        %v2056 = vpop.f32.mrf.mxu0
        %v2057 = vadd.f32 %v2008, %v2056
        %2058 = vmatmul.bf16.gmra.mxu0 %v1463
        %v2059 = vpop.f32.mrf.mxu0
        %v2060 = vadd.f32 %v2011, %v2059
        %v2061 = vpop.f32.mrf.mxu0
        %v2062 = vadd.f32 %v2013, %v2061
        %2063 = vdwg.mxu0
        %2064 = vmatpush.bf16.msra.mxu0 %v1820
        %2065 = vmatpush.bf16.msra.mxu0 %v1819
        %2066 = vmatpush.bf16.msra.mxu0 %v1818
        %2067 = vmatpush.bf16.msra.mxu0 %v1817
        %2068 = vmatpush.bf16.msra.mxu0 %v1816
        %2069 = vmatpush.bf16.msra.mxu0 %v1815
        %2070 = vmatpush.bf16.msra.mxu0 %v1814
        %2071 = vmatpush.bf16.msra.mxu0 %v1813
        %2072 = vmatmul.bf16.gmra.mxu0 %v1408
        %v2073 = vpop.f32.mrf.mxu0
        %v2074 = vadd.f32 %v2025, %v2073
        %v2075 = vpop.f32.mrf.mxu0
        %v2076 = vadd.f32 %v2027, %v2075
        %2077 = vmatmul.bf16.gmra.mxu0 %v1416
        %v2078 = vpop.f32.mrf.mxu0
        %v2079 = vadd.f32 %v2030, %v2078
        %v2080 = vpop.f32.mrf.mxu0
        %v2081 = vadd.f32 %v2032, %v2080
        %2082 = vmatmul.bf16.gmra.mxu0 %v1424
        %v2083 = vpop.f32.mrf.mxu0
        %v2084 = vadd.f32 %v2035, %v2083
        %v2085 = vpop.f32.mrf.mxu0
        %v2086 = vadd.f32 %v2037, %v2085
        %2087 = vmatmul.bf16.gmra.mxu0 %v1432
        %v2088 = vpop.f32.mrf.mxu0
        %v2089 = vadd.f32 %v2040, %v2088
        %v2090 = vpop.f32.mrf.mxu0
        %v2091 = vadd.f32 %v2042, %v2090
        %2092 = vmatmul.bf16.gmra.mxu0 %v1440
        %v2093 = vpop.f32.mrf.mxu0
        %v2094 = vadd.f32 %v2045, %v2093
        %v2095 = vpop.f32.mrf.mxu0
        %v2096 = vadd.f32 %v2047, %v2095
        %2097 = vmatmul.bf16.gmra.mxu0 %v1448
        %v2098 = vpop.f32.mrf.mxu0
        %v2099 = vadd.f32 %v2050, %v2098
        %v2100 = vpop.f32.mrf.mxu0
        %v2101 = vadd.f32 %v2052, %v2100
        %2102 = vmatmul.bf16.gmra.mxu0 %v1456
        %v2103 = vpop.f32.mrf.mxu0
        %v2104 = vadd.f32 %v2055, %v2103
        %v2105 = vpop.f32.mrf.mxu0
        %v2106 = vadd.f32 %v2057, %v2105
        %2107 = vmatmul.bf16.gmra.mxu0 %v1464
        %v2108 = vpop.f32.mrf.mxu0
        %v2109 = vadd.f32 %v2060, %v2108
        %v2110 = vpop.f32.mrf.mxu0
        %v2111 = vadd.f32 %v2062, %v2110
        %2112 = vdwg.mxu0
        %2113 = vmatpush.bf16.msra.mxu0 %v1828
        %2114 = vmatpush.bf16.msra.mxu0 %v1827
        %2115 = vmatpush.bf16.msra.mxu0 %v1826
        %2116 = vmatpush.bf16.msra.mxu0 %v1825
        %2117 = vmatpush.bf16.msra.mxu0 %v1824
        %2118 = vmatpush.bf16.msra.mxu0 %v1823
        %2119 = vmatpush.bf16.msra.mxu0 %v1822
        %2120 = vmatpush.bf16.msra.mxu0 %v1821
        %2121 = vmatmul.bf16.gmra.mxu0 %v1409
        %v2122 = vpop.f32.mrf.mxu0
        %v2123 = vadd.f32 %v2074, %v2122
        %v2124 = vpop.f32.mrf.mxu0
        %v2125 = vadd.f32 %v2076, %v2124
        %2126 = vmatmul.bf16.gmra.mxu0 %v1417
        %v2127 = vpop.f32.mrf.mxu0
        %v2128 = vadd.f32 %v2079, %v2127
        %v2129 = vpop.f32.mrf.mxu0
        %v2130 = vadd.f32 %v2081, %v2129
        %2131 = vmatmul.bf16.gmra.mxu0 %v1425
        %v2132 = vpop.f32.mrf.mxu0
        %v2133 = vadd.f32 %v2084, %v2132
        %v2134 = vpop.f32.mrf.mxu0
        %v2135 = vadd.f32 %v2086, %v2134
        %2136 = vmatmul.bf16.gmra.mxu0 %v1433
        %v2137 = vpop.f32.mrf.mxu0
        %v2138 = vadd.f32 %v2089, %v2137
        %v2139 = vpop.f32.mrf.mxu0
        %v2140 = vadd.f32 %v2091, %v2139
        %2141 = vmatmul.bf16.gmra.mxu0 %v1441
        %v2142 = vpop.f32.mrf.mxu0
        %v2143 = vadd.f32 %v2094, %v2142
        %v2144 = vpop.f32.mrf.mxu0
        %v2145 = vadd.f32 %v2096, %v2144
        %2146 = vmatmul.bf16.gmra.mxu0 %v1449
        %v2147 = vpop.f32.mrf.mxu0
        %v2148 = vadd.f32 %v2099, %v2147
        %v2149 = vpop.f32.mrf.mxu0
        %v2150 = vadd.f32 %v2101, %v2149
        %2151 = vmatmul.bf16.gmra.mxu0 %v1457
        %v2152 = vpop.f32.mrf.mxu0
        %v2153 = vadd.f32 %v2104, %v2152
        %v2154 = vpop.f32.mrf.mxu0
        %v2155 = vadd.f32 %v2106, %v2154
        %2156 = vmatmul.bf16.gmra.mxu0 %v1465
        %v2157 = vpop.f32.mrf.mxu0
        %v2158 = vadd.f32 %v2109, %v2157
        %v2159 = vpop.f32.mrf.mxu0
        %v2160 = vadd.f32 %v2111, %v2159
        %2161 = vdwg.mxu0
        %2162 = vmatpush.bf16.msra.mxu0 %v1836
        %2163 = vmatpush.bf16.msra.mxu0 %v1835
        %2164 = vmatpush.bf16.msra.mxu0 %v1834
        %2165 = vmatpush.bf16.msra.mxu0 %v1833
        %2166 = vmatpush.bf16.msra.mxu0 %v1832
        %2167 = vmatpush.bf16.msra.mxu0 %v1831
        %2168 = vmatpush.bf16.msra.mxu0 %v1830
        %2169 = vmatpush.bf16.msra.mxu0 %v1829
        %2170 = vmatmul.bf16.gmra.mxu0 %v1410
        %v2171 = vpop.f32.mrf.mxu0
        %v2172 = vadd.f32 %v2123, %v2171
        %v2173 = vpop.f32.mrf.mxu0
        %v2174 = vadd.f32 %v2125, %v2173
        %2175 = vmatmul.bf16.gmra.mxu0 %v1418
        %v2176 = vpop.f32.mrf.mxu0
        %v2177 = vadd.f32 %v2128, %v2176
        %v2178 = vpop.f32.mrf.mxu0
        %v2179 = vadd.f32 %v2130, %v2178
        %2180 = vmatmul.bf16.gmra.mxu0 %v1426
        %v2181 = vpop.f32.mrf.mxu0
        %v2182 = vadd.f32 %v2133, %v2181
        %v2183 = vpop.f32.mrf.mxu0
        %v2184 = vadd.f32 %v2135, %v2183
        %2185 = vmatmul.bf16.gmra.mxu0 %v1434
        %v2186 = vpop.f32.mrf.mxu0
        %v2187 = vadd.f32 %v2138, %v2186
        %v2188 = vpop.f32.mrf.mxu0
        %v2189 = vadd.f32 %v2140, %v2188
        %2190 = vmatmul.bf16.gmra.mxu0 %v1442
        %v2191 = vpop.f32.mrf.mxu0
        %v2192 = vadd.f32 %v2143, %v2191
        %v2193 = vpop.f32.mrf.mxu0
        %v2194 = vadd.f32 %v2145, %v2193
        %2195 = vmatmul.bf16.gmra.mxu0 %v1450
        %v2196 = vpop.f32.mrf.mxu0
        %v2197 = vadd.f32 %v2148, %v2196
        %v2198 = vpop.f32.mrf.mxu0
        %v2199 = vadd.f32 %v2150, %v2198
        %2200 = vmatmul.bf16.gmra.mxu0 %v1458
        %v2201 = vpop.f32.mrf.mxu0
        %v2202 = vadd.f32 %v2153, %v2201
        %v2203 = vpop.f32.mrf.mxu0
        %v2204 = vadd.f32 %v2155, %v2203
        %2205 = vmatmul.bf16.gmra.mxu0 %v1466
        %v2206 = vpop.f32.mrf.mxu0
        %v2207 = vadd.f32 %v2158, %v2206
        %v2208 = vpop.f32.mrf.mxu0
        %v2209 = vadd.f32 %v2160, %v2208
        %2210 = vdwg.mxu0
        %2211 = vmatpush.bf16.msra.mxu0 %v1844
        %2212 = vmatpush.bf16.msra.mxu0 %v1843
        %2213 = vmatpush.bf16.msra.mxu0 %v1842
        %2214 = vmatpush.bf16.msra.mxu0 %v1841
        %2215 = vmatpush.bf16.msra.mxu0 %v1840
        %2216 = vmatpush.bf16.msra.mxu0 %v1839
        %2217 = vmatpush.bf16.msra.mxu0 %v1838
        %2218 = vmatpush.bf16.msra.mxu0 %v1837
        %2219 = vmatmul.bf16.gmra.mxu0 %v1411
        %v2220 = vpop.f32.mrf.mxu0
        %v2221 = vadd.f32 %v2172, %v2220
        %v2222 = vpop.f32.mrf.mxu0
        %v2223 = vadd.f32 %v2174, %v2222
        %2224 = vmatmul.bf16.gmra.mxu0 %v1419
        %v2225 = vpop.f32.mrf.mxu0
        %v2226 = vadd.f32 %v2177, %v2225
        %v2227 = vpop.f32.mrf.mxu0
        %v2228 = vadd.f32 %v2179, %v2227
        %2229 = vmatmul.bf16.gmra.mxu0 %v1427
        %v2230 = vpop.f32.mrf.mxu0
        %v2231 = vadd.f32 %v2182, %v2230
        %v2232 = vpop.f32.mrf.mxu0
        %v2233 = vadd.f32 %v2184, %v2232
        %2234 = vmatmul.bf16.gmra.mxu0 %v1435
        %v2235 = vpop.f32.mrf.mxu0
        %v2236 = vadd.f32 %v2187, %v2235
        %v2237 = vpop.f32.mrf.mxu0
        %v2238 = vadd.f32 %v2189, %v2237
        %2239 = vmatmul.bf16.gmra.mxu0 %v1443
        %v2240 = vpop.f32.mrf.mxu0
        %v2241 = vadd.f32 %v2192, %v2240
        %v2242 = vpop.f32.mrf.mxu0
        %v2243 = vadd.f32 %v2194, %v2242
        %2244 = vmatmul.bf16.gmra.mxu0 %v1451
        %v2245 = vpop.f32.mrf.mxu0
        %v2246 = vadd.f32 %v2197, %v2245
        %v2247 = vpop.f32.mrf.mxu0
        %v2248 = vadd.f32 %v2199, %v2247
        %2249 = vmatmul.bf16.gmra.mxu0 %v1459
        %v2250 = vpop.f32.mrf.mxu0
        %v2251 = vadd.f32 %v2202, %v2250
        %v2252 = vpop.f32.mrf.mxu0
        %v2253 = vadd.f32 %v2204, %v2252
        %2254 = vmatmul.bf16.gmra.mxu0 %v1467
        %v2255 = vpop.f32.mrf.mxu0
        %v2256 = vadd.f32 %v2207, %v2255
        %v2257 = vpop.f32.mrf.mxu0
        %v2258 = vadd.f32 %v2209, %v2257
        %2259 = vdwg.mxu0
        %2260 = vmatpush.bf16.msra.mxu0 %v1852
        %2261 = vmatpush.bf16.msra.mxu0 %v1851
        %2262 = vmatpush.bf16.msra.mxu0 %v1850
        %2263 = vmatpush.bf16.msra.mxu0 %v1849
        %2264 = vmatpush.bf16.msra.mxu0 %v1848
        %2265 = vmatpush.bf16.msra.mxu0 %v1847
        %2266 = vmatpush.bf16.msra.mxu0 %v1846
        %2267 = vmatpush.bf16.msra.mxu0 %v1845
        %2268 = vmatmul.bf16.gmra.mxu0 %v1412
        %v2269 = vpop.f32.mrf.mxu0
        %v2270 = vadd.f32 %v2221, %v2269
        %v2271 = vpop.f32.mrf.mxu0
        %v2272 = vadd.f32 %v2223, %v2271
        %2273 = vmatmul.bf16.gmra.mxu0 %v1420
        %v2274 = vpop.f32.mrf.mxu0
        %v2275 = vadd.f32 %v2226, %v2274
        %v2276 = vpop.f32.mrf.mxu0
        %v2277 = vadd.f32 %v2228, %v2276
        %2278 = vmatmul.bf16.gmra.mxu0 %v1428
        %v2279 = vpop.f32.mrf.mxu0
        %v2280 = vadd.f32 %v2231, %v2279
        %v2281 = vpop.f32.mrf.mxu0
        %v2282 = vadd.f32 %v2233, %v2281
        %2283 = vmatmul.bf16.gmra.mxu0 %v1436
        %v2284 = vpop.f32.mrf.mxu0
        %v2285 = vadd.f32 %v2236, %v2284
        %v2286 = vpop.f32.mrf.mxu0
        %v2287 = vadd.f32 %v2238, %v2286
        %2288 = vmatmul.bf16.gmra.mxu0 %v1444
        %v2289 = vpop.f32.mrf.mxu0
        %v2290 = vadd.f32 %v2241, %v2289
        %v2291 = vpop.f32.mrf.mxu0
        %v2292 = vadd.f32 %v2243, %v2291
        %2293 = vmatmul.bf16.gmra.mxu0 %v1452
        %v2294 = vpop.f32.mrf.mxu0
        %v2295 = vadd.f32 %v2246, %v2294
        %v2296 = vpop.f32.mrf.mxu0
        %v2297 = vadd.f32 %v2248, %v2296
        %2298 = vmatmul.bf16.gmra.mxu0 %v1460
        %v2299 = vpop.f32.mrf.mxu0
        %v2300 = vadd.f32 %v2251, %v2299
        %v2301 = vpop.f32.mrf.mxu0
        %v2302 = vadd.f32 %v2253, %v2301
        %2303 = vmatmul.bf16.gmra.mxu0 %v1468
        %v2304 = vpop.f32.mrf.mxu0
        %v2305 = vadd.f32 %v2256, %v2304
        %v2306 = vpop.f32.mrf.mxu0
        %v2307 = vadd.f32 %v2258, %v2306
        %2308 = vdwg.mxu0
        %v2309 = vadd.f32 %v1005, %v2270
        %v2310 = vadd.f32 %v1006, %v2272
        %v2311 = vadd.f32 %v1007, %v2275
        %v2312 = vadd.f32 %v1008, %v2277
        %v2313 = vadd.f32 %v1009, %v2280
        %v2314 = vadd.f32 %v1010, %v2282
        %v2315 = vadd.f32 %v1011, %v2285
        %v2316 = vadd.f32 %v1012, %v2287
        %v2317 = vadd.f32 %v1013, %v2290
        %v2318 = vadd.f32 %v1014, %v2292
        %v2319 = vadd.f32 %v1015, %v2295
        %v2320 = vadd.f32 %v1016, %v2297
        %v2321 = vadd.f32 %v1017, %v2300
        %v2322 = vadd.f32 %v1018, %v2302
        %v2323 = vadd.f32 %v1019, %v2305
        %v2324 = vadd.f32 %v1020, %v2307
        %2325 = vst [vmem:[#allocation2] sm:$0xff] %v2309
        %2326 = vst [vmem:[#allocation2 + $0x8] sm:$0xff] %v2310
        %2327 = vst [vmem:[#allocation2 + $0x10] sm:$0xff] %v2311
        %2328 = vst [vmem:[#allocation2 + $0x18] sm:$0xff] %v2312
        %2329 = vst [vmem:[#allocation2 + $0x20] sm:$0xff] %v2313
        %2330 = vst [vmem:[#allocation2 + $0x28] sm:$0xff] %v2314
        %2331 = vst [vmem:[#allocation2 + $0x30] sm:$0xff] %v2315
        %2332 = vst [vmem:[#allocation2 + $0x38] sm:$0xff] %v2316
        %2333 = vst [vmem:[#allocation2 + $0x40] sm:$0xff] %v2317
        %2334 = vst [vmem:[#allocation2 + $0x48] sm:$0xff] %v2318
        %2335 = vst [vmem:[#allocation2 + $0x50] sm:$0xff] %v2319
        %2336 = vst [vmem:[#allocation2 + $0x58] sm:$0xff] %v2320
        %2337 = vst [vmem:[#allocation2 + $0x60] sm:$0xff] %v2321
        %2338 = vst [vmem:[#allocation2 + $0x68] sm:$0xff] %v2322
        %2339 = vst [vmem:[#allocation2 + $0x70] sm:$0xff] %v2323
        %2340 = vst [vmem:[#allocation2 + $0x78] sm:$0xff] %v2324
        %p2341 = scmp.eq.s32.totalorder %s23, 1
        // Predicated region
        $region97: #{discriminator_forward.10} parent=83 // pred_check
          %p2342 = pneg %p2341
        $region98: #{discriminator_forward.10} parent=83 // pred_check_branch
          %2344 = sbr.rel (%p2342) target = $region100
        $region99: #{discriminator_forward.10} parent=83 // pred_region
          %v2345 = vld [vmem:[#allocation2] sm:$0xff]
          %v2346 = vld [vmem:[#allocation2 + $0x8] sm:$0xff]
          %v2347 = vld [vmem:[#allocation2 + $0x10] sm:$0xff]
          %v2348 = vld [vmem:[#allocation2 + $0x18] sm:$0xff]
          %v2349 = vld [vmem:[#allocation2 + $0x20] sm:$0xff]
          %v2350 = vld [vmem:[#allocation2 + $0x28] sm:$0xff]
          %v2351 = vld [vmem:[#allocation2 + $0x30] sm:$0xff]
          %v2352 = vld [vmem:[#allocation2 + $0x38] sm:$0xff]
          %v2353 = vld [vmem:[#allocation2 + $0x40] sm:$0xff]
          %v2354 = vld [vmem:[#allocation2 + $0x48] sm:$0xff]
          %v2355 = vld [vmem:[#allocation2 + $0x50] sm:$0xff]
          %v2356 = vld [vmem:[#allocation2 + $0x58] sm:$0xff]
          %v2357 = vld [vmem:[#allocation2 + $0x60] sm:$0xff]
          %v2358 = vld [vmem:[#allocation2 + $0x68] sm:$0xff]
          %v2359 = vld [vmem:[#allocation2 + $0x70] sm:$0xff]
          %v2360 = vld [vmem:[#allocation2 + $0x78] sm:$0xff]
          %v2361 = vpack.c.bf16 %v2345, %v2345
          %v2362 = vpack.c.bf16 %v2346, %v2346
          %v2363 = vpack.c.bf16 %v2347, %v2347
          %v2364 = vpack.c.bf16 %v2348, %v2348
          %v2365 = vpack.c.bf16 %v2349, %v2349
          %v2366 = vpack.c.bf16 %v2350, %v2350
          %v2367 = vpack.c.bf16 %v2351, %v2351
          %v2368 = vpack.c.bf16 %v2352, %v2352
          %v2369 = vpack.c.bf16 %v2353, %v2353
          %v2370 = vpack.c.bf16 %v2354, %v2354
          %v2371 = vpack.c.bf16 %v2355, %v2355
          %v2372 = vpack.c.bf16 %v2356, %v2356
          %v2373 = vpack.c.bf16 %v2357, %v2357
          %v2374 = vpack.c.bf16 %v2358, %v2358
          %v2375 = vpack.c.bf16 %v2359, %v2359
          %v2376 = vpack.c.bf16 %v2360, %v2360
          %2377 = vst [vmem:[%s944] sm:$0xf] %v2361
          %2378 = vst [vmem:[%s944 + $0x4] sm:$0xf] %v2362
          %2379 = vst [vmem:[%s944 + $0x8] sm:$0xf] %v2363
          %2380 = vst [vmem:[%s944 + $0xc] sm:$0xf] %v2364
          %2381 = vst [vmem:[%s944 + $0x10] sm:$0xf] %v2365
          %2382 = vst [vmem:[%s944 + $0x14] sm:$0xf] %v2366
          %2383 = vst [vmem:[%s944 + $0x18] sm:$0xf] %v2367
          %2384 = vst [vmem:[%s944 + $0x1c] sm:$0xf] %v2368
          %2385 = vst [vmem:[%s944 + $0x20] sm:$0xf] %v2369
          %2386 = vst [vmem:[%s944 + $0x24] sm:$0xf] %v2370
          %2387 = vst [vmem:[%s944 + $0x28] sm:$0xf] %v2371
          %2388 = vst [vmem:[%s944 + $0x2c] sm:$0xf] %v2372
          %2389 = vst [vmem:[%s944 + $0x30] sm:$0xf] %v2373
          %2390 = vst [vmem:[%s944 + $0x34] sm:$0xf] %v2374
          %2391 = vst [vmem:[%s944 + $0x38] sm:$0xf] %v2375
          %2392 = vst [vmem:[%s944 + $0x3c] sm:$0xf] %v2376
          %v2393 = vadd.f32 %v2345, %v2346
          %v2394 = vadd.f32 %v2393, %v2347
          %v2395 = vadd.f32 %v2394, %v2348
          %v2396 = vadd.f32 %v2395, %v2349
          %v2397 = vadd.f32 %v2396, %v2350
          %v2398 = vadd.f32 %v2397, %v2351
          %v2399 = vadd.f32 %v2398, %v2352
          %v2400 = vadd.f32 %v2399, %v2353
          %v2401 = vadd.f32 %v2400, %v2354
          %v2402 = vadd.f32 %v2401, %v2355
          %v2403 = vadd.f32 %v2402, %v2356
          %v2404 = vadd.f32 %v2403, %v2357
          %v2405 = vadd.f32 %v2404, %v2358
          %v2406 = vadd.f32 %v2405, %v2359
          %v2407 = vadd.f32 %v2406, %v2360
          %v2408 = vrot.slane %v2407, 4
          %v2409 = vadd.f32 %v2407, %v2408
          %v2410 = vrot.slane %v2409, 2
          %v2411 = vadd.f32 %v2409, %v2410
          %v2412 = vrot.slane %v2411, 1
          %v2413 = vadd.f32 %v2411, %v2412
          %2414 = vst [vmem:[%s976] sm:$0x1] %v2413
          %v2415 = vmul.f32 %v2345, %v2345
          %v2416 = vmul.f32 %v2346, %v2346
          %v2417 = vmul.f32 %v2347, %v2347
          %v2418 = vmul.f32 %v2348, %v2348
          %v2419 = vmul.f32 %v2349, %v2349
          %v2420 = vmul.f32 %v2350, %v2350
          %v2421 = vmul.f32 %v2351, %v2351
          %v2422 = vmul.f32 %v2352, %v2352
          %v2423 = vmul.f32 %v2353, %v2353
          %v2424 = vmul.f32 %v2354, %v2354
          %v2425 = vmul.f32 %v2355, %v2355
          %v2426 = vmul.f32 %v2356, %v2356
          %v2427 = vmul.f32 %v2357, %v2357
          %v2428 = vmul.f32 %v2358, %v2358
          %v2429 = vmul.f32 %v2359, %v2359
          %v2430 = vmul.f32 %v2360, %v2360
          %v2431 = vadd.f32 %v2415, %v2416
          %v2432 = vadd.f32 %v2431, %v2417
          %v2433 = vadd.f32 %v2432, %v2418
          %v2434 = vadd.f32 %v2433, %v2419
          %v2435 = vadd.f32 %v2434, %v2420
          %v2436 = vadd.f32 %v2435, %v2421
          %v2437 = vadd.f32 %v2436, %v2422
          %v2438 = vadd.f32 %v2437, %v2423
          %v2439 = vadd.f32 %v2438, %v2424
          %v2440 = vadd.f32 %v2439, %v2425
          %v2441 = vadd.f32 %v2440, %v2426
          %v2442 = vadd.f32 %v2441, %v2427
          %v2443 = vadd.f32 %v2442, %v2428
          %v2444 = vadd.f32 %v2443, %v2429
          %v2445 = vadd.f32 %v2444, %v2430
          %v2446 = vrot.slane %v2445, 4
          %v2447 = vadd.f32 %v2445, %v2446
          %v2448 = vrot.slane %v2447, 2
          %v2449 = vadd.f32 %v2447, %v2448
          %v2450 = vrot.slane %v2449, 1
          %v2451 = vadd.f32 %v2449, %v2450
          %2452 = vst [vmem:[%s984] sm:$0x1] %v2451
        $region100: #{discriminator_forward.10} parent=83 // pred_fallthru
          _
        %s2453 = sand.u32 %s101, 1
        %s2454 = sand.u32 %s101, 1
        %s2455 = smul.addr %s2454, 64
        %s2456 = scalar_lea.vmem [#allocation5], %s2455
        %p2457 = scmp.lt.s32.totalorder %s21, 0
        %s2458 = scalar_select %p2457, %s21, 0
        %p2459 = scmp.lt.s32.totalorder %s22, 1
        %s2460 = scalar_select %p2459, %s22, 1
        %s2461 = smul.addr %s2458, 2
        %s2462 = sadd.s32 %s2460, %s2461
        %s2463 = smul.addr %s2462, 8
        %s2464 = scalar_lea.vmem %s3, %s2463
        %p2465 = scmp.lt.s32.totalorder %s21, 0
        %s2466 = scalar_select %p2465, %s21, 0
        %p2467 = scmp.lt.s32.totalorder %s22, 1
        %s2468 = scalar_select %p2467, %s22, 1
        %s2469 = smul.addr %s2466, 2
        %s2470 = sadd.s32 %s2468, %s2469
        %s2471 = smul.addr %s2470, 8
        %s2472 = scalar_lea.vmem %s4, %s2471
        // Predicated region
        $region101: #{discriminator_forward.10} parent=83 // pred_check
          %p2473 = pneg %p111
        $region102: #{discriminator_forward.10} parent=83 // pred_check_branch
          %2475 = sbr.rel (%p2473) target = $region104
        $region103: #{discriminator_forward.10} parent=83 // pred_region
          %s2476 = smul.u32 16, %s21
          %s2477 = smul.addr %s2476, 2
          %s2478 = sadd.s32 %s22, %s2477
          %s2479 = smul.addr %s2478, 4
          %s2480 = scalar_lea.vmem %s2, %s2479
          // Predicated region
          $region105: #{discriminator_forward.10} parent=103 // pred_check
            _
          $region106: #{discriminator_forward.10} parent=103 // pred_check_branch
            %2482 = sbr.rel (0) target = $region108
          $region107: #{discriminator_forward.10} parent=103 // pred_region
            // Predicated region
            $region109: #{discriminator_forward.10} parent=107 // pred_check
              _
            $region110: #{discriminator_forward.10} parent=107 // pred_check_branch
              %2484 = sbr.rel target = $region112
            $region111: #{discriminator_forward.10} parent=107 // pred_region
              // Predicated region
              $region124: #{discriminator_forward.10} parent=111 // pred_check
                _
              $region125: #{discriminator_forward.10} parent=111 // pred_check_branch
                %2530 = sbr.rel (0) target = $region127
              $region126: #{discriminator_forward.10} parent=111 // pred_region
                loop: start=0, step=1, limit=1
                $region128: #{discriminator_forward.10} parent=126 // loop_pre_header
                  _
                $region129: #{discriminator_forward.10} parent=126 // loop_header
                  %s2532 = sphi 0, %s2536
                  %p2533 = scmp.ge.s32.totalorder %s2532, 1
                  %s2537 = sphi %s2456, %s2456
                  %s2538 = sphi %s2480, %s2480
                $region130: #{discriminator_forward.10} parent=126 // loop_header_branch
                  %2535 = sbr.rel (%p2533) target = $region134
                $region131: #{discriminator_forward.10} parent=126 // loop_body
                  _
                $region132: #{discriminator_forward.10} parent=126 // loop_footer
                  %s2536 = sadd.s32 1, %s2532
                $region133: #{discriminator_forward.10} parent=126 // loop_footer_branch
                  %2531 = sbr.rel target = $region129
                $region134: #{discriminator_forward.10} parent=126 // loop_exit
                  _
                %s2540 = ssub.s32 16, 1
                loop: start=0, step=1, limit=1
                $region135: #{discriminator_forward.10} parent=126 // loop_pre_header
                  _
                $region136: #{discriminator_forward.10} parent=126 // loop_header
                  %s2542 = sphi 0, %s2546
                  %p2543 = scmp.ge.s32.totalorder %s2542, 1
                  %s2547 = sphi %s2456, %s2456
                  %s2548 = sphi %s2480, %s2480
                $region137: #{discriminator_forward.10} parent=126 // loop_header_branch
                  %2545 = sbr.rel (%p2543) target = $region141
                $region138: #{discriminator_forward.10} parent=126 // loop_body
                  %v2549 = vld [vmem:[%s2547] sm:%s2540]
                  %2550 = vst [vmem:[%s2548] sm:%s2540] %v2549
                  %v2551 = vld [vmem:[%s2547 + $0x4] sm:%s2540]
                  %2552 = vst [vmem:[%s2548 + $0x8] sm:%s2540] %v2551
                  %v2553 = vld [vmem:[%s2547 + $0x8] sm:%s2540]
                  %2554 = vst [vmem:[%s2548 + $0x10] sm:%s2540] %v2553
                  %v2555 = vld [vmem:[%s2547 + $0xc] sm:%s2540]
                  %2556 = vst [vmem:[%s2548 + $0x18] sm:%s2540] %v2555
                  %v2557 = vld [vmem:[%s2547 + $0x10] sm:%s2540]
                  %2558 = vst [vmem:[%s2548 + $0x20] sm:%s2540] %v2557
                  %v2559 = vld [vmem:[%s2547 + $0x14] sm:%s2540]
                  %2560 = vst [vmem:[%s2548 + $0x28] sm:%s2540] %v2559
                  %v2561 = vld [vmem:[%s2547 + $0x18] sm:%s2540]
                  %2562 = vst [vmem:[%s2548 + $0x30] sm:%s2540] %v2561
                  %v2563 = vld [vmem:[%s2547 + $0x1c] sm:%s2540]
                  %2564 = vst [vmem:[%s2548 + $0x38] sm:%s2540] %v2563
                  %v2565 = vld [vmem:[%s2547 + $0x20] sm:%s2540]
                  %2566 = vst [vmem:[%s2548 + $0x40] sm:%s2540] %v2565
                  %v2567 = vld [vmem:[%s2547 + $0x24] sm:%s2540]
                  %2568 = vst [vmem:[%s2548 + $0x48] sm:%s2540] %v2567
                  %v2569 = vld [vmem:[%s2547 + $0x28] sm:%s2540]
                  %2570 = vst [vmem:[%s2548 + $0x50] sm:%s2540] %v2569
                  %v2571 = vld [vmem:[%s2547 + $0x2c] sm:%s2540]
                  %2572 = vst [vmem:[%s2548 + $0x58] sm:%s2540] %v2571
                  %v2573 = vld [vmem:[%s2547 + $0x30] sm:%s2540]
                  %2574 = vst [vmem:[%s2548 + $0x60] sm:%s2540] %v2573
                  %v2575 = vld [vmem:[%s2547 + $0x34] sm:%s2540]
                  %2576 = vst [vmem:[%s2548 + $0x68] sm:%s2540] %v2575
                  %v2577 = vld [vmem:[%s2547 + $0x38] sm:%s2540]
                  %2578 = vst [vmem:[%s2548 + $0x70] sm:%s2540] %v2577
                  %v2579 = vld [vmem:[%s2547 + $0x3c] sm:%s2540]
                  %2580 = vst [vmem:[%s2548 + $0x78] sm:%s2540] %v2579
                $region139: #{discriminator_forward.10} parent=126 // loop_footer
                  %s2546 = sadd.s32 1, %s2542
                $region140: #{discriminator_forward.10} parent=126 // loop_footer_branch
                  %2541 = sbr.rel target = $region136
                $region141: #{discriminator_forward.10} parent=126 // loop_exit
                  _
              $region127: #{discriminator_forward.10} parent=111 // pred_fallthru
                _
            $region112: #{discriminator_forward.10} parent=107 // pred_fallthru
              _
            // Predicated region
            $region113: #{discriminator_forward.10} parent=107 // pred_check
              _
            $region114: #{discriminator_forward.10} parent=107 // pred_check_branch
              %2486 = sbr.rel (0) target = $region116
            $region115: #{discriminator_forward.10} parent=107 // pred_region
              %s2488 = ssub.s32 16, 1
              loop: start=0, step=1, limit=1
              $region117: #{discriminator_forward.10} parent=115 // loop_pre_header
                _
              $region118: #{discriminator_forward.10} parent=115 // loop_header
                %s2490 = sphi 0, %s2494
                %p2491 = scmp.ge.s32.totalorder %s2490, 1
                %s2495 = sphi %s2456, %s2456
                %s2496 = sphi %s2480, %s2480
              $region119: #{discriminator_forward.10} parent=115 // loop_header_branch
                %2493 = sbr.rel (%p2491) target = $region123
              $region120: #{discriminator_forward.10} parent=115 // loop_body
                %v2497 = vld [vmem:[%s2495] sm:%s2488]
                %2498 = vst [vmem:[%s2496] sm:%s2488] %v2497
                %v2499 = vld [vmem:[%s2495 + $0x4] sm:%s2488]
                %2500 = vst [vmem:[%s2496 + $0x8] sm:%s2488] %v2499
                %v2501 = vld [vmem:[%s2495 + $0x8] sm:%s2488]
                %2502 = vst [vmem:[%s2496 + $0x10] sm:%s2488] %v2501
                %v2503 = vld [vmem:[%s2495 + $0xc] sm:%s2488]
                %2504 = vst [vmem:[%s2496 + $0x18] sm:%s2488] %v2503
                %v2505 = vld [vmem:[%s2495 + $0x10] sm:%s2488]
                %2506 = vst [vmem:[%s2496 + $0x20] sm:%s2488] %v2505
                %v2507 = vld [vmem:[%s2495 + $0x14] sm:%s2488]
                %2508 = vst [vmem:[%s2496 + $0x28] sm:%s2488] %v2507
                %v2509 = vld [vmem:[%s2495 + $0x18] sm:%s2488]
                %2510 = vst [vmem:[%s2496 + $0x30] sm:%s2488] %v2509
                %v2511 = vld [vmem:[%s2495 + $0x1c] sm:%s2488]
                %2512 = vst [vmem:[%s2496 + $0x38] sm:%s2488] %v2511
                %v2513 = vld [vmem:[%s2495 + $0x20] sm:%s2488]
                %2514 = vst [vmem:[%s2496 + $0x40] sm:%s2488] %v2513
                %v2515 = vld [vmem:[%s2495 + $0x24] sm:%s2488]
                %2516 = vst [vmem:[%s2496 + $0x48] sm:%s2488] %v2515
                %v2517 = vld [vmem:[%s2495 + $0x28] sm:%s2488]
                %2518 = vst [vmem:[%s2496 + $0x50] sm:%s2488] %v2517
                %v2519 = vld [vmem:[%s2495 + $0x2c] sm:%s2488]
                %2520 = vst [vmem:[%s2496 + $0x58] sm:%s2488] %v2519
                %v2521 = vld [vmem:[%s2495 + $0x30] sm:%s2488]
                %2522 = vst [vmem:[%s2496 + $0x60] sm:%s2488] %v2521
                %v2523 = vld [vmem:[%s2495 + $0x34] sm:%s2488]
                %2524 = vst [vmem:[%s2496 + $0x68] sm:%s2488] %v2523
                %v2525 = vld [vmem:[%s2495 + $0x38] sm:%s2488]
                %2526 = vst [vmem:[%s2496 + $0x70] sm:%s2488] %v2525
                %v2527 = vld [vmem:[%s2495 + $0x3c] sm:%s2488]
                %2528 = vst [vmem:[%s2496 + $0x78] sm:%s2488] %v2527
              $region121: #{discriminator_forward.10} parent=115 // loop_footer
                %s2494 = sadd.s32 1, %s2490
              $region122: #{discriminator_forward.10} parent=115 // loop_footer_branch
                %2489 = sbr.rel target = $region118
              $region123: #{discriminator_forward.10} parent=115 // loop_exit
                _
            $region116: #{discriminator_forward.10} parent=107 // pred_fallthru
              _
          $region108: #{discriminator_forward.10} parent=103 // pred_fallthru
            _
          %2581 = vnop
        $region104: #{discriminator_forward.10} parent=83 // pred_fallthru
          _
        // Predicated region
        $region142: #{discriminator_forward.10} parent=83 // pred_check
          %p2582 = pneg %p139
        $region143: #{discriminator_forward.10} parent=83 // pred_check_branch
          %2584 = sbr.rel (%p2582) target = $region145
        $region144: #{discriminator_forward.10} parent=83 // pred_region
          _
        $region145: #{discriminator_forward.10} parent=83 // pred_fallthru
          _
        // Predicated region
        $region146: #{discriminator_forward.10} parent=83 // pred_check
          %p2585 = pneg %p167
        $region147: #{discriminator_forward.10} parent=83 // pred_check_branch
          %2587 = sbr.rel (%p2585) target = $region149
        $region148: #{discriminator_forward.10} parent=83 // pred_region
          _
        $region149: #{discriminator_forward.10} parent=83 // pred_fallthru
          _
      $region84: #{discriminator_forward.10} parent=5 // pred_fallthru
        _
      %p2588 = scmp.le.s32.totalorder 2, %s11
      // Predicated region
      $region150: #{discriminator_forward.10} parent=5 // pred_check
        %p2589 = pneg %p2588
      $region151: #{discriminator_forward.10} parent=5 // pred_check_branch
        %2591 = sbr.rel (%p2589) target = $region153
      $region152: #{discriminator_forward.10} parent=5 // pred_region
        %s2592 = ssub.s32 %s11, 2
        // Predicated region
        $region154: #{discriminator_forward.10} parent=152 // pred_check
          %p2593 = pneg %p117
        $region155: #{discriminator_forward.10} parent=152 // pred_check_branch
          %2595 = sbr.rel (%p2593) target = $region157
        $region156: #{discriminator_forward.10} parent=152 // pred_region
          %s2596 = sand.u32 %s102, 1
          %s2597 = sand.u32 %s102, 1
          %s2598 = smul.addr %s2597, 64
          %s2599 = scalar_lea.vmem [#allocation5], %s2598
        $region157: #{discriminator_forward.10} parent=152 // pred_fallthru
          _
        // Predicated region
        $region158: #{discriminator_forward.10} parent=152 // pred_check
          %p2600 = pneg %p145
        $region159: #{discriminator_forward.10} parent=152 // pred_check_branch
          %2602 = sbr.rel (%p2600) target = $region161
        $region160: #{discriminator_forward.10} parent=152 // pred_region
          %p2603 = scmp.lt.s32.totalorder %s24, 0
          %s2604 = scalar_select %p2603, %s24, 0
          %p2605 = scmp.lt.s32.totalorder %s25, 1
          %s2606 = scalar_select %p2605, %s25, 1
          %s2607 = smul.addr %s2604, 2
          %s2608 = sadd.s32 %s2606, %s2607
          %s2609 = smul.addr %s2608, 8
          %s2610 = scalar_lea.vmem %s3, %s2609
        $region161: #{discriminator_forward.10} parent=152 // pred_fallthru
          _
        // Predicated region
        $region162: #{discriminator_forward.10} parent=152 // pred_check
          %p2611 = pneg %p173
        $region163: #{discriminator_forward.10} parent=152 // pred_check_branch
          %2613 = sbr.rel (%p2611) target = $region165
        $region164: #{discriminator_forward.10} parent=152 // pred_region
          %p2614 = scmp.lt.s32.totalorder %s24, 0
          %s2615 = scalar_select %p2614, %s24, 0
          %p2616 = scmp.lt.s32.totalorder %s25, 1
          %s2617 = scalar_select %p2616, %s25, 1
          %s2618 = smul.addr %s2615, 2
          %s2619 = sadd.s32 %s2617, %s2618
          %s2620 = smul.addr %s2619, 8
          %s2621 = scalar_lea.vmem %s4, %s2620
        $region165: #{discriminator_forward.10} parent=152 // pred_fallthru
          _
      $region153: #{discriminator_forward.10} parent=5 // pred_fallthru
        _
    $region6: #{discriminator_forward.10} parent=1 // loop_footer
      %s15 = sadd.s32 1, %s11
    $region7: #{discriminator_forward.10} parent=1 // loop_footer_branch
      %10 = sbr.rel target = $region3
    $region8: #{discriminator_forward.10} parent=1 // loop_exit
      _

// kernel: discriminator_forward.13
$region0: #{discriminator_forward.13}
  #allocation0 [shape = 'u32[]', space=smem, size = 0x4, offset = 0x4, fixed_abs, tag = 'smem constant byte address 0x4 - core index']
  #allocation1 [shape = 'u32[72,128]{1,0:T(1,128)}', space=vmem, size = 0x9000, scoped, tag = 'internal scratch']
  %s0 = inlined_call_operand.vmem [shape: bf16[32,512], index: 0, kind: input, shape index: {}]
  %s1 = inlined_call_operand.vmem [shape: f32[1,512], index: 1, kind: input, shape index: {}]
  %s2 = inlined_call_operand.vmem [shape: f32[1,512], index: 2, kind: input, shape index: {}]
  %s3 = inlined_call_operand.vmem [shape: f32[32,512], index: 3, kind: input, shape index: {}]
  %s4 = inlined_call_operand.vmem [shape: f32[32,1], index: 4, kind: output, shape index: {}]
  %s5 = sld [smem:[#allocation0]]
  $region26: #{discriminator_forward.13} parent=0
    _
  %s7 = ssub.s32 1, %s5
  %s8 = scalar_select 0, %s7, %s5
  // Predicated region
  $region2: #{discriminator_forward.13} parent=0 // pred_check
    _
  $region3: #{discriminator_forward.13} parent=0 // pred_check_branch
    %10 = sbr.rel (0) target = $region5
  $region4: #{discriminator_forward.13} parent=0 // pred_region
    _
  $region5: #{discriminator_forward.13} parent=0 // pred_fallthru
    _
  // Predicated region
  $region6: #{discriminator_forward.13} parent=0 // pred_check
    _
  $region7: #{discriminator_forward.13} parent=0 // pred_check_branch
    %12 = sbr.rel (0) target = $region9
  $region8: #{discriminator_forward.13} parent=0 // pred_region
    _
  $region9: #{discriminator_forward.13} parent=0 // pred_fallthru
    _
  // Predicated region
  $region10: #{discriminator_forward.13} parent=0 // pred_check
    _
  $region11: #{discriminator_forward.13} parent=0 // pred_check_branch
    %14 = sbr.rel (0) target = $region13
  $region12: #{discriminator_forward.13} parent=0 // pred_region
    _
  $region13: #{discriminator_forward.13} parent=0 // pred_fallthru
    _
  // Predicated region
  $region14: #{discriminator_forward.13} parent=0 // pred_check
    _
  $region15: #{discriminator_forward.13} parent=0 // pred_check_branch
    %16 = sbr.rel (0) target = $region17
  $region16: #{discriminator_forward.13} parent=0 // pred_region
    _
  $region17: #{discriminator_forward.13} parent=0 // pred_fallthru
    _
  %v17 = vld [vmem:[%s0] sm:$0xff]
  %v18 = vld [vmem:[%s0 + $0x8] sm:$0xff]
  %v19 = vld [vmem:[%s0 + $0x10] sm:$0xff]
  %v20 = vld [vmem:[%s0 + $0x18] sm:$0xff]
  %v21 = vld [vmem:[%s0 + $0x20] sm:$0xff]
  %v22 = vld [vmem:[%s0 + $0x28] sm:$0xff]
  %v23 = vld [vmem:[%s0 + $0x30] sm:$0xff]
  %v24 = vld [vmem:[%s0 + $0x38] sm:$0xff]
  %v25 = vunpack.c.l.bf16 %v17
  %v26 = vunpack.c.h.bf16 %v17
  %v27 = vunpack.c.l.bf16 %v18
  %v28 = vunpack.c.h.bf16 %v18
  %v29 = vunpack.c.l.bf16 %v19
  %v30 = vunpack.c.h.bf16 %v19
  %v31 = vunpack.c.l.bf16 %v20
  %v32 = vunpack.c.h.bf16 %v20
  %v33 = vunpack.c.l.bf16 %v21
  %v34 = vunpack.c.h.bf16 %v21
  %v35 = vunpack.c.l.bf16 %v22
  %v36 = vunpack.c.h.bf16 %v22
  %v37 = vunpack.c.l.bf16 %v23
  %v38 = vunpack.c.h.bf16 %v23
  %v39 = vunpack.c.l.bf16 %v24
  %v40 = vunpack.c.h.bf16 %v24
  %v41 = vld [vmem:[%s1] sm:$0xf]
  %v43 = vperm.slane %v41, 0
  %v44 = vperm.slane %v41, 1
  %v45 = vperm.slane %v41, 2
  %v46 = vperm.slane %v41, 3
  %v51 = vmul.f32 %v25, %v43
  %v52 = vmul.f32 %v26, %v44
  %v53 = vmul.f32 %v27, %v45
  %v54 = vmul.f32 %v28, %v46
  %v55 = vmul.f32 %v29, %v43
  %v56 = vmul.f32 %v30, %v44
  %v57 = vmul.f32 %v31, %v45
  %v58 = vmul.f32 %v32, %v46
  %v59 = vmul.f32 %v33, %v43
  %v60 = vmul.f32 %v34, %v44
  %v61 = vmul.f32 %v35, %v45
  %v62 = vmul.f32 %v36, %v46
  %v63 = vmul.f32 %v37, %v43
  %v64 = vmul.f32 %v38, %v44
  %v65 = vmul.f32 %v39, %v45
  %v66 = vmul.f32 %v40, %v46
  %v67 = vld [vmem:[%s2] sm:$0xf]
  %v69 = vperm.slane %v67, 0
  %v70 = vperm.slane %v67, 1
  %v71 = vperm.slane %v67, 2
  %v72 = vperm.slane %v67, 3
  %v77 = vadd.f32 %v51, %v69
  %v78 = vadd.f32 %v52, %v70
  %v79 = vadd.f32 %v53, %v71
  %v80 = vadd.f32 %v54, %v72
  %v81 = vadd.f32 %v55, %v69
  %v82 = vadd.f32 %v56, %v70
  %v83 = vadd.f32 %v57, %v71
  %v84 = vadd.f32 %v58, %v72
  %v85 = vadd.f32 %v59, %v69
  %v86 = vadd.f32 %v60, %v70
  %v87 = vadd.f32 %v61, %v71
  %v88 = vadd.f32 %v62, %v72
  %v89 = vadd.f32 %v63, %v69
  %v90 = vadd.f32 %v64, %v70
  %v91 = vadd.f32 %v65, %v71
  %v92 = vadd.f32 %v66, %v72
  %vm93 = vcmp.ge.f32.partialorder %v77, 0.0
  %vm94 = vcmp.ge.f32.partialorder %v78, 0.0
  %vm95 = vcmp.ge.f32.partialorder %v79, 0.0
  %vm96 = vcmp.ge.f32.partialorder %v80, 0.0
  %vm97 = vcmp.ge.f32.partialorder %v81, 0.0
  %vm98 = vcmp.ge.f32.partialorder %v82, 0.0
  %vm99 = vcmp.ge.f32.partialorder %v83, 0.0
  %vm100 = vcmp.ge.f32.partialorder %v84, 0.0
  %vm101 = vcmp.ge.f32.partialorder %v85, 0.0
  %vm102 = vcmp.ge.f32.partialorder %v86, 0.0
  %vm103 = vcmp.ge.f32.partialorder %v87, 0.0
  %vm104 = vcmp.ge.f32.partialorder %v88, 0.0
  %vm105 = vcmp.ge.f32.partialorder %v89, 0.0
  %vm106 = vcmp.ge.f32.partialorder %v90, 0.0
  %vm107 = vcmp.ge.f32.partialorder %v91, 0.0
  %vm108 = vcmp.ge.f32.partialorder %v92, 0.0
  %v109 = vmul.f32 %v77, 0.2
  %v110 = vmul.f32 %v78, 0.2
  %v111 = vmul.f32 %v79, 0.2
  %v112 = vmul.f32 %v80, 0.2
  %v113 = vmul.f32 %v81, 0.2
  %v114 = vmul.f32 %v82, 0.2
  %v115 = vmul.f32 %v83, 0.2
  %v116 = vmul.f32 %v84, 0.2
  %v117 = vmul.f32 %v85, 0.2
  %v118 = vmul.f32 %v86, 0.2
  %v119 = vmul.f32 %v87, 0.2
  %v120 = vmul.f32 %v88, 0.2
  %v121 = vmul.f32 %v89, 0.2
  %v122 = vmul.f32 %v90, 0.2
  %v123 = vmul.f32 %v91, 0.2
  %v124 = vmul.f32 %v92, 0.2
  %v125 = vsel %vm93, %v77, %v109
  %v126 = vsel %vm94, %v78, %v110
  %v127 = vsel %vm95, %v79, %v111
  %v128 = vsel %vm96, %v80, %v112
  %v129 = vsel %vm97, %v81, %v113
  %v130 = vsel %vm98, %v82, %v114
  %v131 = vsel %vm99, %v83, %v115
  %v132 = vsel %vm100, %v84, %v116
  %v133 = vsel %vm101, %v85, %v117
  %v134 = vsel %vm102, %v86, %v118
  %v135 = vsel %vm103, %v87, %v119
  %v136 = vsel %vm104, %v88, %v120
  %v137 = vsel %vm105, %v89, %v121
  %v138 = vsel %vm106, %v90, %v122
  %v139 = vsel %vm107, %v91, %v123
  %v140 = vsel %vm108, %v92, %v124
  %v141 = vld [vmem:[%s3] sm:$0xff]
  %v142 = vld [vmem:[%s3 + $0x8] sm:$0xff]
  %v143 = vld [vmem:[%s3 + $0x10] sm:$0xff]
  %v144 = vld [vmem:[%s3 + $0x18] sm:$0xff]
  %v145 = vld [vmem:[%s3 + $0x20] sm:$0xff]
  %v146 = vld [vmem:[%s3 + $0x28] sm:$0xff]
  %v147 = vld [vmem:[%s3 + $0x30] sm:$0xff]
  %v148 = vld [vmem:[%s3 + $0x38] sm:$0xff]
  %v149 = vld [vmem:[%s3 + $0x40] sm:$0xff]
  %v150 = vld [vmem:[%s3 + $0x48] sm:$0xff]
  %v151 = vld [vmem:[%s3 + $0x50] sm:$0xff]
  %v152 = vld [vmem:[%s3 + $0x58] sm:$0xff]
  %v153 = vld [vmem:[%s3 + $0x60] sm:$0xff]
  %v154 = vld [vmem:[%s3 + $0x68] sm:$0xff]
  %v155 = vld [vmem:[%s3 + $0x70] sm:$0xff]
  %v156 = vld [vmem:[%s3 + $0x78] sm:$0xff]
  %v157 = vmul.f32 %v125, %v141
  %v158 = vmul.f32 %v126, %v142
  %v159 = vmul.f32 %v127, %v143
  %v160 = vmul.f32 %v128, %v144
  %v161 = vmul.f32 %v129, %v145
  %v162 = vmul.f32 %v130, %v146
  %v163 = vmul.f32 %v131, %v147
  %v164 = vmul.f32 %v132, %v148
  %v165 = vmul.f32 %v133, %v149
  %v166 = vmul.f32 %v134, %v150
  %v167 = vmul.f32 %v135, %v151
  %v168 = vmul.f32 %v136, %v152
  %v169 = vmul.f32 %v137, %v153
  %v170 = vmul.f32 %v138, %v154
  %v171 = vmul.f32 %v139, %v155
  %v172 = vmul.f32 %v140, %v156
  %v173 = vadd.f32 %v157, %v158
  %v174 = vadd.f32 %v173, %v159
  %v175 = vadd.f32 %v174, %v160
  %176 = vadd.xlane.f32.xlu0 %v175
  %v177 = vpop.xlane.xlu0 %176
  %v178 = vadd.f32 %v161, %v162
  %v179 = vadd.f32 %v178, %v163
  %v180 = vadd.f32 %v179, %v164
  %181 = vadd.xlane.f32.xlu0 %v180
  %v182 = vpop.xlane.xlu0 %181
  %v183 = vadd.f32 %v165, %v166
  %v184 = vadd.f32 %v183, %v167
  %v185 = vadd.f32 %v184, %v168
  %186 = vadd.xlane.f32.xlu0 %v185
  %v187 = vpop.xlane.xlu0 %186
  %v188 = vadd.f32 %v169, %v170
  %v189 = vadd.f32 %v188, %v171
  %v190 = vadd.f32 %v189, %v172
  %191 = vadd.xlane.f32.xlu0 %v190
  %v192 = vpop.xlane.xlu0 %191
  %vm193 = vcmask 7168
  %194 = vst.msk [vmem:[%s4] sm:$0xff] %vm193, %v177
  %195 = vst.msk [vmem:[%s4 + $0x8] sm:$0xff] %vm193, %v182
  %196 = vst.msk [vmem:[%s4 + $0x10] sm:$0xff] %vm193, %v187
  %197 = vst.msk [vmem:[%s4 + $0x18] sm:$0xff] %vm193, %v192
  // Predicated region
  $region18: #{discriminator_forward.13} parent=0 // pred_check
    _
  $region19: #{discriminator_forward.13} parent=0 // pred_check_branch
    %199 = sbr.rel (0) target = $region21
  $region20: #{discriminator_forward.13} parent=0 // pred_region
    _
  $region21: #{discriminator_forward.13} parent=0 // pred_fallthru
    _
  // Predicated region
  $region22: #{discriminator_forward.13} parent=0 // pred_check
    _
  $region23: #{discriminator_forward.13} parent=0 // pred_check_branch
    %201 = sbr.rel (0) target = $region25
  $region24: #{discriminator_forward.13} parent=0 // pred_region
    _
  $region25: #{discriminator_forward.13} parent=0 // pred_fallthru
    _

// kernel: discriminator_forward.12
$region0: #{discriminator_forward.12}
  #allocation0 [shape = 'u32[]', space=smem, size = 0x4, offset = 0x4, fixed_abs, tag = 'smem constant byte address 0x4 - core index']
  #allocation1 [shape = 'u32[72,128]{1,0:T(1,128)}', space=vmem, size = 0x9000, scoped, tag = 'internal scratch']
  #allocation2 [shape = 'f32[32,256]{1,0:T(8,128)}', space=vmem, size = 0x8000, scoped, tag = 'scratch operand']
  %s0 = inlined_call_operand.vmem [shape: bf16[32,4096], index: 0, kind: input, shape index: {}]
  %s1 = inlined_call_operand.vmem [shape: bf16[4096,512], index: 1, kind: input, shape index: {}]
  %s2 = inlined_call_operand.vmem [shape: bf16[32,512], index: 2, kind: output, shape index: {0}]
  %s3 = inlined_call_operand.vmem [shape: f32[8,512], index: 3, kind: output, shape index: {1}]
  %s4 = inlined_call_operand.vmem [shape: f32[8,512], index: 4, kind: output, shape index: {2}]
  %5 = xla_tuple %s2, %s3, %s4
  %s6 = sld [smem:[#allocation0]]
  $region160: #{discriminator_forward.12} parent=0
    _
  %s8 = ssub.s32 1, %s6
  %s9 = scalar_select 0, %s8, %s6
  $region1: #{discriminator_forward.12} parent=0
    #allocation3 [shape = 'u8[131072]{0}', space=vmem, size = 0x20000, scoped, tag = 'input window, operand 0']
    #allocation4 [shape = 'u8[1048576]{0}', space=vmem, size = 0x100000, scoped, tag = 'input window, operand 1']
    #allocation5 [shape = 'u8[32768]{0}', space=vmem, size = 0x8000, scoped, tag = 'output window, operand 0']
    loop: start=0, step=1, limit=10
    $region2: #{discriminator_forward.12} parent=1 // loop_pre_header
      _
    $region3: #{discriminator_forward.12} parent=1 // loop_header
      %s11 = sphi 0, %s15
      %p12 = scmp.ge.s32.totalorder %s11, 10
      %s18 = sphi 0, %s37
      %s19 = sphi 0, %s33
      %s20 = sphi 0, %s29
      %s21 = sphi 0, %s18
      %s22 = sphi 0, %s19
      %s23 = sphi 0, %s20
      %s24 = sphi 0, %s21
      %s25 = sphi 0, %s22
      %s26 = sphi 0, %s23
      %s42 = sphi 0, %s44
      %s45 = sphi 0, %s42
      %s46 = sphi 0, %s45
      %s62 = sphi 0, %s46
      %s70 = sphi 0, %s72
      %s73 = sphi 0, %s70
      %s74 = sphi 0, %s73
      %s90 = sphi 0, %s74
      %s98 = sphi 0, %s100
      %s101 = sphi 0, %s98
      %s102 = sphi 0, %s101
      %s118 = sphi 0, %s102
      %s126 = sphi 0, %s128
      %s129 = sphi 0, %s126
      %s130 = sphi 0, %s129
      %s146 = sphi 0, %s130
      %s154 = sphi 0, %s156
      %s157 = sphi 0, %s154
      %s158 = sphi 0, %s157
      %s174 = sphi 0, %s158
    $region4: #{discriminator_forward.12} parent=1 // loop_header_branch
      %14 = sbr.rel (%p12) target = $region8
    $region5: #{discriminator_forward.12} parent=1 // loop_body
      %s16 = ssub.s32 %s11, 1
      %s17 = ssub.s32 %s11, 2
      %s27 = sadd.s32 1, %s20
      %p28 = scmp.ge.s32.totalorder %s27, 4
      %s29 = scalar_select %p28, 0, %s27
      %s30 = sadd.s32 1, %s19
      %s31 = scalar_select %p28, %s30, %s19
      %p32 = scmp.ge.s32.totalorder %s31, 2
      %s33 = scalar_select %p32, 0, %s31
      %s34 = sadd.s32 1, %s18
      %s35 = scalar_select %p32, %s34, %s18
      %p36 = scmp.ge.s32.totalorder %s35, 1
      %s37 = scalar_select %p36, 0, %s35
      %s38 = ssub.s32 %s18, %s37
      %s39 = ssub.s32 %s20, %s29
      %s40 = sor.u32 %s38, %s39
      %p41 = scmp.eq.s32.totalorder %s40, 0
      %s43 = sadd.s32 %s42, 1
      %s44 = scalar_select %p41, %s42, %s43
      %p47 = pneg %p41
      %p48 = scmp.eq.s32.totalorder %s11, 7
      %p49 = por %p47, %p48
      %p50 = scmp.ne.s32.totalorder %s42, %s45
      %p51 = scmp.eq.s32.totalorder %s11, 0
      %p52 = por %p50, %p51
      %p53 = scmp.ne.s32.totalorder %s42, %s45
      %p54 = scmp.eq.s32.totalorder %s16, 7
      %p55 = por %p53, %p54
      %p56 = scmp.ne.s32.totalorder %s45, %s46
      %p57 = scmp.eq.s32.totalorder %s16, 0
      %p58 = por %p56, %p57
      %p59 = scmp.ne.s32.totalorder %s45, %s46
      %p60 = scmp.eq.s32.totalorder %s17, 7
      %p61 = por %p59, %p60
      %p63 = scmp.ne.s32.totalorder %s46, %s62
      %p64 = scmp.eq.s32.totalorder %s17, 0
      %p65 = por %p63, %p64
      %s66 = ssub.s32 %s20, %s29
      %s67 = ssub.s32 %s19, %s33
      %s68 = sor.u32 %s66, %s67
      %p69 = scmp.eq.s32.totalorder %s68, 0
      %s71 = sadd.s32 %s70, 1
      %s72 = scalar_select %p69, %s70, %s71
      %p75 = pneg %p69
      %p76 = scmp.eq.s32.totalorder %s11, 7
      %p77 = por %p75, %p76
      %p78 = scmp.ne.s32.totalorder %s70, %s73
      %p79 = scmp.eq.s32.totalorder %s11, 0
      %p80 = por %p78, %p79
      %p81 = scmp.ne.s32.totalorder %s70, %s73
      %p82 = scmp.eq.s32.totalorder %s16, 7
      %p83 = por %p81, %p82
      %p84 = scmp.ne.s32.totalorder %s73, %s74
      %p85 = scmp.eq.s32.totalorder %s16, 0
      %p86 = por %p84, %p85
      %p87 = scmp.ne.s32.totalorder %s73, %s74
      %p88 = scmp.eq.s32.totalorder %s17, 7
      %p89 = por %p87, %p88
      %p91 = scmp.ne.s32.totalorder %s74, %s90
      %p92 = scmp.eq.s32.totalorder %s17, 0
      %p93 = por %p91, %p92
      %s94 = ssub.s32 %s18, %s37
      %s95 = ssub.s32 %s19, %s33
      %s96 = sor.u32 %s94, %s95
      %p97 = scmp.eq.s32.totalorder %s96, 0
      %s99 = sadd.s32 %s98, 1
      %s100 = scalar_select %p97, %s98, %s99
      %p103 = pneg %p97
      %p104 = scmp.eq.s32.totalorder %s11, 7
      %p105 = por %p103, %p104
      %p106 = scmp.ne.s32.totalorder %s98, %s101
      %p107 = scmp.eq.s32.totalorder %s11, 0
      %p108 = por %p106, %p107
      %p109 = scmp.ne.s32.totalorder %s98, %s101
      %p110 = scmp.eq.s32.totalorder %s16, 7
      %p111 = por %p109, %p110
      %p112 = scmp.ne.s32.totalorder %s101, %s102
      %p113 = scmp.eq.s32.totalorder %s16, 0
      %p114 = por %p112, %p113
      %p115 = scmp.ne.s32.totalorder %s101, %s102
      %p116 = scmp.eq.s32.totalorder %s17, 7
      %p117 = por %p115, %p116
      %p119 = scmp.ne.s32.totalorder %s102, %s118
      %p120 = scmp.eq.s32.totalorder %s17, 0
      %p121 = por %p119, %p120
      %s122 = ssub.s32 %s18, %s37
      %s123 = ssub.s32 %s19, %s33
      %s124 = sor.u32 %s122, %s123
      %p125 = scmp.eq.s32.totalorder %s124, 0
      %s127 = sadd.s32 %s126, 1
      %s128 = scalar_select %p125, %s126, %s127
      %p131 = pneg %p125
      %p132 = scmp.eq.s32.totalorder %s11, 7
      %p133 = por %p131, %p132
      %p134 = scmp.ne.s32.totalorder %s126, %s129
      %p135 = scmp.eq.s32.totalorder %s11, 0
      %p136 = por %p134, %p135
      %p137 = scmp.ne.s32.totalorder %s126, %s129
      %p138 = scmp.eq.s32.totalorder %s16, 7
      %p139 = por %p137, %p138
      %p140 = scmp.ne.s32.totalorder %s129, %s130
      %p141 = scmp.eq.s32.totalorder %s16, 0
      %p142 = por %p140, %p141
      %p143 = scmp.ne.s32.totalorder %s129, %s130
      %p144 = scmp.eq.s32.totalorder %s17, 7
      %p145 = por %p143, %p144
      %p147 = scmp.ne.s32.totalorder %s130, %s146
      %p148 = scmp.eq.s32.totalorder %s17, 0
      %p149 = por %p147, %p148
      %s150 = ssub.s32 %s18, %s37
      %s151 = ssub.s32 %s19, %s33
      %s152 = sor.u32 %s150, %s151
      %p153 = scmp.eq.s32.totalorder %s152, 0
      %s155 = sadd.s32 %s154, 1
      %s156 = scalar_select %p153, %s154, %s155
      %p159 = pneg %p153
      %p160 = scmp.eq.s32.totalorder %s11, 7
      %p161 = por %p159, %p160
      %p162 = scmp.ne.s32.totalorder %s154, %s157
      %p163 = scmp.eq.s32.totalorder %s11, 0
      %p164 = por %p162, %p163
      %p165 = scmp.ne.s32.totalorder %s154, %s157
      %p166 = scmp.eq.s32.totalorder %s16, 7
      %p167 = por %p165, %p166
      %p168 = scmp.ne.s32.totalorder %s157, %s158
      %p169 = scmp.eq.s32.totalorder %s16, 0
      %p170 = por %p168, %p169
      %p171 = scmp.ne.s32.totalorder %s157, %s158
      %p172 = scmp.eq.s32.totalorder %s17, 7
      %p173 = por %p171, %p172
      %p175 = scmp.ne.s32.totalorder %s158, %s174
      %p176 = scmp.eq.s32.totalorder %s17, 0
      %p177 = por %p175, %p176
      %p178 = scmp.le.s32.totalorder 1, %s11
      %p179 = scmp.lt.s32.totalorder %s11, 9
      %p180 = pnand %p178, %p179
      %p181 = pneg %p180
      // Predicated region
      $region9: #{discriminator_forward.12} parent=5 // pred_check
        _
      $region10: #{discriminator_forward.12} parent=5 // pred_check_branch
        %183 = sbr.rel (%p180) target = $region12
      $region11: #{discriminator_forward.12} parent=5 // pred_region
        %s184 = ssub.s32 %s11, 1
      $region12: #{discriminator_forward.12} parent=5 // pred_fallthru
        _
      %p185 = scmp.lt.s32.totalorder %s11, 8
      // Predicated region
      $region13: #{discriminator_forward.12} parent=5 // pred_check
        %p186 = pneg %p185
      $region14: #{discriminator_forward.12} parent=5 // pred_check_branch
        %188 = sbr.rel (%p186) target = $region16
      $region15: #{discriminator_forward.12} parent=5 // pred_region
        // Predicated region
        $region17: #{discriminator_forward.12} parent=15 // pred_check
          %p189 = pneg %p52
        $region18: #{discriminator_forward.12} parent=15 // pred_check_branch
          %191 = sbr.rel (%p189) target = $region20
        $region19: #{discriminator_forward.12} parent=15 // pred_region
          %s192 = sand.u32 %s42, 1
          %s193 = sand.u32 %s42, 1
          %s194 = smul.addr %s193, 128
          %s195 = scalar_lea.vmem [#allocation3], %s194
          %s196 = smul.u32 4, %s18
          %s197 = smul.u32 8, %s20
          %s198 = smul.addr %s196, 32
          %s199 = sadd.s32 %s197, %s198
          %s200 = smul.addr %s199, 4
          %s201 = scalar_lea.vmem %s0, %s200
          // Predicated region
          $region21: #{discriminator_forward.12} parent=19 // pred_check
            _
          $region22: #{discriminator_forward.12} parent=19 // pred_check_branch
            %203 = sbr.rel (0) target = $region24
          $region23: #{discriminator_forward.12} parent=19 // pred_region
            // Predicated region
            $region25: #{discriminator_forward.12} parent=23 // pred_check
              _
            $region26: #{discriminator_forward.12} parent=23 // pred_check_branch
              %205 = sbr.rel (0) target = $region28
            $region27: #{discriminator_forward.12} parent=23 // pred_region
              loop: start=0, step=1, limit=1
              $region29: #{discriminator_forward.12} parent=27 // loop_pre_header
                _
              $region30: #{discriminator_forward.12} parent=27 // loop_header
                %s207 = sphi 0, %s211
                %p208 = scmp.ge.s32.totalorder %s207, 1
                %s212 = sphi %s201, %s201
                %s213 = sphi %s195, %s195
              $region31: #{discriminator_forward.12} parent=27 // loop_header_branch
                %210 = sbr.rel (%p208) target = $region35
              $region32: #{discriminator_forward.12} parent=27 // loop_body
                %v214 = vld [vmem:[%s212] sm:$0xff]
                %215 = vst [vmem:[%s213] sm:$0xff] %v214
                %v216 = vld [vmem:[%s212 + $0x8] sm:$0xff]
                %217 = vst [vmem:[%s213 + $0x8] sm:$0xff] %v216
                %v218 = vld [vmem:[%s212 + $0x10] sm:$0xff]
                %219 = vst [vmem:[%s213 + $0x10] sm:$0xff] %v218
                %v220 = vld [vmem:[%s212 + $0x18] sm:$0xff]
                %221 = vst [vmem:[%s213 + $0x18] sm:$0xff] %v220
                %v222 = vld [vmem:[%s212 + $0x80] sm:$0xff]
                %223 = vst [vmem:[%s213 + $0x20] sm:$0xff] %v222
                %v224 = vld [vmem:[%s212 + $0x88] sm:$0xff]
                %225 = vst [vmem:[%s213 + $0x28] sm:$0xff] %v224
                %v226 = vld [vmem:[%s212 + $0x90] sm:$0xff]
                %227 = vst [vmem:[%s213 + $0x30] sm:$0xff] %v226
                %v228 = vld [vmem:[%s212 + $0x98] sm:$0xff]
                %229 = vst [vmem:[%s213 + $0x38] sm:$0xff] %v228
                %v230 = vld [vmem:[%s212 + $0x100] sm:$0xff]
                %231 = vst [vmem:[%s213 + $0x40] sm:$0xff] %v230
                %v232 = vld [vmem:[%s212 + $0x108] sm:$0xff]
                %233 = vst [vmem:[%s213 + $0x48] sm:$0xff] %v232
                %v234 = vld [vmem:[%s212 + $0x110] sm:$0xff]
                %235 = vst [vmem:[%s213 + $0x50] sm:$0xff] %v234
                %v236 = vld [vmem:[%s212 + $0x118] sm:$0xff]
                %237 = vst [vmem:[%s213 + $0x58] sm:$0xff] %v236
                %v238 = vld [vmem:[%s212 + $0x180] sm:$0xff]
                %239 = vst [vmem:[%s213 + $0x60] sm:$0xff] %v238
                %v240 = vld [vmem:[%s212 + $0x188] sm:$0xff]
                %241 = vst [vmem:[%s213 + $0x68] sm:$0xff] %v240
                %v242 = vld [vmem:[%s212 + $0x190] sm:$0xff]
                %243 = vst [vmem:[%s213 + $0x70] sm:$0xff] %v242
                %v244 = vld [vmem:[%s212 + $0x198] sm:$0xff]
                %245 = vst [vmem:[%s213 + $0x78] sm:$0xff] %v244
              $region33: #{discriminator_forward.12} parent=27 // loop_footer
                %s211 = sadd.s32 1, %s207
              $region34: #{discriminator_forward.12} parent=27 // loop_footer_branch
                %206 = sbr.rel target = $region30
              $region35: #{discriminator_forward.12} parent=27 // loop_exit
                _
            $region28: #{discriminator_forward.12} parent=23 // pred_fallthru
              _
            // Predicated region
            $region36: #{discriminator_forward.12} parent=23 // pred_check
              _
            $region37: #{discriminator_forward.12} parent=23 // pred_check_branch
              %247 = sbr.rel target = $region39
            $region38: #{discriminator_forward.12} parent=23 // pred_region
              _
            $region39: #{discriminator_forward.12} parent=23 // pred_fallthru
              _
          $region24: #{discriminator_forward.12} parent=19 // pred_fallthru
            _
          %248 = vnop
        $region20: #{discriminator_forward.12} parent=15 // pred_fallthru
          _
        // Predicated region
        $region40: #{discriminator_forward.12} parent=15 // pred_check
          %p249 = pneg %p80
        $region41: #{discriminator_forward.12} parent=15 // pred_check_branch
          %251 = sbr.rel (%p249) target = $region43
        $region42: #{discriminator_forward.12} parent=15 // pred_region
          %s252 = sand.u32 %s70, 1
          %s253 = sand.u32 %s70, 1
          %s254 = smul.addr %s253, 1024
          %s255 = scalar_lea.vmem [#allocation4], %s254
          %s256 = smul.u32 128, %s20
          %s257 = smul.u32 2, %s19
          %s258 = smul.addr %s256, 4
          %s259 = sadd.s32 %s257, %s258
          %s260 = smul.addr %s259, 4
          %s261 = scalar_lea.vmem %s1, %s260
          // Predicated region
          $region44: #{discriminator_forward.12} parent=42 // pred_check
            _
          $region45: #{discriminator_forward.12} parent=42 // pred_check_branch
            %263 = sbr.rel (0) target = $region47
          $region46: #{discriminator_forward.12} parent=42 // pred_region
            // Predicated region
            $region48: #{discriminator_forward.12} parent=46 // pred_check
              _
            $region49: #{discriminator_forward.12} parent=46 // pred_check_branch
              %265 = sbr.rel (0) target = $region51
            $region50: #{discriminator_forward.12} parent=46 // pred_region
              // Predicated region
              $region63: #{discriminator_forward.12} parent=50 // pred_check
                _
              $region64: #{discriminator_forward.12} parent=50 // pred_check_branch
                %535 = sbr.rel (0) target = $region66
              $region65: #{discriminator_forward.12} parent=50 // pred_region
                loop: start=0, step=1, limit=1
                $region67: #{discriminator_forward.12} parent=65 // loop_pre_header
                  _
                $region68: #{discriminator_forward.12} parent=65 // loop_header
                  %s537 = sphi 0, %s541
                  %p538 = scmp.ge.s32.totalorder %s537, 1
                  %s542 = sphi %s261, %s261
                  %s543 = sphi %s255, %s255
                $region69: #{discriminator_forward.12} parent=65 // loop_header_branch
                  %540 = sbr.rel (%p538) target = $region73
                $region70: #{discriminator_forward.12} parent=65 // loop_body
                  %v544 = vld [vmem:[%s542] sm:$0xff]
                  %545 = vst [vmem:[%s543] sm:$0xff] %v544
                  %v546 = vld [vmem:[%s542 + $0x10] sm:$0xff]
                  %547 = vst [vmem:[%s543 + $0x8] sm:$0xff] %v546
                  %v548 = vld [vmem:[%s542 + $0x20] sm:$0xff]
                  %549 = vst [vmem:[%s543 + $0x10] sm:$0xff] %v548
                  %v550 = vld [vmem:[%s542 + $0x30] sm:$0xff]
                  %551 = vst [vmem:[%s543 + $0x18] sm:$0xff] %v550
                  %v552 = vld [vmem:[%s542 + $0x40] sm:$0xff]
                  %553 = vst [vmem:[%s543 + $0x20] sm:$0xff] %v552
                  %v554 = vld [vmem:[%s542 + $0x50] sm:$0xff]
                  %555 = vst [vmem:[%s543 + $0x28] sm:$0xff] %v554
                  %v556 = vld [vmem:[%s542 + $0x60] sm:$0xff]
                  %557 = vst [vmem:[%s543 + $0x30] sm:$0xff] %v556
                  %v558 = vld [vmem:[%s542 + $0x70] sm:$0xff]
                  %559 = vst [vmem:[%s543 + $0x38] sm:$0xff] %v558
                  %v560 = vld [vmem:[%s542 + $0x80] sm:$0xff]
                  %561 = vst [vmem:[%s543 + $0x40] sm:$0xff] %v560
                  %v562 = vld [vmem:[%s542 + $0x90] sm:$0xff]
                  %563 = vst [vmem:[%s543 + $0x48] sm:$0xff] %v562
                  %v564 = vld [vmem:[%s542 + $0xa0] sm:$0xff]
                  %565 = vst [vmem:[%s543 + $0x50] sm:$0xff] %v564
                  %v566 = vld [vmem:[%s542 + $0xb0] sm:$0xff]
                  %567 = vst [vmem:[%s543 + $0x58] sm:$0xff] %v566
                  %v568 = vld [vmem:[%s542 + $0xc0] sm:$0xff]
                  %569 = vst [vmem:[%s543 + $0x60] sm:$0xff] %v568
                  %v570 = vld [vmem:[%s542 + $0xd0] sm:$0xff]
                  %571 = vst [vmem:[%s543 + $0x68] sm:$0xff] %v570
                  %v572 = vld [vmem:[%s542 + $0xe0] sm:$0xff]
                  %573 = vst [vmem:[%s543 + $0x70] sm:$0xff] %v572
                  %v574 = vld [vmem:[%s542 + $0xf0] sm:$0xff]
                  %575 = vst [vmem:[%s543 + $0x78] sm:$0xff] %v574
                  %v576 = vld [vmem:[%s542 + $0x100] sm:$0xff]
                  %577 = vst [vmem:[%s543 + $0x80] sm:$0xff] %v576
                  %v578 = vld [vmem:[%s542 + $0x110] sm:$0xff]
                  %579 = vst [vmem:[%s543 + $0x88] sm:$0xff] %v578
                  %v580 = vld [vmem:[%s542 + $0x120] sm:$0xff]
                  %581 = vst [vmem:[%s543 + $0x90] sm:$0xff] %v580
                  %v582 = vld [vmem:[%s542 + $0x130] sm:$0xff]
                  %583 = vst [vmem:[%s543 + $0x98] sm:$0xff] %v582
                  %v584 = vld [vmem:[%s542 + $0x140] sm:$0xff]
                  %585 = vst [vmem:[%s543 + $0xa0] sm:$0xff] %v584
                  %v586 = vld [vmem:[%s542 + $0x150] sm:$0xff]
                  %587 = vst [vmem:[%s543 + $0xa8] sm:$0xff] %v586
                  %v588 = vld [vmem:[%s542 + $0x160] sm:$0xff]
                  %589 = vst [vmem:[%s543 + $0xb0] sm:$0xff] %v588
                  %v590 = vld [vmem:[%s542 + $0x170] sm:$0xff]
                  %591 = vst [vmem:[%s543 + $0xb8] sm:$0xff] %v590
                  %v592 = vld [vmem:[%s542 + $0x180] sm:$0xff]
                  %593 = vst [vmem:[%s543 + $0xc0] sm:$0xff] %v592
                  %v594 = vld [vmem:[%s542 + $0x190] sm:$0xff]
                  %595 = vst [vmem:[%s543 + $0xc8] sm:$0xff] %v594
                  %v596 = vld [vmem:[%s542 + $0x1a0] sm:$0xff]
                  %597 = vst [vmem:[%s543 + $0xd0] sm:$0xff] %v596
                  %v598 = vld [vmem:[%s542 + $0x1b0] sm:$0xff]
                  %599 = vst [vmem:[%s543 + $0xd8] sm:$0xff] %v598
                  %v600 = vld [vmem:[%s542 + $0x1c0] sm:$0xff]
                  %601 = vst [vmem:[%s543 + $0xe0] sm:$0xff] %v600
                  %v602 = vld [vmem:[%s542 + $0x1d0] sm:$0xff]
                  %603 = vst [vmem:[%s543 + $0xe8] sm:$0xff] %v602
                  %v604 = vld [vmem:[%s542 + $0x1e0] sm:$0xff]
                  %605 = vst [vmem:[%s543 + $0xf0] sm:$0xff] %v604
                  %v606 = vld [vmem:[%s542 + $0x1f0] sm:$0xff]
                  %607 = vst [vmem:[%s543 + $0xf8] sm:$0xff] %v606
                  %v608 = vld [vmem:[%s542 + $0x200] sm:$0xff]
                  %609 = vst [vmem:[%s543 + $0x100] sm:$0xff] %v608
                  %v610 = vld [vmem:[%s542 + $0x210] sm:$0xff]
                  %611 = vst [vmem:[%s543 + $0x108] sm:$0xff] %v610
                  %v612 = vld [vmem:[%s542 + $0x220] sm:$0xff]
                  %613 = vst [vmem:[%s543 + $0x110] sm:$0xff] %v612
                  %v614 = vld [vmem:[%s542 + $0x230] sm:$0xff]
                  %615 = vst [vmem:[%s543 + $0x118] sm:$0xff] %v614
                  %v616 = vld [vmem:[%s542 + $0x240] sm:$0xff]
                  %617 = vst [vmem:[%s543 + $0x120] sm:$0xff] %v616
                  %v618 = vld [vmem:[%s542 + $0x250] sm:$0xff]
                  %619 = vst [vmem:[%s543 + $0x128] sm:$0xff] %v618
                  %v620 = vld [vmem:[%s542 + $0x260] sm:$0xff]
                  %621 = vst [vmem:[%s543 + $0x130] sm:$0xff] %v620
                  %v622 = vld [vmem:[%s542 + $0x270] sm:$0xff]
                  %623 = vst [vmem:[%s543 + $0x138] sm:$0xff] %v622
                  %v624 = vld [vmem:[%s542 + $0x280] sm:$0xff]
                  %625 = vst [vmem:[%s543 + $0x140] sm:$0xff] %v624
                  %v626 = vld [vmem:[%s542 + $0x290] sm:$0xff]
                  %627 = vst [vmem:[%s543 + $0x148] sm:$0xff] %v626
                  %v628 = vld [vmem:[%s542 + $0x2a0] sm:$0xff]
                  %629 = vst [vmem:[%s543 + $0x150] sm:$0xff] %v628
                  %v630 = vld [vmem:[%s542 + $0x2b0] sm:$0xff]
                  %631 = vst [vmem:[%s543 + $0x158] sm:$0xff] %v630
                  %v632 = vld [vmem:[%s542 + $0x2c0] sm:$0xff]
                  %633 = vst [vmem:[%s543 + $0x160] sm:$0xff] %v632
                  %v634 = vld [vmem:[%s542 + $0x2d0] sm:$0xff]
                  %635 = vst [vmem:[%s543 + $0x168] sm:$0xff] %v634
                  %v636 = vld [vmem:[%s542 + $0x2e0] sm:$0xff]
                  %637 = vst [vmem:[%s543 + $0x170] sm:$0xff] %v636
                  %v638 = vld [vmem:[%s542 + $0x2f0] sm:$0xff]
                  %639 = vst [vmem:[%s543 + $0x178] sm:$0xff] %v638
                  %v640 = vld [vmem:[%s542 + $0x300] sm:$0xff]
                  %641 = vst [vmem:[%s543 + $0x180] sm:$0xff] %v640
                  %v642 = vld [vmem:[%s542 + $0x310] sm:$0xff]
                  %643 = vst [vmem:[%s543 + $0x188] sm:$0xff] %v642
                  %v644 = vld [vmem:[%s542 + $0x320] sm:$0xff]
                  %645 = vst [vmem:[%s543 + $0x190] sm:$0xff] %v644
                  %v646 = vld [vmem:[%s542 + $0x330] sm:$0xff]
                  %647 = vst [vmem:[%s543 + $0x198] sm:$0xff] %v646
                  %v648 = vld [vmem:[%s542 + $0x340] sm:$0xff]
                  %649 = vst [vmem:[%s543 + $0x1a0] sm:$0xff] %v648
                  %v650 = vld [vmem:[%s542 + $0x350] sm:$0xff]
                  %651 = vst [vmem:[%s543 + $0x1a8] sm:$0xff] %v650
                  %v652 = vld [vmem:[%s542 + $0x360] sm:$0xff]
                  %653 = vst [vmem:[%s543 + $0x1b0] sm:$0xff] %v652
                  %v654 = vld [vmem:[%s542 + $0x370] sm:$0xff]
                  %655 = vst [vmem:[%s543 + $0x1b8] sm:$0xff] %v654
                  %v656 = vld [vmem:[%s542 + $0x380] sm:$0xff]
                  %657 = vst [vmem:[%s543 + $0x1c0] sm:$0xff] %v656
                  %v658 = vld [vmem:[%s542 + $0x390] sm:$0xff]
                  %659 = vst [vmem:[%s543 + $0x1c8] sm:$0xff] %v658
                  %v660 = vld [vmem:[%s542 + $0x3a0] sm:$0xff]
                  %661 = vst [vmem:[%s543 + $0x1d0] sm:$0xff] %v660
                  %v662 = vld [vmem:[%s542 + $0x3b0] sm:$0xff]
                  %663 = vst [vmem:[%s543 + $0x1d8] sm:$0xff] %v662
                  %v664 = vld [vmem:[%s542 + $0x3c0] sm:$0xff]
                  %665 = vst [vmem:[%s543 + $0x1e0] sm:$0xff] %v664
                  %v666 = vld [vmem:[%s542 + $0x3d0] sm:$0xff]
                  %667 = vst [vmem:[%s543 + $0x1e8] sm:$0xff] %v666
                  %v668 = vld [vmem:[%s542 + $0x3e0] sm:$0xff]
                  %669 = vst [vmem:[%s543 + $0x1f0] sm:$0xff] %v668
                  %v670 = vld [vmem:[%s542 + $0x3f0] sm:$0xff]
                  %671 = vst [vmem:[%s543 + $0x1f8] sm:$0xff] %v670
                  %v672 = vld [vmem:[%s542 + $0x400] sm:$0xff]
                  %673 = vst [vmem:[%s543 + $0x200] sm:$0xff] %v672
                  %v674 = vld [vmem:[%s542 + $0x410] sm:$0xff]
                  %675 = vst [vmem:[%s543 + $0x208] sm:$0xff] %v674
                  %v676 = vld [vmem:[%s542 + $0x420] sm:$0xff]
                  %677 = vst [vmem:[%s543 + $0x210] sm:$0xff] %v676
                  %v678 = vld [vmem:[%s542 + $0x430] sm:$0xff]
                  %679 = vst [vmem:[%s543 + $0x218] sm:$0xff] %v678
                  %v680 = vld [vmem:[%s542 + $0x440] sm:$0xff]
                  %681 = vst [vmem:[%s543 + $0x220] sm:$0xff] %v680
                  %v682 = vld [vmem:[%s542 + $0x450] sm:$0xff]
                  %683 = vst [vmem:[%s543 + $0x228] sm:$0xff] %v682
                  %v684 = vld [vmem:[%s542 + $0x460] sm:$0xff]
                  %685 = vst [vmem:[%s543 + $0x230] sm:$0xff] %v684
                  %v686 = vld [vmem:[%s542 + $0x470] sm:$0xff]
                  %687 = vst [vmem:[%s543 + $0x238] sm:$0xff] %v686
                  %v688 = vld [vmem:[%s542 + $0x480] sm:$0xff]
                  %689 = vst [vmem:[%s543 + $0x240] sm:$0xff] %v688
                  %v690 = vld [vmem:[%s542 + $0x490] sm:$0xff]
                  %691 = vst [vmem:[%s543 + $0x248] sm:$0xff] %v690
                  %v692 = vld [vmem:[%s542 + $0x4a0] sm:$0xff]
                  %693 = vst [vmem:[%s543 + $0x250] sm:$0xff] %v692
                  %v694 = vld [vmem:[%s542 + $0x4b0] sm:$0xff]
                  %695 = vst [vmem:[%s543 + $0x258] sm:$0xff] %v694
                  %v696 = vld [vmem:[%s542 + $0x4c0] sm:$0xff]
                  %697 = vst [vmem:[%s543 + $0x260] sm:$0xff] %v696
                  %v698 = vld [vmem:[%s542 + $0x4d0] sm:$0xff]
                  %699 = vst [vmem:[%s543 + $0x268] sm:$0xff] %v698
                  %v700 = vld [vmem:[%s542 + $0x4e0] sm:$0xff]
                  %701 = vst [vmem:[%s543 + $0x270] sm:$0xff] %v700
                  %v702 = vld [vmem:[%s542 + $0x4f0] sm:$0xff]
                  %703 = vst [vmem:[%s543 + $0x278] sm:$0xff] %v702
                  %v704 = vld [vmem:[%s542 + $0x500] sm:$0xff]
                  %705 = vst [vmem:[%s543 + $0x280] sm:$0xff] %v704
                  %v706 = vld [vmem:[%s542 + $0x510] sm:$0xff]
                  %707 = vst [vmem:[%s543 + $0x288] sm:$0xff] %v706
                  %v708 = vld [vmem:[%s542 + $0x520] sm:$0xff]
                  %709 = vst [vmem:[%s543 + $0x290] sm:$0xff] %v708
                  %v710 = vld [vmem:[%s542 + $0x530] sm:$0xff]
                  %711 = vst [vmem:[%s543 + $0x298] sm:$0xff] %v710
                  %v712 = vld [vmem:[%s542 + $0x540] sm:$0xff]
                  %713 = vst [vmem:[%s543 + $0x2a0] sm:$0xff] %v712
                  %v714 = vld [vmem:[%s542 + $0x550] sm:$0xff]
                  %715 = vst [vmem:[%s543 + $0x2a8] sm:$0xff] %v714
                  %v716 = vld [vmem:[%s542 + $0x560] sm:$0xff]
                  %717 = vst [vmem:[%s543 + $0x2b0] sm:$0xff] %v716
                  %v718 = vld [vmem:[%s542 + $0x570] sm:$0xff]
                  %719 = vst [vmem:[%s543 + $0x2b8] sm:$0xff] %v718
                  %v720 = vld [vmem:[%s542 + $0x580] sm:$0xff]
                  %721 = vst [vmem:[%s543 + $0x2c0] sm:$0xff] %v720
                  %v722 = vld [vmem:[%s542 + $0x590] sm:$0xff]
                  %723 = vst [vmem:[%s543 + $0x2c8] sm:$0xff] %v722
                  %v724 = vld [vmem:[%s542 + $0x5a0] sm:$0xff]
                  %725 = vst [vmem:[%s543 + $0x2d0] sm:$0xff] %v724
                  %v726 = vld [vmem:[%s542 + $0x5b0] sm:$0xff]
                  %727 = vst [vmem:[%s543 + $0x2d8] sm:$0xff] %v726
                  %v728 = vld [vmem:[%s542 + $0x5c0] sm:$0xff]
                  %729 = vst [vmem:[%s543 + $0x2e0] sm:$0xff] %v728
                  %v730 = vld [vmem:[%s542 + $0x5d0] sm:$0xff]
                  %731 = vst [vmem:[%s543 + $0x2e8] sm:$0xff] %v730
                  %v732 = vld [vmem:[%s542 + $0x5e0] sm:$0xff]
                  %733 = vst [vmem:[%s543 + $0x2f0] sm:$0xff] %v732
                  %v734 = vld [vmem:[%s542 + $0x5f0] sm:$0xff]
                  %735 = vst [vmem:[%s543 + $0x2f8] sm:$0xff] %v734
                  %v736 = vld [vmem:[%s542 + $0x600] sm:$0xff]
                  %737 = vst [vmem:[%s543 + $0x300] sm:$0xff] %v736
                  %v738 = vld [vmem:[%s542 + $0x610] sm:$0xff]
                  %739 = vst [vmem:[%s543 + $0x308] sm:$0xff] %v738
                  %v740 = vld [vmem:[%s542 + $0x620] sm:$0xff]
                  %741 = vst [vmem:[%s543 + $0x310] sm:$0xff] %v740
                  %v742 = vld [vmem:[%s542 + $0x630] sm:$0xff]
                  %743 = vst [vmem:[%s543 + $0x318] sm:$0xff] %v742
                  %v744 = vld [vmem:[%s542 + $0x640] sm:$0xff]
                  %745 = vst [vmem:[%s543 + $0x320] sm:$0xff] %v744
                  %v746 = vld [vmem:[%s542 + $0x650] sm:$0xff]
                  %747 = vst [vmem:[%s543 + $0x328] sm:$0xff] %v746
                  %v748 = vld [vmem:[%s542 + $0x660] sm:$0xff]
                  %749 = vst [vmem:[%s543 + $0x330] sm:$0xff] %v748
                  %v750 = vld [vmem:[%s542 + $0x670] sm:$0xff]
                  %751 = vst [vmem:[%s543 + $0x338] sm:$0xff] %v750
                  %v752 = vld [vmem:[%s542 + $0x680] sm:$0xff]
                  %753 = vst [vmem:[%s543 + $0x340] sm:$0xff] %v752
                  %v754 = vld [vmem:[%s542 + $0x690] sm:$0xff]
                  %755 = vst [vmem:[%s543 + $0x348] sm:$0xff] %v754
                  %v756 = vld [vmem:[%s542 + $0x6a0] sm:$0xff]
                  %757 = vst [vmem:[%s543 + $0x350] sm:$0xff] %v756
                  %v758 = vld [vmem:[%s542 + $0x6b0] sm:$0xff]
                  %759 = vst [vmem:[%s543 + $0x358] sm:$0xff] %v758
                  %v760 = vld [vmem:[%s542 + $0x6c0] sm:$0xff]
                  %761 = vst [vmem:[%s543 + $0x360] sm:$0xff] %v760
                  %v762 = vld [vmem:[%s542 + $0x6d0] sm:$0xff]
                  %763 = vst [vmem:[%s543 + $0x368] sm:$0xff] %v762
                  %v764 = vld [vmem:[%s542 + $0x6e0] sm:$0xff]
                  %765 = vst [vmem:[%s543 + $0x370] sm:$0xff] %v764
                  %v766 = vld [vmem:[%s542 + $0x6f0] sm:$0xff]
                  %767 = vst [vmem:[%s543 + $0x378] sm:$0xff] %v766
                  %v768 = vld [vmem:[%s542 + $0x700] sm:$0xff]
                  %769 = vst [vmem:[%s543 + $0x380] sm:$0xff] %v768
                  %v770 = vld [vmem:[%s542 + $0x710] sm:$0xff]
                  %771 = vst [vmem:[%s543 + $0x388] sm:$0xff] %v770
                  %v772 = vld [vmem:[%s542 + $0x720] sm:$0xff]
                  %773 = vst [vmem:[%s543 + $0x390] sm:$0xff] %v772
                  %v774 = vld [vmem:[%s542 + $0x730] sm:$0xff]
                  %775 = vst [vmem:[%s543 + $0x398] sm:$0xff] %v774
                  %v776 = vld [vmem:[%s542 + $0x740] sm:$0xff]
                  %777 = vst [vmem:[%s543 + $0x3a0] sm:$0xff] %v776
                  %v778 = vld [vmem:[%s542 + $0x750] sm:$0xff]
                  %779 = vst [vmem:[%s543 + $0x3a8] sm:$0xff] %v778
                  %v780 = vld [vmem:[%s542 + $0x760] sm:$0xff]
                  %781 = vst [vmem:[%s543 + $0x3b0] sm:$0xff] %v780
                  %v782 = vld [vmem:[%s542 + $0x770] sm:$0xff]
                  %783 = vst [vmem:[%s543 + $0x3b8] sm:$0xff] %v782
                  %v784 = vld [vmem:[%s542 + $0x780] sm:$0xff]
                  %785 = vst [vmem:[%s543 + $0x3c0] sm:$0xff] %v784
                  %v786 = vld [vmem:[%s542 + $0x790] sm:$0xff]
                  %787 = vst [vmem:[%s543 + $0x3c8] sm:$0xff] %v786
                  %v788 = vld [vmem:[%s542 + $0x7a0] sm:$0xff]
                  %789 = vst [vmem:[%s543 + $0x3d0] sm:$0xff] %v788
                  %v790 = vld [vmem:[%s542 + $0x7b0] sm:$0xff]
                  %791 = vst [vmem:[%s543 + $0x3d8] sm:$0xff] %v790
                  %v792 = vld [vmem:[%s542 + $0x7c0] sm:$0xff]
                  %793 = vst [vmem:[%s543 + $0x3e0] sm:$0xff] %v792
                  %v794 = vld [vmem:[%s542 + $0x7d0] sm:$0xff]
                  %795 = vst [vmem:[%s543 + $0x3e8] sm:$0xff] %v794
                  %v796 = vld [vmem:[%s542 + $0x7e0] sm:$0xff]
                  %797 = vst [vmem:[%s543 + $0x3f0] sm:$0xff] %v796
                  %v798 = vld [vmem:[%s542 + $0x7f0] sm:$0xff]
                  %799 = vst [vmem:[%s543 + $0x3f8] sm:$0xff] %v798
                $region71: #{discriminator_forward.12} parent=65 // loop_footer
                  %s541 = sadd.s32 1, %s537
                $region72: #{discriminator_forward.12} parent=65 // loop_footer_branch
                  %536 = sbr.rel target = $region68
                $region73: #{discriminator_forward.12} parent=65 // loop_exit
                  _
              $region66: #{discriminator_forward.12} parent=50 // pred_fallthru
                _
              // Predicated region
              $region74: #{discriminator_forward.12} parent=50 // pred_check
                _
              $region75: #{discriminator_forward.12} parent=50 // pred_check_branch
                %801 = sbr.rel target = $region77
              $region76: #{discriminator_forward.12} parent=50 // pred_region
                _
              $region77: #{discriminator_forward.12} parent=50 // pred_fallthru
                _
            $region51: #{discriminator_forward.12} parent=46 // pred_fallthru
              _
            // Predicated region
            $region52: #{discriminator_forward.12} parent=46 // pred_check
              _
            $region53: #{discriminator_forward.12} parent=46 // pred_check_branch
              %267 = sbr.rel target = $region55
            $region54: #{discriminator_forward.12} parent=46 // pred_region
              %s269 = ssub.s32 256, 1
              loop: start=0, step=1, limit=1
              $region56: #{discriminator_forward.12} parent=54 // loop_pre_header
                _
              $region57: #{discriminator_forward.12} parent=54 // loop_header
                %s271 = sphi 0, %s275
                %p272 = scmp.ge.s32.totalorder %s271, 1
                %s276 = sphi %s261, %s261
                %s277 = sphi %s255, %s255
              $region58: #{discriminator_forward.12} parent=54 // loop_header_branch
                %274 = sbr.rel (%p272) target = $region62
              $region59: #{discriminator_forward.12} parent=54 // loop_body
                %v278 = vld [vmem:[%s276] sm:%s269]
                %279 = vst [vmem:[%s277] sm:%s269] %v278
                %v280 = vld [vmem:[%s276 + $0x10] sm:%s269]
                %281 = vst [vmem:[%s277 + $0x8] sm:%s269] %v280
                %v282 = vld [vmem:[%s276 + $0x20] sm:%s269]
                %283 = vst [vmem:[%s277 + $0x10] sm:%s269] %v282
                %v284 = vld [vmem:[%s276 + $0x30] sm:%s269]
                %285 = vst [vmem:[%s277 + $0x18] sm:%s269] %v284
                %v286 = vld [vmem:[%s276 + $0x40] sm:%s269]
                %287 = vst [vmem:[%s277 + $0x20] sm:%s269] %v286
                %v288 = vld [vmem:[%s276 + $0x50] sm:%s269]
                %289 = vst [vmem:[%s277 + $0x28] sm:%s269] %v288
                %v290 = vld [vmem:[%s276 + $0x60] sm:%s269]
                %291 = vst [vmem:[%s277 + $0x30] sm:%s269] %v290
                %v292 = vld [vmem:[%s276 + $0x70] sm:%s269]
                %293 = vst [vmem:[%s277 + $0x38] sm:%s269] %v292
                %v294 = vld [vmem:[%s276 + $0x80] sm:%s269]
                %295 = vst [vmem:[%s277 + $0x40] sm:%s269] %v294
                %v296 = vld [vmem:[%s276 + $0x90] sm:%s269]
                %297 = vst [vmem:[%s277 + $0x48] sm:%s269] %v296
                %v298 = vld [vmem:[%s276 + $0xa0] sm:%s269]
                %299 = vst [vmem:[%s277 + $0x50] sm:%s269] %v298
                %v300 = vld [vmem:[%s276 + $0xb0] sm:%s269]
                %301 = vst [vmem:[%s277 + $0x58] sm:%s269] %v300
                %v302 = vld [vmem:[%s276 + $0xc0] sm:%s269]
                %303 = vst [vmem:[%s277 + $0x60] sm:%s269] %v302
                %v304 = vld [vmem:[%s276 + $0xd0] sm:%s269]
                %305 = vst [vmem:[%s277 + $0x68] sm:%s269] %v304
                %v306 = vld [vmem:[%s276 + $0xe0] sm:%s269]
                %307 = vst [vmem:[%s277 + $0x70] sm:%s269] %v306
                %v308 = vld [vmem:[%s276 + $0xf0] sm:%s269]
                %309 = vst [vmem:[%s277 + $0x78] sm:%s269] %v308
                %v310 = vld [vmem:[%s276 + $0x100] sm:%s269]
                %311 = vst [vmem:[%s277 + $0x80] sm:%s269] %v310
                %v312 = vld [vmem:[%s276 + $0x110] sm:%s269]
                %313 = vst [vmem:[%s277 + $0x88] sm:%s269] %v312
                %v314 = vld [vmem:[%s276 + $0x120] sm:%s269]
                %315 = vst [vmem:[%s277 + $0x90] sm:%s269] %v314
                %v316 = vld [vmem:[%s276 + $0x130] sm:%s269]
                %317 = vst [vmem:[%s277 + $0x98] sm:%s269] %v316
                %v318 = vld [vmem:[%s276 + $0x140] sm:%s269]
                %319 = vst [vmem:[%s277 + $0xa0] sm:%s269] %v318
                %v320 = vld [vmem:[%s276 + $0x150] sm:%s269]
                %321 = vst [vmem:[%s277 + $0xa8] sm:%s269] %v320
                %v322 = vld [vmem:[%s276 + $0x160] sm:%s269]
                %323 = vst [vmem:[%s277 + $0xb0] sm:%s269] %v322
                %v324 = vld [vmem:[%s276 + $0x170] sm:%s269]
                %325 = vst [vmem:[%s277 + $0xb8] sm:%s269] %v324
                %v326 = vld [vmem:[%s276 + $0x180] sm:%s269]
                %327 = vst [vmem:[%s277 + $0xc0] sm:%s269] %v326
                %v328 = vld [vmem:[%s276 + $0x190] sm:%s269]
                %329 = vst [vmem:[%s277 + $0xc8] sm:%s269] %v328
                %v330 = vld [vmem:[%s276 + $0x1a0] sm:%s269]
                %331 = vst [vmem:[%s277 + $0xd0] sm:%s269] %v330
                %v332 = vld [vmem:[%s276 + $0x1b0] sm:%s269]
                %333 = vst [vmem:[%s277 + $0xd8] sm:%s269] %v332
                %v334 = vld [vmem:[%s276 + $0x1c0] sm:%s269]
                %335 = vst [vmem:[%s277 + $0xe0] sm:%s269] %v334
                %v336 = vld [vmem:[%s276 + $0x1d0] sm:%s269]
                %337 = vst [vmem:[%s277 + $0xe8] sm:%s269] %v336
                %v338 = vld [vmem:[%s276 + $0x1e0] sm:%s269]
                %339 = vst [vmem:[%s277 + $0xf0] sm:%s269] %v338
                %v340 = vld [vmem:[%s276 + $0x1f0] sm:%s269]
                %341 = vst [vmem:[%s277 + $0xf8] sm:%s269] %v340
                %v342 = vld [vmem:[%s276 + $0x200] sm:%s269]
                %343 = vst [vmem:[%s277 + $0x100] sm:%s269] %v342
                %v344 = vld [vmem:[%s276 + $0x210] sm:%s269]
                %345 = vst [vmem:[%s277 + $0x108] sm:%s269] %v344
                %v346 = vld [vmem:[%s276 + $0x220] sm:%s269]
                %347 = vst [vmem:[%s277 + $0x110] sm:%s269] %v346
                %v348 = vld [vmem:[%s276 + $0x230] sm:%s269]
                %349 = vst [vmem:[%s277 + $0x118] sm:%s269] %v348
                %v350 = vld [vmem:[%s276 + $0x240] sm:%s269]
                %351 = vst [vmem:[%s277 + $0x120] sm:%s269] %v350
                %v352 = vld [vmem:[%s276 + $0x250] sm:%s269]
                %353 = vst [vmem:[%s277 + $0x128] sm:%s269] %v352
                %v354 = vld [vmem:[%s276 + $0x260] sm:%s269]
                %355 = vst [vmem:[%s277 + $0x130] sm:%s269] %v354
                %v356 = vld [vmem:[%s276 + $0x270] sm:%s269]
                %357 = vst [vmem:[%s277 + $0x138] sm:%s269] %v356
                %v358 = vld [vmem:[%s276 + $0x280] sm:%s269]
                %359 = vst [vmem:[%s277 + $0x140] sm:%s269] %v358
                %v360 = vld [vmem:[%s276 + $0x290] sm:%s269]
                %361 = vst [vmem:[%s277 + $0x148] sm:%s269] %v360
                %v362 = vld [vmem:[%s276 + $0x2a0] sm:%s269]
                %363 = vst [vmem:[%s277 + $0x150] sm:%s269] %v362
                %v364 = vld [vmem:[%s276 + $0x2b0] sm:%s269]
                %365 = vst [vmem:[%s277 + $0x158] sm:%s269] %v364
                %v366 = vld [vmem:[%s276 + $0x2c0] sm:%s269]
                %367 = vst [vmem:[%s277 + $0x160] sm:%s269] %v366
                %v368 = vld [vmem:[%s276 + $0x2d0] sm:%s269]
                %369 = vst [vmem:[%s277 + $0x168] sm:%s269] %v368
                %v370 = vld [vmem:[%s276 + $0x2e0] sm:%s269]
                %371 = vst [vmem:[%s277 + $0x170] sm:%s269] %v370
                %v372 = vld [vmem:[%s276 + $0x2f0] sm:%s269]
                %373 = vst [vmem:[%s277 + $0x178] sm:%s269] %v372
                %v374 = vld [vmem:[%s276 + $0x300] sm:%s269]
                %375 = vst [vmem:[%s277 + $0x180] sm:%s269] %v374
                %v376 = vld [vmem:[%s276 + $0x310] sm:%s269]
                %377 = vst [vmem:[%s277 + $0x188] sm:%s269] %v376
                %v378 = vld [vmem:[%s276 + $0x320] sm:%s269]
                %379 = vst [vmem:[%s277 + $0x190] sm:%s269] %v378
                %v380 = vld [vmem:[%s276 + $0x330] sm:%s269]
                %381 = vst [vmem:[%s277 + $0x198] sm:%s269] %v380
                %v382 = vld [vmem:[%s276 + $0x340] sm:%s269]
                %383 = vst [vmem:[%s277 + $0x1a0] sm:%s269] %v382
                %v384 = vld [vmem:[%s276 + $0x350] sm:%s269]
                %385 = vst [vmem:[%s277 + $0x1a8] sm:%s269] %v384
                %v386 = vld [vmem:[%s276 + $0x360] sm:%s269]
                %387 = vst [vmem:[%s277 + $0x1b0] sm:%s269] %v386
                %v388 = vld [vmem:[%s276 + $0x370] sm:%s269]
                %389 = vst [vmem:[%s277 + $0x1b8] sm:%s269] %v388
                %v390 = vld [vmem:[%s276 + $0x380] sm:%s269]
                %391 = vst [vmem:[%s277 + $0x1c0] sm:%s269] %v390
                %v392 = vld [vmem:[%s276 + $0x390] sm:%s269]
                %393 = vst [vmem:[%s277 + $0x1c8] sm:%s269] %v392
                %v394 = vld [vmem:[%s276 + $0x3a0] sm:%s269]
                %395 = vst [vmem:[%s277 + $0x1d0] sm:%s269] %v394
                %v396 = vld [vmem:[%s276 + $0x3b0] sm:%s269]
                %397 = vst [vmem:[%s277 + $0x1d8] sm:%s269] %v396
                %v398 = vld [vmem:[%s276 + $0x3c0] sm:%s269]
                %399 = vst [vmem:[%s277 + $0x1e0] sm:%s269] %v398
                %v400 = vld [vmem:[%s276 + $0x3d0] sm:%s269]
                %401 = vst [vmem:[%s277 + $0x1e8] sm:%s269] %v400
                %v402 = vld [vmem:[%s276 + $0x3e0] sm:%s269]
                %403 = vst [vmem:[%s277 + $0x1f0] sm:%s269] %v402
                %v404 = vld [vmem:[%s276 + $0x3f0] sm:%s269]
                %405 = vst [vmem:[%s277 + $0x1f8] sm:%s269] %v404
                %v406 = vld [vmem:[%s276 + $0x400] sm:%s269]
                %407 = vst [vmem:[%s277 + $0x200] sm:%s269] %v406
                %v408 = vld [vmem:[%s276 + $0x410] sm:%s269]
                %409 = vst [vmem:[%s277 + $0x208] sm:%s269] %v408
                %v410 = vld [vmem:[%s276 + $0x420] sm:%s269]
                %411 = vst [vmem:[%s277 + $0x210] sm:%s269] %v410
                %v412 = vld [vmem:[%s276 + $0x430] sm:%s269]
                %413 = vst [vmem:[%s277 + $0x218] sm:%s269] %v412
                %v414 = vld [vmem:[%s276 + $0x440] sm:%s269]
                %415 = vst [vmem:[%s277 + $0x220] sm:%s269] %v414
                %v416 = vld [vmem:[%s276 + $0x450] sm:%s269]
                %417 = vst [vmem:[%s277 + $0x228] sm:%s269] %v416
                %v418 = vld [vmem:[%s276 + $0x460] sm:%s269]
                %419 = vst [vmem:[%s277 + $0x230] sm:%s269] %v418
                %v420 = vld [vmem:[%s276 + $0x470] sm:%s269]
                %421 = vst [vmem:[%s277 + $0x238] sm:%s269] %v420
                %v422 = vld [vmem:[%s276 + $0x480] sm:%s269]
                %423 = vst [vmem:[%s277 + $0x240] sm:%s269] %v422
                %v424 = vld [vmem:[%s276 + $0x490] sm:%s269]
                %425 = vst [vmem:[%s277 + $0x248] sm:%s269] %v424
                %v426 = vld [vmem:[%s276 + $0x4a0] sm:%s269]
                %427 = vst [vmem:[%s277 + $0x250] sm:%s269] %v426
                %v428 = vld [vmem:[%s276 + $0x4b0] sm:%s269]
                %429 = vst [vmem:[%s277 + $0x258] sm:%s269] %v428
                %v430 = vld [vmem:[%s276 + $0x4c0] sm:%s269]
                %431 = vst [vmem:[%s277 + $0x260] sm:%s269] %v430
                %v432 = vld [vmem:[%s276 + $0x4d0] sm:%s269]
                %433 = vst [vmem:[%s277 + $0x268] sm:%s269] %v432
                %v434 = vld [vmem:[%s276 + $0x4e0] sm:%s269]
                %435 = vst [vmem:[%s277 + $0x270] sm:%s269] %v434
                %v436 = vld [vmem:[%s276 + $0x4f0] sm:%s269]
                %437 = vst [vmem:[%s277 + $0x278] sm:%s269] %v436
                %v438 = vld [vmem:[%s276 + $0x500] sm:%s269]
                %439 = vst [vmem:[%s277 + $0x280] sm:%s269] %v438
                %v440 = vld [vmem:[%s276 + $0x510] sm:%s269]
                %441 = vst [vmem:[%s277 + $0x288] sm:%s269] %v440
                %v442 = vld [vmem:[%s276 + $0x520] sm:%s269]
                %443 = vst [vmem:[%s277 + $0x290] sm:%s269] %v442
                %v444 = vld [vmem:[%s276 + $0x530] sm:%s269]
                %445 = vst [vmem:[%s277 + $0x298] sm:%s269] %v444
                %v446 = vld [vmem:[%s276 + $0x540] sm:%s269]
                %447 = vst [vmem:[%s277 + $0x2a0] sm:%s269] %v446
                %v448 = vld [vmem:[%s276 + $0x550] sm:%s269]
                %449 = vst [vmem:[%s277 + $0x2a8] sm:%s269] %v448
                %v450 = vld [vmem:[%s276 + $0x560] sm:%s269]
                %451 = vst [vmem:[%s277 + $0x2b0] sm:%s269] %v450
                %v452 = vld [vmem:[%s276 + $0x570] sm:%s269]
                %453 = vst [vmem:[%s277 + $0x2b8] sm:%s269] %v452
                %v454 = vld [vmem:[%s276 + $0x580] sm:%s269]
                %455 = vst [vmem:[%s277 + $0x2c0] sm:%s269] %v454
                %v456 = vld [vmem:[%s276 + $0x590] sm:%s269]
                %457 = vst [vmem:[%s277 + $0x2c8] sm:%s269] %v456
                %v458 = vld [vmem:[%s276 + $0x5a0] sm:%s269]
                %459 = vst [vmem:[%s277 + $0x2d0] sm:%s269] %v458
                %v460 = vld [vmem:[%s276 + $0x5b0] sm:%s269]
                %461 = vst [vmem:[%s277 + $0x2d8] sm:%s269] %v460
                %v462 = vld [vmem:[%s276 + $0x5c0] sm:%s269]
                %463 = vst [vmem:[%s277 + $0x2e0] sm:%s269] %v462
                %v464 = vld [vmem:[%s276 + $0x5d0] sm:%s269]
                %465 = vst [vmem:[%s277 + $0x2e8] sm:%s269] %v464
                %v466 = vld [vmem:[%s276 + $0x5e0] sm:%s269]
                %467 = vst [vmem:[%s277 + $0x2f0] sm:%s269] %v466
                %v468 = vld [vmem:[%s276 + $0x5f0] sm:%s269]
                %469 = vst [vmem:[%s277 + $0x2f8] sm:%s269] %v468
                %v470 = vld [vmem:[%s276 + $0x600] sm:%s269]
                %471 = vst [vmem:[%s277 + $0x300] sm:%s269] %v470
                %v472 = vld [vmem:[%s276 + $0x610] sm:%s269]
                %473 = vst [vmem:[%s277 + $0x308] sm:%s269] %v472
                %v474 = vld [vmem:[%s276 + $0x620] sm:%s269]
                %475 = vst [vmem:[%s277 + $0x310] sm:%s269] %v474
                %v476 = vld [vmem:[%s276 + $0x630] sm:%s269]
                %477 = vst [vmem:[%s277 + $0x318] sm:%s269] %v476
                %v478 = vld [vmem:[%s276 + $0x640] sm:%s269]
                %479 = vst [vmem:[%s277 + $0x320] sm:%s269] %v478
                %v480 = vld [vmem:[%s276 + $0x650] sm:%s269]
                %481 = vst [vmem:[%s277 + $0x328] sm:%s269] %v480
                %v482 = vld [vmem:[%s276 + $0x660] sm:%s269]
                %483 = vst [vmem:[%s277 + $0x330] sm:%s269] %v482
                %v484 = vld [vmem:[%s276 + $0x670] sm:%s269]
                %485 = vst [vmem:[%s277 + $0x338] sm:%s269] %v484
                %v486 = vld [vmem:[%s276 + $0x680] sm:%s269]
                %487 = vst [vmem:[%s277 + $0x340] sm:%s269] %v486
                %v488 = vld [vmem:[%s276 + $0x690] sm:%s269]
                %489 = vst [vmem:[%s277 + $0x348] sm:%s269] %v488
                %v490 = vld [vmem:[%s276 + $0x6a0] sm:%s269]
                %491 = vst [vmem:[%s277 + $0x350] sm:%s269] %v490
                %v492 = vld [vmem:[%s276 + $0x6b0] sm:%s269]
                %493 = vst [vmem:[%s277 + $0x358] sm:%s269] %v492
                %v494 = vld [vmem:[%s276 + $0x6c0] sm:%s269]
                %495 = vst [vmem:[%s277 + $0x360] sm:%s269] %v494
                %v496 = vld [vmem:[%s276 + $0x6d0] sm:%s269]
                %497 = vst [vmem:[%s277 + $0x368] sm:%s269] %v496
                %v498 = vld [vmem:[%s276 + $0x6e0] sm:%s269]
                %499 = vst [vmem:[%s277 + $0x370] sm:%s269] %v498
                %v500 = vld [vmem:[%s276 + $0x6f0] sm:%s269]
                %501 = vst [vmem:[%s277 + $0x378] sm:%s269] %v500
                %v502 = vld [vmem:[%s276 + $0x700] sm:%s269]
                %503 = vst [vmem:[%s277 + $0x380] sm:%s269] %v502
                %v504 = vld [vmem:[%s276 + $0x710] sm:%s269]
                %505 = vst [vmem:[%s277 + $0x388] sm:%s269] %v504
                %v506 = vld [vmem:[%s276 + $0x720] sm:%s269]
                %507 = vst [vmem:[%s277 + $0x390] sm:%s269] %v506
                %v508 = vld [vmem:[%s276 + $0x730] sm:%s269]
                %509 = vst [vmem:[%s277 + $0x398] sm:%s269] %v508
                %v510 = vld [vmem:[%s276 + $0x740] sm:%s269]
                %511 = vst [vmem:[%s277 + $0x3a0] sm:%s269] %v510
                %v512 = vld [vmem:[%s276 + $0x750] sm:%s269]
                %513 = vst [vmem:[%s277 + $0x3a8] sm:%s269] %v512
                %v514 = vld [vmem:[%s276 + $0x760] sm:%s269]
                %515 = vst [vmem:[%s277 + $0x3b0] sm:%s269] %v514
                %v516 = vld [vmem:[%s276 + $0x770] sm:%s269]
                %517 = vst [vmem:[%s277 + $0x3b8] sm:%s269] %v516
                %v518 = vld [vmem:[%s276 + $0x780] sm:%s269]
                %519 = vst [vmem:[%s277 + $0x3c0] sm:%s269] %v518
                %v520 = vld [vmem:[%s276 + $0x790] sm:%s269]
                %521 = vst [vmem:[%s277 + $0x3c8] sm:%s269] %v520
                %v522 = vld [vmem:[%s276 + $0x7a0] sm:%s269]
                %523 = vst [vmem:[%s277 + $0x3d0] sm:%s269] %v522
                %v524 = vld [vmem:[%s276 + $0x7b0] sm:%s269]
                %525 = vst [vmem:[%s277 + $0x3d8] sm:%s269] %v524
                %v526 = vld [vmem:[%s276 + $0x7c0] sm:%s269]
                %527 = vst [vmem:[%s277 + $0x3e0] sm:%s269] %v526
                %v528 = vld [vmem:[%s276 + $0x7d0] sm:%s269]
                %529 = vst [vmem:[%s277 + $0x3e8] sm:%s269] %v528
                %v530 = vld [vmem:[%s276 + $0x7e0] sm:%s269]
                %531 = vst [vmem:[%s277 + $0x3f0] sm:%s269] %v530
                %v532 = vld [vmem:[%s276 + $0x7f0] sm:%s269]
                %533 = vst [vmem:[%s277 + $0x3f8] sm:%s269] %v532
              $region60: #{discriminator_forward.12} parent=54 // loop_footer
                %s275 = sadd.s32 1, %s271
              $region61: #{discriminator_forward.12} parent=54 // loop_footer_branch
                %270 = sbr.rel target = $region57
              $region62: #{discriminator_forward.12} parent=54 // loop_exit
                _
            $region55: #{discriminator_forward.12} parent=46 // pred_fallthru
              _
          $region47: #{discriminator_forward.12} parent=42 // pred_fallthru
            _
          %802 = vnop
        $region43: #{discriminator_forward.12} parent=15 // pred_fallthru
          _
      $region16: #{discriminator_forward.12} parent=5 // pred_fallthru
        _
      %p803 = scmp.le.s32.totalorder 1, %s11
      %p804 = scmp.lt.s32.totalorder %s11, 9
      %p805 = pnand %p803, %p804
      %p806 = pneg %p805
      // Predicated region
      $region78: #{discriminator_forward.12} parent=5 // pred_check
        _
      $region79: #{discriminator_forward.12} parent=5 // pred_check_branch
        %808 = sbr.rel (%p805) target = $region81
      $region80: #{discriminator_forward.12} parent=5 // pred_region
        %s809 = ssub.s32 %s11, 1
        %s810 = sand.u32 %s45, 1
        %s811 = sand.u32 %s45, 1
        %s812 = smul.addr %s811, 128
        %s813 = scalar_lea.vmem [#allocation3], %s812
        // Predicated region
        $region82: #{discriminator_forward.12} parent=80 // pred_check
          %p814 = pneg %p58
        $region83: #{discriminator_forward.12} parent=80 // pred_check_branch
          %816 = sbr.rel (%p814) target = $region85
        $region84: #{discriminator_forward.12} parent=80 // pred_region
          _
        $region85: #{discriminator_forward.12} parent=80 // pred_fallthru
          _
        %s817 = sand.u32 %s73, 1
        %s818 = sand.u32 %s73, 1
        %s819 = smul.addr %s818, 1024
        %s820 = scalar_lea.vmem [#allocation4], %s819
        // Predicated region
        $region86: #{discriminator_forward.12} parent=80 // pred_check
          %p821 = pneg %p86
        $region87: #{discriminator_forward.12} parent=80 // pred_check_branch
          %823 = sbr.rel (%p821) target = $region89
        $region88: #{discriminator_forward.12} parent=80 // pred_region
          _
        $region89: #{discriminator_forward.12} parent=80 // pred_fallthru
          _
        %s824 = sand.u32 %s45, 1
        %s825 = sand.u32 %s45, 1
        %s826 = smul.addr %s825, 128
        %s827 = scalar_lea.vmem [#allocation3], %s826
        %p828 = pneg %p58
        %p829 = pneg %p55
        %s830 = sand.u32 %s73, 1
        %s831 = sand.u32 %s73, 1
        %s832 = smul.addr %s831, 1024
        %s833 = scalar_lea.vmem [#allocation4], %s832
        %p834 = pneg %p86
        %p835 = pneg %p83
        %p836 = pneg %p114
        %p837 = pneg %p111
        %s838 = sand.u32 %s101, 1
        %s839 = sand.u32 %s101, 1
        %s840 = smul.addr %s839, 32
        %s841 = scalar_lea.vmem [#allocation5], %s840
        %p842 = pneg %p142
        %p843 = pneg %p139
        %s844 = smul.u32 2, %s22
        %p845 = scmp.lt.s32.totalorder %s21, 0
        %s846 = scalar_select %p845, %s21, 0
        %p847 = scmp.lt.s32.totalorder %s844, 3
        %s848 = scalar_select %p847, %s844, 3
        %s849 = smul.addr %s846, 4
        %s850 = sadd.s32 %s848, %s849
        %s851 = smul.addr %s850, 8
        %s852 = scalar_lea.vmem %s3, %s851
        %p853 = pneg %p170
        %p854 = pneg %p167
        %s855 = smul.u32 2, %s22
        %p856 = scmp.lt.s32.totalorder %s21, 0
        %s857 = scalar_select %p856, %s21, 0
        %p858 = scmp.lt.s32.totalorder %s855, 3
        %s859 = scalar_select %p858, %s855, 3
        %s860 = smul.addr %s857, 4
        %s861 = sadd.s32 %s859, %s860
        %s862 = smul.addr %s861, 8
        %s863 = scalar_lea.vmem %s4, %s862
        %s864 = smul.u32 4, %s21
        %s865 = smul.u32 8, %s23
        %s866 = smul.u32 128, %s23
        %s867 = smul.u32 2, %s22
        %s868 = smul.u32 4, %s21
        %s869 = smul.u32 2, %s22
        %s870 = smul.u32 2, %s22
        %p871 = scmp.lt.s32.totalorder %s21, 0
        %s872 = scalar_select %p871, %s21, 0
        %p873 = scmp.lt.s32.totalorder %s870, 3
        %s874 = scalar_select %p873, %s870, 3
        %s875 = smul.addr %s872, 4
        %s876 = sadd.s32 %s874, %s875
        %s877 = smul.addr %s876, 8
        %s878 = scalar_lea.vmem %s3, %s877
        %s879 = smul.u32 2, %s22
        %s880 = smul.u32 2, %s22
        %p881 = scmp.lt.s32.totalorder %s21, 0
        %s882 = scalar_select %p881, %s21, 0
        %p883 = scmp.lt.s32.totalorder %s880, 3
        %s884 = scalar_select %p883, %s880, 3
        %s885 = smul.addr %s882, 4
        %s886 = sadd.s32 %s884, %s885
        %s887 = smul.addr %s886, 8
        %s888 = scalar_lea.vmem %s4, %s887
        %s889 = smul.u32 2, %s22
        %p890 = scmp.eq.s32.totalorder %s23, 0
        // Predicated region
        $region90: #{discriminator_forward.12} parent=80 // pred_check
          %p891 = pneg %p890
        $region91: #{discriminator_forward.12} parent=80 // pred_check_branch
          %893 = sbr.rel (%p891) target = $region93
        $region92: #{discriminator_forward.12} parent=80 // pred_region
          %894 = vst [vmem:[#allocation2] sm:$0xff] 0.0
          %895 = vst [vmem:[#allocation2 + $0x8] sm:$0xff] 0.0
          %896 = vst [vmem:[#allocation2 + $0x10] sm:$0xff] 0.0
          %897 = vst [vmem:[#allocation2 + $0x18] sm:$0xff] 0.0
          %898 = vst [vmem:[#allocation2 + $0x20] sm:$0xff] 0.0
          %899 = vst [vmem:[#allocation2 + $0x28] sm:$0xff] 0.0
          %900 = vst [vmem:[#allocation2 + $0x30] sm:$0xff] 0.0
          %901 = vst [vmem:[#allocation2 + $0x38] sm:$0xff] 0.0
        $region93: #{discriminator_forward.12} parent=80 // pred_fallthru
          _
        %v902 = vld [vmem:[#allocation2] sm:$0xff]
        %v903 = vld [vmem:[#allocation2 + $0x8] sm:$0xff]
        %v904 = vld [vmem:[#allocation2 + $0x10] sm:$0xff]
        %v905 = vld [vmem:[#allocation2 + $0x18] sm:$0xff]
        %v906 = vld [vmem:[#allocation2 + $0x20] sm:$0xff]
        %v907 = vld [vmem:[#allocation2 + $0x28] sm:$0xff]
        %v908 = vld [vmem:[#allocation2 + $0x30] sm:$0xff]
        %v909 = vld [vmem:[#allocation2 + $0x38] sm:$0xff]
        %v910 = vld [vmem:[%s813] sm:$0xff]
        %v911 = vld [vmem:[%s813 + $0x8] sm:$0xff]
        %v912 = vld [vmem:[%s813 + $0x10] sm:$0xff]
        %v913 = vld [vmem:[%s813 + $0x18] sm:$0xff]
        %v914 = vld [vmem:[%s813 + $0x20] sm:$0xff]
        %v915 = vld [vmem:[%s813 + $0x28] sm:$0xff]
        %v916 = vld [vmem:[%s813 + $0x30] sm:$0xff]
        %v917 = vld [vmem:[%s813 + $0x38] sm:$0xff]
        %v918 = vld [vmem:[%s813 + $0x40] sm:$0xff]
        %v919 = vld [vmem:[%s813 + $0x48] sm:$0xff]
        %v920 = vld [vmem:[%s813 + $0x50] sm:$0xff]
        %v921 = vld [vmem:[%s813 + $0x58] sm:$0xff]
        %v922 = vld [vmem:[%s813 + $0x60] sm:$0xff]
        %v923 = vld [vmem:[%s813 + $0x68] sm:$0xff]
        %v924 = vld [vmem:[%s813 + $0x70] sm:$0xff]
        %v925 = vld [vmem:[%s813 + $0x78] sm:$0xff]
        %v926 = vld [vmem:[%s820] sm:$0xff]
        %v927 = vld [vmem:[%s820 + $0x8] sm:$0xff]
        %v928 = vld [vmem:[%s820 + $0x10] sm:$0xff]
        %v929 = vld [vmem:[%s820 + $0x18] sm:$0xff]
        %v930 = vld [vmem:[%s820 + $0x20] sm:$0xff]
        %v931 = vld [vmem:[%s820 + $0x28] sm:$0xff]
        %v932 = vld [vmem:[%s820 + $0x30] sm:$0xff]
        %v933 = vld [vmem:[%s820 + $0x38] sm:$0xff]
        %v934 = vld [vmem:[%s820 + $0x40] sm:$0xff]
        %v935 = vld [vmem:[%s820 + $0x48] sm:$0xff]
        %v936 = vld [vmem:[%s820 + $0x50] sm:$0xff]
        %v937 = vld [vmem:[%s820 + $0x58] sm:$0xff]
        %v938 = vld [vmem:[%s820 + $0x60] sm:$0xff]
        %v939 = vld [vmem:[%s820 + $0x68] sm:$0xff]
        %v940 = vld [vmem:[%s820 + $0x70] sm:$0xff]
        %v941 = vld [vmem:[%s820 + $0x78] sm:$0xff]
        %v942 = vld [vmem:[%s820 + $0x80] sm:$0xff]
        %v943 = vld [vmem:[%s820 + $0x88] sm:$0xff]
        %v944 = vld [vmem:[%s820 + $0x90] sm:$0xff]
        %v945 = vld [vmem:[%s820 + $0x98] sm:$0xff]
        %v946 = vld [vmem:[%s820 + $0xa0] sm:$0xff]
        %v947 = vld [vmem:[%s820 + $0xa8] sm:$0xff]
        %v948 = vld [vmem:[%s820 + $0xb0] sm:$0xff]
        %v949 = vld [vmem:[%s820 + $0xb8] sm:$0xff]
        %v950 = vld [vmem:[%s820 + $0xc0] sm:$0xff]
        %v951 = vld [vmem:[%s820 + $0xc8] sm:$0xff]
        %v952 = vld [vmem:[%s820 + $0xd0] sm:$0xff]
        %v953 = vld [vmem:[%s820 + $0xd8] sm:$0xff]
        %v954 = vld [vmem:[%s820 + $0xe0] sm:$0xff]
        %v955 = vld [vmem:[%s820 + $0xe8] sm:$0xff]
        %v956 = vld [vmem:[%s820 + $0xf0] sm:$0xff]
        %v957 = vld [vmem:[%s820 + $0xf8] sm:$0xff]
        %v958 = vld [vmem:[%s820 + $0x100] sm:$0xff]
        %v959 = vld [vmem:[%s820 + $0x108] sm:$0xff]
        %v960 = vld [vmem:[%s820 + $0x110] sm:$0xff]
        %v961 = vld [vmem:[%s820 + $0x118] sm:$0xff]
        %v962 = vld [vmem:[%s820 + $0x120] sm:$0xff]
        %v963 = vld [vmem:[%s820 + $0x128] sm:$0xff]
        %v964 = vld [vmem:[%s820 + $0x130] sm:$0xff]
        %v965 = vld [vmem:[%s820 + $0x138] sm:$0xff]
        %v966 = vld [vmem:[%s820 + $0x140] sm:$0xff]
        %v967 = vld [vmem:[%s820 + $0x148] sm:$0xff]
        %v968 = vld [vmem:[%s820 + $0x150] sm:$0xff]
        %v969 = vld [vmem:[%s820 + $0x158] sm:$0xff]
        %v970 = vld [vmem:[%s820 + $0x160] sm:$0xff]
        %v971 = vld [vmem:[%s820 + $0x168] sm:$0xff]
        %v972 = vld [vmem:[%s820 + $0x170] sm:$0xff]
        %v973 = vld [vmem:[%s820 + $0x178] sm:$0xff]
        %v974 = vld [vmem:[%s820 + $0x180] sm:$0xff]
        %v975 = vld [vmem:[%s820 + $0x188] sm:$0xff]
        %v976 = vld [vmem:[%s820 + $0x190] sm:$0xff]
        %v977 = vld [vmem:[%s820 + $0x198] sm:$0xff]
        %v978 = vld [vmem:[%s820 + $0x1a0] sm:$0xff]
        %v979 = vld [vmem:[%s820 + $0x1a8] sm:$0xff]
        %v980 = vld [vmem:[%s820 + $0x1b0] sm:$0xff]
        %v981 = vld [vmem:[%s820 + $0x1b8] sm:$0xff]
        %v982 = vld [vmem:[%s820 + $0x1c0] sm:$0xff]
        %v983 = vld [vmem:[%s820 + $0x1c8] sm:$0xff]
        %v984 = vld [vmem:[%s820 + $0x1d0] sm:$0xff]
        %v985 = vld [vmem:[%s820 + $0x1d8] sm:$0xff]
        %v986 = vld [vmem:[%s820 + $0x1e0] sm:$0xff]
        %v987 = vld [vmem:[%s820 + $0x1e8] sm:$0xff]
        %v988 = vld [vmem:[%s820 + $0x1f0] sm:$0xff]
        %v989 = vld [vmem:[%s820 + $0x1f8] sm:$0xff]
        %v990 = vld [vmem:[%s820 + $0x200] sm:$0xff]
        %v991 = vld [vmem:[%s820 + $0x208] sm:$0xff]
        %v992 = vld [vmem:[%s820 + $0x210] sm:$0xff]
        %v993 = vld [vmem:[%s820 + $0x218] sm:$0xff]
        %v994 = vld [vmem:[%s820 + $0x220] sm:$0xff]
        %v995 = vld [vmem:[%s820 + $0x228] sm:$0xff]
        %v996 = vld [vmem:[%s820 + $0x230] sm:$0xff]
        %v997 = vld [vmem:[%s820 + $0x238] sm:$0xff]
        %v998 = vld [vmem:[%s820 + $0x240] sm:$0xff]
        %v999 = vld [vmem:[%s820 + $0x248] sm:$0xff]
        %v1000 = vld [vmem:[%s820 + $0x250] sm:$0xff]
        %v1001 = vld [vmem:[%s820 + $0x258] sm:$0xff]
        %v1002 = vld [vmem:[%s820 + $0x260] sm:$0xff]
        %v1003 = vld [vmem:[%s820 + $0x268] sm:$0xff]
        %v1004 = vld [vmem:[%s820 + $0x270] sm:$0xff]
        %v1005 = vld [vmem:[%s820 + $0x278] sm:$0xff]
        %v1006 = vld [vmem:[%s820 + $0x280] sm:$0xff]
        %v1007 = vld [vmem:[%s820 + $0x288] sm:$0xff]
        %v1008 = vld [vmem:[%s820 + $0x290] sm:$0xff]
        %v1009 = vld [vmem:[%s820 + $0x298] sm:$0xff]
        %v1010 = vld [vmem:[%s820 + $0x2a0] sm:$0xff]
        %v1011 = vld [vmem:[%s820 + $0x2a8] sm:$0xff]
        %v1012 = vld [vmem:[%s820 + $0x2b0] sm:$0xff]
        %v1013 = vld [vmem:[%s820 + $0x2b8] sm:$0xff]
        %v1014 = vld [vmem:[%s820 + $0x2c0] sm:$0xff]
        %v1015 = vld [vmem:[%s820 + $0x2c8] sm:$0xff]
        %v1016 = vld [vmem:[%s820 + $0x2d0] sm:$0xff]
        %v1017 = vld [vmem:[%s820 + $0x2d8] sm:$0xff]
        %v1018 = vld [vmem:[%s820 + $0x2e0] sm:$0xff]
        %v1019 = vld [vmem:[%s820 + $0x2e8] sm:$0xff]
        %v1020 = vld [vmem:[%s820 + $0x2f0] sm:$0xff]
        %v1021 = vld [vmem:[%s820 + $0x2f8] sm:$0xff]
        %v1022 = vld [vmem:[%s820 + $0x300] sm:$0xff]
        %v1023 = vld [vmem:[%s820 + $0x308] sm:$0xff]
        %v1024 = vld [vmem:[%s820 + $0x310] sm:$0xff]
        %v1025 = vld [vmem:[%s820 + $0x318] sm:$0xff]
        %v1026 = vld [vmem:[%s820 + $0x320] sm:$0xff]
        %v1027 = vld [vmem:[%s820 + $0x328] sm:$0xff]
        %v1028 = vld [vmem:[%s820 + $0x330] sm:$0xff]
        %v1029 = vld [vmem:[%s820 + $0x338] sm:$0xff]
        %v1030 = vld [vmem:[%s820 + $0x340] sm:$0xff]
        %v1031 = vld [vmem:[%s820 + $0x348] sm:$0xff]
        %v1032 = vld [vmem:[%s820 + $0x350] sm:$0xff]
        %v1033 = vld [vmem:[%s820 + $0x358] sm:$0xff]
        %v1034 = vld [vmem:[%s820 + $0x360] sm:$0xff]
        %v1035 = vld [vmem:[%s820 + $0x368] sm:$0xff]
        %v1036 = vld [vmem:[%s820 + $0x370] sm:$0xff]
        %v1037 = vld [vmem:[%s820 + $0x378] sm:$0xff]
        %v1038 = vld [vmem:[%s820 + $0x380] sm:$0xff]
        %v1039 = vld [vmem:[%s820 + $0x388] sm:$0xff]
        %v1040 = vld [vmem:[%s820 + $0x390] sm:$0xff]
        %v1041 = vld [vmem:[%s820 + $0x398] sm:$0xff]
        %v1042 = vld [vmem:[%s820 + $0x3a0] sm:$0xff]
        %v1043 = vld [vmem:[%s820 + $0x3a8] sm:$0xff]
        %v1044 = vld [vmem:[%s820 + $0x3b0] sm:$0xff]
        %v1045 = vld [vmem:[%s820 + $0x3b8] sm:$0xff]
        %v1046 = vld [vmem:[%s820 + $0x3c0] sm:$0xff]
        %v1047 = vld [vmem:[%s820 + $0x3c8] sm:$0xff]
        %v1048 = vld [vmem:[%s820 + $0x3d0] sm:$0xff]
        %v1049 = vld [vmem:[%s820 + $0x3d8] sm:$0xff]
        %v1050 = vld [vmem:[%s820 + $0x3e0] sm:$0xff]
        %v1051 = vld [vmem:[%s820 + $0x3e8] sm:$0xff]
        %v1052 = vld [vmem:[%s820 + $0x3f0] sm:$0xff]
        %v1053 = vld [vmem:[%s820 + $0x3f8] sm:$0xff]
        %v1070 = vunpack.c.l.b16 %v910
        %v1071 = vunpack.c.h.b16 %v910
        %v1072 = vunpack.c.l.b16 %v911
        %v1073 = vunpack.c.h.b16 %v911
        %v1074 = vunpack.c.l.b16 %v912
        %v1075 = vunpack.c.h.b16 %v912
        %v1076 = vunpack.c.l.b16 %v913
        %v1077 = vunpack.c.h.b16 %v913
        %v1078 = vunpack.c.l.b16 %v914
        %v1079 = vunpack.c.h.b16 %v914
        %v1080 = vunpack.c.l.b16 %v915
        %v1081 = vunpack.c.h.b16 %v915
        %v1082 = vunpack.c.l.b16 %v916
        %v1083 = vunpack.c.h.b16 %v916
        %v1084 = vunpack.c.l.b16 %v917
        %v1085 = vunpack.c.h.b16 %v917
        %v1086 = vunpack.c.l.b16 %v918
        %v1087 = vunpack.c.h.b16 %v918
        %v1088 = vunpack.c.l.b16 %v919
        %v1089 = vunpack.c.h.b16 %v919
        %v1090 = vunpack.c.l.b16 %v920
        %v1091 = vunpack.c.h.b16 %v920
        %v1092 = vunpack.c.l.b16 %v921
        %v1093 = vunpack.c.h.b16 %v921
        %v1094 = vunpack.c.l.b16 %v922
        %v1095 = vunpack.c.h.b16 %v922
        %v1096 = vunpack.c.l.b16 %v923
        %v1097 = vunpack.c.h.b16 %v923
        %v1098 = vunpack.c.l.b16 %v924
        %v1099 = vunpack.c.h.b16 %v924
        %v1100 = vunpack.c.l.b16 %v925
        %v1101 = vunpack.c.h.b16 %v925
        %v1102 = vpack.c.b16 %v1078, %v1070
        %v1103 = vpack.c.b16 %v1079, %v1071
        %v1104 = vpack.c.b16 %v1080, %v1072
        %v1105 = vpack.c.b16 %v1081, %v1073
        %v1106 = vpack.c.b16 %v1082, %v1074
        %v1107 = vpack.c.b16 %v1083, %v1075
        %v1108 = vpack.c.b16 %v1084, %v1076
        %v1109 = vpack.c.b16 %v1085, %v1077
        %v1110 = vpack.c.b16 %v1094, %v1086
        %v1111 = vpack.c.b16 %v1095, %v1087
        %v1112 = vpack.c.b16 %v1096, %v1088
        %v1113 = vpack.c.b16 %v1097, %v1089
        %v1114 = vpack.c.b16 %v1098, %v1090
        %v1115 = vpack.c.b16 %v1099, %v1091
        %v1116 = vpack.c.b16 %v1100, %v1092
        %v1117 = vpack.c.b16 %v1101, %v1093
        %v1262 = vunpack.c.l.b16 %v926
        %v1263 = vunpack.c.h.b16 %v926
        %v1264 = vunpack.c.l.b16 %v927
        %v1265 = vunpack.c.h.b16 %v927
        %v1266 = vunpack.c.l.b16 %v928
        %v1267 = vunpack.c.h.b16 %v928
        %v1268 = vunpack.c.l.b16 %v929
        %v1269 = vunpack.c.h.b16 %v929
        %v1270 = vunpack.c.l.b16 %v930
        %v1271 = vunpack.c.h.b16 %v930
        %v1272 = vunpack.c.l.b16 %v931
        %v1273 = vunpack.c.h.b16 %v931
        %v1274 = vunpack.c.l.b16 %v932
        %v1275 = vunpack.c.h.b16 %v932
        %v1276 = vunpack.c.l.b16 %v933
        %v1277 = vunpack.c.h.b16 %v933
        %v1278 = vunpack.c.l.b16 %v934
        %v1279 = vunpack.c.h.b16 %v934
        %v1280 = vunpack.c.l.b16 %v935
        %v1281 = vunpack.c.h.b16 %v935
        %v1282 = vunpack.c.l.b16 %v936
        %v1283 = vunpack.c.h.b16 %v936
        %v1284 = vunpack.c.l.b16 %v937
        %v1285 = vunpack.c.h.b16 %v937
        %v1286 = vunpack.c.l.b16 %v938
        %v1287 = vunpack.c.h.b16 %v938
        %v1288 = vunpack.c.l.b16 %v939
        %v1289 = vunpack.c.h.b16 %v939
        %v1290 = vunpack.c.l.b16 %v940
        %v1291 = vunpack.c.h.b16 %v940
        %v1292 = vunpack.c.l.b16 %v941
        %v1293 = vunpack.c.h.b16 %v941
        %v1294 = vunpack.c.l.b16 %v942
        %v1295 = vunpack.c.h.b16 %v942
        %v1296 = vunpack.c.l.b16 %v943
        %v1297 = vunpack.c.h.b16 %v943
        %v1298 = vunpack.c.l.b16 %v944
        %v1299 = vunpack.c.h.b16 %v944
        %v1300 = vunpack.c.l.b16 %v945
        %v1301 = vunpack.c.h.b16 %v945
        %v1302 = vunpack.c.l.b16 %v946
        %v1303 = vunpack.c.h.b16 %v946
        %v1304 = vunpack.c.l.b16 %v947
        %v1305 = vunpack.c.h.b16 %v947
        %v1306 = vunpack.c.l.b16 %v948
        %v1307 = vunpack.c.h.b16 %v948
        %v1308 = vunpack.c.l.b16 %v949
        %v1309 = vunpack.c.h.b16 %v949
        %v1310 = vunpack.c.l.b16 %v950
        %v1311 = vunpack.c.h.b16 %v950
        %v1312 = vunpack.c.l.b16 %v951
        %v1313 = vunpack.c.h.b16 %v951
        %v1314 = vunpack.c.l.b16 %v952
        %v1315 = vunpack.c.h.b16 %v952
        %v1316 = vunpack.c.l.b16 %v953
        %v1317 = vunpack.c.h.b16 %v953
        %v1318 = vunpack.c.l.b16 %v954
        %v1319 = vunpack.c.h.b16 %v954
        %v1320 = vunpack.c.l.b16 %v955
        %v1321 = vunpack.c.h.b16 %v955
        %v1322 = vunpack.c.l.b16 %v956
        %v1323 = vunpack.c.h.b16 %v956
        %v1324 = vunpack.c.l.b16 %v957
        %v1325 = vunpack.c.h.b16 %v957
        %v1326 = vunpack.c.l.b16 %v958
        %v1327 = vunpack.c.h.b16 %v958
        %v1328 = vunpack.c.l.b16 %v959
        %v1329 = vunpack.c.h.b16 %v959
        %v1330 = vunpack.c.l.b16 %v960
        %v1331 = vunpack.c.h.b16 %v960
        %v1332 = vunpack.c.l.b16 %v961
        %v1333 = vunpack.c.h.b16 %v961
        %v1334 = vunpack.c.l.b16 %v962
        %v1335 = vunpack.c.h.b16 %v962
        %v1336 = vunpack.c.l.b16 %v963
        %v1337 = vunpack.c.h.b16 %v963
        %v1338 = vunpack.c.l.b16 %v964
        %v1339 = vunpack.c.h.b16 %v964
        %v1340 = vunpack.c.l.b16 %v965
        %v1341 = vunpack.c.h.b16 %v965
        %v1342 = vunpack.c.l.b16 %v966
        %v1343 = vunpack.c.h.b16 %v966
        %v1344 = vunpack.c.l.b16 %v967
        %v1345 = vunpack.c.h.b16 %v967
        %v1346 = vunpack.c.l.b16 %v968
        %v1347 = vunpack.c.h.b16 %v968
        %v1348 = vunpack.c.l.b16 %v969
        %v1349 = vunpack.c.h.b16 %v969
        %v1350 = vunpack.c.l.b16 %v970
        %v1351 = vunpack.c.h.b16 %v970
        %v1352 = vunpack.c.l.b16 %v971
        %v1353 = vunpack.c.h.b16 %v971
        %v1354 = vunpack.c.l.b16 %v972
        %v1355 = vunpack.c.h.b16 %v972
        %v1356 = vunpack.c.l.b16 %v973
        %v1357 = vunpack.c.h.b16 %v973
        %v1358 = vunpack.c.l.b16 %v974
        %v1359 = vunpack.c.h.b16 %v974
        %v1360 = vunpack.c.l.b16 %v975
        %v1361 = vunpack.c.h.b16 %v975
        %v1362 = vunpack.c.l.b16 %v976
        %v1363 = vunpack.c.h.b16 %v976
        %v1364 = vunpack.c.l.b16 %v977
        %v1365 = vunpack.c.h.b16 %v977
        %v1366 = vunpack.c.l.b16 %v978
        %v1367 = vunpack.c.h.b16 %v978
        %v1368 = vunpack.c.l.b16 %v979
        %v1369 = vunpack.c.h.b16 %v979
        %v1370 = vunpack.c.l.b16 %v980
        %v1371 = vunpack.c.h.b16 %v980
        %v1372 = vunpack.c.l.b16 %v981
        %v1373 = vunpack.c.h.b16 %v981
        %v1374 = vunpack.c.l.b16 %v982
        %v1375 = vunpack.c.h.b16 %v982
        %v1376 = vunpack.c.l.b16 %v983
        %v1377 = vunpack.c.h.b16 %v983
        %v1378 = vunpack.c.l.b16 %v984
        %v1379 = vunpack.c.h.b16 %v984
        %v1380 = vunpack.c.l.b16 %v985
        %v1381 = vunpack.c.h.b16 %v985
        %v1382 = vunpack.c.l.b16 %v986
        %v1383 = vunpack.c.h.b16 %v986
        %v1384 = vunpack.c.l.b16 %v987
        %v1385 = vunpack.c.h.b16 %v987
        %v1386 = vunpack.c.l.b16 %v988
        %v1387 = vunpack.c.h.b16 %v988
        %v1388 = vunpack.c.l.b16 %v989
        %v1389 = vunpack.c.h.b16 %v989
        %v1390 = vunpack.c.l.b16 %v990
        %v1391 = vunpack.c.h.b16 %v990
        %v1392 = vunpack.c.l.b16 %v991
        %v1393 = vunpack.c.h.b16 %v991
        %v1394 = vunpack.c.l.b16 %v992
        %v1395 = vunpack.c.h.b16 %v992
        %v1396 = vunpack.c.l.b16 %v993
        %v1397 = vunpack.c.h.b16 %v993
        %v1398 = vunpack.c.l.b16 %v994
        %v1399 = vunpack.c.h.b16 %v994
        %v1400 = vunpack.c.l.b16 %v995
        %v1401 = vunpack.c.h.b16 %v995
        %v1402 = vunpack.c.l.b16 %v996
        %v1403 = vunpack.c.h.b16 %v996
        %v1404 = vunpack.c.l.b16 %v997
        %v1405 = vunpack.c.h.b16 %v997
        %v1406 = vunpack.c.l.b16 %v998
        %v1407 = vunpack.c.h.b16 %v998
        %v1408 = vunpack.c.l.b16 %v999
        %v1409 = vunpack.c.h.b16 %v999
        %v1410 = vunpack.c.l.b16 %v1000
        %v1411 = vunpack.c.h.b16 %v1000
        %v1412 = vunpack.c.l.b16 %v1001
        %v1413 = vunpack.c.h.b16 %v1001
        %v1414 = vunpack.c.l.b16 %v1002
        %v1415 = vunpack.c.h.b16 %v1002
        %v1416 = vunpack.c.l.b16 %v1003
        %v1417 = vunpack.c.h.b16 %v1003
        %v1418 = vunpack.c.l.b16 %v1004
        %v1419 = vunpack.c.h.b16 %v1004
        %v1420 = vunpack.c.l.b16 %v1005
        %v1421 = vunpack.c.h.b16 %v1005
        %v1422 = vunpack.c.l.b16 %v1006
        %v1423 = vunpack.c.h.b16 %v1006
        %v1424 = vunpack.c.l.b16 %v1007
        %v1425 = vunpack.c.h.b16 %v1007
        %v1426 = vunpack.c.l.b16 %v1008
        %v1427 = vunpack.c.h.b16 %v1008
        %v1428 = vunpack.c.l.b16 %v1009
        %v1429 = vunpack.c.h.b16 %v1009
        %v1430 = vunpack.c.l.b16 %v1010
        %v1431 = vunpack.c.h.b16 %v1010
        %v1432 = vunpack.c.l.b16 %v1011
        %v1433 = vunpack.c.h.b16 %v1011
        %v1434 = vunpack.c.l.b16 %v1012
        %v1435 = vunpack.c.h.b16 %v1012
        %v1436 = vunpack.c.l.b16 %v1013
        %v1437 = vunpack.c.h.b16 %v1013
        %v1438 = vunpack.c.l.b16 %v1014
        %v1439 = vunpack.c.h.b16 %v1014
        %v1440 = vunpack.c.l.b16 %v1015
        %v1441 = vunpack.c.h.b16 %v1015
        %v1442 = vunpack.c.l.b16 %v1016
        %v1443 = vunpack.c.h.b16 %v1016
        %v1444 = vunpack.c.l.b16 %v1017
        %v1445 = vunpack.c.h.b16 %v1017
        %v1446 = vunpack.c.l.b16 %v1018
        %v1447 = vunpack.c.h.b16 %v1018
        %v1448 = vunpack.c.l.b16 %v1019
        %v1449 = vunpack.c.h.b16 %v1019
        %v1450 = vunpack.c.l.b16 %v1020
        %v1451 = vunpack.c.h.b16 %v1020
        %v1452 = vunpack.c.l.b16 %v1021
        %v1453 = vunpack.c.h.b16 %v1021
        %v1454 = vunpack.c.l.b16 %v1022
        %v1455 = vunpack.c.h.b16 %v1022
        %v1456 = vunpack.c.l.b16 %v1023
        %v1457 = vunpack.c.h.b16 %v1023
        %v1458 = vunpack.c.l.b16 %v1024
        %v1459 = vunpack.c.h.b16 %v1024
        %v1460 = vunpack.c.l.b16 %v1025
        %v1461 = vunpack.c.h.b16 %v1025
        %v1462 = vunpack.c.l.b16 %v1026
        %v1463 = vunpack.c.h.b16 %v1026
        %v1464 = vunpack.c.l.b16 %v1027
        %v1465 = vunpack.c.h.b16 %v1027
        %v1466 = vunpack.c.l.b16 %v1028
        %v1467 = vunpack.c.h.b16 %v1028
        %v1468 = vunpack.c.l.b16 %v1029
        %v1469 = vunpack.c.h.b16 %v1029
        %v1470 = vunpack.c.l.b16 %v1030
        %v1471 = vunpack.c.h.b16 %v1030
        %v1472 = vunpack.c.l.b16 %v1031
        %v1473 = vunpack.c.h.b16 %v1031
        %v1474 = vunpack.c.l.b16 %v1032
        %v1475 = vunpack.c.h.b16 %v1032
        %v1476 = vunpack.c.l.b16 %v1033
        %v1477 = vunpack.c.h.b16 %v1033
        %v1478 = vunpack.c.l.b16 %v1034
        %v1479 = vunpack.c.h.b16 %v1034
        %v1480 = vunpack.c.l.b16 %v1035
        %v1481 = vunpack.c.h.b16 %v1035
        %v1482 = vunpack.c.l.b16 %v1036
        %v1483 = vunpack.c.h.b16 %v1036
        %v1484 = vunpack.c.l.b16 %v1037
        %v1485 = vunpack.c.h.b16 %v1037
        %v1486 = vunpack.c.l.b16 %v1038
        %v1487 = vunpack.c.h.b16 %v1038
        %v1488 = vunpack.c.l.b16 %v1039
        %v1489 = vunpack.c.h.b16 %v1039
        %v1490 = vunpack.c.l.b16 %v1040
        %v1491 = vunpack.c.h.b16 %v1040
        %v1492 = vunpack.c.l.b16 %v1041
        %v1493 = vunpack.c.h.b16 %v1041
        %v1494 = vunpack.c.l.b16 %v1042
        %v1495 = vunpack.c.h.b16 %v1042
        %v1496 = vunpack.c.l.b16 %v1043
        %v1497 = vunpack.c.h.b16 %v1043
        %v1498 = vunpack.c.l.b16 %v1044
        %v1499 = vunpack.c.h.b16 %v1044
        %v1500 = vunpack.c.l.b16 %v1045
        %v1501 = vunpack.c.h.b16 %v1045
        %v1502 = vunpack.c.l.b16 %v1046
        %v1503 = vunpack.c.h.b16 %v1046
        %v1504 = vunpack.c.l.b16 %v1047
        %v1505 = vunpack.c.h.b16 %v1047
        %v1506 = vunpack.c.l.b16 %v1048
        %v1507 = vunpack.c.h.b16 %v1048
        %v1508 = vunpack.c.l.b16 %v1049
        %v1509 = vunpack.c.h.b16 %v1049
        %v1510 = vunpack.c.l.b16 %v1050
        %v1511 = vunpack.c.h.b16 %v1050
        %v1512 = vunpack.c.l.b16 %v1051
        %v1513 = vunpack.c.h.b16 %v1051
        %v1514 = vunpack.c.l.b16 %v1052
        %v1515 = vunpack.c.h.b16 %v1052
        %v1516 = vunpack.c.l.b16 %v1053
        %v1517 = vunpack.c.h.b16 %v1053
        %v1518 = vpack.c.b16 %v1264, %v1262
        %v1519 = vpack.c.b16 %v1265, %v1263
        %v1520 = vpack.c.b16 %v1268, %v1266
        %v1521 = vpack.c.b16 %v1269, %v1267
        %v1522 = vpack.c.b16 %v1272, %v1270
        %v1523 = vpack.c.b16 %v1273, %v1271
        %v1524 = vpack.c.b16 %v1276, %v1274
        %v1525 = vpack.c.b16 %v1277, %v1275
        %v1526 = vpack.c.b16 %v1280, %v1278
        %v1527 = vpack.c.b16 %v1281, %v1279
        %v1528 = vpack.c.b16 %v1284, %v1282
        %v1529 = vpack.c.b16 %v1285, %v1283
        %v1530 = vpack.c.b16 %v1288, %v1286
        %v1531 = vpack.c.b16 %v1289, %v1287
        %v1532 = vpack.c.b16 %v1292, %v1290
        %v1533 = vpack.c.b16 %v1293, %v1291
        %v1534 = vpack.c.b16 %v1296, %v1294
        %v1535 = vpack.c.b16 %v1297, %v1295
        %v1536 = vpack.c.b16 %v1300, %v1298
        %v1537 = vpack.c.b16 %v1301, %v1299
        %v1538 = vpack.c.b16 %v1304, %v1302
        %v1539 = vpack.c.b16 %v1305, %v1303
        %v1540 = vpack.c.b16 %v1308, %v1306
        %v1541 = vpack.c.b16 %v1309, %v1307
        %v1542 = vpack.c.b16 %v1312, %v1310
        %v1543 = vpack.c.b16 %v1313, %v1311
        %v1544 = vpack.c.b16 %v1316, %v1314
        %v1545 = vpack.c.b16 %v1317, %v1315
        %v1546 = vpack.c.b16 %v1320, %v1318
        %v1547 = vpack.c.b16 %v1321, %v1319
        %v1548 = vpack.c.b16 %v1324, %v1322
        %v1549 = vpack.c.b16 %v1325, %v1323
        %v1550 = vpack.c.b16 %v1328, %v1326
        %v1551 = vpack.c.b16 %v1329, %v1327
        %v1552 = vpack.c.b16 %v1332, %v1330
        %v1553 = vpack.c.b16 %v1333, %v1331
        %v1554 = vpack.c.b16 %v1336, %v1334
        %v1555 = vpack.c.b16 %v1337, %v1335
        %v1556 = vpack.c.b16 %v1340, %v1338
        %v1557 = vpack.c.b16 %v1341, %v1339
        %v1558 = vpack.c.b16 %v1344, %v1342
        %v1559 = vpack.c.b16 %v1345, %v1343
        %v1560 = vpack.c.b16 %v1348, %v1346
        %v1561 = vpack.c.b16 %v1349, %v1347
        %v1562 = vpack.c.b16 %v1352, %v1350
        %v1563 = vpack.c.b16 %v1353, %v1351
        %v1564 = vpack.c.b16 %v1356, %v1354
        %v1565 = vpack.c.b16 %v1357, %v1355
        %v1566 = vpack.c.b16 %v1360, %v1358
        %v1567 = vpack.c.b16 %v1361, %v1359
        %v1568 = vpack.c.b16 %v1364, %v1362
        %v1569 = vpack.c.b16 %v1365, %v1363
        %v1570 = vpack.c.b16 %v1368, %v1366
        %v1571 = vpack.c.b16 %v1369, %v1367
        %v1572 = vpack.c.b16 %v1372, %v1370
        %v1573 = vpack.c.b16 %v1373, %v1371
        %v1574 = vpack.c.b16 %v1376, %v1374
        %v1575 = vpack.c.b16 %v1377, %v1375
        %v1576 = vpack.c.b16 %v1380, %v1378
        %v1577 = vpack.c.b16 %v1381, %v1379
        %v1578 = vpack.c.b16 %v1384, %v1382
        %v1579 = vpack.c.b16 %v1385, %v1383
        %v1580 = vpack.c.b16 %v1388, %v1386
        %v1581 = vpack.c.b16 %v1389, %v1387
        %v1582 = vpack.c.b16 %v1392, %v1390
        %v1583 = vpack.c.b16 %v1393, %v1391
        %v1584 = vpack.c.b16 %v1396, %v1394
        %v1585 = vpack.c.b16 %v1397, %v1395
        %v1586 = vpack.c.b16 %v1400, %v1398
        %v1587 = vpack.c.b16 %v1401, %v1399
        %v1588 = vpack.c.b16 %v1404, %v1402
        %v1589 = vpack.c.b16 %v1405, %v1403
        %v1590 = vpack.c.b16 %v1408, %v1406
        %v1591 = vpack.c.b16 %v1409, %v1407
        %v1592 = vpack.c.b16 %v1412, %v1410
        %v1593 = vpack.c.b16 %v1413, %v1411
        %v1594 = vpack.c.b16 %v1416, %v1414
        %v1595 = vpack.c.b16 %v1417, %v1415
        %v1596 = vpack.c.b16 %v1420, %v1418
        %v1597 = vpack.c.b16 %v1421, %v1419
        %v1598 = vpack.c.b16 %v1424, %v1422
        %v1599 = vpack.c.b16 %v1425, %v1423
        %v1600 = vpack.c.b16 %v1428, %v1426
        %v1601 = vpack.c.b16 %v1429, %v1427
        %v1602 = vpack.c.b16 %v1432, %v1430
        %v1603 = vpack.c.b16 %v1433, %v1431
        %v1604 = vpack.c.b16 %v1436, %v1434
        %v1605 = vpack.c.b16 %v1437, %v1435
        %v1606 = vpack.c.b16 %v1440, %v1438
        %v1607 = vpack.c.b16 %v1441, %v1439
        %v1608 = vpack.c.b16 %v1444, %v1442
        %v1609 = vpack.c.b16 %v1445, %v1443
        %v1610 = vpack.c.b16 %v1448, %v1446
        %v1611 = vpack.c.b16 %v1449, %v1447
        %v1612 = vpack.c.b16 %v1452, %v1450
        %v1613 = vpack.c.b16 %v1453, %v1451
        %v1614 = vpack.c.b16 %v1456, %v1454
        %v1615 = vpack.c.b16 %v1457, %v1455
        %v1616 = vpack.c.b16 %v1460, %v1458
        %v1617 = vpack.c.b16 %v1461, %v1459
        %v1618 = vpack.c.b16 %v1464, %v1462
        %v1619 = vpack.c.b16 %v1465, %v1463
        %v1620 = vpack.c.b16 %v1468, %v1466
        %v1621 = vpack.c.b16 %v1469, %v1467
        %v1622 = vpack.c.b16 %v1472, %v1470
        %v1623 = vpack.c.b16 %v1473, %v1471
        %v1624 = vpack.c.b16 %v1476, %v1474
        %v1625 = vpack.c.b16 %v1477, %v1475
        %v1626 = vpack.c.b16 %v1480, %v1478
        %v1627 = vpack.c.b16 %v1481, %v1479
        %v1628 = vpack.c.b16 %v1484, %v1482
        %v1629 = vpack.c.b16 %v1485, %v1483
        %v1630 = vpack.c.b16 %v1488, %v1486
        %v1631 = vpack.c.b16 %v1489, %v1487
        %v1632 = vpack.c.b16 %v1492, %v1490
        %v1633 = vpack.c.b16 %v1493, %v1491
        %v1634 = vpack.c.b16 %v1496, %v1494
        %v1635 = vpack.c.b16 %v1497, %v1495
        %v1636 = vpack.c.b16 %v1500, %v1498
        %v1637 = vpack.c.b16 %v1501, %v1499
        %v1638 = vpack.c.b16 %v1504, %v1502
        %v1639 = vpack.c.b16 %v1505, %v1503
        %v1640 = vpack.c.b16 %v1508, %v1506
        %v1641 = vpack.c.b16 %v1509, %v1507
        %v1642 = vpack.c.b16 %v1512, %v1510
        %v1643 = vpack.c.b16 %v1513, %v1511
        %v1644 = vpack.c.b16 %v1516, %v1514
        %v1645 = vpack.c.b16 %v1517, %v1515
        %1774 = vmatpush.bf16.msra.mxu0 %v1532
        %1775 = vmatpush.bf16.msra.mxu0 %v1530
        %1776 = vmatpush.bf16.msra.mxu0 %v1528
        %1777 = vmatpush.bf16.msra.mxu0 %v1526
        %1778 = vmatpush.bf16.msra.mxu0 %v1524
        %1779 = vmatpush.bf16.msra.mxu0 %v1522
        %1780 = vmatpush.bf16.msra.mxu0 %v1520
        %1781 = vmatpush.bf16.msra.mxu0 %v1518
        %1782 = vmatmul.bf16.gmra.mxu0 %v1102
        %v1783 = vpop.f32.mrf.mxu0
        %v1784 = vadd.f32 0.0, %v1783
        %v1785 = vpop.f32.mrf.mxu0
        %v1786 = vadd.f32 0.0, %v1785
        %1787 = vmatmul.bf16.gmra.mxu0 %v1110
        %v1788 = vpop.f32.mrf.mxu0
        %v1789 = vadd.f32 0.0, %v1788
        %v1790 = vpop.f32.mrf.mxu0
        %v1791 = vadd.f32 0.0, %v1790
        %1792 = vdwg.mxu0
        %1793 = vmatpush.bf16.msra.mxu0 %v1548
        %1794 = vmatpush.bf16.msra.mxu0 %v1546
        %1795 = vmatpush.bf16.msra.mxu0 %v1544
        %1796 = vmatpush.bf16.msra.mxu0 %v1542
        %1797 = vmatpush.bf16.msra.mxu0 %v1540
        %1798 = vmatpush.bf16.msra.mxu0 %v1538
        %1799 = vmatpush.bf16.msra.mxu0 %v1536
        %1800 = vmatpush.bf16.msra.mxu0 %v1534
        %1801 = vmatmul.bf16.gmra.mxu0 %v1103
        %v1802 = vpop.f32.mrf.mxu0
        %v1803 = vadd.f32 %v1784, %v1802
        %v1804 = vpop.f32.mrf.mxu0
        %v1805 = vadd.f32 %v1786, %v1804
        %1806 = vmatmul.bf16.gmra.mxu0 %v1111
        %v1807 = vpop.f32.mrf.mxu0
        %v1808 = vadd.f32 %v1789, %v1807
        %v1809 = vpop.f32.mrf.mxu0
        %v1810 = vadd.f32 %v1791, %v1809
        %1811 = vdwg.mxu0
        %1812 = vmatpush.bf16.msra.mxu0 %v1564
        %1813 = vmatpush.bf16.msra.mxu0 %v1562
        %1814 = vmatpush.bf16.msra.mxu0 %v1560
        %1815 = vmatpush.bf16.msra.mxu0 %v1558
        %1816 = vmatpush.bf16.msra.mxu0 %v1556
        %1817 = vmatpush.bf16.msra.mxu0 %v1554
        %1818 = vmatpush.bf16.msra.mxu0 %v1552
        %1819 = vmatpush.bf16.msra.mxu0 %v1550
        %1820 = vmatmul.bf16.gmra.mxu0 %v1104
        %v1821 = vpop.f32.mrf.mxu0
        %v1822 = vadd.f32 %v1803, %v1821
        %v1823 = vpop.f32.mrf.mxu0
        %v1824 = vadd.f32 %v1805, %v1823
        %1825 = vmatmul.bf16.gmra.mxu0 %v1112
        %v1826 = vpop.f32.mrf.mxu0
        %v1827 = vadd.f32 %v1808, %v1826
        %v1828 = vpop.f32.mrf.mxu0
        %v1829 = vadd.f32 %v1810, %v1828
        %1830 = vdwg.mxu0
        %1831 = vmatpush.bf16.msra.mxu0 %v1580
        %1832 = vmatpush.bf16.msra.mxu0 %v1578
        %1833 = vmatpush.bf16.msra.mxu0 %v1576
        %1834 = vmatpush.bf16.msra.mxu0 %v1574
        %1835 = vmatpush.bf16.msra.mxu0 %v1572
        %1836 = vmatpush.bf16.msra.mxu0 %v1570
        %1837 = vmatpush.bf16.msra.mxu0 %v1568
        %1838 = vmatpush.bf16.msra.mxu0 %v1566
        %1839 = vmatmul.bf16.gmra.mxu0 %v1105
        %v1840 = vpop.f32.mrf.mxu0
        %v1841 = vadd.f32 %v1822, %v1840
        %v1842 = vpop.f32.mrf.mxu0
        %v1843 = vadd.f32 %v1824, %v1842
        %1844 = vmatmul.bf16.gmra.mxu0 %v1113
        %v1845 = vpop.f32.mrf.mxu0
        %v1846 = vadd.f32 %v1827, %v1845
        %v1847 = vpop.f32.mrf.mxu0
        %v1848 = vadd.f32 %v1829, %v1847
        %1849 = vdwg.mxu0
        %1850 = vmatpush.bf16.msra.mxu0 %v1596
        %1851 = vmatpush.bf16.msra.mxu0 %v1594
        %1852 = vmatpush.bf16.msra.mxu0 %v1592
        %1853 = vmatpush.bf16.msra.mxu0 %v1590
        %1854 = vmatpush.bf16.msra.mxu0 %v1588
        %1855 = vmatpush.bf16.msra.mxu0 %v1586
        %1856 = vmatpush.bf16.msra.mxu0 %v1584
        %1857 = vmatpush.bf16.msra.mxu0 %v1582
        %1858 = vmatmul.bf16.gmra.mxu0 %v1106
        %v1859 = vpop.f32.mrf.mxu0
        %v1860 = vadd.f32 %v1841, %v1859
        %v1861 = vpop.f32.mrf.mxu0
        %v1862 = vadd.f32 %v1843, %v1861
        %1863 = vmatmul.bf16.gmra.mxu0 %v1114
        %v1864 = vpop.f32.mrf.mxu0
        %v1865 = vadd.f32 %v1846, %v1864
        %v1866 = vpop.f32.mrf.mxu0
        %v1867 = vadd.f32 %v1848, %v1866
        %1868 = vdwg.mxu0
        %1869 = vmatpush.bf16.msra.mxu0 %v1612
        %1870 = vmatpush.bf16.msra.mxu0 %v1610
        %1871 = vmatpush.bf16.msra.mxu0 %v1608
        %1872 = vmatpush.bf16.msra.mxu0 %v1606
        %1873 = vmatpush.bf16.msra.mxu0 %v1604
        %1874 = vmatpush.bf16.msra.mxu0 %v1602
        %1875 = vmatpush.bf16.msra.mxu0 %v1600
        %1876 = vmatpush.bf16.msra.mxu0 %v1598
        %1877 = vmatmul.bf16.gmra.mxu0 %v1107
        %v1878 = vpop.f32.mrf.mxu0
        %v1879 = vadd.f32 %v1860, %v1878
        %v1880 = vpop.f32.mrf.mxu0
        %v1881 = vadd.f32 %v1862, %v1880
        %1882 = vmatmul.bf16.gmra.mxu0 %v1115
        %v1883 = vpop.f32.mrf.mxu0
        %v1884 = vadd.f32 %v1865, %v1883
        %v1885 = vpop.f32.mrf.mxu0
        %v1886 = vadd.f32 %v1867, %v1885
        %1887 = vdwg.mxu0
        %1888 = vmatpush.bf16.msra.mxu0 %v1628
        %1889 = vmatpush.bf16.msra.mxu0 %v1626
        %1890 = vmatpush.bf16.msra.mxu0 %v1624
        %1891 = vmatpush.bf16.msra.mxu0 %v1622
        %1892 = vmatpush.bf16.msra.mxu0 %v1620
        %1893 = vmatpush.bf16.msra.mxu0 %v1618
        %1894 = vmatpush.bf16.msra.mxu0 %v1616
        %1895 = vmatpush.bf16.msra.mxu0 %v1614
        %1896 = vmatmul.bf16.gmra.mxu0 %v1108
        %v1897 = vpop.f32.mrf.mxu0
        %v1898 = vadd.f32 %v1879, %v1897
        %v1899 = vpop.f32.mrf.mxu0
        %v1900 = vadd.f32 %v1881, %v1899
        %1901 = vmatmul.bf16.gmra.mxu0 %v1116
        %v1902 = vpop.f32.mrf.mxu0
        %v1903 = vadd.f32 %v1884, %v1902
        %v1904 = vpop.f32.mrf.mxu0
        %v1905 = vadd.f32 %v1886, %v1904
        %1906 = vdwg.mxu0
        %1907 = vmatpush.bf16.msra.mxu0 %v1644
        %1908 = vmatpush.bf16.msra.mxu0 %v1642
        %1909 = vmatpush.bf16.msra.mxu0 %v1640
        %1910 = vmatpush.bf16.msra.mxu0 %v1638
        %1911 = vmatpush.bf16.msra.mxu0 %v1636
        %1912 = vmatpush.bf16.msra.mxu0 %v1634
        %1913 = vmatpush.bf16.msra.mxu0 %v1632
        %1914 = vmatpush.bf16.msra.mxu0 %v1630
        %1915 = vmatmul.bf16.gmra.mxu0 %v1109
        %v1916 = vpop.f32.mrf.mxu0
        %v1917 = vadd.f32 %v1898, %v1916
        %v1918 = vpop.f32.mrf.mxu0
        %v1919 = vadd.f32 %v1900, %v1918
        %1920 = vmatmul.bf16.gmra.mxu0 %v1117
        %v1921 = vpop.f32.mrf.mxu0
        %v1922 = vadd.f32 %v1903, %v1921
        %v1923 = vpop.f32.mrf.mxu0
        %v1924 = vadd.f32 %v1905, %v1923
        %1925 = vdwg.mxu0
        %1926 = vmatpush.bf16.msra.mxu0 %v1533
        %1927 = vmatpush.bf16.msra.mxu0 %v1531
        %1928 = vmatpush.bf16.msra.mxu0 %v1529
        %1929 = vmatpush.bf16.msra.mxu0 %v1527
        %1930 = vmatpush.bf16.msra.mxu0 %v1525
        %1931 = vmatpush.bf16.msra.mxu0 %v1523
        %1932 = vmatpush.bf16.msra.mxu0 %v1521
        %1933 = vmatpush.bf16.msra.mxu0 %v1519
        %1934 = vmatmul.bf16.gmra.mxu0 %v1102
        %v1935 = vpop.f32.mrf.mxu0
        %v1936 = vadd.f32 0.0, %v1935
        %v1937 = vpop.f32.mrf.mxu0
        %v1938 = vadd.f32 0.0, %v1937
        %1939 = vmatmul.bf16.gmra.mxu0 %v1110
        %v1940 = vpop.f32.mrf.mxu0
        %v1941 = vadd.f32 0.0, %v1940
        %v1942 = vpop.f32.mrf.mxu0
        %v1943 = vadd.f32 0.0, %v1942
        %1944 = vdwg.mxu0
        %1945 = vmatpush.bf16.msra.mxu0 %v1549
        %1946 = vmatpush.bf16.msra.mxu0 %v1547
        %1947 = vmatpush.bf16.msra.mxu0 %v1545
        %1948 = vmatpush.bf16.msra.mxu0 %v1543
        %1949 = vmatpush.bf16.msra.mxu0 %v1541
        %1950 = vmatpush.bf16.msra.mxu0 %v1539
        %1951 = vmatpush.bf16.msra.mxu0 %v1537
        %1952 = vmatpush.bf16.msra.mxu0 %v1535
        %1953 = vmatmul.bf16.gmra.mxu0 %v1103
        %v1954 = vpop.f32.mrf.mxu0
        %v1955 = vadd.f32 %v1936, %v1954
        %v1956 = vpop.f32.mrf.mxu0
        %v1957 = vadd.f32 %v1938, %v1956
        %1958 = vmatmul.bf16.gmra.mxu0 %v1111
        %v1959 = vpop.f32.mrf.mxu0
        %v1960 = vadd.f32 %v1941, %v1959
        %v1961 = vpop.f32.mrf.mxu0
        %v1962 = vadd.f32 %v1943, %v1961
        %1963 = vdwg.mxu0
        %1964 = vmatpush.bf16.msra.mxu0 %v1565
        %1965 = vmatpush.bf16.msra.mxu0 %v1563
        %1966 = vmatpush.bf16.msra.mxu0 %v1561
        %1967 = vmatpush.bf16.msra.mxu0 %v1559
        %1968 = vmatpush.bf16.msra.mxu0 %v1557
        %1969 = vmatpush.bf16.msra.mxu0 %v1555
        %1970 = vmatpush.bf16.msra.mxu0 %v1553
        %1971 = vmatpush.bf16.msra.mxu0 %v1551
        %1972 = vmatmul.bf16.gmra.mxu0 %v1104
        %v1973 = vpop.f32.mrf.mxu0
        %v1974 = vadd.f32 %v1955, %v1973
        %v1975 = vpop.f32.mrf.mxu0
        %v1976 = vadd.f32 %v1957, %v1975
        %1977 = vmatmul.bf16.gmra.mxu0 %v1112
        %v1978 = vpop.f32.mrf.mxu0
        %v1979 = vadd.f32 %v1960, %v1978
        %v1980 = vpop.f32.mrf.mxu0
        %v1981 = vadd.f32 %v1962, %v1980
        %1982 = vdwg.mxu0
        %1983 = vmatpush.bf16.msra.mxu0 %v1581
        %1984 = vmatpush.bf16.msra.mxu0 %v1579
        %1985 = vmatpush.bf16.msra.mxu0 %v1577
        %1986 = vmatpush.bf16.msra.mxu0 %v1575
        %1987 = vmatpush.bf16.msra.mxu0 %v1573
        %1988 = vmatpush.bf16.msra.mxu0 %v1571
        %1989 = vmatpush.bf16.msra.mxu0 %v1569
        %1990 = vmatpush.bf16.msra.mxu0 %v1567
        %1991 = vmatmul.bf16.gmra.mxu0 %v1105
        %v1992 = vpop.f32.mrf.mxu0
        %v1993 = vadd.f32 %v1974, %v1992
        %v1994 = vpop.f32.mrf.mxu0
        %v1995 = vadd.f32 %v1976, %v1994
        %1996 = vmatmul.bf16.gmra.mxu0 %v1113
        %v1997 = vpop.f32.mrf.mxu0
        %v1998 = vadd.f32 %v1979, %v1997
        %v1999 = vpop.f32.mrf.mxu0
        %v2000 = vadd.f32 %v1981, %v1999
        %2001 = vdwg.mxu0
        %2002 = vmatpush.bf16.msra.mxu0 %v1597
        %2003 = vmatpush.bf16.msra.mxu0 %v1595
        %2004 = vmatpush.bf16.msra.mxu0 %v1593
        %2005 = vmatpush.bf16.msra.mxu0 %v1591
        %2006 = vmatpush.bf16.msra.mxu0 %v1589
        %2007 = vmatpush.bf16.msra.mxu0 %v1587
        %2008 = vmatpush.bf16.msra.mxu0 %v1585
        %2009 = vmatpush.bf16.msra.mxu0 %v1583
        %2010 = vmatmul.bf16.gmra.mxu0 %v1106
        %v2011 = vpop.f32.mrf.mxu0
        %v2012 = vadd.f32 %v1993, %v2011
        %v2013 = vpop.f32.mrf.mxu0
        %v2014 = vadd.f32 %v1995, %v2013
        %2015 = vmatmul.bf16.gmra.mxu0 %v1114
        %v2016 = vpop.f32.mrf.mxu0
        %v2017 = vadd.f32 %v1998, %v2016
        %v2018 = vpop.f32.mrf.mxu0
        %v2019 = vadd.f32 %v2000, %v2018
        %2020 = vdwg.mxu0
        %2021 = vmatpush.bf16.msra.mxu0 %v1613
        %2022 = vmatpush.bf16.msra.mxu0 %v1611
        %2023 = vmatpush.bf16.msra.mxu0 %v1609
        %2024 = vmatpush.bf16.msra.mxu0 %v1607
        %2025 = vmatpush.bf16.msra.mxu0 %v1605
        %2026 = vmatpush.bf16.msra.mxu0 %v1603
        %2027 = vmatpush.bf16.msra.mxu0 %v1601
        %2028 = vmatpush.bf16.msra.mxu0 %v1599
        %2029 = vmatmul.bf16.gmra.mxu0 %v1107
        %v2030 = vpop.f32.mrf.mxu0
        %v2031 = vadd.f32 %v2012, %v2030
        %v2032 = vpop.f32.mrf.mxu0
        %v2033 = vadd.f32 %v2014, %v2032
        %2034 = vmatmul.bf16.gmra.mxu0 %v1115
        %v2035 = vpop.f32.mrf.mxu0
        %v2036 = vadd.f32 %v2017, %v2035
        %v2037 = vpop.f32.mrf.mxu0
        %v2038 = vadd.f32 %v2019, %v2037
        %2039 = vdwg.mxu0
        %2040 = vmatpush.bf16.msra.mxu0 %v1629
        %2041 = vmatpush.bf16.msra.mxu0 %v1627
        %2042 = vmatpush.bf16.msra.mxu0 %v1625
        %2043 = vmatpush.bf16.msra.mxu0 %v1623
        %2044 = vmatpush.bf16.msra.mxu0 %v1621
        %2045 = vmatpush.bf16.msra.mxu0 %v1619
        %2046 = vmatpush.bf16.msra.mxu0 %v1617
        %2047 = vmatpush.bf16.msra.mxu0 %v1615
        %2048 = vmatmul.bf16.gmra.mxu0 %v1108
        %v2049 = vpop.f32.mrf.mxu0
        %v2050 = vadd.f32 %v2031, %v2049
        %v2051 = vpop.f32.mrf.mxu0
        %v2052 = vadd.f32 %v2033, %v2051
        %2053 = vmatmul.bf16.gmra.mxu0 %v1116
        %v2054 = vpop.f32.mrf.mxu0
        %v2055 = vadd.f32 %v2036, %v2054
        %v2056 = vpop.f32.mrf.mxu0
        %v2057 = vadd.f32 %v2038, %v2056
        %2058 = vdwg.mxu0
        %2059 = vmatpush.bf16.msra.mxu0 %v1645
        %2060 = vmatpush.bf16.msra.mxu0 %v1643
        %2061 = vmatpush.bf16.msra.mxu0 %v1641
        %2062 = vmatpush.bf16.msra.mxu0 %v1639
        %2063 = vmatpush.bf16.msra.mxu0 %v1637
        %2064 = vmatpush.bf16.msra.mxu0 %v1635
        %2065 = vmatpush.bf16.msra.mxu0 %v1633
        %2066 = vmatpush.bf16.msra.mxu0 %v1631
        %2067 = vmatmul.bf16.gmra.mxu0 %v1109
        %v2068 = vpop.f32.mrf.mxu0
        %v2069 = vadd.f32 %v2050, %v2068
        %v2070 = vpop.f32.mrf.mxu0
        %v2071 = vadd.f32 %v2052, %v2070
        %2072 = vmatmul.bf16.gmra.mxu0 %v1117
        %v2073 = vpop.f32.mrf.mxu0
        %v2074 = vadd.f32 %v2055, %v2073
        %v2075 = vpop.f32.mrf.mxu0
        %v2076 = vadd.f32 %v2057, %v2075
        %2077 = vdwg.mxu0
        %v2078 = vadd.f32 %v902, %v1917
        %v2079 = vadd.f32 %v903, %v2069
        %v2080 = vadd.f32 %v904, %v1919
        %v2081 = vadd.f32 %v905, %v2071
        %v2082 = vadd.f32 %v906, %v1922
        %v2083 = vadd.f32 %v907, %v2074
        %v2084 = vadd.f32 %v908, %v1924
        %v2085 = vadd.f32 %v909, %v2076
        %2086 = vst [vmem:[#allocation2] sm:$0xff] %v2078
        %2087 = vst [vmem:[#allocation2 + $0x8] sm:$0xff] %v2079
        %2088 = vst [vmem:[#allocation2 + $0x10] sm:$0xff] %v2080
        %2089 = vst [vmem:[#allocation2 + $0x18] sm:$0xff] %v2081
        %2090 = vst [vmem:[#allocation2 + $0x20] sm:$0xff] %v2082
        %2091 = vst [vmem:[#allocation2 + $0x28] sm:$0xff] %v2083
        %2092 = vst [vmem:[#allocation2 + $0x30] sm:$0xff] %v2084
        %2093 = vst [vmem:[#allocation2 + $0x38] sm:$0xff] %v2085
        %p2094 = scmp.eq.s32.totalorder %s23, 3
        // Predicated region
        $region94: #{discriminator_forward.12} parent=80 // pred_check
          %p2095 = pneg %p2094
        $region95: #{discriminator_forward.12} parent=80 // pred_check_branch
          %2097 = sbr.rel (%p2095) target = $region97
        $region96: #{discriminator_forward.12} parent=80 // pred_region
          %v2098 = vld [vmem:[#allocation2] sm:$0xff]
          %v2099 = vld [vmem:[#allocation2 + $0x8] sm:$0xff]
          %v2100 = vld [vmem:[#allocation2 + $0x10] sm:$0xff]
          %v2101 = vld [vmem:[#allocation2 + $0x18] sm:$0xff]
          %v2102 = vld [vmem:[#allocation2 + $0x20] sm:$0xff]
          %v2103 = vld [vmem:[#allocation2 + $0x28] sm:$0xff]
          %v2104 = vld [vmem:[#allocation2 + $0x30] sm:$0xff]
          %v2105 = vld [vmem:[#allocation2 + $0x38] sm:$0xff]
          %v2106 = vpack.c.bf16 %v2099, %v2098
          %v2107 = vpack.c.bf16 %v2101, %v2100
          %v2108 = vpack.c.bf16 %v2103, %v2102
          %v2109 = vpack.c.bf16 %v2105, %v2104
          %2110 = vst [vmem:[%s841] sm:$0xff] %v2106
          %2111 = vst [vmem:[%s841 + $0x8] sm:$0xff] %v2107
          %2112 = vst [vmem:[%s841 + $0x10] sm:$0xff] %v2108
          %2113 = vst [vmem:[%s841 + $0x18] sm:$0xff] %v2109
          %v2114 = vadd.f32 %v2098, %v2100
          %v2115 = vadd.f32 %v2114, %v2102
          %v2116 = vadd.f32 %v2115, %v2104
          %v2117 = vrot.slane %v2116, 4
          %v2118 = vadd.f32 %v2116, %v2117
          %v2119 = vrot.slane %v2118, 2
          %v2120 = vadd.f32 %v2118, %v2119
          %v2121 = vrot.slane %v2120, 1
          %v2122 = vadd.f32 %v2120, %v2121
          %v2123 = vadd.f32 %v2099, %v2101
          %v2124 = vadd.f32 %v2123, %v2103
          %v2125 = vadd.f32 %v2124, %v2105
          %v2126 = vrot.slane %v2125, 4
          %v2127 = vadd.f32 %v2125, %v2126
          %v2128 = vrot.slane %v2127, 2
          %v2129 = vadd.f32 %v2127, %v2128
          %v2130 = vrot.slane %v2129, 1
          %v2131 = vadd.f32 %v2129, %v2130
          %v2134 = vrot.slane %v2131, 7
          %vm2135 = vcmask 1040384
          %v2136 = vsel %vm2135, %v2122, %v2134
          %v2138 = vlaneseq
          %vm2139 = vcmp.ge.s32.totalorder %v2138, 0
          %vm2140 = vcmp.lt.s32.totalorder %v2138, 256
          %vm2141 = vmand %vm2139, %vm2140
          %2142 = vst.msk [vmem:[%s878] ss:$8 sm:$0x3] %vm2141, %v2136
          %2143 = vst.msk [vmem:[%s878] ss:$8 sm:$0x0] %vm2141, %v2136
          %v2144 = vmul.f32 %v2098, %v2098
          %v2145 = vmul.f32 %v2099, %v2099
          %v2146 = vmul.f32 %v2100, %v2100
          %v2147 = vmul.f32 %v2101, %v2101
          %v2148 = vmul.f32 %v2102, %v2102
          %v2149 = vmul.f32 %v2103, %v2103
          %v2150 = vmul.f32 %v2104, %v2104
          %v2151 = vmul.f32 %v2105, %v2105
          %v2152 = vadd.f32 %v2144, %v2146
          %v2153 = vadd.f32 %v2152, %v2148
          %v2154 = vadd.f32 %v2153, %v2150
          %v2155 = vrot.slane %v2154, 4
          %v2156 = vadd.f32 %v2154, %v2155
          %v2157 = vrot.slane %v2156, 2
          %v2158 = vadd.f32 %v2156, %v2157
          %v2159 = vrot.slane %v2158, 1
          %v2160 = vadd.f32 %v2158, %v2159
          %v2161 = vadd.f32 %v2145, %v2147
          %v2162 = vadd.f32 %v2161, %v2149
          %v2163 = vadd.f32 %v2162, %v2151
          %v2164 = vrot.slane %v2163, 4
          %v2165 = vadd.f32 %v2163, %v2164
          %v2166 = vrot.slane %v2165, 2
          %v2167 = vadd.f32 %v2165, %v2166
          %v2168 = vrot.slane %v2167, 1
          %v2169 = vadd.f32 %v2167, %v2168
          %v2172 = vrot.slane %v2169, 7
          %v2173 = vsel %vm2135, %v2160, %v2172
          %2175 = vst.msk [vmem:[%s888] ss:$8 sm:$0x3] %vm2141, %v2173
          %2176 = vst.msk [vmem:[%s888] ss:$8 sm:$0x0] %vm2141, %v2173
        $region97: #{discriminator_forward.12} parent=80 // pred_fallthru
          _
        %s2177 = sand.u32 %s101, 1
        %s2178 = sand.u32 %s101, 1
        %s2179 = smul.addr %s2178, 32
        %s2180 = scalar_lea.vmem [#allocation5], %s2179
        %s2181 = smul.u32 2, %s22
        %p2182 = scmp.lt.s32.totalorder %s21, 0
        %s2183 = scalar_select %p2182, %s21, 0
        %p2184 = scmp.lt.s32.totalorder %s2181, 3
        %s2185 = scalar_select %p2184, %s2181, 3
        %s2186 = smul.addr %s2183, 4
        %s2187 = sadd.s32 %s2185, %s2186
        %s2188 = smul.addr %s2187, 8
        %s2189 = scalar_lea.vmem %s3, %s2188
        %s2190 = smul.u32 2, %s22
        %p2191 = scmp.lt.s32.totalorder %s21, 0
        %s2192 = scalar_select %p2191, %s21, 0
        %p2193 = scmp.lt.s32.totalorder %s2190, 3
        %s2194 = scalar_select %p2193, %s2190, 3
        %s2195 = smul.addr %s2192, 4
        %s2196 = sadd.s32 %s2194, %s2195
        %s2197 = smul.addr %s2196, 8
        %s2198 = scalar_lea.vmem %s4, %s2197
        // Predicated region
        $region98: #{discriminator_forward.12} parent=80 // pred_check
          %p2199 = pneg %p111
        $region99: #{discriminator_forward.12} parent=80 // pred_check_branch
          %2201 = sbr.rel (%p2199) target = $region101
        $region100: #{discriminator_forward.12} parent=80 // pred_region
          %s2202 = smul.u32 4, %s21
          %s2203 = smul.u32 2, %s22
          %s2204 = smul.addr %s2202, 4
          %s2205 = sadd.s32 %s2203, %s2204
          %s2206 = smul.addr %s2205, 4
          %s2207 = scalar_lea.vmem %s2, %s2206
          // Predicated region
          $region102: #{discriminator_forward.12} parent=100 // pred_check
            _
          $region103: #{discriminator_forward.12} parent=100 // pred_check_branch
            %2209 = sbr.rel (0) target = $region105
          $region104: #{discriminator_forward.12} parent=100 // pred_region
            // Predicated region
            $region106: #{discriminator_forward.12} parent=104 // pred_check
              _
            $region107: #{discriminator_forward.12} parent=104 // pred_check_branch
              %2211 = sbr.rel (0) target = $region109
            $region108: #{discriminator_forward.12} parent=104 // pred_region
              // Predicated region
              $region121: #{discriminator_forward.12} parent=108 // pred_check
                _
              $region122: #{discriminator_forward.12} parent=108 // pred_check_branch
                %2233 = sbr.rel (0) target = $region124
              $region123: #{discriminator_forward.12} parent=108 // pred_region
                loop: start=0, step=1, limit=1
                $region125: #{discriminator_forward.12} parent=123 // loop_pre_header
                  _
                $region126: #{discriminator_forward.12} parent=123 // loop_header
                  %s2235 = sphi 0, %s2239
                  %p2236 = scmp.ge.s32.totalorder %s2235, 1
                  %s2240 = sphi %s2180, %s2180
                  %s2241 = sphi %s2207, %s2207
                $region127: #{discriminator_forward.12} parent=123 // loop_header_branch
                  %2238 = sbr.rel (%p2236) target = $region131
                $region128: #{discriminator_forward.12} parent=123 // loop_body
                  %v2242 = vld [vmem:[%s2240] sm:$0xff]
                  %2243 = vst [vmem:[%s2241] sm:$0xff] %v2242
                  %v2244 = vld [vmem:[%s2240 + $0x8] sm:$0xff]
                  %2245 = vst [vmem:[%s2241 + $0x10] sm:$0xff] %v2244
                  %v2246 = vld [vmem:[%s2240 + $0x10] sm:$0xff]
                  %2247 = vst [vmem:[%s2241 + $0x20] sm:$0xff] %v2246
                  %v2248 = vld [vmem:[%s2240 + $0x18] sm:$0xff]
                  %2249 = vst [vmem:[%s2241 + $0x30] sm:$0xff] %v2248
                $region129: #{discriminator_forward.12} parent=123 // loop_footer
                  %s2239 = sadd.s32 1, %s2235
                $region130: #{discriminator_forward.12} parent=123 // loop_footer_branch
                  %2234 = sbr.rel target = $region126
                $region131: #{discriminator_forward.12} parent=123 // loop_exit
                  _
              $region124: #{discriminator_forward.12} parent=108 // pred_fallthru
                _
              // Predicated region
              $region132: #{discriminator_forward.12} parent=108 // pred_check
                _
              $region133: #{discriminator_forward.12} parent=108 // pred_check_branch
                %2251 = sbr.rel target = $region135
              $region134: #{discriminator_forward.12} parent=108 // pred_region
                _
              $region135: #{discriminator_forward.12} parent=108 // pred_fallthru
                _
            $region109: #{discriminator_forward.12} parent=104 // pred_fallthru
              _
            // Predicated region
            $region110: #{discriminator_forward.12} parent=104 // pred_check
              _
            $region111: #{discriminator_forward.12} parent=104 // pred_check_branch
              %2213 = sbr.rel target = $region113
            $region112: #{discriminator_forward.12} parent=104 // pred_region
              %s2215 = ssub.s32 256, 1
              loop: start=0, step=1, limit=1
              $region114: #{discriminator_forward.12} parent=112 // loop_pre_header
                _
              $region115: #{discriminator_forward.12} parent=112 // loop_header
                %s2217 = sphi 0, %s2221
                %p2218 = scmp.ge.s32.totalorder %s2217, 1
                %s2222 = sphi %s2180, %s2180
                %s2223 = sphi %s2207, %s2207
              $region116: #{discriminator_forward.12} parent=112 // loop_header_branch
                %2220 = sbr.rel (%p2218) target = $region120
              $region117: #{discriminator_forward.12} parent=112 // loop_body
                %v2224 = vld [vmem:[%s2222] sm:%s2215]
                %2225 = vst [vmem:[%s2223] sm:%s2215] %v2224
                %v2226 = vld [vmem:[%s2222 + $0x8] sm:%s2215]
                %2227 = vst [vmem:[%s2223 + $0x10] sm:%s2215] %v2226
                %v2228 = vld [vmem:[%s2222 + $0x10] sm:%s2215]
                %2229 = vst [vmem:[%s2223 + $0x20] sm:%s2215] %v2228
                %v2230 = vld [vmem:[%s2222 + $0x18] sm:%s2215]
                %2231 = vst [vmem:[%s2223 + $0x30] sm:%s2215] %v2230
              $region118: #{discriminator_forward.12} parent=112 // loop_footer
                %s2221 = sadd.s32 1, %s2217
              $region119: #{discriminator_forward.12} parent=112 // loop_footer_branch
                %2216 = sbr.rel target = $region115
              $region120: #{discriminator_forward.12} parent=112 // loop_exit
                _
            $region113: #{discriminator_forward.12} parent=104 // pred_fallthru
              _
          $region105: #{discriminator_forward.12} parent=100 // pred_fallthru
            _
          %2252 = vnop
        $region101: #{discriminator_forward.12} parent=80 // pred_fallthru
          _
        // Predicated region
        $region136: #{discriminator_forward.12} parent=80 // pred_check
          %p2253 = pneg %p139
        $region137: #{discriminator_forward.12} parent=80 // pred_check_branch
          %2255 = sbr.rel (%p2253) target = $region139
        $region138: #{discriminator_forward.12} parent=80 // pred_region
          %s2256 = smul.u32 2, %s22
        $region139: #{discriminator_forward.12} parent=80 // pred_fallthru
          _
        // Predicated region
        $region140: #{discriminator_forward.12} parent=80 // pred_check
          %p2257 = pneg %p167
        $region141: #{discriminator_forward.12} parent=80 // pred_check_branch
          %2259 = sbr.rel (%p2257) target = $region143
        $region142: #{discriminator_forward.12} parent=80 // pred_region
          %s2260 = smul.u32 2, %s22
        $region143: #{discriminator_forward.12} parent=80 // pred_fallthru
          _
      $region81: #{discriminator_forward.12} parent=5 // pred_fallthru
        _
      %p2261 = scmp.le.s32.totalorder 2, %s11
      // Predicated region
      $region144: #{discriminator_forward.12} parent=5 // pred_check
        %p2262 = pneg %p2261
      $region145: #{discriminator_forward.12} parent=5 // pred_check_branch
        %2264 = sbr.rel (%p2262) target = $region147
      $region146: #{discriminator_forward.12} parent=5 // pred_region
        %s2265 = ssub.s32 %s11, 2
        // Predicated region
        $region148: #{discriminator_forward.12} parent=146 // pred_check
          %p2266 = pneg %p117
        $region149: #{discriminator_forward.12} parent=146 // pred_check_branch
          %2268 = sbr.rel (%p2266) target = $region151
        $region150: #{discriminator_forward.12} parent=146 // pred_region
          %s2269 = sand.u32 %s102, 1
          %s2270 = sand.u32 %s102, 1
          %s2271 = smul.addr %s2270, 32
          %s2272 = scalar_lea.vmem [#allocation5], %s2271
        $region151: #{discriminator_forward.12} parent=146 // pred_fallthru
          _
        // Predicated region
        $region152: #{discriminator_forward.12} parent=146 // pred_check
          %p2273 = pneg %p145
        $region153: #{discriminator_forward.12} parent=146 // pred_check_branch
          %2275 = sbr.rel (%p2273) target = $region155
        $region154: #{discriminator_forward.12} parent=146 // pred_region
          %s2276 = smul.u32 2, %s25
          %p2277 = scmp.lt.s32.totalorder %s24, 0
          %s2278 = scalar_select %p2277, %s24, 0
          %p2279 = scmp.lt.s32.totalorder %s2276, 3
          %s2280 = scalar_select %p2279, %s2276, 3
          %s2281 = smul.addr %s2278, 4
          %s2282 = sadd.s32 %s2280, %s2281
          %s2283 = smul.addr %s2282, 8
          %s2284 = scalar_lea.vmem %s3, %s2283
        $region155: #{discriminator_forward.12} parent=146 // pred_fallthru
          _
        // Predicated region
        $region156: #{discriminator_forward.12} parent=146 // pred_check
          %p2285 = pneg %p173
        $region157: #{discriminator_forward.12} parent=146 // pred_check_branch
          %2287 = sbr.rel (%p2285) target = $region159
        $region158: #{discriminator_forward.12} parent=146 // pred_region
          %s2288 = smul.u32 2, %s25
          %p2289 = scmp.lt.s32.totalorder %s24, 0
          %s2290 = scalar_select %p2289, %s24, 0
          %p2291 = scmp.lt.s32.totalorder %s2288, 3
          %s2292 = scalar_select %p2291, %s2288, 3
          %s2293 = smul.addr %s2290, 4
          %s2294 = sadd.s32 %s2292, %s2293
          %s2295 = smul.addr %s2294, 8
          %s2296 = scalar_lea.vmem %s4, %s2295
        $region159: #{discriminator_forward.12} parent=146 // pred_fallthru
          _
      $region147: #{discriminator_forward.12} parent=5 // pred_fallthru
        _
    $region6: #{discriminator_forward.12} parent=1 // loop_footer
      %s15 = sadd.s32 1, %s11
    $region7: #{discriminator_forward.12} parent=1 // loop_footer_branch
      %10 = sbr.rel target = $region3
    $region8: #{discriminator_forward.12} parent=1 // loop_exit
      _

</llo_original>
